<compile_context>
chip_gen: v7x
topology: tpu7x:2x2x1
jax: 0.10.0
libtpu: 0.0.40
codegen_flags: <defaults>
</compile_context>

<pallas_src>
import numpy as np
import jax
import jax.numpy as jnp
from jax import lax
from jax.experimental import pallas as pl
from jax.experimental.pallas import tpu as pltpu


_OFF = 8  # sublane-aligned column offset of the image interior inside the padded scratches


def _round_up(v, m):
    return (v + m - 1) // m * m


# ------------------------------- Pallas kernel ------------------------------ #

def _unit_kernel(x_ref, w1_ref, b1_ref, w2_ref, b2_ref, o_ref, xpad_ref, hpad_ref):
    """Fused residual block, one (batch, row-tile) grid step.

    x_ref   : (1, H, W, C)  f32   whole unpadded image; same block for every
                                  row-tile step of a batch (DMA'd once/image).
    w1_ref  : (9*C, C) bf16       conv1 weight, rows ordered (ky, kx, cin)
    b1_ref  : (1, C)   f32
    w2_ref  : (9*C, C) bf16       conv2 weight
    b2_ref  : (1, C)   f32
    o_ref   : (1, TH, W, C) f32   one output row tile
    xpad_ref: (H+2, WP, C) bf16   persistent padded input  (interior at [1:H+1, OFF:OFF+W])
    hpad_ref: (H+2, WP, C) bf16   persistent padded hidden (same placement)
    """
    t = pl.program_id(1)
    _, H, W, C = x_ref.shape
    TH = o_ref.shape[1]
    WP = xpad_ref.shape[1]

    def conv3x3(src_ref, w_ref, row0, nrows):
        # Sum of 9 per-tap (nrows*W, C) x (C, C) bf16 matmuls, f32 accumulation.
        acc = None
        for dy in range(3):
            for dx in range(3):
                tap = src_ref[pl.ds(row0 + dy, nrows),
                              _OFF - 1 + dx:_OFF - 1 + dx + W, :]
                tap = tap.reshape(nrows * W, C)
                k = 3 * dy + dx
                part = jnp.dot(tap, w_ref[k * C:(k + 1) * C, :],
                               preferred_element_type=jnp.float32)
                acc = part if acc is None else acc + part
        return acc

    # ---- once per image (t == 0): halo zero, padded bf16 input, conv1 ------
    @pl.when(t == 0)
    def _per_image():
        # Zero only the 1-pixel halo ring the taps actually read.  Interiors
        # are fully rewritten below; this runs once per image so it stays
        # correct for any batch->core assignment on megacore parts.
        zrow = jnp.zeros((1, WP, C), jnp.bfloat16)
        zcol = jnp.zeros((H, 1, C), jnp.bfloat16)
        for ref in (xpad_ref, hpad_ref):
            ref[0:1, :, :] = zrow                                 # top halo row
            ref[H + 1:H + 2, :, :] = zrow                         # bottom halo row
            ref[1:H + 1, _OFF - 1:_OFF, :] = zcol                 # left halo col
            ref[1:H + 1, _OFF + W:_OFF + W + 1, :] = zcol         # right halo col

        # bf16 padded copy of the input; interior write is sublane-aligned.
        xpad_ref[1:H + 1, _OFF:_OFF + W, :] = x_ref[0].astype(jnp.bfloat16)

        # conv1 + bias + ReLU for the whole image -> padded bf16 hidden.
        z1 = conv3x3(xpad_ref, w1_ref, 0, H) + b1_ref[...]        # f32
        z1 = jnp.maximum(z1, 0.0)
        hpad_ref[1:H + 1, _OFF:_OFF + W, :] = (
            z1.reshape(H, W, C).astype(jnp.bfloat16))

    # ---- conv2 + bias + residual for this row tile --------------------------
    r0 = t * TH
    z2 = conv3x3(hpad_ref, w2_ref, r0, TH) + b2_ref[...]          # (TH*W, C) f32
    res = x_ref[:, pl.ds(r0, TH), :, :]                           # (1, TH, W, C) f32
    o_ref[...] = (z2.reshape(1, TH, W, C) + res).astype(o_ref.dtype)


# ------------------------------ Pallas wrappers ------------------------------ #

def _choose_row_tile(h):
    for th in (8, 4, 2, 1):
        if h % th == 0:
            return th
    return h


@jax.jit
def unit_pallas_nhwc(params, x_nhwc):
    """Fused Unit forward, NHWC layout (preferred entry: no layout transposes)."""
    x = x_nhwc.astype(jnp.float32)
    b, h, w, c = x.shape
    th = _choose_row_tile(h)
    n_tiles = h // th
    wp = _OFF + _round_up(w + 1, 8)                # padded-scratch width

    w1 = params["w1"].reshape(9 * c, c).astype(jnp.bfloat16)   # rows = (ky,kx,cin)
    w2 = params["w2"].reshape(9 * c, c).astype(jnp.bfloat16)
    b1 = params["b1"].reshape(1, c).astype(jnp.float32)
    b2 = params["b2"].reshape(1, c).astype(jnp.float32)

    return pl.pallas_call(
        _unit_kernel,
        out_shape=jax.ShapeDtypeStruct((b, h, w, c), jnp.float32),
        grid_spec=pltpu.PrefetchScalarGridSpec(
            num_scalar_prefetch=0,
            grid=(b, n_tiles),
            in_specs=[
                # Whole image per batch; block index constant across the
                # row-tile axis, so it is DMA'd once per image and the next
                # image is prefetched while the last tiles compute.
                pl.BlockSpec((1, h, w, c), lambda i, t: (i, 0, 0, 0)),
                pl.BlockSpec((9 * c, c), lambda i, t: (0, 0)),
                pl.BlockSpec((1, c), lambda i, t: (0, 0)),
                pl.BlockSpec((9 * c, c), lambda i, t: (0, 0)),
                pl.BlockSpec((1, c), lambda i, t: (0, 0)),
            ],
            out_specs=pl.BlockSpec((1, th, w, c), lambda i, t: (i, t, 0, 0)),
            scratch_shapes=[
                pltpu.VMEM((h + 2, wp, c), jnp.bfloat16),   # padded input (bf16)
                pltpu.VMEM((h + 2, wp, c), jnp.bfloat16),   # padded hidden (bf16)
            ],
        ),
        compiler_params=pltpu.CompilerParams(
            dimension_semantics=("parallel", "arbitrary"),
            vmem_limit_bytes=32 * 1024 * 1024),
    )(x, w1, b1, w2, b2)


@jax.jit
def unit_pallas(params, x_nchw):
    """NCHW adapter matching the PyTorch module layout (test harness only)."""
    y = unit_pallas_nhwc(params, jnp.transpose(x_nchw, (0, 2, 3, 1)))
    return jnp.transpose(y, (0, 3, 1, 2))


# ------------------------------ Reference impls ----------------------------- #

def _conv3x3_ref(x_nhwc, w_hwio, bias, matmul_dtype):
    y = lax.conv_general_dilated(
        x_nhwc.astype(matmul_dtype), w_hwio.astype(matmul_dtype),
        window_strides=(1, 1), padding="SAME",
        dimension_numbers=("NHWC", "HWIO", "NHWC"),
        preferred_element_type=jnp.float32)
    return y + bias


def _unit_forward_ref(params, x_nchw, matmul_dtype):
    x = jnp.transpose(x_nchw, (0, 2, 3, 1)).astype(jnp.float32)
    h1 = jax.nn.relu(_conv3x3_ref(x, params["w1"], params["b1"], matmul_dtype))
    y = _conv3x3_ref(h1, params["w2"], params["b2"], matmul_dtype) + x
    return jnp.transpose(y, (0, 3, 1, 2))


@jax.jit
def unit_ref_bf16(params, x):   # same numerics as the kernel (bf16 MXU, f32 acc)
    return _unit_forward_ref(params, x, jnp.bfloat16)


@jax.jit
def unit_ref_f32(params, x):    # pure f32 reference (original module math)
    return _unit_forward_ref(params, x, jnp.float32)


# ---------------------------------- Params ---------------------------------- #

def init_params(key, n_feats):
    ks = jax.random.split(key, 4)

    def w_init(k, shape, scale=0.05):
        return scale * jax.random.normal(k, shape, jnp.float32)

    return {
        "w1": w_init(ks[0], (3, 3, n_feats, n_feats)),   # HWIO
        "b1": w_init(ks[1], (n_feats,)),
        "w2": w_init(ks[2], (3, 3, n_feats, n_feats)),
        "b2": w_init(ks[3], (n_feats,)),
    }


# ------------------------------------ Main ----------------------------------- #

if __name__ == "__main__":
    n_feats, B, H, W = 128, 2, 16, 16

    key = jax.random.PRNGKey(0)
    k_par, k_x = jax.random.split(key)
    params = init_params(k_par, n_feats)
    x = jax.random.normal(k_x, (B, n_feats, H, W), jnp.float32)

    out = jax.block_until_ready(unit_pallas(params, x))
    assert out.shape == (B, n_feats, H, W), out.shape

    # Tight check against a reference with identical numerics (bf16 MXU inputs,
    # f32 accumulation, f32 bias/ReLU/residual).
    ref_bf16 = jax.block_until_ready(unit_ref_bf16(params, x))
    np.testing.assert_allclose(np.asarray(out), np.asarray(ref_bf16),
                               rtol=2e-3, atol=2e-3)

    # Loose sanity check against the pure-f32 module math.
    ref_f32 = jax.block_until_ready(unit_ref_f32(params, x))
    np.testing.assert_allclose(np.asarray(out), np.asarray(ref_f32),
                               rtol=1e-1, atol=1e-1)

    print("KERNEL_OK")
</pallas_src>

<mosaic_0001>
module attributes {stable_mosaic.version = 11 : i64} {
  func.func @_unit_kernel(%arg0: i32, %arg1: i32, %arg2: memref<1x16x16x128xf32, #tpu.memory_space<vmem>>, %arg3: memref<1152x128xbf16, #tpu.memory_space<vmem>>, %arg4: memref<1x128xf32, #tpu.memory_space<vmem>>, %arg5: memref<1152x128xbf16, #tpu.memory_space<vmem>>, %arg6: memref<1x128xf32, #tpu.memory_space<vmem>>, %arg7: memref<1x8x16x128xf32, #tpu.memory_space<vmem>>, %arg8: memref<18x32x128xbf16, #tpu.memory_space<vmem>>, %arg9: memref<18x32x128xbf16, #tpu.memory_space<vmem>>) attributes {dimension_semantics = [#tpu.dimension_semantics<parallel>, #tpu.dimension_semantics<arbitrary>], iteration_bounds = array<i64: 2, 2>, scalar_prefetch = 0 : i64, scratch_operands = 2 : i64, tpu.core_type = #tpu.core_type<tc>, window_params = [{transform_indices = @transform_0, window_bounds = array<i64: 1, 16, 16, 128>}, {pipeline_mode = #tpu.pipeline_mode<synchronous>, transform_indices = @transform_1, window_bounds = array<i64: 1152, 128>}, {pipeline_mode = #tpu.pipeline_mode<synchronous>, transform_indices = @transform_2, window_bounds = array<i64: 1, 128>}, {pipeline_mode = #tpu.pipeline_mode<synchronous>, transform_indices = @transform_3, window_bounds = array<i64: 1152, 128>}, {pipeline_mode = #tpu.pipeline_mode<synchronous>, transform_indices = @transform_4, window_bounds = array<i64: 1, 128>}, {transform_indices = @transform_5, window_bounds = array<i64: 1, 8, 16, 128>}]} {
    %c0_i32 = arith.constant 0 : i32
    %0 = arith.cmpi eq, %arg1, %c0_i32 : i32
    %1 = arith.extui %0 : i1 to i32
    %c0_i32_0 = arith.constant 0 : i32
    %2 = arith.cmpi ne, %1, %c0_i32_0 : i32
    scf.if %2 {
      %cst_49 = arith.constant 0.000000e+00 : bf16
      %74 = vector.broadcast %cst_49 : bf16 to vector<1x32x128xbf16>
      %cst_50 = arith.constant 0.000000e+00 : bf16
      %75 = vector.broadcast %cst_50 : bf16 to vector<16x1x128xbf16>
      %c0_51 = arith.constant 0 : index
      %c0_52 = arith.constant 0 : index
      %c0_53 = arith.constant 0 : index
      %76 = vector.load %arg8[%c0_51, %c0_52, %c0_53] : memref<18x32x128xbf16, #tpu.memory_space<vmem>>, vector<1x32x128xbf16>
      tpu.vector_store %arg8[%c0_51, %c0_52, %c0_53], %74 {strides = array<i32>} : memref<18x32x128xbf16, #tpu.memory_space<vmem>>, vector<1x32x128xbf16>,
      %c17 = arith.constant 17 : index
      %c0_54 = arith.constant 0 : index
      %c0_55 = arith.constant 0 : index
      %77 = vector.load %arg8[%c17, %c0_54, %c0_55] : memref<18x32x128xbf16, #tpu.memory_space<vmem>>, vector<1x32x128xbf16>
      tpu.vector_store %arg8[%c17, %c0_54, %c0_55], %74 {strides = array<i32>} : memref<18x32x128xbf16, #tpu.memory_space<vmem>>, vector<1x32x128xbf16>,
      %c1 = arith.constant 1 : index
      %c7_56 = arith.constant 7 : index
      %c0_57 = arith.constant 0 : index
      %78 = vector.load %arg8[%c1, %c7_56, %c0_57] : memref<18x32x128xbf16, #tpu.memory_space<vmem>>, vector<16x1x128xbf16>
      tpu.vector_store %arg8[%c1, %c7_56, %c0_57], %75 {strides = array<i32>} : memref<18x32x128xbf16, #tpu.memory_space<vmem>>, vector<16x1x128xbf16>,
      %c1_58 = arith.constant 1 : index
      %c24 = arith.constant 24 : index
      %c0_59 = arith.constant 0 : index
      %79 = vector.load %arg8[%c1_58, %c24, %c0_59] : memref<18x32x128xbf16, #tpu.memory_space<vmem>>, vector<16x1x128xbf16>
      tpu.vector_store %arg8[%c1_58, %c24, %c0_59], %75 {strides = array<i32>} : memref<18x32x128xbf16, #tpu.memory_space<vmem>>, vector<16x1x128xbf16>,
      %c0_60 = arith.constant 0 : index
      %c0_61 = arith.constant 0 : index
      %c0_62 = arith.constant 0 : index
      %80 = vector.load %arg9[%c0_60, %c0_61, %c0_62] : memref<18x32x128xbf16, #tpu.memory_space<vmem>>, vector<1x32x128xbf16>
      tpu.vector_store %arg9[%c0_60, %c0_61, %c0_62], %74 {strides = array<i32>} : memref<18x32x128xbf16, #tpu.memory_space<vmem>>, vector<1x32x128xbf16>,
      %c17_63 = arith.constant 17 : index
      %c0_64 = arith.constant 0 : index
      %c0_65 = arith.constant 0 : index
      %81 = vector.load %arg9[%c17_63, %c0_64, %c0_65] : memref<18x32x128xbf16, #tpu.memory_space<vmem>>, vector<1x32x128xbf16>
      tpu.vector_store %arg9[%c17_63, %c0_64, %c0_65], %74 {strides = array<i32>} : memref<18x32x128xbf16, #tpu.memory_space<vmem>>, vector<1x32x128xbf16>,
      %c1_66 = arith.constant 1 : index
      %c7_67 = arith.constant 7 : index
      %c0_68 = arith.constant 0 : index
      %82 = vector.load %arg9[%c1_66, %c7_67, %c0_68] : memref<18x32x128xbf16, #tpu.memory_space<vmem>>, vector<16x1x128xbf16>
      tpu.vector_store %arg9[%c1_66, %c7_67, %c0_68], %75 {strides = array<i32>} : memref<18x32x128xbf16, #tpu.memory_space<vmem>>, vector<16x1x128xbf16>,
      %c1_69 = arith.constant 1 : index
      %c24_70 = arith.constant 24 : index
      %c0_71 = arith.constant 0 : index
      %83 = vector.load %arg9[%c1_69, %c24_70, %c0_71] : memref<18x32x128xbf16, #tpu.memory_space<vmem>>, vector<16x1x128xbf16>
      tpu.vector_store %arg9[%c1_69, %c24_70, %c0_71], %75 {strides = array<i32>} : memref<18x32x128xbf16, #tpu.memory_space<vmem>>, vector<16x1x128xbf16>,
      %c0_72 = arith.constant 0 : index
      %c0_73 = arith.constant 0 : index
      %c0_74 = arith.constant 0 : index
      %c0_75 = arith.constant 0 : index
      %84 = vector.load %arg2[%c0_72, %c0_73, %c0_74, %c0_75] : memref<1x16x16x128xf32, #tpu.memory_space<vmem>>, vector<1x16x16x128xf32>
      %85 = vector.shape_cast %84 : vector<1x16x16x128xf32> to vector<16x16x128xf32>
      %86 = arith.truncf %85 : vector<16x16x128xf32> to vector<16x16x128xbf16>
      %c1_76 = arith.constant 1 : index
      %c8_77 = arith.constant 8 : index
      %c0_78 = arith.constant 0 : index
      %87 = vector.load %arg8[%c1_76, %c8_77, %c0_78] : memref<18x32x128xbf16, #tpu.memory_space<vmem>>, vector<16x16x128xbf16>
      tpu.vector_store %arg8[%c1_76, %c8_77, %c0_78], %86 {strides = array<i32>} : memref<18x32x128xbf16, #tpu.memory_space<vmem>>, vector<16x16x128xbf16>,
      %c0_79 = arith.constant 0 : index
      %c7_80 = arith.constant 7 : index
      %c0_81 = arith.constant 0 : index
      %88 = vector.load %arg8[%c0_79, %c7_80, %c0_81] : memref<18x32x128xbf16, #tpu.memory_space<vmem>>, vector<16x16x128xbf16>
      %89 = vector.shape_cast %88 : vector<16x16x128xbf16> to vector<256x128xbf16>
      %c0_82 = arith.constant 0 : index
      %c0_83 = arith.constant 0 : index
      %90 = vector.load %arg3[%c0_82, %c0_83] : memref<1152x128xbf16, #tpu.memory_space<vmem>>, vector<128x128xbf16>
      %cst_84 = arith.constant dense<0.000000e+00> : vector<256x128xf32>
      %91 = tpu.matmul %89, %90, %cst_84 {dimension_numbers = #tpu.dot_dimension_numbers<[1], [0], [0], [1], [0, 0, 1, 1], [], []>} : vector<256x128xbf16>, vector<128x128xbf16>, vector<256x128xf32> -> vector<256x128xf32>
      %c0_85 = arith.constant 0 : index
      %c8_86 = arith.constant 8 : index
      %c0_87 = arith.constant 0 : index
      %92 = vector.load %arg8[%c0_85, %c8_86, %c0_87] : memref<18x32x128xbf16, #tpu.memory_space<vmem>>, vector<16x16x128xbf16>
      %93 = vector.shape_cast %92 : vector<16x16x128xbf16> to vector<256x128xbf16>
      %c128_88 = arith.constant 128 : index
      %c0_89 = arith.constant 0 : index
      %94 = vector.load %arg3[%c128_88, %c0_89] : memref<1152x128xbf16, #tpu.memory_space<vmem>>, vector<128x128xbf16>
      %cst_90 = arith.constant dense<0.000000e+00> : vector<256x128xf32>
      %95 = tpu.matmul %93, %94, %cst_90 {dimension_numbers = #tpu.dot_dimension_numbers<[1], [0], [0], [1], [0, 0, 1, 1], [], []>} : vector<256x128xbf16>, vector<128x128xbf16>, vector<256x128xf32> -> vector<256x128xf32>
      %96 = arith.addf %91, %95 : vector<256x128xf32>
      %c0_91 = arith.constant 0 : index
      %c9_92 = arith.constant 9 : index
      %c0_93 = arith.constant 0 : index
      %97 = vector.load %arg8[%c0_91, %c9_92, %c0_93] : memref<18x32x128xbf16, #tpu.memory_space<vmem>>, vector<16x16x128xbf16>
      %98 = vector.shape_cast %97 : vector<16x16x128xbf16> to vector<256x128xbf16>
      %c256_94 = arith.constant 256 : index
      %c0_95 = arith.constant 0 : index
      %99 = vector.load %arg3[%c256_94, %c0_95] : memref<1152x128xbf16, #tpu.memory_space<vmem>>, vector<128x128xbf16>
      %cst_96 = arith.constant dense<0.000000e+00> : vector<256x128xf32>
      %100 = tpu.matmul %98, %99, %cst_96 {dimension_numbers = #tpu.dot_dimension_numbers<[1], [0], [0], [1], [0, 0, 1, 1], [], []>} : vector<256x128xbf16>, vector<128x128xbf16>, vector<256x128xf32> -> vector<256x128xf32>
      %101 = arith.addf %96, %100 : vector<256x128xf32>
      %c1_97 = arith.constant 1 : index
      %c7_98 = arith.constant 7 : index
      %c0_99 = arith.constant 0 : index
      %102 = vector.load %arg8[%c1_97, %c7_98, %c0_99] : memref<18x32x128xbf16, #tpu.memory_space<vmem>>, vector<16x16x128xbf16>
      %103 = vector.shape_cast %102 : vector<16x16x128xbf16> to vector<256x128xbf16>
      %c384_100 = arith.constant 384 : index
      %c0_101 = arith.constant 0 : index
      %104 = vector.load %arg3[%c384_100, %c0_101] : memref<1152x128xbf16, #tpu.memory_space<vmem>>, vector<128x128xbf16>
      %cst_102 = arith.constant dense<0.000000e+00> : vector<256x128xf32>
      %105 = tpu.matmul %103, %104, %cst_102 {dimension_numbers = #tpu.dot_dimension_numbers<[1], [0], [0], [1], [0, 0, 1, 1], [], []>} : vector<256x128xbf16>, vector<128x128xbf16>, vector<256x128xf32> -> vector<256x128xf32>
      %106 = arith.addf %101, %105 : vector<256x128xf32>
      %c1_103 = arith.constant 1 : index
      %c8_104 = arith.constant 8 : index
      %c0_105 = arith.constant 0 : index
      %107 = vector.load %arg8[%c1_103, %c8_104, %c0_105] : memref<18x32x128xbf16, #tpu.memory_space<vmem>>, vector<16x16x128xbf16>
      %108 = vector.shape_cast %107 : vector<16x16x128xbf16> to vector<256x128xbf16>
      %c512_106 = arith.constant 512 : index
      %c0_107 = arith.constant 0 : index
      %109 = vector.load %arg3[%c512_106, %c0_107] : memref<1152x128xbf16, #tpu.memory_space<vmem>>, vector<128x128xbf16>
      %cst_108 = arith.constant dense<0.000000e+00> : vector<256x128xf32>
      %110 = tpu.matmul %108, %109, %cst_108 {dimension_numbers = #tpu.dot_dimension_numbers<[1], [0], [0], [1], [0, 0, 1, 1], [], []>} : vector<256x128xbf16>, vector<128x128xbf16>, vector<256x128xf32> -> vector<256x128xf32>
      %111 = arith.addf %106, %110 : vector<256x128xf32>
      %c1_109 = arith.constant 1 : index
      %c9_110 = arith.constant 9 : index
      %c0_111 = arith.constant 0 : index
      %112 = vector.load %arg8[%c1_109, %c9_110, %c0_111] : memref<18x32x128xbf16, #tpu.memory_space<vmem>>, vector<16x16x128xbf16>
      %113 = vector.shape_cast %112 : vector<16x16x128xbf16> to vector<256x128xbf16>
      %c640_112 = arith.constant 640 : index
      %c0_113 = arith.constant 0 : index
      %114 = vector.load %arg3[%c640_112, %c0_113] : memref<1152x128xbf16, #tpu.memory_space<vmem>>, vector<128x128xbf16>
      %cst_114 = arith.constant dense<0.000000e+00> : vector<256x128xf32>
      %115 = tpu.matmul %113, %114, %cst_114 {dimension_numbers = #tpu.dot_dimension_numbers<[1], [0], [0], [1], [0, 0, 1, 1], [], []>} : vector<256x128xbf16>, vector<128x128xbf16>, vector<256x128xf32> -> vector<256x128xf32>
      %116 = arith.addf %111, %115 : vector<256x128xf32>
      %c2 = arith.constant 2 : index
      %c7_115 = arith.constant 7 : index
      %c0_116 = arith.constant 0 : index
      %117 = vector.load %arg8[%c2, %c7_115, %c0_116] : memref<18x32x128xbf16, #tpu.memory_space<vmem>>, vector<16x16x128xbf16>
      %118 = vector.shape_cast %117 : vector<16x16x128xbf16> to vector<256x128xbf16>
      %c768_117 = arith.constant 768 : index
      %c0_118 = arith.constant 0 : index
      %119 = vector.load %arg3[%c768_117, %c0_118] : memref<1152x128xbf16, #tpu.memory_space<vmem>>, vector<128x128xbf16>
      %cst_119 = arith.constant dense<0.000000e+00> : vector<256x128xf32>
      %120 = tpu.matmul %118, %119, %cst_119 {dimension_numbers = #tpu.dot_dimension_numbers<[1], [0], [0], [1], [0, 0, 1, 1], [], []>} : vector<256x128xbf16>, vector<128x128xbf16>, vector<256x128xf32> -> vector<256x128xf32>
      %121 = arith.addf %116, %120 : vector<256x128xf32>
      %c2_120 = arith.constant 2 : index
      %c8_121 = arith.constant 8 : index
      %c0_122 = arith.constant 0 : index
      %122 = vector.load %arg8[%c2_120, %c8_121, %c0_122] : memref<18x32x128xbf16, #tpu.memory_space<vmem>>, vector<16x16x128xbf16>
      %123 = vector.shape_cast %122 : vector<16x16x128xbf16> to vector<256x128xbf16>
      %c896_123 = arith.constant 896 : index
      %c0_124 = arith.constant 0 : index
      %124 = vector.load %arg3[%c896_123, %c0_124] : memref<1152x128xbf16, #tpu.memory_space<vmem>>, vector<128x128xbf16>
      %cst_125 = arith.constant dense<0.000000e+00> : vector<256x128xf32>
      %125 = tpu.matmul %123, %124, %cst_125 {dimension_numbers = #tpu.dot_dimension_numbers<[1], [0], [0], [1], [0, 0, 1, 1], [], []>} : vector<256x128xbf16>, vector<128x128xbf16>, vector<256x128xf32> -> vector<256x128xf32>
      %126 = arith.addf %121, %125 : vector<256x128xf32>
      %c2_126 = arith.constant 2 : index
      %c9_127 = arith.constant 9 : index
      %c0_128 = arith.constant 0 : index
      %127 = vector.load %arg8[%c2_126, %c9_127, %c0_128] : memref<18x32x128xbf16, #tpu.memory_space<vmem>>, vector<16x16x128xbf16>
      %128 = vector.shape_cast %127 : vector<16x16x128xbf16> to vector<256x128xbf16>
      %c1024_129 = arith.constant 1024 : index
      %c0_130 = arith.constant 0 : index
      %129 = vector.load %arg3[%c1024_129, %c0_130] : memref<1152x128xbf16, #tpu.memory_space<vmem>>, vector<128x128xbf16>
      %cst_131 = arith.constant dense<0.000000e+00> : vector<256x128xf32>
      %130 = tpu.matmul %128, %129, %cst_131 {dimension_numbers = #tpu.dot_dimension_numbers<[1], [0], [0], [1], [0, 0, 1, 1], [], []>} : vector<256x128xbf16>, vector<128x128xbf16>, vector<256x128xf32> -> vector<256x128xf32>
      %131 = arith.addf %126, %130 : vector<256x128xf32>
      %c0_132 = arith.constant 0 : index
      %c0_133 = arith.constant 0 : index
      %132 = vector.load %arg4[%c0_132, %c0_133] : memref<1x128xf32, #tpu.memory_space<vmem>>, vector<1x128xf32>
      %133 = vector.broadcast %132 : vector<1x128xf32> to vector<256x128xf32>
      %134 = arith.addf %131, %133 : vector<256x128xf32>
      %cst_134 = arith.constant 0.000000e+00 : f32
      %135 = vector.broadcast %cst_134 : f32 to vector<256x128xf32>
      %136 = arith.maximumf %134, %135 : vector<256x128xf32>
      %137 = vector.shape_cast %136 : vector<256x128xf32> to vector<16x16x128xf32>
      %138 = arith.truncf %137 : vector<16x16x128xf32> to vector<16x16x128xbf16>
      %c1_135 = arith.constant 1 : index
      %c8_136 = arith.constant 8 : index
      %c0_137 = arith.constant 0 : index
      %139 = vector.load %arg9[%c1_135, %c8_136, %c0_137] : memref<18x32x128xbf16, #tpu.memory_space<vmem>>, vector<16x16x128xbf16>
      tpu.vector_store %arg9[%c1_135, %c8_136, %c0_137], %138 {strides = array<i32>} : memref<18x32x128xbf16, #tpu.memory_space<vmem>>, vector<16x16x128xbf16>,
    } else {
    }
    %c8_i32 = arith.constant 8 : i32
    %3 = arith.muli %arg1, %c8_i32 : i32
    %c0_i32_1 = arith.constant 0 : i32
    %4 = arith.addi %3, %c0_i32_1 : i32
    %5 = arith.index_cast %4 : i32 to index
    %c7 = arith.constant 7 : index
    %c0 = arith.constant 0 : index
    %6 = vector.load %arg9[%5, %c7, %c0] : memref<18x32x128xbf16, #tpu.memory_space<vmem>>, vector<8x16x128xbf16>
    %7 = vector.shape_cast %6 : vector<8x16x128xbf16> to vector<128x128xbf16>
    %c0_2 = arith.constant 0 : index
    %c0_3 = arith.constant 0 : index
    %8 = vector.load %arg5[%c0_2, %c0_3] : memref<1152x128xbf16, #tpu.memory_space<vmem>>, vector<128x128xbf16>
    %cst = arith.constant dense<0.000000e+00> : vector<128x128xf32>
    %9 = tpu.matmul %7, %8, %cst {dimension_numbers = #tpu.dot_dimension_numbers<[1], [0], [0], [1], [0, 0, 1, 1], [], []>} : vector<128x128xbf16>, vector<128x128xbf16>, vector<128x128xf32> -> vector<128x128xf32>
    %c0_i32_4 = arith.constant 0 : i32
    %10 = arith.addi %3, %c0_i32_4 : i32
    %11 = arith.index_cast %10 : i32 to index
    %c8 = arith.constant 8 : index
    %c0_5 = arith.constant 0 : index
    %12 = vector.load %arg9[%11, %c8, %c0_5] : memref<18x32x128xbf16, #tpu.memory_space<vmem>>, vector<8x16x128xbf16>
    %13 = vector.shape_cast %12 : vector<8x16x128xbf16> to vector<128x128xbf16>
    %c128 = arith.constant 128 : index
    %c0_6 = arith.constant 0 : index
    %14 = vector.load %arg5[%c128, %c0_6] : memref<1152x128xbf16, #tpu.memory_space<vmem>>, vector<128x128xbf16>
    %cst_7 = arith.constant dense<0.000000e+00> : vector<128x128xf32>
    %15 = tpu.matmul %13, %14, %cst_7 {dimension_numbers = #tpu.dot_dimension_numbers<[1], [0], [0], [1], [0, 0, 1, 1], [], []>} : vector<128x128xbf16>, vector<128x128xbf16>, vector<128x128xf32> -> vector<128x128xf32>
    %16 = arith.addf %9, %15 : vector<128x128xf32>
    %c0_i32_8 = arith.constant 0 : i32
    %17 = arith.addi %3, %c0_i32_8 : i32
    %18 = arith.index_cast %17 : i32 to index
    %c9 = arith.constant 9 : index
    %c0_9 = arith.constant 0 : index
    %19 = vector.load %arg9[%18, %c9, %c0_9] : memref<18x32x128xbf16, #tpu.memory_space<vmem>>, vector<8x16x128xbf16>
    %20 = vector.shape_cast %19 : vector<8x16x128xbf16> to vector<128x128xbf16>
    %c256 = arith.constant 256 : index
    %c0_10 = arith.constant 0 : index
    %21 = vector.load %arg5[%c256, %c0_10] : memref<1152x128xbf16, #tpu.memory_space<vmem>>, vector<128x128xbf16>
    %cst_11 = arith.constant dense<0.000000e+00> : vector<128x128xf32>
    %22 = tpu.matmul %20, %21, %cst_11 {dimension_numbers = #tpu.dot_dimension_numbers<[1], [0], [0], [1], [0, 0, 1, 1], [], []>} : vector<128x128xbf16>, vector<128x128xbf16>, vector<128x128xf32> -> vector<128x128xf32>
    %23 = arith.addf %16, %22 : vector<128x128xf32>
    %c1_i32 = arith.constant 1 : i32
    %24 = arith.addi %3, %c1_i32 : i32
    %25 = arith.index_cast %24 : i32 to index
    %c7_12 = arith.constant 7 : index
    %c0_13 = arith.constant 0 : index
    %26 = vector.load %arg9[%25, %c7_12, %c0_13] : memref<18x32x128xbf16, #tpu.memory_space<vmem>>, vector<8x16x128xbf16>
    %27 = vector.shape_cast %26 : vector<8x16x128xbf16> to vector<128x128xbf16>
    %c384 = arith.constant 384 : index
    %c0_14 = arith.constant 0 : index
    %28 = vector.load %arg5[%c384, %c0_14] : memref<1152x128xbf16, #tpu.memory_space<vmem>>, vector<128x128xbf16>
    %cst_15 = arith.constant dense<0.000000e+00> : vector<128x128xf32>
    %29 = tpu.matmul %27, %28, %cst_15 {dimension_numbers = #tpu.dot_dimension_numbers<[1], [0], [0], [1], [0, 0, 1, 1], [], []>} : vector<128x128xbf16>, vector<128x128xbf16>, vector<128x128xf32> -> vector<128x128xf32>
    %30 = arith.addf %23, %29 : vector<128x128xf32>
    %c1_i32_16 = arith.constant 1 : i32
    %31 = arith.addi %3, %c1_i32_16 : i32
    %32 = arith.index_cast %31 : i32 to index
    %c8_17 = arith.constant 8 : index
    %c0_18 = arith.constant 0 : index
    %33 = vector.load %arg9[%32, %c8_17, %c0_18] : memref<18x32x128xbf16, #tpu.memory_space<vmem>>, vector<8x16x128xbf16>
    %34 = vector.shape_cast %33 : vector<8x16x128xbf16> to vector<128x128xbf16>
    %c512 = arith.constant 512 : index
    %c0_19 = arith.constant 0 : index
    %35 = vector.load %arg5[%c512, %c0_19] : memref<1152x128xbf16, #tpu.memory_space<vmem>>, vector<128x128xbf16>
    %cst_20 = arith.constant dense<0.000000e+00> : vector<128x128xf32>
    %36 = tpu.matmul %34, %35, %cst_20 {dimension_numbers = #tpu.dot_dimension_numbers<[1], [0], [0], [1], [0, 0, 1, 1], [], []>} : vector<128x128xbf16>, vector<128x128xbf16>, vector<128x128xf32> -> vector<128x128xf32>
    %37 = arith.addf %30, %36 : vector<128x128xf32>
    %c1_i32_21 = arith.constant 1 : i32
    %38 = arith.addi %3, %c1_i32_21 : i32
    %39 = arith.index_cast %38 : i32 to index
    %c9_22 = arith.constant 9 : index
    %c0_23 = arith.constant 0 : index
    %40 = vector.load %arg9[%39, %c9_22, %c0_23] : memref<18x32x128xbf16, #tpu.memory_space<vmem>>, vector<8x16x128xbf16>
    %41 = vector.shape_cast %40 : vector<8x16x128xbf16> to vector<128x128xbf16>
    %c640 = arith.constant 640 : index
    %c0_24 = arith.constant 0 : index
    %42 = vector.load %arg5[%c640, %c0_24] : memref<1152x128xbf16, #tpu.memory_space<vmem>>, vector<128x128xbf16>
    %cst_25 = arith.constant dense<0.000000e+00> : vector<128x128xf32>
    %43 = tpu.matmul %41, %42, %cst_25 {dimension_numbers = #tpu.dot_dimension_numbers<[1], [0], [0], [1], [0, 0, 1, 1], [], []>} : vector<128x128xbf16>, vector<128x128xbf16>, vector<128x128xf32> -> vector<128x128xf32>
    %44 = arith.addf %37, %43 : vector<128x128xf32>
    %c2_i32 = arith.constant 2 : i32
    %45 = arith.addi %3, %c2_i32 : i32
    %46 = arith.index_cast %45 : i32 to index
    %c7_26 = arith.constant 7 : index
    %c0_27 = arith.constant 0 : index
    %47 = vector.load %arg9[%46, %c7_26, %c0_27] : memref<18x32x128xbf16, #tpu.memory_space<vmem>>, vector<8x16x128xbf16>
    %48 = vector.shape_cast %47 : vector<8x16x128xbf16> to vector<128x128xbf16>
    %c768 = arith.constant 768 : index
    %c0_28 = arith.constant 0 : index
    %49 = vector.load %arg5[%c768, %c0_28] : memref<1152x128xbf16, #tpu.memory_space<vmem>>, vector<128x128xbf16>
    %cst_29 = arith.constant dense<0.000000e+00> : vector<128x128xf32>
    %50 = tpu.matmul %48, %49, %cst_29 {dimension_numbers = #tpu.dot_dimension_numbers<[1], [0], [0], [1], [0, 0, 1, 1], [], []>} : vector<128x128xbf16>, vector<128x128xbf16>, vector<128x128xf32> -> vector<128x128xf32>
    %51 = arith.addf %44, %50 : vector<128x128xf32>
    %c2_i32_30 = arith.constant 2 : i32
    %52 = arith.addi %3, %c2_i32_30 : i32
    %53 = arith.index_cast %52 : i32 to index
    %c8_31 = arith.constant 8 : index
    %c0_32 = arith.constant 0 : index
    %54 = vector.load %arg9[%53, %c8_31, %c0_32] : memref<18x32x128xbf16, #tpu.memory_space<vmem>>, vector<8x16x128xbf16>
    %55 = vector.shape_cast %54 : vector<8x16x128xbf16> to vector<128x128xbf16>
    %c896 = arith.constant 896 : index
    %c0_33 = arith.constant 0 : index
    %56 = vector.load %arg5[%c896, %c0_33] : memref<1152x128xbf16, #tpu.memory_space<vmem>>, vector<128x128xbf16>
    %cst_34 = arith.constant dense<0.000000e+00> : vector<128x128xf32>
    %57 = tpu.matmul %55, %56, %cst_34 {dimension_numbers = #tpu.dot_dimension_numbers<[1], [0], [0], [1], [0, 0, 1, 1], [], []>} : vector<128x128xbf16>, vector<128x128xbf16>, vector<128x128xf32> -> vector<128x128xf32>
    %58 = arith.addf %51, %57 : vector<128x128xf32>
    %c2_i32_35 = arith.constant 2 : i32
    %59 = arith.addi %3, %c2_i32_35 : i32
    %60 = arith.index_cast %59 : i32 to index
    %c9_36 = arith.constant 9 : index
    %c0_37 = arith.constant 0 : index
    %61 = vector.load %arg9[%60, %c9_36, %c0_37] : memref<18x32x128xbf16, #tpu.memory_space<vmem>>, vector<8x16x128xbf16>
    %62 = vector.shape_cast %61 : vector<8x16x128xbf16> to vector<128x128xbf16>
    %c1024 = arith.constant 1024 : index
    %c0_38 = arith.constant 0 : index
    %63 = vector.load %arg5[%c1024, %c0_38] : memref<1152x128xbf16, #tpu.memory_space<vmem>>, vector<128x128xbf16>
    %cst_39 = arith.constant dense<0.000000e+00> : vector<128x128xf32>
    %64 = tpu.matmul %62, %63, %cst_39 {dimension_numbers = #tpu.dot_dimension_numbers<[1], [0], [0], [1], [0, 0, 1, 1], [], []>} : vector<128x128xbf16>, vector<128x128xbf16>, vector<128x128xf32> -> vector<128x128xf32>
    %65 = arith.addf %58, %64 : vector<128x128xf32>
    %c0_40 = arith.constant 0 : index
    %c0_41 = arith.constant 0 : index
    %66 = vector.load %arg6[%c0_40, %c0_41] : memref<1x128xf32, #tpu.memory_space<vmem>>, vector<1x128xf32>
    %67 = vector.broadcast %66 : vector<1x128xf32> to vector<128x128xf32>
    %68 = arith.addf %65, %67 : vector<128x128xf32>
    %c0_42 = arith.constant 0 : index
    %69 = arith.index_cast %3 : i32 to index
    %c0_43 = arith.constant 0 : index
    %c0_44 = arith.constant 0 : index
    %70 = vector.load %arg2[%c0_42, %69, %c0_43, %c0_44] : memref<1x16x16x128xf32, #tpu.memory_space<vmem>>, vector<1x8x16x128xf32>
    %71 = vector.shape_cast %68 : vector<128x128xf32> to vector<1x8x16x128xf32>
    %72 = arith.addf %71, %70 : vector<1x8x16x128xf32>
    %c0_45 = arith.constant 0 : index
    %c0_46 = arith.constant 0 : index
    %c0_47 = arith.constant 0 : index
    %c0_48 = arith.constant 0 : index
    %73 = vector.load %arg7[%c0_45, %c0_46, %c0_47, %c0_48] : memref<1x8x16x128xf32, #tpu.memory_space<vmem>>, vector<1x8x16x128xf32>
    tpu.vector_store %arg7[%c0_45, %c0_46, %c0_47, %c0_48], %72 {strides = array<i32>} : memref<1x8x16x128xf32, #tpu.memory_space<vmem>>, vector<1x8x16x128xf32>,
    return
  }
  func.func @transform_0(%arg0: i32, %arg1: i32) -> (i32, i32, i32, i32) {
    %c0_i32 = arith.constant 0 : i32
    %c0_i32_0 = arith.constant 0 : i32
    %c0_i32_1 = arith.constant 0 : i32
    %c0_i32_2 = arith.constant 0 : i32
    return %arg0, %c0_i32, %c0_i32_0, %c0_i32_1 : i32, i32, i32, i32
  }
  func.func @transform_1(%arg0: i32, %arg1: i32) -> (i32, i32) {
    %c0_i32 = arith.constant 0 : i32
    %c0_i32_0 = arith.constant 0 : i32
    %c0_i32_1 = arith.constant 0 : i32
    return %c0_i32, %c0_i32_0 : i32, i32
  }
  func.func @transform_2(%arg0: i32, %arg1: i32) -> (i32, i32) {
    %c0_i32 = arith.constant 0 : i32
    %c0_i32_0 = arith.constant 0 : i32
    %c0_i32_1 = arith.constant 0 : i32
    return %c0_i32, %c0_i32_0 : i32, i32
  }
  func.func @transform_3(%arg0: i32, %arg1: i32) -> (i32, i32) {
    %c0_i32 = arith.constant 0 : i32
    %c0_i32_0 = arith.constant 0 : i32
    %c0_i32_1 = arith.constant 0 : i32
    return %c0_i32, %c0_i32_0 : i32, i32
  }
  func.func @transform_4(%arg0: i32, %arg1: i32) -> (i32, i32) {
    %c0_i32 = arith.constant 0 : i32
    %c0_i32_0 = arith.constant 0 : i32
    %c0_i32_1 = arith.constant 0 : i32
    return %c0_i32, %c0_i32_0 : i32, i32
  }
  func.func @transform_5(%arg0: i32, %arg1: i32) -> (i32, i32, i32, i32) {
    %c0_i32 = arith.constant 0 : i32
    %c0_i32_0 = arith.constant 0 : i32
    %c0_i32_1 = arith.constant 0 : i32
    return %arg0, %arg1, %c0_i32, %c0_i32_0 : i32, i32, i32, i32
  }
}

</mosaic_0001>

<llo_original>
// kernel: unit_pallas_nhwc.1
$region0: #{unit_pallas_nhwc.1}
  #allocation0 [shape = 'u32[]', space=smem, size = 0x4, offset = 0x4, fixed_abs, tag = 'smem constant byte address 0x4 - core index']
  #allocation1 [shape = 'u32[144,128]{1,0:T(1,128)}', space=vmem, size = 0x12000, scoped, tag = 'internal scratch']
  #allocation2 [shape = 'bf16[18,32,128]{2,1,0:T(16,128)(2,1)}', space=vmem, size = 0x24000, scoped, tag = 'scratch operand']
  #allocation3 [shape = 'bf16[18,32,128]{2,1,0:T(16,128)(2,1)}', space=vmem, size = 0x24000, scoped, tag = 'scratch operand']
  %s0 = inlined_call_operand.vmem [shape: f32[2,16,16,128], index: 0, kind: input, shape index: {}]
  %s1 = inlined_call_operand.vmem [shape: bf16[1152,128], index: 1, kind: input, shape index: {}]
  %s2 = inlined_call_operand.vmem [shape: f32[1,128], index: 2, kind: input, shape index: {}]
  %s3 = inlined_call_operand.vmem [shape: bf16[1152,128], index: 3, kind: input, shape index: {}]
  %s4 = inlined_call_operand.vmem [shape: f32[1,128], index: 4, kind: input, shape index: {}]
  %s5 = inlined_call_operand.hbm [shape: f32[2,16,16,128], index: 5, kind: output, shape index: {}]
  %s6 = sld [smem:[#allocation0]]
  $region57: #{unit_pallas_nhwc.1} parent=0
    _
  %s8 = ssub.s32 1, %s6
  %s9 = scalar_select 0, %s8, %s6
  $region1: #{unit_pallas_nhwc.1} parent=0
    #allocation4 [shape = 'u8[131072]{0}', space=vmem, size = 0x20000, scoped, tag = 'output window, operand 0']
    #allocation5 [shape = 's32[2]{0}', space=sflag, size = 0x8, scoped, tag = 'scoped memory for unit_pallas_nhwc.1']
    %10 = vsyncpa [#allocation5], 0
    %s11 = scalar_lea.sflag [#allocation5], 1
    %12 = vsyncpa %s11, 0
    loop: start=0, step=1, limit=6
    $region2: #{unit_pallas_nhwc.1} parent=1 // loop_pre_header
      _
    $region3: #{unit_pallas_nhwc.1} parent=1 // loop_header
      %s14 = sphi 0, %s18
      %p15 = scmp.ge.s32.totalorder %s14, 6
      %s21 = sphi 0, %s33
      %s22 = sphi 0, %s29
      %s23 = sphi 0, %s21
      %s24 = sphi 0, %s22
      %s25 = sphi 0, %s23
      %s26 = sphi 0, %s24
      %s36 = sphi 0, %s38
      %s39 = sphi 0, %s36
      %s40 = sphi 0, %s39
      %s56 = sphi 0, %s40
      %s60 = sphi 0, %s60
      %s62 = sphi 0, %s60
      %s63 = sphi 0, %s62
      %s77 = sphi 0, %s63
      %s81 = sphi 0, %s81
      %s83 = sphi 0, %s81
      %s84 = sphi 0, %s83
      %s98 = sphi 0, %s84
      %s102 = sphi 0, %s102
      %s104 = sphi 0, %s102
      %s105 = sphi 0, %s104
      %s119 = sphi 0, %s105
      %s123 = sphi 0, %s123
      %s125 = sphi 0, %s123
      %s126 = sphi 0, %s125
      %s140 = sphi 0, %s126
      %s148 = sphi 0, %s150
      %s151 = sphi 0, %s148
      %s152 = sphi 0, %s151
      %s168 = sphi 0, %s152
    $region4: #{unit_pallas_nhwc.1} parent=1 // loop_header_branch
      %17 = sbr.rel (%p15) target = $region8
    $region5: #{unit_pallas_nhwc.1} parent=1 // loop_body
      %s19 = ssub.s32 %s14, 1
      %s20 = ssub.s32 %s14, 2
      %s27 = sadd.s32 1, %s22
      %p28 = scmp.ge.s32.totalorder %s27, 2
      %s29 = scalar_select %p28, 0, %s27
      %s30 = sadd.s32 1, %s21
      %s31 = scalar_select %p28, %s30, %s21
      %p32 = scmp.ge.s32.totalorder %s31, 2
      %s33 = scalar_select %p32, 0, %s31
      %s34 = ssub.s32 %s21, %s33
      %p35 = scmp.eq.s32.totalorder %s34, 0
      %s37 = sadd.s32 %s36, 1
      %s38 = scalar_select %p35, %s36, %s37
      %p41 = pneg %p35
      %p42 = scmp.eq.s32.totalorder %s14, 3
      %p43 = por %p41, %p42
      %p44 = scmp.ne.s32.totalorder %s36, %s39
      %p45 = scmp.eq.s32.totalorder %s14, 0
      %p46 = por %p44, %p45
      %p47 = scmp.ne.s32.totalorder %s36, %s39
      %p48 = scmp.eq.s32.totalorder %s19, 3
      %p49 = por %p47, %p48
      %p50 = scmp.ne.s32.totalorder %s39, %s40
      %p51 = scmp.eq.s32.totalorder %s19, 0
      %p52 = por %p50, %p51
      %p53 = scmp.ne.s32.totalorder %s39, %s40
      %p54 = scmp.eq.s32.totalorder %s20, 3
      %p55 = por %p53, %p54
      %p57 = scmp.ne.s32.totalorder %s40, %s56
      %p58 = scmp.eq.s32.totalorder %s20, 0
      %p59 = por %p57, %p58
      %s61 = sadd.s32 %s60, 1
      %p64 = scmp.eq.s32.totalorder %s14, 3
      %p65 = scmp.ne.s32.totalorder %s60, %s62
      %p66 = scmp.eq.s32.totalorder %s14, 0
      %p67 = por %p65, %p66
      %p68 = scmp.ne.s32.totalorder %s60, %s62
      %p69 = scmp.eq.s32.totalorder %s19, 3
      %p70 = por %p68, %p69
      %p71 = scmp.ne.s32.totalorder %s62, %s63
      %p72 = scmp.eq.s32.totalorder %s19, 0
      %p73 = por %p71, %p72
      %p74 = scmp.ne.s32.totalorder %s62, %s63
      %p75 = scmp.eq.s32.totalorder %s20, 3
      %p76 = por %p74, %p75
      %p78 = scmp.ne.s32.totalorder %s63, %s77
      %p79 = scmp.eq.s32.totalorder %s20, 0
      %p80 = por %p78, %p79
      %s82 = sadd.s32 %s81, 1
      %p85 = scmp.eq.s32.totalorder %s14, 3
      %p86 = scmp.ne.s32.totalorder %s81, %s83
      %p87 = scmp.eq.s32.totalorder %s14, 0
      %p88 = por %p86, %p87
      %p89 = scmp.ne.s32.totalorder %s81, %s83
      %p90 = scmp.eq.s32.totalorder %s19, 3
      %p91 = por %p89, %p90
      %p92 = scmp.ne.s32.totalorder %s83, %s84
      %p93 = scmp.eq.s32.totalorder %s19, 0
      %p94 = por %p92, %p93
      %p95 = scmp.ne.s32.totalorder %s83, %s84
      %p96 = scmp.eq.s32.totalorder %s20, 3
      %p97 = por %p95, %p96
      %p99 = scmp.ne.s32.totalorder %s84, %s98
      %p100 = scmp.eq.s32.totalorder %s20, 0
      %p101 = por %p99, %p100
      %s103 = sadd.s32 %s102, 1
      %p106 = scmp.eq.s32.totalorder %s14, 3
      %p107 = scmp.ne.s32.totalorder %s102, %s104
      %p108 = scmp.eq.s32.totalorder %s14, 0
      %p109 = por %p107, %p108
      %p110 = scmp.ne.s32.totalorder %s102, %s104
      %p111 = scmp.eq.s32.totalorder %s19, 3
      %p112 = por %p110, %p111
      %p113 = scmp.ne.s32.totalorder %s104, %s105
      %p114 = scmp.eq.s32.totalorder %s19, 0
      %p115 = por %p113, %p114
      %p116 = scmp.ne.s32.totalorder %s104, %s105
      %p117 = scmp.eq.s32.totalorder %s20, 3
      %p118 = por %p116, %p117
      %p120 = scmp.ne.s32.totalorder %s105, %s119
      %p121 = scmp.eq.s32.totalorder %s20, 0
      %p122 = por %p120, %p121
      %s124 = sadd.s32 %s123, 1
      %p127 = scmp.eq.s32.totalorder %s14, 3
      %p128 = scmp.ne.s32.totalorder %s123, %s125
      %p129 = scmp.eq.s32.totalorder %s14, 0
      %p130 = por %p128, %p129
      %p131 = scmp.ne.s32.totalorder %s123, %s125
      %p132 = scmp.eq.s32.totalorder %s19, 3
      %p133 = por %p131, %p132
      %p134 = scmp.ne.s32.totalorder %s125, %s126
      %p135 = scmp.eq.s32.totalorder %s19, 0
      %p136 = por %p134, %p135
      %p137 = scmp.ne.s32.totalorder %s125, %s126
      %p138 = scmp.eq.s32.totalorder %s20, 3
      %p139 = por %p137, %p138
      %p141 = scmp.ne.s32.totalorder %s126, %s140
      %p142 = scmp.eq.s32.totalorder %s20, 0
      %p143 = por %p141, %p142
      %s144 = ssub.s32 %s21, %s33
      %s145 = ssub.s32 %s22, %s29
      %s146 = sor.u32 %s144, %s145
      %p147 = scmp.eq.s32.totalorder %s146, 0
      %s149 = sadd.s32 %s148, 1
      %s150 = scalar_select %p147, %s148, %s149
      %p153 = pneg %p147
      %p154 = scmp.eq.s32.totalorder %s14, 3
      %p155 = por %p153, %p154
      %p156 = scmp.ne.s32.totalorder %s148, %s151
      %p157 = scmp.eq.s32.totalorder %s14, 0
      %p158 = por %p156, %p157
      %p159 = scmp.ne.s32.totalorder %s148, %s151
      %p160 = scmp.eq.s32.totalorder %s19, 3
      %p161 = por %p159, %p160
      %p162 = scmp.ne.s32.totalorder %s151, %s152
      %p163 = scmp.eq.s32.totalorder %s19, 0
      %p164 = por %p162, %p163
      %p165 = scmp.ne.s32.totalorder %s151, %s152
      %p166 = scmp.eq.s32.totalorder %s20, 3
      %p167 = por %p165, %p166
      %p169 = scmp.ne.s32.totalorder %s152, %s168
      %p170 = scmp.eq.s32.totalorder %s20, 0
      %p171 = por %p169, %p170
      %p172 = scmp.le.s32.totalorder 1, %s14
      %p173 = scmp.lt.s32.totalorder %s14, 5
      %p174 = pnand %p172, %p173
      %p175 = pneg %p174
      // Predicated region
      $region9: #{unit_pallas_nhwc.1} parent=5 // pred_check
        _
      $region10: #{unit_pallas_nhwc.1} parent=5 // pred_check_branch
        %177 = sbr.rel (%p174) target = $region12
      $region11: #{unit_pallas_nhwc.1} parent=5 // pred_region
        %s178 = ssub.s32 %s14, 1
        // Predicated region
        $region13: #{unit_pallas_nhwc.1} parent=11 // pred_check
          %p179 = pneg %p73
        $region14: #{unit_pallas_nhwc.1} parent=11 // pred_check_branch
          %181 = sbr.rel (%p179) target = $region16
        $region15: #{unit_pallas_nhwc.1} parent=11 // pred_region
          _
        $region16: #{unit_pallas_nhwc.1} parent=11 // pred_fallthru
          _
        // Predicated region
        $region17: #{unit_pallas_nhwc.1} parent=11 // pred_check
          %p182 = pneg %p94
        $region18: #{unit_pallas_nhwc.1} parent=11 // pred_check_branch
          %184 = sbr.rel (%p182) target = $region20
        $region19: #{unit_pallas_nhwc.1} parent=11 // pred_region
          _
        $region20: #{unit_pallas_nhwc.1} parent=11 // pred_fallthru
          _
        // Predicated region
        $region21: #{unit_pallas_nhwc.1} parent=11 // pred_check
          %p185 = pneg %p115
        $region22: #{unit_pallas_nhwc.1} parent=11 // pred_check_branch
          %187 = sbr.rel (%p185) target = $region24
        $region23: #{unit_pallas_nhwc.1} parent=11 // pred_region
          _
        $region24: #{unit_pallas_nhwc.1} parent=11 // pred_fallthru
          _
        // Predicated region
        $region25: #{unit_pallas_nhwc.1} parent=11 // pred_check
          %p188 = pneg %p136
        $region26: #{unit_pallas_nhwc.1} parent=11 // pred_check_branch
          %190 = sbr.rel (%p188) target = $region28
        $region27: #{unit_pallas_nhwc.1} parent=11 // pred_region
          _
        $region28: #{unit_pallas_nhwc.1} parent=11 // pred_fallthru
          _
      $region12: #{unit_pallas_nhwc.1} parent=5 // pred_fallthru
        _
      %p191 = scmp.lt.s32.totalorder %s14, 4
      // Predicated region
      $region29: #{unit_pallas_nhwc.1} parent=5 // pred_check
        %p192 = pneg %p191
      $region30: #{unit_pallas_nhwc.1} parent=5 // pred_check_branch
        %194 = sbr.rel (%p192) target = $region32
      $region31: #{unit_pallas_nhwc.1} parent=5 // pred_region
        // Predicated region
        $region33: #{unit_pallas_nhwc.1} parent=31 // pred_check
          %p195 = pneg %p46
        $region34: #{unit_pallas_nhwc.1} parent=31 // pred_check_branch
          %197 = sbr.rel (%p195) target = $region36
        $region35: #{unit_pallas_nhwc.1} parent=31 // pred_region
          %p198 = scmp.lt.s32.totalorder %s21, 1
          %s199 = scalar_select %p198, %s21, 1
          %s200 = smul.addr %s199, 32
          %s201 = smul.addr %s200, 8
          %s202 = scalar_lea.vmem %s0, %s201
        $region36: #{unit_pallas_nhwc.1} parent=31 // pred_fallthru
          _
      $region32: #{unit_pallas_nhwc.1} parent=5 // pred_fallthru
        _
      %p203 = scmp.le.s32.totalorder 1, %s14
      %p204 = scmp.lt.s32.totalorder %s14, 5
      %p205 = pnand %p203, %p204
      %p206 = pneg %p205
      // Predicated region
      $region37: #{unit_pallas_nhwc.1} parent=5 // pred_check
        _
      $region38: #{unit_pallas_nhwc.1} parent=5 // pred_check_branch
        %208 = sbr.rel (%p205) target = $region40
      $region39: #{unit_pallas_nhwc.1} parent=5 // pred_region
        %s209 = ssub.s32 %s14, 1
        %p210 = scmp.lt.s32.totalorder %s23, 1
        %s211 = scalar_select %p210, %s23, 1
        %s212 = smul.addr %s211, 32
        %s213 = smul.addr %s212, 8
        %s214 = scalar_lea.vmem %s0, %s213
        %p215 = pneg %p52
        %p216 = pneg %p49
        %p217 = pneg %p73
        %p218 = pneg %p70
        %p219 = pneg %p94
        %p220 = pneg %p91
        %p221 = pneg %p115
        %p222 = pneg %p112
        %p223 = pneg %p136
        %p224 = pneg %p133
        %p225 = pneg %p164
        %p226 = pneg %p161
        %s227 = sand.u32 %s151, 1
        %s228 = scalar_lea.sflag [#allocation5], %s227
        %s229 = sand.u32 %s151, 1
        %s230 = smul.addr %s229, 128
        %s231 = scalar_lea.vmem [#allocation4], %s230
        %p232 = scmp.lt.s32.totalorder %s23, 1
        %s233 = scalar_select %p232, %s23, 1
        %s234 = smul.addr %s233, 32
        %s235 = smul.addr %s234, 8
        %s236 = scalar_lea.vmem %s0, %s235
        %s237 = smul.u32 8, %s24
        %p239 = scmp.eq.s32.totalorder %s24, 0
        // Predicated region
        $region41: #{unit_pallas_nhwc.1} parent=39 // pred_check
          %p240 = pneg %p239
        $region42: #{unit_pallas_nhwc.1} parent=39 // pred_check_branch
          %242 = sbr.rel (%p240) target = $region44
        $region43: #{unit_pallas_nhwc.1} parent=39 // pred_region
          %243 = vst [vmem:[#allocation2] sm:$0xff] 0
          %244 = vst [vmem:[#allocation2 + $0x8] sm:$0xff] 0
          %s245 = scalar_lea.vmem [#allocation2], 272
          %246 = vst [vmem:[%s245] sm:$0xff] 0
          %247 = vst [vmem:[%s245 + $0x8] sm:$0xff] 0
          %s248 = scalar_lea.vmem [#allocation2], 16
          %vm249 = vcmask 1043459
          %vm250 = vsmask.f32 7950
          %vm251 = vmand %vm249, %vm250
          %v252 = vld [vmem:[%s248] sm:$0x8]
          %v253 = vsel %vm251, 0, %v252
          %254 = vst [vmem:[%s248] sm:$0x8] %v253
          %v255 = vld [vmem:[%s248 + $0x10] sm:$0x8]
          %v256 = vsel %vm251, 0, %v255
          %257 = vst [vmem:[%s248 + $0x10] sm:$0x8] %v256
          %v258 = vld [vmem:[%s248 + $0x20] sm:$0x8]
          %v259 = vsel %vm251, 0, %v258
          %260 = vst [vmem:[%s248 + $0x20] sm:$0x8] %v259
          %v261 = vld [vmem:[%s248 + $0x30] sm:$0x8]
          %v262 = vsel %vm251, 0, %v261
          %263 = vst [vmem:[%s248 + $0x30] sm:$0x8] %v262
          %v264 = vld [vmem:[%s248 + $0x40] sm:$0x8]
          %v265 = vsel %vm251, 0, %v264
          %266 = vst [vmem:[%s248 + $0x40] sm:$0x8] %v265
          %v267 = vld [vmem:[%s248 + $0x50] sm:$0x8]
          %v268 = vsel %vm251, 0, %v267
          %269 = vst [vmem:[%s248 + $0x50] sm:$0x8] %v268
          %v270 = vld [vmem:[%s248 + $0x60] sm:$0x8]
          %v271 = vsel %vm251, 0, %v270
          %272 = vst [vmem:[%s248 + $0x60] sm:$0x8] %v271
          %v273 = vld [vmem:[%s248 + $0x70] sm:$0x8]
          %v274 = vsel %vm251, 0, %v273
          %275 = vst [vmem:[%s248 + $0x70] sm:$0x8] %v274
          %v276 = vld [vmem:[%s248 + $0x80] sm:$0x8]
          %v277 = vsel %vm251, 0, %v276
          %278 = vst [vmem:[%s248 + $0x80] sm:$0x8] %v277
          %v279 = vld [vmem:[%s248 + $0x90] sm:$0x8]
          %v280 = vsel %vm251, 0, %v279
          %281 = vst [vmem:[%s248 + $0x90] sm:$0x8] %v280
          %v282 = vld [vmem:[%s248 + $0xa0] sm:$0x8]
          %v283 = vsel %vm251, 0, %v282
          %284 = vst [vmem:[%s248 + $0xa0] sm:$0x8] %v283
          %v285 = vld [vmem:[%s248 + $0xb0] sm:$0x8]
          %v286 = vsel %vm251, 0, %v285
          %287 = vst [vmem:[%s248 + $0xb0] sm:$0x8] %v286
          %v288 = vld [vmem:[%s248 + $0xc0] sm:$0x8]
          %v289 = vsel %vm251, 0, %v288
          %290 = vst [vmem:[%s248 + $0xc0] sm:$0x8] %v289
          %v291 = vld [vmem:[%s248 + $0xd0] sm:$0x8]
          %v292 = vsel %vm251, 0, %v291
          %293 = vst [vmem:[%s248 + $0xd0] sm:$0x8] %v292
          %v294 = vld [vmem:[%s248 + $0xe0] sm:$0x8]
          %v295 = vsel %vm251, 0, %v294
          %296 = vst [vmem:[%s248 + $0xe0] sm:$0x8] %v295
          %v297 = vld [vmem:[%s248 + $0xf0] sm:$0x8]
          %v298 = vsel %vm251, 0, %v297
          %299 = vst [vmem:[%s248 + $0xf0] sm:$0x8] %v298
          %vm300 = vcmask 1044484
          %vm301 = vsmask.f32 4352
          %vm302 = vmand %vm300, %vm301
          %v303 = vld [vmem:[%s248 + $0x8] sm:$0x10]
          %v304 = vsel %vm302, 0, %v303
          %305 = vst [vmem:[%s248 + $0x8] sm:$0x10] %v304
          %v306 = vld [vmem:[%s248 + $0x18] sm:$0x10]
          %v307 = vsel %vm302, 0, %v306
          %308 = vst [vmem:[%s248 + $0x18] sm:$0x10] %v307
          %v309 = vld [vmem:[%s248 + $0x28] sm:$0x10]
          %v310 = vsel %vm302, 0, %v309
          %311 = vst [vmem:[%s248 + $0x28] sm:$0x10] %v310
          %v312 = vld [vmem:[%s248 + $0x38] sm:$0x10]
          %v313 = vsel %vm302, 0, %v312
          %314 = vst [vmem:[%s248 + $0x38] sm:$0x10] %v313
          %v315 = vld [vmem:[%s248 + $0x48] sm:$0x10]
          %v316 = vsel %vm302, 0, %v315
          %317 = vst [vmem:[%s248 + $0x48] sm:$0x10] %v316
          %v318 = vld [vmem:[%s248 + $0x58] sm:$0x10]
          %v319 = vsel %vm302, 0, %v318
          %320 = vst [vmem:[%s248 + $0x58] sm:$0x10] %v319
          %v321 = vld [vmem:[%s248 + $0x68] sm:$0x10]
          %v322 = vsel %vm302, 0, %v321
          %323 = vst [vmem:[%s248 + $0x68] sm:$0x10] %v322
          %v324 = vld [vmem:[%s248 + $0x78] sm:$0x10]
          %v325 = vsel %vm302, 0, %v324
          %326 = vst [vmem:[%s248 + $0x78] sm:$0x10] %v325
          %v327 = vld [vmem:[%s248 + $0x88] sm:$0x10]
          %v328 = vsel %vm302, 0, %v327
          %329 = vst [vmem:[%s248 + $0x88] sm:$0x10] %v328
          %v330 = vld [vmem:[%s248 + $0x98] sm:$0x10]
          %v331 = vsel %vm302, 0, %v330
          %332 = vst [vmem:[%s248 + $0x98] sm:$0x10] %v331
          %v333 = vld [vmem:[%s248 + $0xa8] sm:$0x10]
          %v334 = vsel %vm302, 0, %v333
          %335 = vst [vmem:[%s248 + $0xa8] sm:$0x10] %v334
          %v336 = vld [vmem:[%s248 + $0xb8] sm:$0x10]
          %v337 = vsel %vm302, 0, %v336
          %338 = vst [vmem:[%s248 + $0xb8] sm:$0x10] %v337
          %v339 = vld [vmem:[%s248 + $0xc8] sm:$0x10]
          %v340 = vsel %vm302, 0, %v339
          %341 = vst [vmem:[%s248 + $0xc8] sm:$0x10] %v340
          %v342 = vld [vmem:[%s248 + $0xd8] sm:$0x10]
          %v343 = vsel %vm302, 0, %v342
          %344 = vst [vmem:[%s248 + $0xd8] sm:$0x10] %v343
          %v345 = vld [vmem:[%s248 + $0xe8] sm:$0x10]
          %v346 = vsel %vm302, 0, %v345
          %347 = vst [vmem:[%s248 + $0xe8] sm:$0x10] %v346
          %v348 = vld [vmem:[%s248 + $0xf8] sm:$0x10]
          %v349 = vsel %vm302, 0, %v348
          %350 = vst [vmem:[%s248 + $0xf8] sm:$0x10] %v349
          %351 = vst [vmem:[#allocation3] sm:$0xff] 0
          %352 = vst [vmem:[#allocation3 + $0x8] sm:$0xff] 0
          %s353 = scalar_lea.vmem [#allocation3], 272
          %354 = vst [vmem:[%s353] sm:$0xff] 0
          %355 = vst [vmem:[%s353 + $0x8] sm:$0xff] 0
          %s356 = scalar_lea.vmem [#allocation3], 16
          %v357 = vld [vmem:[%s356] sm:$0x8]
          %v358 = vsel %vm251, 0, %v357
          %359 = vst [vmem:[%s356] sm:$0x8] %v358
          %v360 = vld [vmem:[%s356 + $0x10] sm:$0x8]
          %v361 = vsel %vm251, 0, %v360
          %362 = vst [vmem:[%s356 + $0x10] sm:$0x8] %v361
          %v363 = vld [vmem:[%s356 + $0x20] sm:$0x8]
          %v364 = vsel %vm251, 0, %v363
          %365 = vst [vmem:[%s356 + $0x20] sm:$0x8] %v364
          %v366 = vld [vmem:[%s356 + $0x30] sm:$0x8]
          %v367 = vsel %vm251, 0, %v366
          %368 = vst [vmem:[%s356 + $0x30] sm:$0x8] %v367
          %v369 = vld [vmem:[%s356 + $0x40] sm:$0x8]
          %v370 = vsel %vm251, 0, %v369
          %371 = vst [vmem:[%s356 + $0x40] sm:$0x8] %v370
          %v372 = vld [vmem:[%s356 + $0x50] sm:$0x8]
          %v373 = vsel %vm251, 0, %v372
          %374 = vst [vmem:[%s356 + $0x50] sm:$0x8] %v373
          %v375 = vld [vmem:[%s356 + $0x60] sm:$0x8]
          %v376 = vsel %vm251, 0, %v375
          %377 = vst [vmem:[%s356 + $0x60] sm:$0x8] %v376
          %v378 = vld [vmem:[%s356 + $0x70] sm:$0x8]
          %v379 = vsel %vm251, 0, %v378
          %380 = vst [vmem:[%s356 + $0x70] sm:$0x8] %v379
          %v381 = vld [vmem:[%s356 + $0x80] sm:$0x8]
          %v382 = vsel %vm251, 0, %v381
          %383 = vst [vmem:[%s356 + $0x80] sm:$0x8] %v382
          %v384 = vld [vmem:[%s356 + $0x90] sm:$0x8]
          %v385 = vsel %vm251, 0, %v384
          %386 = vst [vmem:[%s356 + $0x90] sm:$0x8] %v385
          %v387 = vld [vmem:[%s356 + $0xa0] sm:$0x8]
          %v388 = vsel %vm251, 0, %v387
          %389 = vst [vmem:[%s356 + $0xa0] sm:$0x8] %v388
          %v390 = vld [vmem:[%s356 + $0xb0] sm:$0x8]
          %v391 = vsel %vm251, 0, %v390
          %392 = vst [vmem:[%s356 + $0xb0] sm:$0x8] %v391
          %v393 = vld [vmem:[%s356 + $0xc0] sm:$0x8]
          %v394 = vsel %vm251, 0, %v393
          %395 = vst [vmem:[%s356 + $0xc0] sm:$0x8] %v394
          %v396 = vld [vmem:[%s356 + $0xd0] sm:$0x8]
          %v397 = vsel %vm251, 0, %v396
          %398 = vst [vmem:[%s356 + $0xd0] sm:$0x8] %v397
          %v399 = vld [vmem:[%s356 + $0xe0] sm:$0x8]
          %v400 = vsel %vm251, 0, %v399
          %401 = vst [vmem:[%s356 + $0xe0] sm:$0x8] %v400
          %v402 = vld [vmem:[%s356 + $0xf0] sm:$0x8]
          %v403 = vsel %vm251, 0, %v402
          %404 = vst [vmem:[%s356 + $0xf0] sm:$0x8] %v403
          %v405 = vld [vmem:[%s356 + $0x8] sm:$0x10]
          %v406 = vsel %vm302, 0, %v405
          %407 = vst [vmem:[%s356 + $0x8] sm:$0x10] %v406
          %v408 = vld [vmem:[%s356 + $0x18] sm:$0x10]
          %v409 = vsel %vm302, 0, %v408
          %410 = vst [vmem:[%s356 + $0x18] sm:$0x10] %v409
          %v411 = vld [vmem:[%s356 + $0x28] sm:$0x10]
          %v412 = vsel %vm302, 0, %v411
          %413 = vst [vmem:[%s356 + $0x28] sm:$0x10] %v412
          %v414 = vld [vmem:[%s356 + $0x38] sm:$0x10]
          %v415 = vsel %vm302, 0, %v414
          %416 = vst [vmem:[%s356 + $0x38] sm:$0x10] %v415
          %v417 = vld [vmem:[%s356 + $0x48] sm:$0x10]
          %v418 = vsel %vm302, 0, %v417
          %419 = vst [vmem:[%s356 + $0x48] sm:$0x10] %v418
          %v420 = vld [vmem:[%s356 + $0x58] sm:$0x10]
          %v421 = vsel %vm302, 0, %v420
          %422 = vst [vmem:[%s356 + $0x58] sm:$0x10] %v421
          %v423 = vld [vmem:[%s356 + $0x68] sm:$0x10]
          %v424 = vsel %vm302, 0, %v423
          %425 = vst [vmem:[%s356 + $0x68] sm:$0x10] %v424
          %v426 = vld [vmem:[%s356 + $0x78] sm:$0x10]
          %v427 = vsel %vm302, 0, %v426
          %428 = vst [vmem:[%s356 + $0x78] sm:$0x10] %v427
          %v429 = vld [vmem:[%s356 + $0x88] sm:$0x10]
          %v430 = vsel %vm302, 0, %v429
          %431 = vst [vmem:[%s356 + $0x88] sm:$0x10] %v430
          %v432 = vld [vmem:[%s356 + $0x98] sm:$0x10]
          %v433 = vsel %vm302, 0, %v432
          %434 = vst [vmem:[%s356 + $0x98] sm:$0x10] %v433
          %v435 = vld [vmem:[%s356 + $0xa8] sm:$0x10]
          %v436 = vsel %vm302, 0, %v435
          %437 = vst [vmem:[%s356 + $0xa8] sm:$0x10] %v436
          %v438 = vld [vmem:[%s356 + $0xb8] sm:$0x10]
          %v439 = vsel %vm302, 0, %v438
          %440 = vst [vmem:[%s356 + $0xb8] sm:$0x10] %v439
          %v441 = vld [vmem:[%s356 + $0xc8] sm:$0x10]
          %v442 = vsel %vm302, 0, %v441
          %443 = vst [vmem:[%s356 + $0xc8] sm:$0x10] %v442
          %v444 = vld [vmem:[%s356 + $0xd8] sm:$0x10]
          %v445 = vsel %vm302, 0, %v444
          %446 = vst [vmem:[%s356 + $0xd8] sm:$0x10] %v445
          %v447 = vld [vmem:[%s356 + $0xe8] sm:$0x10]
          %v448 = vsel %vm302, 0, %v447
          %449 = vst [vmem:[%s356 + $0xe8] sm:$0x10] %v448
          %v450 = vld [vmem:[%s356 + $0xf8] sm:$0x10]
          %v451 = vsel %vm302, 0, %v450
          %452 = vst [vmem:[%s356 + $0xf8] sm:$0x10] %v451
          %v453 = vld [vmem:[%s236] sm:$0xff]
          %v454 = vld [vmem:[%s236 + $0x8] sm:$0xff]
          %v455 = vld [vmem:[%s236 + $0x10] sm:$0xff]
          %v456 = vld [vmem:[%s236 + $0x18] sm:$0xff]
          %v457 = vld [vmem:[%s236 + $0x20] sm:$0xff]
          %v458 = vld [vmem:[%s236 + $0x28] sm:$0xff]
          %v459 = vld [vmem:[%s236 + $0x30] sm:$0xff]
          %v460 = vld [vmem:[%s236 + $0x38] sm:$0xff]
          %v461 = vld [vmem:[%s236 + $0x40] sm:$0xff]
          %v462 = vld [vmem:[%s236 + $0x48] sm:$0xff]
          %v463 = vld [vmem:[%s236 + $0x50] sm:$0xff]
          %v464 = vld [vmem:[%s236 + $0x58] sm:$0xff]
          %v465 = vld [vmem:[%s236 + $0x60] sm:$0xff]
          %v466 = vld [vmem:[%s236 + $0x68] sm:$0xff]
          %v467 = vld [vmem:[%s236 + $0x70] sm:$0xff]
          %v468 = vld [vmem:[%s236 + $0x78] sm:$0xff]
          %v469 = vld [vmem:[%s236 + $0x80] sm:$0xff]
          %v470 = vld [vmem:[%s236 + $0x88] sm:$0xff]
          %v471 = vld [vmem:[%s236 + $0x90] sm:$0xff]
          %v472 = vld [vmem:[%s236 + $0x98] sm:$0xff]
          %v473 = vld [vmem:[%s236 + $0xa0] sm:$0xff]
          %v474 = vld [vmem:[%s236 + $0xa8] sm:$0xff]
          %v475 = vld [vmem:[%s236 + $0xb0] sm:$0xff]
          %v476 = vld [vmem:[%s236 + $0xb8] sm:$0xff]
          %v477 = vld [vmem:[%s236 + $0xc0] sm:$0xff]
          %v478 = vld [vmem:[%s236 + $0xc8] sm:$0xff]
          %v479 = vld [vmem:[%s236 + $0xd0] sm:$0xff]
          %v480 = vld [vmem:[%s236 + $0xd8] sm:$0xff]
          %v481 = vld [vmem:[%s236 + $0xe0] sm:$0xff]
          %v482 = vld [vmem:[%s236 + $0xe8] sm:$0xff]
          %v483 = vld [vmem:[%s236 + $0xf0] sm:$0xff]
          %v484 = vld [vmem:[%s236 + $0xf8] sm:$0xff]
          %v485 = vpack.c.bf16 %v454, %v453
          %v486 = vpack.c.bf16 %v456, %v455
          %v487 = vpack.c.bf16 %v458, %v457
          %v488 = vpack.c.bf16 %v460, %v459
          %v489 = vpack.c.bf16 %v462, %v461
          %v490 = vpack.c.bf16 %v464, %v463
          %v491 = vpack.c.bf16 %v466, %v465
          %v492 = vpack.c.bf16 %v468, %v467
          %v493 = vpack.c.bf16 %v470, %v469
          %v494 = vpack.c.bf16 %v472, %v471
          %v495 = vpack.c.bf16 %v474, %v473
          %v496 = vpack.c.bf16 %v476, %v475
          %v497 = vpack.c.bf16 %v478, %v477
          %v498 = vpack.c.bf16 %v480, %v479
          %v499 = vpack.c.bf16 %v482, %v481
          %v500 = vpack.c.bf16 %v484, %v483
          %v517 = vrot.slane %v485, 4
          %v518 = vrot.slane %v486, 4
          %v519 = vrot.slane %v487, 4
          %v520 = vrot.slane %v488, 4
          %v521 = vrot.slane %v489, 4
          %v522 = vrot.slane %v490, 4
          %v523 = vrot.slane %v491, 4
          %v524 = vrot.slane %v492, 4
          %v525 = vrot.slane %v493, 4
          %v526 = vrot.slane %v494, 4
          %v527 = vrot.slane %v495, 4
          %v528 = vrot.slane %v496, 4
          %v529 = vrot.slane %v497, 4
          %v530 = vrot.slane %v498, 4
          %v531 = vrot.slane %v499, 4
          %v532 = vrot.slane %v500, 4
          %549 = vst [vmem:[%s248] sm:$0xf0] %v517
          %550 = vst [vmem:[%s248 + $0x8] sm:$0xf] %v517
          %551 = vst [vmem:[%s248 + $0x10] sm:$0xf0] %v518
          %552 = vst [vmem:[%s248 + $0x18] sm:$0xf] %v518
          %553 = vst [vmem:[%s248 + $0x20] sm:$0xf0] %v519
          %554 = vst [vmem:[%s248 + $0x28] sm:$0xf] %v519
          %555 = vst [vmem:[%s248 + $0x30] sm:$0xf0] %v520
          %556 = vst [vmem:[%s248 + $0x38] sm:$0xf] %v520
          %557 = vst [vmem:[%s248 + $0x40] sm:$0xf0] %v521
          %558 = vst [vmem:[%s248 + $0x48] sm:$0xf] %v521
          %559 = vst [vmem:[%s248 + $0x50] sm:$0xf0] %v522
          %560 = vst [vmem:[%s248 + $0x58] sm:$0xf] %v522
          %561 = vst [vmem:[%s248 + $0x60] sm:$0xf0] %v523
          %562 = vst [vmem:[%s248 + $0x68] sm:$0xf] %v523
          %563 = vst [vmem:[%s248 + $0x70] sm:$0xf0] %v524
          %564 = vst [vmem:[%s248 + $0x78] sm:$0xf] %v524
          %565 = vst [vmem:[%s248 + $0x80] sm:$0xf0] %v525
          %566 = vst [vmem:[%s248 + $0x88] sm:$0xf] %v525
          %567 = vst [vmem:[%s248 + $0x90] sm:$0xf0] %v526
          %568 = vst [vmem:[%s248 + $0x98] sm:$0xf] %v526
          %569 = vst [vmem:[%s248 + $0xa0] sm:$0xf0] %v527
          %570 = vst [vmem:[%s248 + $0xa8] sm:$0xf] %v527
          %571 = vst [vmem:[%s248 + $0xb0] sm:$0xf0] %v528
          %572 = vst [vmem:[%s248 + $0xb8] sm:$0xf] %v528
          %573 = vst [vmem:[%s248 + $0xc0] sm:$0xf0] %v529
          %574 = vst [vmem:[%s248 + $0xc8] sm:$0xf] %v529
          %575 = vst [vmem:[%s248 + $0xd0] sm:$0xf0] %v530
          %576 = vst [vmem:[%s248 + $0xd8] sm:$0xf] %v530
          %577 = vst [vmem:[%s248 + $0xe0] sm:$0xf0] %v531
          %578 = vst [vmem:[%s248 + $0xe8] sm:$0xf] %v531
          %579 = vst [vmem:[%s248 + $0xf0] sm:$0xf0] %v532
          %580 = vst [vmem:[%s248 + $0xf8] sm:$0xf] %v532
          %v581 = vld [vmem:[#allocation2] sm:$0xf8]
          %v582 = vld [vmem:[#allocation2 + $0x8] sm:$0xf]
          %v583 = vld [vmem:[#allocation2 + $0x10] sm:$0xf8]
          %v584 = vld [vmem:[#allocation2 + $0x18] sm:$0xf]
          %v585 = vld [vmem:[#allocation2 + $0x20] sm:$0xf8]
          %v586 = vld [vmem:[#allocation2 + $0x28] sm:$0xf]
          %v587 = vld [vmem:[#allocation2 + $0x30] sm:$0xf8]
          %v588 = vld [vmem:[#allocation2 + $0x38] sm:$0xf]
          %v589 = vld [vmem:[#allocation2 + $0x40] sm:$0xf8]
          %v590 = vld [vmem:[#allocation2 + $0x48] sm:$0xf]
          %v591 = vld [vmem:[#allocation2 + $0x50] sm:$0xf8]
          %v592 = vld [vmem:[#allocation2 + $0x58] sm:$0xf]
          %v593 = vld [vmem:[#allocation2 + $0x60] sm:$0xf8]
          %v594 = vld [vmem:[#allocation2 + $0x68] sm:$0xf]
          %v595 = vld [vmem:[#allocation2 + $0x70] sm:$0xf8]
          %v596 = vld [vmem:[#allocation2 + $0x78] sm:$0xf]
          %v597 = vld [vmem:[#allocation2 + $0x80] sm:$0xf8]
          %v598 = vld [vmem:[#allocation2 + $0x88] sm:$0xf]
          %v599 = vld [vmem:[#allocation2 + $0x90] sm:$0xf8]
          %v600 = vld [vmem:[#allocation2 + $0x98] sm:$0xf]
          %v601 = vld [vmem:[#allocation2 + $0xa0] sm:$0xf8]
          %v602 = vld [vmem:[#allocation2 + $0xa8] sm:$0xf]
          %v603 = vld [vmem:[#allocation2 + $0xb0] sm:$0xf8]
          %v604 = vld [vmem:[#allocation2 + $0xb8] sm:$0xf]
          %v605 = vld [vmem:[#allocation2 + $0xc0] sm:$0xf8]
          %v606 = vld [vmem:[#allocation2 + $0xc8] sm:$0xf]
          %v607 = vld [vmem:[#allocation2 + $0xd0] sm:$0xf8]
          %v608 = vld [vmem:[#allocation2 + $0xd8] sm:$0xf]
          %v609 = vld [vmem:[#allocation2 + $0xe0] sm:$0xf8]
          %v610 = vld [vmem:[#allocation2 + $0xe8] sm:$0xf]
          %v611 = vld [vmem:[#allocation2 + $0xf0] sm:$0xf8]
          %v612 = vld [vmem:[#allocation2 + $0xf8] sm:$0xf]
          %v614 = vshrl.u32 %v581, 16
          %v616 = vrot.slane %v614, 3
          %v617 = vshll.u32 %v581, 16
          %v619 = vrot.slane %v617, 4
          %v620 = vor.u32 %v616, %v619
          %v622 = vshrl.u32 %v582, 16
          %v624 = vrot.slane %v622, 3
          %v625 = vshll.u32 %v582, 16
          %v627 = vrot.slane %v625, 4
          %v628 = vor.u32 %v624, %v627
          %v629 = vsel %vm301, %v620, %v628
          %v631 = vshrl.u32 %v583, 16
          %v633 = vrot.slane %v631, 3
          %v634 = vshll.u32 %v583, 16
          %v636 = vrot.slane %v634, 4
          %v637 = vor.u32 %v633, %v636
          %v639 = vshrl.u32 %v584, 16
          %v641 = vrot.slane %v639, 3
          %v642 = vshll.u32 %v584, 16
          %v644 = vrot.slane %v642, 4
          %v645 = vor.u32 %v641, %v644
          %v646 = vsel %vm301, %v637, %v645
          %v648 = vshrl.u32 %v585, 16
          %v650 = vrot.slane %v648, 3
          %v651 = vshll.u32 %v585, 16
          %v653 = vrot.slane %v651, 4
          %v654 = vor.u32 %v650, %v653
          %v656 = vshrl.u32 %v586, 16
          %v658 = vrot.slane %v656, 3
          %v659 = vshll.u32 %v586, 16
          %v661 = vrot.slane %v659, 4
          %v662 = vor.u32 %v658, %v661
          %v663 = vsel %vm301, %v654, %v662
          %v665 = vshrl.u32 %v587, 16
          %v667 = vrot.slane %v665, 3
          %v668 = vshll.u32 %v587, 16
          %v670 = vrot.slane %v668, 4
          %v671 = vor.u32 %v667, %v670
          %v673 = vshrl.u32 %v588, 16
          %v675 = vrot.slane %v673, 3
          %v676 = vshll.u32 %v588, 16
          %v678 = vrot.slane %v676, 4
          %v679 = vor.u32 %v675, %v678
          %v680 = vsel %vm301, %v671, %v679
          %v682 = vshrl.u32 %v589, 16
          %v684 = vrot.slane %v682, 3
          %v685 = vshll.u32 %v589, 16
          %v687 = vrot.slane %v685, 4
          %v688 = vor.u32 %v684, %v687
          %v690 = vshrl.u32 %v590, 16
          %v692 = vrot.slane %v690, 3
          %v693 = vshll.u32 %v590, 16
          %v695 = vrot.slane %v693, 4
          %v696 = vor.u32 %v692, %v695
          %v697 = vsel %vm301, %v688, %v696
          %v699 = vshrl.u32 %v591, 16
          %v701 = vrot.slane %v699, 3
          %v702 = vshll.u32 %v591, 16
          %v704 = vrot.slane %v702, 4
          %v705 = vor.u32 %v701, %v704
          %v707 = vshrl.u32 %v592, 16
          %v709 = vrot.slane %v707, 3
          %v710 = vshll.u32 %v592, 16
          %v712 = vrot.slane %v710, 4
          %v713 = vor.u32 %v709, %v712
          %v714 = vsel %vm301, %v705, %v713
          %v716 = vshrl.u32 %v593, 16
          %v718 = vrot.slane %v716, 3
          %v719 = vshll.u32 %v593, 16
          %v721 = vrot.slane %v719, 4
          %v722 = vor.u32 %v718, %v721
          %v724 = vshrl.u32 %v594, 16
          %v726 = vrot.slane %v724, 3
          %v727 = vshll.u32 %v594, 16
          %v729 = vrot.slane %v727, 4
          %v730 = vor.u32 %v726, %v729
          %v731 = vsel %vm301, %v722, %v730
          %v733 = vshrl.u32 %v595, 16
          %v735 = vrot.slane %v733, 3
          %v736 = vshll.u32 %v595, 16
          %v738 = vrot.slane %v736, 4
          %v739 = vor.u32 %v735, %v738
          %v741 = vshrl.u32 %v596, 16
          %v743 = vrot.slane %v741, 3
          %v744 = vshll.u32 %v596, 16
          %v746 = vrot.slane %v744, 4
          %v747 = vor.u32 %v743, %v746
          %v748 = vsel %vm301, %v739, %v747
          %v750 = vshrl.u32 %v597, 16
          %v752 = vrot.slane %v750, 3
          %v753 = vshll.u32 %v597, 16
          %v755 = vrot.slane %v753, 4
          %v756 = vor.u32 %v752, %v755
          %v758 = vshrl.u32 %v598, 16
          %v760 = vrot.slane %v758, 3
          %v761 = vshll.u32 %v598, 16
          %v763 = vrot.slane %v761, 4
          %v764 = vor.u32 %v760, %v763
          %v765 = vsel %vm301, %v756, %v764
          %v767 = vshrl.u32 %v599, 16
          %v769 = vrot.slane %v767, 3
          %v770 = vshll.u32 %v599, 16
          %v772 = vrot.slane %v770, 4
          %v773 = vor.u32 %v769, %v772
          %v775 = vshrl.u32 %v600, 16
          %v777 = vrot.slane %v775, 3
          %v778 = vshll.u32 %v600, 16
          %v780 = vrot.slane %v778, 4
          %v781 = vor.u32 %v777, %v780
          %v782 = vsel %vm301, %v773, %v781
          %v784 = vshrl.u32 %v601, 16
          %v786 = vrot.slane %v784, 3
          %v787 = vshll.u32 %v601, 16
          %v789 = vrot.slane %v787, 4
          %v790 = vor.u32 %v786, %v789
          %v792 = vshrl.u32 %v602, 16
          %v794 = vrot.slane %v792, 3
          %v795 = vshll.u32 %v602, 16
          %v797 = vrot.slane %v795, 4
          %v798 = vor.u32 %v794, %v797
          %v799 = vsel %vm301, %v790, %v798
          %v801 = vshrl.u32 %v603, 16
          %v803 = vrot.slane %v801, 3
          %v804 = vshll.u32 %v603, 16
          %v806 = vrot.slane %v804, 4
          %v807 = vor.u32 %v803, %v806
          %v809 = vshrl.u32 %v604, 16
          %v811 = vrot.slane %v809, 3
          %v812 = vshll.u32 %v604, 16
          %v814 = vrot.slane %v812, 4
          %v815 = vor.u32 %v811, %v814
          %v816 = vsel %vm301, %v807, %v815
          %v818 = vshrl.u32 %v605, 16
          %v820 = vrot.slane %v818, 3
          %v821 = vshll.u32 %v605, 16
          %v823 = vrot.slane %v821, 4
          %v824 = vor.u32 %v820, %v823
          %v826 = vshrl.u32 %v606, 16
          %v828 = vrot.slane %v826, 3
          %v829 = vshll.u32 %v606, 16
          %v831 = vrot.slane %v829, 4
          %v832 = vor.u32 %v828, %v831
          %v833 = vsel %vm301, %v824, %v832
          %v835 = vshrl.u32 %v607, 16
          %v837 = vrot.slane %v835, 3
          %v838 = vshll.u32 %v607, 16
          %v840 = vrot.slane %v838, 4
          %v841 = vor.u32 %v837, %v840
          %v843 = vshrl.u32 %v608, 16
          %v845 = vrot.slane %v843, 3
          %v846 = vshll.u32 %v608, 16
          %v848 = vrot.slane %v846, 4
          %v849 = vor.u32 %v845, %v848
          %v850 = vsel %vm301, %v841, %v849
          %v852 = vshrl.u32 %v609, 16
          %v854 = vrot.slane %v852, 3
          %v855 = vshll.u32 %v609, 16
          %v857 = vrot.slane %v855, 4
          %v858 = vor.u32 %v854, %v857
          %v860 = vshrl.u32 %v610, 16
          %v862 = vrot.slane %v860, 3
          %v863 = vshll.u32 %v610, 16
          %v865 = vrot.slane %v863, 4
          %v866 = vor.u32 %v862, %v865
          %v867 = vsel %vm301, %v858, %v866
          %v869 = vshrl.u32 %v611, 16
          %v871 = vrot.slane %v869, 3
          %v872 = vshll.u32 %v611, 16
          %v874 = vrot.slane %v872, 4
          %v875 = vor.u32 %v871, %v874
          %v877 = vshrl.u32 %v612, 16
          %v879 = vrot.slane %v877, 3
          %v880 = vshll.u32 %v612, 16
          %v882 = vrot.slane %v880, 4
          %v883 = vor.u32 %v879, %v882
          %v884 = vsel %vm301, %v875, %v883
          %v901 = vld [vmem:[%s1] sm:$0xf]
          %v902 = vld [vmem:[%s1 + $0x4] sm:$0xf]
          %v903 = vld [vmem:[%s1 + $0x8] sm:$0xf]
          %v904 = vld [vmem:[%s1 + $0xc] sm:$0xf]
          %v905 = vld [vmem:[%s1 + $0x10] sm:$0xf]
          %v906 = vld [vmem:[%s1 + $0x14] sm:$0xf]
          %v907 = vld [vmem:[%s1 + $0x18] sm:$0xf]
          %v908 = vld [vmem:[%s1 + $0x1c] sm:$0xf]
          %v909 = vld [vmem:[%s1 + $0x20] sm:$0xf]
          %v910 = vld [vmem:[%s1 + $0x24] sm:$0xf]
          %v911 = vld [vmem:[%s1 + $0x28] sm:$0xf]
          %v912 = vld [vmem:[%s1 + $0x2c] sm:$0xf]
          %v913 = vld [vmem:[%s1 + $0x30] sm:$0xf]
          %v914 = vld [vmem:[%s1 + $0x34] sm:$0xf]
          %v915 = vld [vmem:[%s1 + $0x38] sm:$0xf]
          %v916 = vld [vmem:[%s1 + $0x3c] sm:$0xf]
          %v917 = vld [vmem:[#allocation2] sm:$0xf0]
          %v918 = vld [vmem:[#allocation2 + $0x10] sm:$0xf0]
          %v919 = vld [vmem:[#allocation2 + $0x20] sm:$0xf0]
          %v920 = vld [vmem:[#allocation2 + $0x30] sm:$0xf0]
          %v921 = vld [vmem:[#allocation2 + $0x40] sm:$0xf0]
          %v922 = vld [vmem:[#allocation2 + $0x50] sm:$0xf0]
          %v923 = vld [vmem:[#allocation2 + $0x60] sm:$0xf0]
          %v924 = vld [vmem:[#allocation2 + $0x70] sm:$0xf0]
          %v925 = vld [vmem:[#allocation2 + $0x80] sm:$0xf0]
          %v926 = vld [vmem:[#allocation2 + $0x90] sm:$0xf0]
          %v927 = vld [vmem:[#allocation2 + $0xa0] sm:$0xf0]
          %v928 = vld [vmem:[#allocation2 + $0xb0] sm:$0xf0]
          %v929 = vld [vmem:[#allocation2 + $0xc0] sm:$0xf0]
          %v930 = vld [vmem:[#allocation2 + $0xd0] sm:$0xf0]
          %v931 = vld [vmem:[#allocation2 + $0xe0] sm:$0xf0]
          %v932 = vld [vmem:[#allocation2 + $0xf0] sm:$0xf0]
          %vm965 = vcmask 1043456
          %v966 = vrot.slane %v917, 4
          %v967 = vrot.slane %v582, 4
          %v968 = vsel %vm965, %v966, %v967
          %v969 = vrot.slane %v918, 4
          %v970 = vrot.slane %v584, 4
          %v971 = vsel %vm965, %v969, %v970
          %v972 = vrot.slane %v919, 4
          %v973 = vrot.slane %v586, 4
          %v974 = vsel %vm965, %v972, %v973
          %v975 = vrot.slane %v920, 4
          %v976 = vrot.slane %v588, 4
          %v977 = vsel %vm965, %v975, %v976
          %v978 = vrot.slane %v921, 4
          %v979 = vrot.slane %v590, 4
          %v980 = vsel %vm965, %v978, %v979
          %v981 = vrot.slane %v922, 4
          %v982 = vrot.slane %v592, 4
          %v983 = vsel %vm965, %v981, %v982
          %v984 = vrot.slane %v923, 4
          %v985 = vrot.slane %v594, 4
          %v986 = vsel %vm965, %v984, %v985
          %v987 = vrot.slane %v924, 4
          %v988 = vrot.slane %v596, 4
          %v989 = vsel %vm965, %v987, %v988
          %v990 = vrot.slane %v925, 4
          %v991 = vrot.slane %v598, 4
          %v992 = vsel %vm965, %v990, %v991
          %v993 = vrot.slane %v926, 4
          %v994 = vrot.slane %v600, 4
          %v995 = vsel %vm965, %v993, %v994
          %v996 = vrot.slane %v927, 4
          %v997 = vrot.slane %v602, 4
          %v998 = vsel %vm965, %v996, %v997
          %v999 = vrot.slane %v928, 4
          %v1000 = vrot.slane %v604, 4
          %v1001 = vsel %vm965, %v999, %v1000
          %v1002 = vrot.slane %v929, 4
          %v1003 = vrot.slane %v606, 4
          %v1004 = vsel %vm965, %v1002, %v1003
          %v1005 = vrot.slane %v930, 4
          %v1006 = vrot.slane %v608, 4
          %v1007 = vsel %vm965, %v1005, %v1006
          %v1008 = vrot.slane %v931, 4
          %v1009 = vrot.slane %v610, 4
          %v1010 = vsel %vm965, %v1008, %v1009
          %v1011 = vrot.slane %v932, 4
          %v1012 = vrot.slane %v612, 4
          %v1013 = vsel %vm965, %v1011, %v1012
          %v1030 = vld [vmem:[%s1 + $0x40] sm:$0xf]
          %v1031 = vld [vmem:[%s1 + $0x44] sm:$0xf]
          %v1032 = vld [vmem:[%s1 + $0x48] sm:$0xf]
          %v1033 = vld [vmem:[%s1 + $0x4c] sm:$0xf]
          %v1034 = vld [vmem:[%s1 + $0x50] sm:$0xf]
          %v1035 = vld [vmem:[%s1 + $0x54] sm:$0xf]
          %v1036 = vld [vmem:[%s1 + $0x58] sm:$0xf]
          %v1037 = vld [vmem:[%s1 + $0x5c] sm:$0xf]
          %v1038 = vld [vmem:[%s1 + $0x60] sm:$0xf]
          %v1039 = vld [vmem:[%s1 + $0x64] sm:$0xf]
          %v1040 = vld [vmem:[%s1 + $0x68] sm:$0xf]
          %v1041 = vld [vmem:[%s1 + $0x6c] sm:$0xf]
          %v1042 = vld [vmem:[%s1 + $0x70] sm:$0xf]
          %v1043 = vld [vmem:[%s1 + $0x74] sm:$0xf]
          %v1044 = vld [vmem:[%s1 + $0x78] sm:$0xf]
          %v1045 = vld [vmem:[%s1 + $0x7c] sm:$0xf]
          %v1062 = vunpack.c.l.b16 %v1030
          %v1063 = vunpack.c.l.b16 %v1031
          %v1064 = vunpack.c.l.b16 %v1032
          %v1065 = vunpack.c.l.b16 %v1033
          %v1066 = vunpack.c.l.b16 %v1034
          %v1067 = vunpack.c.l.b16 %v1035
          %v1068 = vunpack.c.l.b16 %v1036
          %v1069 = vunpack.c.l.b16 %v1037
          %v1070 = vunpack.c.l.b16 %v1038
          %v1071 = vunpack.c.l.b16 %v1039
          %v1072 = vunpack.c.l.b16 %v1040
          %v1073 = vunpack.c.l.b16 %v1041
          %v1074 = vunpack.c.l.b16 %v1042
          %v1075 = vunpack.c.l.b16 %v1043
          %v1076 = vunpack.c.l.b16 %v1044
          %v1077 = vunpack.c.l.b16 %v1045
          %v1078 = vpack.c.b16 %v1063, %v1062
          %v1079 = vpack.c.b16 %v1065, %v1064
          %v1080 = vpack.c.b16 %v1067, %v1066
          %v1081 = vpack.c.b16 %v1069, %v1068
          %v1082 = vpack.c.b16 %v1071, %v1070
          %v1083 = vpack.c.b16 %v1073, %v1072
          %v1084 = vpack.c.b16 %v1075, %v1074
          %v1085 = vpack.c.b16 %v1077, %v1076
          %1094 = vmatprep.subr.bf16.mxu0 0
          %1095 = vmatpush1.bf16.msra.mxu0 %v1078
          %1096 = vmatprep.subr.bf16.mxu0 0
          %1097 = vmatpush1.bf16.msra.mxu0 %v1079
          %1098 = vmatprep.subr.bf16.mxu0 0
          %1099 = vmatpush1.bf16.msra.mxu0 %v1080
          %1100 = vmatprep.subr.bf16.mxu0 0
          %1101 = vmatpush1.bf16.msra.mxu0 %v1081
          %1102 = vmatprep.subr.bf16.mxu0 0
          %1103 = vmatpush1.bf16.msra.mxu0 %v1082
          %1104 = vmatprep.subr.bf16.mxu0 0
          %1105 = vmatpush1.bf16.msra.mxu0 %v1083
          %1106 = vmatprep.subr.bf16.mxu0 0
          %1107 = vmatpush1.bf16.msra.mxu0 %v1084
          %1108 = vmatprep.subr.bf16.mxu0 0
          %1109 = vmatpush1.bf16.msra.mxu0 %v1085
          %1110 = vmatprep.subr.bf16.mxu0 0
          %1111 = vmatpush1.bf16.msra.mxu0 0
          %1112 = vmatprep.subr.bf16.mxu0 0
          %1113 = vmatpush1.bf16.msra.mxu0 0
          %1114 = vmatprep.subr.bf16.mxu0 0
          %1115 = vmatpush1.bf16.msra.mxu0 0
          %1116 = vmatprep.subr.bf16.mxu0 0
          %1117 = vmatpush1.bf16.msra.mxu0 0
          %1118 = vmatprep.subr.bf16.mxu0 0
          %1119 = vmatpush1.bf16.msra.mxu0 0
          %1120 = vmatprep.subr.bf16.mxu0 0
          %1121 = vmatpush1.bf16.msra.mxu0 0
          %1122 = vmatprep.subr.bf16.mxu0 0
          %1123 = vmatpush1.bf16.msra.mxu0 0
          %1124 = vmatprep.subr.bf16.mxu0 0
          %1125 = vmatpush1.bf16.msra.mxu0 0
          %1126 = vmatprep.mubr.bf16.mxu0 0
          %1127 = vmatmul.mubr.bf16.gmra.mrb[0].mxu0 %v968
          %v1128 = vpop.f32.mrb[0].mxu0
          %v1129 = vadd.f32 0.0, %v1128
          %v1130 = vpop.f32.mrb[0].mxu0
          %v1131 = vpop.f32.mrb[0].mxu0
          %v1132 = vadd.f32 0.0, %v1131
          %v1133 = vpop.f32.mrb[0].mxu0
          %1134 = vmatprep.mubr.bf16.mxu0 0
          %1135 = vmatmul.mubr.bf16.gmra.mrb[0].mxu0 %v971
          %v1136 = vpop.f32.mrb[0].mxu0
          %v1137 = vadd.f32 0.0, %v1136
          %v1138 = vpop.f32.mrb[0].mxu0
          %v1139 = vpop.f32.mrb[0].mxu0
          %v1140 = vadd.f32 0.0, %v1139
          %v1141 = vpop.f32.mrb[0].mxu0
          %1142 = vmatprep.mubr.bf16.mxu0 0
          %1143 = vmatmul.mubr.bf16.gmra.mrb[0].mxu0 %v974
          %v1144 = vpop.f32.mrb[0].mxu0
          %v1145 = vadd.f32 0.0, %v1144
          %v1146 = vpop.f32.mrb[0].mxu0
          %v1147 = vpop.f32.mrb[0].mxu0
          %v1148 = vadd.f32 0.0, %v1147
          %v1149 = vpop.f32.mrb[0].mxu0
          %1150 = vmatprep.mubr.bf16.mxu0 0
          %1151 = vmatmul.mubr.bf16.gmra.mrb[0].mxu0 %v977
          %v1152 = vpop.f32.mrb[0].mxu0
          %v1153 = vadd.f32 0.0, %v1152
          %v1154 = vpop.f32.mrb[0].mxu0
          %v1155 = vpop.f32.mrb[0].mxu0
          %v1156 = vadd.f32 0.0, %v1155
          %v1157 = vpop.f32.mrb[0].mxu0
          %1158 = vmatprep.mubr.bf16.mxu0 0
          %1159 = vmatmul.mubr.bf16.gmra.mrb[0].mxu0 %v980
          %v1160 = vpop.f32.mrb[0].mxu0
          %v1161 = vadd.f32 0.0, %v1160
          %v1162 = vpop.f32.mrb[0].mxu0
          %v1163 = vpop.f32.mrb[0].mxu0
          %v1164 = vadd.f32 0.0, %v1163
          %v1165 = vpop.f32.mrb[0].mxu0
          %1166 = vmatprep.mubr.bf16.mxu0 0
          %1167 = vmatmul.mubr.bf16.gmra.mrb[0].mxu0 %v983
          %v1168 = vpop.f32.mrb[0].mxu0
          %v1169 = vadd.f32 0.0, %v1168
          %v1170 = vpop.f32.mrb[0].mxu0
          %v1171 = vpop.f32.mrb[0].mxu0
          %v1172 = vadd.f32 0.0, %v1171
          %v1173 = vpop.f32.mrb[0].mxu0
          %1174 = vmatprep.mubr.bf16.mxu0 0
          %1175 = vmatmul.mubr.bf16.gmra.mrb[0].mxu0 %v986
          %v1176 = vpop.f32.mrb[0].mxu0
          %v1177 = vadd.f32 0.0, %v1176
          %v1178 = vpop.f32.mrb[0].mxu0
          %v1179 = vpop.f32.mrb[0].mxu0
          %v1180 = vadd.f32 0.0, %v1179
          %v1181 = vpop.f32.mrb[0].mxu0
          %1182 = vmatprep.mubr.bf16.mxu0 0
          %1183 = vmatmul.mubr.bf16.gmra.mrb[0].mxu0 %v989
          %v1184 = vpop.f32.mrb[0].mxu0
          %v1185 = vadd.f32 0.0, %v1184
          %v1186 = vpop.f32.mrb[0].mxu0
          %v1187 = vpop.f32.mrb[0].mxu0
          %v1188 = vadd.f32 0.0, %v1187
          %v1189 = vpop.f32.mrb[0].mxu0
          %1190 = vmatprep.mubr.bf16.mxu0 0
          %1191 = vmatmul.mubr.bf16.gmra.mrb[0].mxu0 %v992
          %v1192 = vpop.f32.mrb[0].mxu0
          %v1193 = vadd.f32 0.0, %v1192
          %v1194 = vpop.f32.mrb[0].mxu0
          %v1195 = vpop.f32.mrb[0].mxu0
          %v1196 = vadd.f32 0.0, %v1195
          %v1197 = vpop.f32.mrb[0].mxu0
          %1198 = vmatprep.mubr.bf16.mxu0 0
          %1199 = vmatmul.mubr.bf16.gmra.mrb[0].mxu0 %v995
          %v1200 = vpop.f32.mrb[0].mxu0
          %v1201 = vadd.f32 0.0, %v1200
          %v1202 = vpop.f32.mrb[0].mxu0
          %v1203 = vpop.f32.mrb[0].mxu0
          %v1204 = vadd.f32 0.0, %v1203
          %v1205 = vpop.f32.mrb[0].mxu0
          %1206 = vmatprep.mubr.bf16.mxu0 0
          %1207 = vmatmul.mubr.bf16.gmra.mrb[0].mxu0 %v998
          %v1208 = vpop.f32.mrb[0].mxu0
          %v1209 = vadd.f32 0.0, %v1208
          %v1210 = vpop.f32.mrb[0].mxu0
          %v1211 = vpop.f32.mrb[0].mxu0
          %v1212 = vadd.f32 0.0, %v1211
          %v1213 = vpop.f32.mrb[0].mxu0
          %1214 = vmatprep.mubr.bf16.mxu0 0
          %1215 = vmatmul.mubr.bf16.gmra.mrb[0].mxu0 %v1001
          %v1216 = vpop.f32.mrb[0].mxu0
          %v1217 = vadd.f32 0.0, %v1216
          %v1218 = vpop.f32.mrb[0].mxu0
          %v1219 = vpop.f32.mrb[0].mxu0
          %v1220 = vadd.f32 0.0, %v1219
          %v1221 = vpop.f32.mrb[0].mxu0
          %1222 = vmatprep.mubr.bf16.mxu0 0
          %1223 = vmatmul.mubr.bf16.gmra.mrb[0].mxu0 %v1004
          %v1224 = vpop.f32.mrb[0].mxu0
          %v1225 = vadd.f32 0.0, %v1224
          %v1226 = vpop.f32.mrb[0].mxu0
          %v1227 = vpop.f32.mrb[0].mxu0
          %v1228 = vadd.f32 0.0, %v1227
          %v1229 = vpop.f32.mrb[0].mxu0
          %1230 = vmatprep.mubr.bf16.mxu0 0
          %1231 = vmatmul.mubr.bf16.gmra.mrb[0].mxu0 %v1007
          %v1232 = vpop.f32.mrb[0].mxu0
          %v1233 = vadd.f32 0.0, %v1232
          %v1234 = vpop.f32.mrb[0].mxu0
          %v1235 = vpop.f32.mrb[0].mxu0
          %v1236 = vadd.f32 0.0, %v1235
          %v1237 = vpop.f32.mrb[0].mxu0
          %1238 = vmatprep.mubr.bf16.mxu0 0
          %1239 = vmatmul.mubr.bf16.gmra.mrb[0].mxu0 %v1010
          %v1240 = vpop.f32.mrb[0].mxu0
          %v1241 = vadd.f32 0.0, %v1240
          %v1242 = vpop.f32.mrb[0].mxu0
          %v1243 = vpop.f32.mrb[0].mxu0
          %v1244 = vadd.f32 0.0, %v1243
          %v1245 = vpop.f32.mrb[0].mxu0
          %1246 = vmatprep.mubr.bf16.mxu0 0
          %1247 = vmatmul.mubr.bf16.gmra.mrb[0].mxu0 %v1013
          %v1248 = vpop.f32.mrb[0].mxu0
          %v1249 = vadd.f32 0.0, %v1248
          %v1250 = vpop.f32.mrb[0].mxu0
          %v1251 = vpop.f32.mrb[0].mxu0
          %v1252 = vadd.f32 0.0, %v1251
          %v1253 = vpop.f32.mrb[0].mxu0
          %1254 = vdwg.mxu0
          %v1271 = vunpack.c.l.b16 %v901
          %v1272 = vunpack.c.l.b16 %v902
          %v1273 = vunpack.c.l.b16 %v903
          %v1274 = vunpack.c.l.b16 %v904
          %v1275 = vunpack.c.l.b16 %v905
          %v1276 = vunpack.c.l.b16 %v906
          %v1277 = vunpack.c.l.b16 %v907
          %v1278 = vunpack.c.l.b16 %v908
          %v1279 = vunpack.c.l.b16 %v909
          %v1280 = vunpack.c.l.b16 %v910
          %v1281 = vunpack.c.l.b16 %v911
          %v1282 = vunpack.c.l.b16 %v912
          %v1283 = vunpack.c.l.b16 %v913
          %v1284 = vunpack.c.l.b16 %v914
          %v1285 = vunpack.c.l.b16 %v915
          %v1286 = vunpack.c.l.b16 %v916
          %v1287 = vpack.c.b16 %v1272, %v1271
          %v1288 = vpack.c.b16 %v1274, %v1273
          %v1289 = vpack.c.b16 %v1276, %v1275
          %v1290 = vpack.c.b16 %v1278, %v1277
          %v1291 = vpack.c.b16 %v1280, %v1279
          %v1292 = vpack.c.b16 %v1282, %v1281
          %v1293 = vpack.c.b16 %v1284, %v1283
          %v1294 = vpack.c.b16 %v1286, %v1285
          %1303 = vmatprep.subr.bf16.mxu0 0
          %1304 = vmatpush1.bf16.msra.mxu0 %v1287
          %1305 = vmatprep.subr.bf16.mxu0 0
          %1306 = vmatpush1.bf16.msra.mxu0 %v1288
          %1307 = vmatprep.subr.bf16.mxu0 0
          %1308 = vmatpush1.bf16.msra.mxu0 %v1289
          %1309 = vmatprep.subr.bf16.mxu0 0
          %1310 = vmatpush1.bf16.msra.mxu0 %v1290
          %1311 = vmatprep.subr.bf16.mxu0 0
          %1312 = vmatpush1.bf16.msra.mxu0 %v1291
          %1313 = vmatprep.subr.bf16.mxu0 0
          %1314 = vmatpush1.bf16.msra.mxu0 %v1292
          %1315 = vmatprep.subr.bf16.mxu0 0
          %1316 = vmatpush1.bf16.msra.mxu0 %v1293
          %1317 = vmatprep.subr.bf16.mxu0 0
          %1318 = vmatpush1.bf16.msra.mxu0 %v1294
          %1319 = vmatprep.subr.bf16.mxu0 0
          %1320 = vmatpush1.bf16.msra.mxu0 0
          %1321 = vmatprep.subr.bf16.mxu0 0
          %1322 = vmatpush1.bf16.msra.mxu0 0
          %1323 = vmatprep.subr.bf16.mxu0 0
          %1324 = vmatpush1.bf16.msra.mxu0 0
          %1325 = vmatprep.subr.bf16.mxu0 0
          %1326 = vmatpush1.bf16.msra.mxu0 0
          %1327 = vmatprep.subr.bf16.mxu0 0
          %1328 = vmatpush1.bf16.msra.mxu0 0
          %1329 = vmatprep.subr.bf16.mxu0 0
          %1330 = vmatpush1.bf16.msra.mxu0 0
          %1331 = vmatprep.subr.bf16.mxu0 0
          %1332 = vmatpush1.bf16.msra.mxu0 0
          %1333 = vmatprep.subr.bf16.mxu0 0
          %1334 = vmatpush1.bf16.msra.mxu0 0
          %1335 = vmatprep.mubr.bf16.mxu0 0
          %1336 = vmatmul.mubr.bf16.gmra.mrb[0].mxu0 %v629
          %v1337 = vpop.f32.mrb[0].mxu0
          %v1338 = vadd.f32 %v1129, %v1337
          %v1339 = vpop.f32.mrb[0].mxu0
          %v1340 = vpop.f32.mrb[0].mxu0
          %v1341 = vadd.f32 %v1132, %v1340
          %v1342 = vpop.f32.mrb[0].mxu0
          %1343 = vmatprep.mubr.bf16.mxu0 0
          %1344 = vmatmul.mubr.bf16.gmra.mrb[0].mxu0 %v646
          %v1345 = vpop.f32.mrb[0].mxu0
          %v1346 = vadd.f32 %v1137, %v1345
          %v1347 = vpop.f32.mrb[0].mxu0
          %v1348 = vpop.f32.mrb[0].mxu0
          %v1349 = vadd.f32 %v1140, %v1348
          %v1350 = vpop.f32.mrb[0].mxu0
          %1351 = vmatprep.mubr.bf16.mxu0 0
          %1352 = vmatmul.mubr.bf16.gmra.mrb[0].mxu0 %v663
          %v1353 = vpop.f32.mrb[0].mxu0
          %v1354 = vadd.f32 %v1145, %v1353
          %v1355 = vpop.f32.mrb[0].mxu0
          %v1356 = vpop.f32.mrb[0].mxu0
          %v1357 = vadd.f32 %v1148, %v1356
          %v1358 = vpop.f32.mrb[0].mxu0
          %1359 = vmatprep.mubr.bf16.mxu0 0
          %1360 = vmatmul.mubr.bf16.gmra.mrb[0].mxu0 %v680
          %v1361 = vpop.f32.mrb[0].mxu0
          %v1362 = vadd.f32 %v1153, %v1361
          %v1363 = vpop.f32.mrb[0].mxu0
          %v1364 = vpop.f32.mrb[0].mxu0
          %v1365 = vadd.f32 %v1156, %v1364
          %v1366 = vpop.f32.mrb[0].mxu0
          %1367 = vmatprep.mubr.bf16.mxu0 0
          %1368 = vmatmul.mubr.bf16.gmra.mrb[0].mxu0 %v697
          %v1369 = vpop.f32.mrb[0].mxu0
          %v1370 = vadd.f32 %v1161, %v1369
          %v1371 = vpop.f32.mrb[0].mxu0
          %v1372 = vpop.f32.mrb[0].mxu0
          %v1373 = vadd.f32 %v1164, %v1372
          %v1374 = vpop.f32.mrb[0].mxu0
          %1375 = vmatprep.mubr.bf16.mxu0 0
          %1376 = vmatmul.mubr.bf16.gmra.mrb[0].mxu0 %v714
          %v1377 = vpop.f32.mrb[0].mxu0
          %v1378 = vadd.f32 %v1169, %v1377
          %v1379 = vpop.f32.mrb[0].mxu0
          %v1380 = vpop.f32.mrb[0].mxu0
          %v1381 = vadd.f32 %v1172, %v1380
          %v1382 = vpop.f32.mrb[0].mxu0
          %1383 = vmatprep.mubr.bf16.mxu0 0
          %1384 = vmatmul.mubr.bf16.gmra.mrb[0].mxu0 %v731
          %v1385 = vpop.f32.mrb[0].mxu0
          %v1386 = vadd.f32 %v1177, %v1385
          %v1387 = vpop.f32.mrb[0].mxu0
          %v1388 = vpop.f32.mrb[0].mxu0
          %v1389 = vadd.f32 %v1180, %v1388
          %v1390 = vpop.f32.mrb[0].mxu0
          %1391 = vmatprep.mubr.bf16.mxu0 0
          %1392 = vmatmul.mubr.bf16.gmra.mrb[0].mxu0 %v748
          %v1393 = vpop.f32.mrb[0].mxu0
          %v1394 = vadd.f32 %v1185, %v1393
          %v1395 = vpop.f32.mrb[0].mxu0
          %v1396 = vpop.f32.mrb[0].mxu0
          %v1397 = vadd.f32 %v1188, %v1396
          %v1398 = vpop.f32.mrb[0].mxu0
          %1399 = vmatprep.mubr.bf16.mxu0 0
          %1400 = vmatmul.mubr.bf16.gmra.mrb[0].mxu0 %v765
          %v1401 = vpop.f32.mrb[0].mxu0
          %v1402 = vadd.f32 %v1193, %v1401
          %v1403 = vpop.f32.mrb[0].mxu0
          %v1404 = vpop.f32.mrb[0].mxu0
          %v1405 = vadd.f32 %v1196, %v1404
          %v1406 = vpop.f32.mrb[0].mxu0
          %1407 = vmatprep.mubr.bf16.mxu0 0
          %1408 = vmatmul.mubr.bf16.gmra.mrb[0].mxu0 %v782
          %v1409 = vpop.f32.mrb[0].mxu0
          %v1410 = vadd.f32 %v1201, %v1409
          %v1411 = vpop.f32.mrb[0].mxu0
          %v1412 = vpop.f32.mrb[0].mxu0
          %v1413 = vadd.f32 %v1204, %v1412
          %v1414 = vpop.f32.mrb[0].mxu0
          %1415 = vmatprep.mubr.bf16.mxu0 0
          %1416 = vmatmul.mubr.bf16.gmra.mrb[0].mxu0 %v799
          %v1417 = vpop.f32.mrb[0].mxu0
          %v1418 = vadd.f32 %v1209, %v1417
          %v1419 = vpop.f32.mrb[0].mxu0
          %v1420 = vpop.f32.mrb[0].mxu0
          %v1421 = vadd.f32 %v1212, %v1420
          %v1422 = vpop.f32.mrb[0].mxu0
          %1423 = vmatprep.mubr.bf16.mxu0 0
          %1424 = vmatmul.mubr.bf16.gmra.mrb[0].mxu0 %v816
          %v1425 = vpop.f32.mrb[0].mxu0
          %v1426 = vadd.f32 %v1217, %v1425
          %v1427 = vpop.f32.mrb[0].mxu0
          %v1428 = vpop.f32.mrb[0].mxu0
          %v1429 = vadd.f32 %v1220, %v1428
          %v1430 = vpop.f32.mrb[0].mxu0
          %1431 = vmatprep.mubr.bf16.mxu0 0
          %1432 = vmatmul.mubr.bf16.gmra.mrb[0].mxu0 %v833
          %v1433 = vpop.f32.mrb[0].mxu0
          %v1434 = vadd.f32 %v1225, %v1433
          %v1435 = vpop.f32.mrb[0].mxu0
          %v1436 = vpop.f32.mrb[0].mxu0
          %v1437 = vadd.f32 %v1228, %v1436
          %v1438 = vpop.f32.mrb[0].mxu0
          %1439 = vmatprep.mubr.bf16.mxu0 0
          %1440 = vmatmul.mubr.bf16.gmra.mrb[0].mxu0 %v850
          %v1441 = vpop.f32.mrb[0].mxu0
          %v1442 = vadd.f32 %v1233, %v1441
          %v1443 = vpop.f32.mrb[0].mxu0
          %v1444 = vpop.f32.mrb[0].mxu0
          %v1445 = vadd.f32 %v1236, %v1444
          %v1446 = vpop.f32.mrb[0].mxu0
          %1447 = vmatprep.mubr.bf16.mxu0 0
          %1448 = vmatmul.mubr.bf16.gmra.mrb[0].mxu0 %v867
          %v1449 = vpop.f32.mrb[0].mxu0
          %v1450 = vadd.f32 %v1241, %v1449
          %v1451 = vpop.f32.mrb[0].mxu0
          %v1452 = vpop.f32.mrb[0].mxu0
          %v1453 = vadd.f32 %v1244, %v1452
          %v1454 = vpop.f32.mrb[0].mxu0
          %1455 = vmatprep.mubr.bf16.mxu0 0
          %1456 = vmatmul.mubr.bf16.gmra.mrb[0].mxu0 %v884
          %v1457 = vpop.f32.mrb[0].mxu0
          %v1458 = vadd.f32 %v1249, %v1457
          %v1459 = vpop.f32.mrb[0].mxu0
          %v1460 = vpop.f32.mrb[0].mxu0
          %v1461 = vadd.f32 %v1252, %v1460
          %v1462 = vpop.f32.mrb[0].mxu0
          %1463 = vdwg.mxu0
          %v1464 = vld [vmem:[#allocation2 + $0x8] sm:$0x1f]
          %v1465 = vld [vmem:[#allocation2 + $0x18] sm:$0x1f]
          %v1466 = vld [vmem:[#allocation2 + $0x28] sm:$0x1f]
          %v1467 = vld [vmem:[#allocation2 + $0x38] sm:$0x1f]
          %v1468 = vld [vmem:[#allocation2 + $0x48] sm:$0x1f]
          %v1469 = vld [vmem:[#allocation2 + $0x58] sm:$0x1f]
          %v1470 = vld [vmem:[#allocation2 + $0x68] sm:$0x1f]
          %v1471 = vld [vmem:[#allocation2 + $0x78] sm:$0x1f]
          %v1472 = vld [vmem:[#allocation2 + $0x88] sm:$0x1f]
          %v1473 = vld [vmem:[#allocation2 + $0x98] sm:$0x1f]
          %v1474 = vld [vmem:[#allocation2 + $0xa8] sm:$0x1f]
          %v1475 = vld [vmem:[#allocation2 + $0xb8] sm:$0x1f]
          %v1476 = vld [vmem:[#allocation2 + $0xc8] sm:$0x1f]
          %v1477 = vld [vmem:[#allocation2 + $0xd8] sm:$0x1f]
          %v1478 = vld [vmem:[#allocation2 + $0xe8] sm:$0x1f]
          %v1479 = vld [vmem:[#allocation2 + $0xf8] sm:$0x1f]
          %vm1480 = vsmask.f32 3328
          %v1482 = vshrl.u32 %v917, 16
          %v1484 = vrot.slane %v1482, 4
          %v1485 = vshll.u32 %v917, 16
          %v1487 = vrot.slane %v1485, 5
          %v1488 = vor.u32 %v1484, %v1487
          %v1490 = vshrl.u32 %v1464, 16
          %v1492 = vrot.slane %v1490, 4
          %v1493 = vshll.u32 %v1464, 16
          %v1495 = vrot.slane %v1493, 5
          %v1496 = vor.u32 %v1492, %v1495
          %v1497 = vsel %vm1480, %v1488, %v1496
          %v1499 = vshrl.u32 %v918, 16
          %v1501 = vrot.slane %v1499, 4
          %v1502 = vshll.u32 %v918, 16
          %v1504 = vrot.slane %v1502, 5
          %v1505 = vor.u32 %v1501, %v1504
          %v1507 = vshrl.u32 %v1465, 16
          %v1509 = vrot.slane %v1507, 4
          %v1510 = vshll.u32 %v1465, 16
          %v1512 = vrot.slane %v1510, 5
          %v1513 = vor.u32 %v1509, %v1512
          %v1514 = vsel %vm1480, %v1505, %v1513
          %v1516 = vshrl.u32 %v919, 16
          %v1518 = vrot.slane %v1516, 4
          %v1519 = vshll.u32 %v919, 16
          %v1521 = vrot.slane %v1519, 5
          %v1522 = vor.u32 %v1518, %v1521
          %v1524 = vshrl.u32 %v1466, 16
          %v1526 = vrot.slane %v1524, 4
          %v1527 = vshll.u32 %v1466, 16
          %v1529 = vrot.slane %v1527, 5
          %v1530 = vor.u32 %v1526, %v1529
          %v1531 = vsel %vm1480, %v1522, %v1530
          %v1533 = vshrl.u32 %v920, 16
          %v1535 = vrot.slane %v1533, 4
          %v1536 = vshll.u32 %v920, 16
          %v1538 = vrot.slane %v1536, 5
          %v1539 = vor.u32 %v1535, %v1538
          %v1541 = vshrl.u32 %v1467, 16
          %v1543 = vrot.slane %v1541, 4
          %v1544 = vshll.u32 %v1467, 16
          %v1546 = vrot.slane %v1544, 5
          %v1547 = vor.u32 %v1543, %v1546
          %v1548 = vsel %vm1480, %v1539, %v1547
          %v1550 = vshrl.u32 %v921, 16
          %v1552 = vrot.slane %v1550, 4
          %v1553 = vshll.u32 %v921, 16
          %v1555 = vrot.slane %v1553, 5
          %v1556 = vor.u32 %v1552, %v1555
          %v1558 = vshrl.u32 %v1468, 16
          %v1560 = vrot.slane %v1558, 4
          %v1561 = vshll.u32 %v1468, 16
          %v1563 = vrot.slane %v1561, 5
          %v1564 = vor.u32 %v1560, %v1563
          %v1565 = vsel %vm1480, %v1556, %v1564
          %v1567 = vshrl.u32 %v922, 16
          %v1569 = vrot.slane %v1567, 4
          %v1570 = vshll.u32 %v922, 16
          %v1572 = vrot.slane %v1570, 5
          %v1573 = vor.u32 %v1569, %v1572
          %v1575 = vshrl.u32 %v1469, 16
          %v1577 = vrot.slane %v1575, 4
          %v1578 = vshll.u32 %v1469, 16
          %v1580 = vrot.slane %v1578, 5
          %v1581 = vor.u32 %v1577, %v1580
          %v1582 = vsel %vm1480, %v1573, %v1581
          %v1584 = vshrl.u32 %v923, 16
          %v1586 = vrot.slane %v1584, 4
          %v1587 = vshll.u32 %v923, 16
          %v1589 = vrot.slane %v1587, 5
          %v1590 = vor.u32 %v1586, %v1589
          %v1592 = vshrl.u32 %v1470, 16
          %v1594 = vrot.slane %v1592, 4
          %v1595 = vshll.u32 %v1470, 16
          %v1597 = vrot.slane %v1595, 5
          %v1598 = vor.u32 %v1594, %v1597
          %v1599 = vsel %vm1480, %v1590, %v1598
          %v1601 = vshrl.u32 %v924, 16
          %v1603 = vrot.slane %v1601, 4
          %v1604 = vshll.u32 %v924, 16
          %v1606 = vrot.slane %v1604, 5
          %v1607 = vor.u32 %v1603, %v1606
          %v1609 = vshrl.u32 %v1471, 16
          %v1611 = vrot.slane %v1609, 4
          %v1612 = vshll.u32 %v1471, 16
          %v1614 = vrot.slane %v1612, 5
          %v1615 = vor.u32 %v1611, %v1614
          %v1616 = vsel %vm1480, %v1607, %v1615
          %v1618 = vshrl.u32 %v925, 16
          %v1620 = vrot.slane %v1618, 4
          %v1621 = vshll.u32 %v925, 16
          %v1623 = vrot.slane %v1621, 5
          %v1624 = vor.u32 %v1620, %v1623
          %v1626 = vshrl.u32 %v1472, 16
          %v1628 = vrot.slane %v1626, 4
          %v1629 = vshll.u32 %v1472, 16
          %v1631 = vrot.slane %v1629, 5
          %v1632 = vor.u32 %v1628, %v1631
          %v1633 = vsel %vm1480, %v1624, %v1632
          %v1635 = vshrl.u32 %v926, 16
          %v1637 = vrot.slane %v1635, 4
          %v1638 = vshll.u32 %v926, 16
          %v1640 = vrot.slane %v1638, 5
          %v1641 = vor.u32 %v1637, %v1640
          %v1643 = vshrl.u32 %v1473, 16
          %v1645 = vrot.slane %v1643, 4
          %v1646 = vshll.u32 %v1473, 16
          %v1648 = vrot.slane %v1646, 5
          %v1649 = vor.u32 %v1645, %v1648
          %v1650 = vsel %vm1480, %v1641, %v1649
          %v1652 = vshrl.u32 %v927, 16
          %v1654 = vrot.slane %v1652, 4
          %v1655 = vshll.u32 %v927, 16
          %v1657 = vrot.slane %v1655, 5
          %v1658 = vor.u32 %v1654, %v1657
          %v1660 = vshrl.u32 %v1474, 16
          %v1662 = vrot.slane %v1660, 4
          %v1663 = vshll.u32 %v1474, 16
          %v1665 = vrot.slane %v1663, 5
          %v1666 = vor.u32 %v1662, %v1665
          %v1667 = vsel %vm1480, %v1658, %v1666
          %v1669 = vshrl.u32 %v928, 16
          %v1671 = vrot.slane %v1669, 4
          %v1672 = vshll.u32 %v928, 16
          %v1674 = vrot.slane %v1672, 5
          %v1675 = vor.u32 %v1671, %v1674
          %v1677 = vshrl.u32 %v1475, 16
          %v1679 = vrot.slane %v1677, 4
          %v1680 = vshll.u32 %v1475, 16
          %v1682 = vrot.slane %v1680, 5
          %v1683 = vor.u32 %v1679, %v1682
          %v1684 = vsel %vm1480, %v1675, %v1683
          %v1686 = vshrl.u32 %v929, 16
          %v1688 = vrot.slane %v1686, 4
          %v1689 = vshll.u32 %v929, 16
          %v1691 = vrot.slane %v1689, 5
          %v1692 = vor.u32 %v1688, %v1691
          %v1694 = vshrl.u32 %v1476, 16
          %v1696 = vrot.slane %v1694, 4
          %v1697 = vshll.u32 %v1476, 16
          %v1699 = vrot.slane %v1697, 5
          %v1700 = vor.u32 %v1696, %v1699
          %v1701 = vsel %vm1480, %v1692, %v1700
          %v1703 = vshrl.u32 %v930, 16
          %v1705 = vrot.slane %v1703, 4
          %v1706 = vshll.u32 %v930, 16
          %v1708 = vrot.slane %v1706, 5
          %v1709 = vor.u32 %v1705, %v1708
          %v1711 = vshrl.u32 %v1477, 16
          %v1713 = vrot.slane %v1711, 4
          %v1714 = vshll.u32 %v1477, 16
          %v1716 = vrot.slane %v1714, 5
          %v1717 = vor.u32 %v1713, %v1716
          %v1718 = vsel %vm1480, %v1709, %v1717
          %v1720 = vshrl.u32 %v931, 16
          %v1722 = vrot.slane %v1720, 4
          %v1723 = vshll.u32 %v931, 16
          %v1725 = vrot.slane %v1723, 5
          %v1726 = vor.u32 %v1722, %v1725
          %v1728 = vshrl.u32 %v1478, 16
          %v1730 = vrot.slane %v1728, 4
          %v1731 = vshll.u32 %v1478, 16
          %v1733 = vrot.slane %v1731, 5
          %v1734 = vor.u32 %v1730, %v1733
          %v1735 = vsel %vm1480, %v1726, %v1734
          %v1737 = vshrl.u32 %v932, 16
          %v1739 = vrot.slane %v1737, 4
          %v1740 = vshll.u32 %v932, 16
          %v1742 = vrot.slane %v1740, 5
          %v1743 = vor.u32 %v1739, %v1742
          %v1745 = vshrl.u32 %v1479, 16
          %v1747 = vrot.slane %v1745, 4
          %v1748 = vshll.u32 %v1479, 16
          %v1750 = vrot.slane %v1748, 5
          %v1751 = vor.u32 %v1747, %v1750
          %v1752 = vsel %vm1480, %v1743, %v1751
          %v1769 = vld [vmem:[%s1 + $0x80] sm:$0xf]
          %v1770 = vld [vmem:[%s1 + $0x84] sm:$0xf]
          %v1771 = vld [vmem:[%s1 + $0x88] sm:$0xf]
          %v1772 = vld [vmem:[%s1 + $0x8c] sm:$0xf]
          %v1773 = vld [vmem:[%s1 + $0x90] sm:$0xf]
          %v1774 = vld [vmem:[%s1 + $0x94] sm:$0xf]
          %v1775 = vld [vmem:[%s1 + $0x98] sm:$0xf]
          %v1776 = vld [vmem:[%s1 + $0x9c] sm:$0xf]
          %v1777 = vld [vmem:[%s1 + $0xa0] sm:$0xf]
          %v1778 = vld [vmem:[%s1 + $0xa4] sm:$0xf]
          %v1779 = vld [vmem:[%s1 + $0xa8] sm:$0xf]
          %v1780 = vld [vmem:[%s1 + $0xac] sm:$0xf]
          %v1781 = vld [vmem:[%s1 + $0xb0] sm:$0xf]
          %v1782 = vld [vmem:[%s1 + $0xb4] sm:$0xf]
          %v1783 = vld [vmem:[%s1 + $0xb8] sm:$0xf]
          %v1784 = vld [vmem:[%s1 + $0xbc] sm:$0xf]
          %v1801 = vunpack.c.l.b16 %v1769
          %v1802 = vunpack.c.l.b16 %v1770
          %v1803 = vunpack.c.l.b16 %v1771
          %v1804 = vunpack.c.l.b16 %v1772
          %v1805 = vunpack.c.l.b16 %v1773
          %v1806 = vunpack.c.l.b16 %v1774
          %v1807 = vunpack.c.l.b16 %v1775
          %v1808 = vunpack.c.l.b16 %v1776
          %v1809 = vunpack.c.l.b16 %v1777
          %v1810 = vunpack.c.l.b16 %v1778
          %v1811 = vunpack.c.l.b16 %v1779
          %v1812 = vunpack.c.l.b16 %v1780
          %v1813 = vunpack.c.l.b16 %v1781
          %v1814 = vunpack.c.l.b16 %v1782
          %v1815 = vunpack.c.l.b16 %v1783
          %v1816 = vunpack.c.l.b16 %v1784
          %v1817 = vpack.c.b16 %v1802, %v1801
          %v1818 = vpack.c.b16 %v1804, %v1803
          %v1819 = vpack.c.b16 %v1806, %v1805
          %v1820 = vpack.c.b16 %v1808, %v1807
          %v1821 = vpack.c.b16 %v1810, %v1809
          %v1822 = vpack.c.b16 %v1812, %v1811
          %v1823 = vpack.c.b16 %v1814, %v1813
          %v1824 = vpack.c.b16 %v1816, %v1815
          %1833 = vmatprep.subr.bf16.mxu0 0
          %1834 = vmatpush1.bf16.msra.mxu0 %v1817
          %1835 = vmatprep.subr.bf16.mxu0 0
          %1836 = vmatpush1.bf16.msra.mxu0 %v1818
          %1837 = vmatprep.subr.bf16.mxu0 0
          %1838 = vmatpush1.bf16.msra.mxu0 %v1819
          %1839 = vmatprep.subr.bf16.mxu0 0
          %1840 = vmatpush1.bf16.msra.mxu0 %v1820
          %1841 = vmatprep.subr.bf16.mxu0 0
          %1842 = vmatpush1.bf16.msra.mxu0 %v1821
          %1843 = vmatprep.subr.bf16.mxu0 0
          %1844 = vmatpush1.bf16.msra.mxu0 %v1822
          %1845 = vmatprep.subr.bf16.mxu0 0
          %1846 = vmatpush1.bf16.msra.mxu0 %v1823
          %1847 = vmatprep.subr.bf16.mxu0 0
          %1848 = vmatpush1.bf16.msra.mxu0 %v1824
          %1849 = vmatprep.subr.bf16.mxu0 0
          %1850 = vmatpush1.bf16.msra.mxu0 0
          %1851 = vmatprep.subr.bf16.mxu0 0
          %1852 = vmatpush1.bf16.msra.mxu0 0
          %1853 = vmatprep.subr.bf16.mxu0 0
          %1854 = vmatpush1.bf16.msra.mxu0 0
          %1855 = vmatprep.subr.bf16.mxu0 0
          %1856 = vmatpush1.bf16.msra.mxu0 0
          %1857 = vmatprep.subr.bf16.mxu0 0
          %1858 = vmatpush1.bf16.msra.mxu0 0
          %1859 = vmatprep.subr.bf16.mxu0 0
          %1860 = vmatpush1.bf16.msra.mxu0 0
          %1861 = vmatprep.subr.bf16.mxu0 0
          %1862 = vmatpush1.bf16.msra.mxu0 0
          %1863 = vmatprep.subr.bf16.mxu0 0
          %1864 = vmatpush1.bf16.msra.mxu0 0
          %1865 = vmatprep.mubr.bf16.mxu0 0
          %1866 = vmatmul.mubr.bf16.gmra.mrb[0].mxu0 %v1497
          %v1867 = vpop.f32.mrb[0].mxu0
          %v1868 = vadd.f32 0.0, %v1867
          %v1869 = vpop.f32.mrb[0].mxu0
          %v1870 = vpop.f32.mrb[0].mxu0
          %v1871 = vadd.f32 0.0, %v1870
          %v1872 = vpop.f32.mrb[0].mxu0
          %1873 = vmatprep.mubr.bf16.mxu0 0
          %1874 = vmatmul.mubr.bf16.gmra.mrb[0].mxu0 %v1514
          %v1875 = vpop.f32.mrb[0].mxu0
          %v1876 = vadd.f32 0.0, %v1875
          %v1877 = vpop.f32.mrb[0].mxu0
          %v1878 = vpop.f32.mrb[0].mxu0
          %v1879 = vadd.f32 0.0, %v1878
          %v1880 = vpop.f32.mrb[0].mxu0
          %1881 = vmatprep.mubr.bf16.mxu0 0
          %1882 = vmatmul.mubr.bf16.gmra.mrb[0].mxu0 %v1531
          %v1883 = vpop.f32.mrb[0].mxu0
          %v1884 = vadd.f32 0.0, %v1883
          %v1885 = vpop.f32.mrb[0].mxu0
          %v1886 = vpop.f32.mrb[0].mxu0
          %v1887 = vadd.f32 0.0, %v1886
          %v1888 = vpop.f32.mrb[0].mxu0
          %1889 = vmatprep.mubr.bf16.mxu0 0
          %1890 = vmatmul.mubr.bf16.gmra.mrb[0].mxu0 %v1548
          %v1891 = vpop.f32.mrb[0].mxu0
          %v1892 = vadd.f32 0.0, %v1891
          %v1893 = vpop.f32.mrb[0].mxu0
          %v1894 = vpop.f32.mrb[0].mxu0
          %v1895 = vadd.f32 0.0, %v1894
          %v1896 = vpop.f32.mrb[0].mxu0
          %1897 = vmatprep.mubr.bf16.mxu0 0
          %1898 = vmatmul.mubr.bf16.gmra.mrb[0].mxu0 %v1565
          %v1899 = vpop.f32.mrb[0].mxu0
          %v1900 = vadd.f32 0.0, %v1899
          %v1901 = vpop.f32.mrb[0].mxu0
          %v1902 = vpop.f32.mrb[0].mxu0
          %v1903 = vadd.f32 0.0, %v1902
          %v1904 = vpop.f32.mrb[0].mxu0
          %1905 = vmatprep.mubr.bf16.mxu0 0
          %1906 = vmatmul.mubr.bf16.gmra.mrb[0].mxu0 %v1582
          %v1907 = vpop.f32.mrb[0].mxu0
          %v1908 = vadd.f32 0.0, %v1907
          %v1909 = vpop.f32.mrb[0].mxu0
          %v1910 = vpop.f32.mrb[0].mxu0
          %v1911 = vadd.f32 0.0, %v1910
          %v1912 = vpop.f32.mrb[0].mxu0
          %1913 = vmatprep.mubr.bf16.mxu0 0
          %1914 = vmatmul.mubr.bf16.gmra.mrb[0].mxu0 %v1599
          %v1915 = vpop.f32.mrb[0].mxu0
          %v1916 = vadd.f32 0.0, %v1915
          %v1917 = vpop.f32.mrb[0].mxu0
          %v1918 = vpop.f32.mrb[0].mxu0
          %v1919 = vadd.f32 0.0, %v1918
          %v1920 = vpop.f32.mrb[0].mxu0
          %1921 = vmatprep.mubr.bf16.mxu0 0
          %1922 = vmatmul.mubr.bf16.gmra.mrb[0].mxu0 %v1616
          %v1923 = vpop.f32.mrb[0].mxu0
          %v1924 = vadd.f32 0.0, %v1923
          %v1925 = vpop.f32.mrb[0].mxu0
          %v1926 = vpop.f32.mrb[0].mxu0
          %v1927 = vadd.f32 0.0, %v1926
          %v1928 = vpop.f32.mrb[0].mxu0
          %1929 = vmatprep.mubr.bf16.mxu0 0
          %1930 = vmatmul.mubr.bf16.gmra.mrb[0].mxu0 %v1633
          %v1931 = vpop.f32.mrb[0].mxu0
          %v1932 = vadd.f32 0.0, %v1931
          %v1933 = vpop.f32.mrb[0].mxu0
          %v1934 = vpop.f32.mrb[0].mxu0
          %v1935 = vadd.f32 0.0, %v1934
          %v1936 = vpop.f32.mrb[0].mxu0
          %1937 = vmatprep.mubr.bf16.mxu0 0
          %1938 = vmatmul.mubr.bf16.gmra.mrb[0].mxu0 %v1650
          %v1939 = vpop.f32.mrb[0].mxu0
          %v1940 = vadd.f32 0.0, %v1939
          %v1941 = vpop.f32.mrb[0].mxu0
          %v1942 = vpop.f32.mrb[0].mxu0
          %v1943 = vadd.f32 0.0, %v1942
          %v1944 = vpop.f32.mrb[0].mxu0
          %1945 = vmatprep.mubr.bf16.mxu0 0
          %1946 = vmatmul.mubr.bf16.gmra.mrb[0].mxu0 %v1667
          %v1947 = vpop.f32.mrb[0].mxu0
          %v1948 = vadd.f32 0.0, %v1947
          %v1949 = vpop.f32.mrb[0].mxu0
          %v1950 = vpop.f32.mrb[0].mxu0
          %v1951 = vadd.f32 0.0, %v1950
          %v1952 = vpop.f32.mrb[0].mxu0
          %1953 = vmatprep.mubr.bf16.mxu0 0
          %1954 = vmatmul.mubr.bf16.gmra.mrb[0].mxu0 %v1684
          %v1955 = vpop.f32.mrb[0].mxu0
          %v1956 = vadd.f32 0.0, %v1955
          %v1957 = vpop.f32.mrb[0].mxu0
          %v1958 = vpop.f32.mrb[0].mxu0
          %v1959 = vadd.f32 0.0, %v1958
          %v1960 = vpop.f32.mrb[0].mxu0
          %1961 = vmatprep.mubr.bf16.mxu0 0
          %1962 = vmatmul.mubr.bf16.gmra.mrb[0].mxu0 %v1701
          %v1963 = vpop.f32.mrb[0].mxu0
          %v1964 = vadd.f32 0.0, %v1963
          %v1965 = vpop.f32.mrb[0].mxu0
          %v1966 = vpop.f32.mrb[0].mxu0
          %v1967 = vadd.f32 0.0, %v1966
          %v1968 = vpop.f32.mrb[0].mxu0
          %1969 = vmatprep.mubr.bf16.mxu0 0
          %1970 = vmatmul.mubr.bf16.gmra.mrb[0].mxu0 %v1718
          %v1971 = vpop.f32.mrb[0].mxu0
          %v1972 = vadd.f32 0.0, %v1971
          %v1973 = vpop.f32.mrb[0].mxu0
          %v1974 = vpop.f32.mrb[0].mxu0
          %v1975 = vadd.f32 0.0, %v1974
          %v1976 = vpop.f32.mrb[0].mxu0
          %1977 = vmatprep.mubr.bf16.mxu0 0
          %1978 = vmatmul.mubr.bf16.gmra.mrb[0].mxu0 %v1735
          %v1979 = vpop.f32.mrb[0].mxu0
          %v1980 = vadd.f32 0.0, %v1979
          %v1981 = vpop.f32.mrb[0].mxu0
          %v1982 = vpop.f32.mrb[0].mxu0
          %v1983 = vadd.f32 0.0, %v1982
          %v1984 = vpop.f32.mrb[0].mxu0
          %1985 = vmatprep.mubr.bf16.mxu0 0
          %1986 = vmatmul.mubr.bf16.gmra.mrb[0].mxu0 %v1752
          %v1987 = vpop.f32.mrb[0].mxu0
          %v1988 = vadd.f32 0.0, %v1987
          %v1989 = vpop.f32.mrb[0].mxu0
          %v1990 = vpop.f32.mrb[0].mxu0
          %v1991 = vadd.f32 0.0, %v1990
          %v1992 = vpop.f32.mrb[0].mxu0
          %1993 = vdwg.mxu0
          %v1994 = vadd.f32 %v1338, %v1868
          %v1995 = vadd.f32 %v1341, %v1871
          %v1996 = vadd.f32 %v1346, %v1876
          %v1997 = vadd.f32 %v1349, %v1879
          %v1998 = vadd.f32 %v1354, %v1884
          %v1999 = vadd.f32 %v1357, %v1887
          %v2000 = vadd.f32 %v1362, %v1892
          %v2001 = vadd.f32 %v1365, %v1895
          %v2002 = vadd.f32 %v1370, %v1900
          %v2003 = vadd.f32 %v1373, %v1903
          %v2004 = vadd.f32 %v1378, %v1908
          %v2005 = vadd.f32 %v1381, %v1911
          %v2006 = vadd.f32 %v1386, %v1916
          %v2007 = vadd.f32 %v1389, %v1919
          %v2008 = vadd.f32 %v1394, %v1924
          %v2009 = vadd.f32 %v1397, %v1927
          %v2010 = vadd.f32 %v1402, %v1932
          %v2011 = vadd.f32 %v1405, %v1935
          %v2012 = vadd.f32 %v1410, %v1940
          %v2013 = vadd.f32 %v1413, %v1943
          %v2014 = vadd.f32 %v1418, %v1948
          %v2015 = vadd.f32 %v1421, %v1951
          %v2016 = vadd.f32 %v1426, %v1956
          %v2017 = vadd.f32 %v1429, %v1959
          %v2018 = vadd.f32 %v1434, %v1964
          %v2019 = vadd.f32 %v1437, %v1967
          %v2020 = vadd.f32 %v1442, %v1972
          %v2021 = vadd.f32 %v1445, %v1975
          %v2022 = vadd.f32 %v1450, %v1980
          %v2023 = vadd.f32 %v1453, %v1983
          %v2024 = vadd.f32 %v1458, %v1988
          %v2025 = vadd.f32 %v1461, %v1991
          %v2026 = vld [vmem:[%s248] sm:$0xf8]
          %v2027 = vld [vmem:[%s248 + $0x8] sm:$0xf]
          %v2028 = vld [vmem:[%s248 + $0x10] sm:$0xf8]
          %v2029 = vld [vmem:[%s248 + $0x18] sm:$0xf]
          %v2030 = vld [vmem:[%s248 + $0x20] sm:$0xf8]
          %v2031 = vld [vmem:[%s248 + $0x28] sm:$0xf]
          %v2032 = vld [vmem:[%s248 + $0x30] sm:$0xf8]
          %v2033 = vld [vmem:[%s248 + $0x38] sm:$0xf]
          %v2034 = vld [vmem:[%s248 + $0x40] sm:$0xf8]
          %v2035 = vld [vmem:[%s248 + $0x48] sm:$0xf]
          %v2036 = vld [vmem:[%s248 + $0x50] sm:$0xf8]
          %v2037 = vld [vmem:[%s248 + $0x58] sm:$0xf]
          %v2038 = vld [vmem:[%s248 + $0x60] sm:$0xf8]
          %v2039 = vld [vmem:[%s248 + $0x68] sm:$0xf]
          %v2040 = vld [vmem:[%s248 + $0x70] sm:$0xf8]
          %v2041 = vld [vmem:[%s248 + $0x78] sm:$0xf]
          %v2042 = vld [vmem:[%s248 + $0x80] sm:$0xf8]
          %v2043 = vld [vmem:[%s248 + $0x88] sm:$0xf]
          %v2044 = vld [vmem:[%s248 + $0x90] sm:$0xf8]
          %v2045 = vld [vmem:[%s248 + $0x98] sm:$0xf]
          %v2046 = vld [vmem:[%s248 + $0xa0] sm:$0xf8]
          %v2047 = vld [vmem:[%s248 + $0xa8] sm:$0xf]
          %v2048 = vld [vmem:[%s248 + $0xb0] sm:$0xf8]
          %v2049 = vld [vmem:[%s248 + $0xb8] sm:$0xf]
          %v2050 = vld [vmem:[%s248 + $0xc0] sm:$0xf8]
          %v2051 = vld [vmem:[%s248 + $0xc8] sm:$0xf]
          %v2052 = vld [vmem:[%s248 + $0xd0] sm:$0xf8]
          %v2053 = vld [vmem:[%s248 + $0xd8] sm:$0xf]
          %v2054 = vld [vmem:[%s248 + $0xe0] sm:$0xf8]
          %v2055 = vld [vmem:[%s248 + $0xe8] sm:$0xf]
          %v2056 = vld [vmem:[%s248 + $0xf0] sm:$0xf8]
          %v2057 = vld [vmem:[%s248 + $0xf8] sm:$0xf]
          %v2059 = vshrl.u32 %v2026, 16
          %v2061 = vrot.slane %v2059, 3
          %v2062 = vshll.u32 %v2026, 16
          %v2064 = vrot.slane %v2062, 4
          %v2065 = vor.u32 %v2061, %v2064
          %v2067 = vshrl.u32 %v2027, 16
          %v2069 = vrot.slane %v2067, 3
          %v2070 = vshll.u32 %v2027, 16
          %v2072 = vrot.slane %v2070, 4
          %v2073 = vor.u32 %v2069, %v2072
          %v2074 = vsel %vm301, %v2065, %v2073
          %v2076 = vshrl.u32 %v2028, 16
          %v2078 = vrot.slane %v2076, 3
          %v2079 = vshll.u32 %v2028, 16
          %v2081 = vrot.slane %v2079, 4
          %v2082 = vor.u32 %v2078, %v2081
          %v2084 = vshrl.u32 %v2029, 16
          %v2086 = vrot.slane %v2084, 3
          %v2087 = vshll.u32 %v2029, 16
          %v2089 = vrot.slane %v2087, 4
          %v2090 = vor.u32 %v2086, %v2089
          %v2091 = vsel %vm301, %v2082, %v2090
          %v2093 = vshrl.u32 %v2030, 16
          %v2095 = vrot.slane %v2093, 3
          %v2096 = vshll.u32 %v2030, 16
          %v2098 = vrot.slane %v2096, 4
          %v2099 = vor.u32 %v2095, %v2098
          %v2101 = vshrl.u32 %v2031, 16
          %v2103 = vrot.slane %v2101, 3
          %v2104 = vshll.u32 %v2031, 16
          %v2106 = vrot.slane %v2104, 4
          %v2107 = vor.u32 %v2103, %v2106
          %v2108 = vsel %vm301, %v2099, %v2107
          %v2110 = vshrl.u32 %v2032, 16
          %v2112 = vrot.slane %v2110, 3
          %v2113 = vshll.u32 %v2032, 16
          %v2115 = vrot.slane %v2113, 4
          %v2116 = vor.u32 %v2112, %v2115
          %v2118 = vshrl.u32 %v2033, 16
          %v2120 = vrot.slane %v2118, 3
          %v2121 = vshll.u32 %v2033, 16
          %v2123 = vrot.slane %v2121, 4
          %v2124 = vor.u32 %v2120, %v2123
          %v2125 = vsel %vm301, %v2116, %v2124
          %v2127 = vshrl.u32 %v2034, 16
          %v2129 = vrot.slane %v2127, 3
          %v2130 = vshll.u32 %v2034, 16
          %v2132 = vrot.slane %v2130, 4
          %v2133 = vor.u32 %v2129, %v2132
          %v2135 = vshrl.u32 %v2035, 16
          %v2137 = vrot.slane %v2135, 3
          %v2138 = vshll.u32 %v2035, 16
          %v2140 = vrot.slane %v2138, 4
          %v2141 = vor.u32 %v2137, %v2140
          %v2142 = vsel %vm301, %v2133, %v2141
          %v2144 = vshrl.u32 %v2036, 16
          %v2146 = vrot.slane %v2144, 3
          %v2147 = vshll.u32 %v2036, 16
          %v2149 = vrot.slane %v2147, 4
          %v2150 = vor.u32 %v2146, %v2149
          %v2152 = vshrl.u32 %v2037, 16
          %v2154 = vrot.slane %v2152, 3
          %v2155 = vshll.u32 %v2037, 16
          %v2157 = vrot.slane %v2155, 4
          %v2158 = vor.u32 %v2154, %v2157
          %v2159 = vsel %vm301, %v2150, %v2158
          %v2161 = vshrl.u32 %v2038, 16
          %v2163 = vrot.slane %v2161, 3
          %v2164 = vshll.u32 %v2038, 16
          %v2166 = vrot.slane %v2164, 4
          %v2167 = vor.u32 %v2163, %v2166
          %v2169 = vshrl.u32 %v2039, 16
          %v2171 = vrot.slane %v2169, 3
          %v2172 = vshll.u32 %v2039, 16
          %v2174 = vrot.slane %v2172, 4
          %v2175 = vor.u32 %v2171, %v2174
          %v2176 = vsel %vm301, %v2167, %v2175
          %v2178 = vshrl.u32 %v2040, 16
          %v2180 = vrot.slane %v2178, 3
          %v2181 = vshll.u32 %v2040, 16
          %v2183 = vrot.slane %v2181, 4
          %v2184 = vor.u32 %v2180, %v2183
          %v2186 = vshrl.u32 %v2041, 16
          %v2188 = vrot.slane %v2186, 3
          %v2189 = vshll.u32 %v2041, 16
          %v2191 = vrot.slane %v2189, 4
          %v2192 = vor.u32 %v2188, %v2191
          %v2193 = vsel %vm301, %v2184, %v2192
          %v2195 = vshrl.u32 %v2042, 16
          %v2197 = vrot.slane %v2195, 3
          %v2198 = vshll.u32 %v2042, 16
          %v2200 = vrot.slane %v2198, 4
          %v2201 = vor.u32 %v2197, %v2200
          %v2203 = vshrl.u32 %v2043, 16
          %v2205 = vrot.slane %v2203, 3
          %v2206 = vshll.u32 %v2043, 16
          %v2208 = vrot.slane %v2206, 4
          %v2209 = vor.u32 %v2205, %v2208
          %v2210 = vsel %vm301, %v2201, %v2209
          %v2212 = vshrl.u32 %v2044, 16
          %v2214 = vrot.slane %v2212, 3
          %v2215 = vshll.u32 %v2044, 16
          %v2217 = vrot.slane %v2215, 4
          %v2218 = vor.u32 %v2214, %v2217
          %v2220 = vshrl.u32 %v2045, 16
          %v2222 = vrot.slane %v2220, 3
          %v2223 = vshll.u32 %v2045, 16
          %v2225 = vrot.slane %v2223, 4
          %v2226 = vor.u32 %v2222, %v2225
          %v2227 = vsel %vm301, %v2218, %v2226
          %v2229 = vshrl.u32 %v2046, 16
          %v2231 = vrot.slane %v2229, 3
          %v2232 = vshll.u32 %v2046, 16
          %v2234 = vrot.slane %v2232, 4
          %v2235 = vor.u32 %v2231, %v2234
          %v2237 = vshrl.u32 %v2047, 16
          %v2239 = vrot.slane %v2237, 3
          %v2240 = vshll.u32 %v2047, 16
          %v2242 = vrot.slane %v2240, 4
          %v2243 = vor.u32 %v2239, %v2242
          %v2244 = vsel %vm301, %v2235, %v2243
          %v2246 = vshrl.u32 %v2048, 16
          %v2248 = vrot.slane %v2246, 3
          %v2249 = vshll.u32 %v2048, 16
          %v2251 = vrot.slane %v2249, 4
          %v2252 = vor.u32 %v2248, %v2251
          %v2254 = vshrl.u32 %v2049, 16
          %v2256 = vrot.slane %v2254, 3
          %v2257 = vshll.u32 %v2049, 16
          %v2259 = vrot.slane %v2257, 4
          %v2260 = vor.u32 %v2256, %v2259
          %v2261 = vsel %vm301, %v2252, %v2260
          %v2263 = vshrl.u32 %v2050, 16
          %v2265 = vrot.slane %v2263, 3
          %v2266 = vshll.u32 %v2050, 16
          %v2268 = vrot.slane %v2266, 4
          %v2269 = vor.u32 %v2265, %v2268
          %v2271 = vshrl.u32 %v2051, 16
          %v2273 = vrot.slane %v2271, 3
          %v2274 = vshll.u32 %v2051, 16
          %v2276 = vrot.slane %v2274, 4
          %v2277 = vor.u32 %v2273, %v2276
          %v2278 = vsel %vm301, %v2269, %v2277
          %v2280 = vshrl.u32 %v2052, 16
          %v2282 = vrot.slane %v2280, 3
          %v2283 = vshll.u32 %v2052, 16
          %v2285 = vrot.slane %v2283, 4
          %v2286 = vor.u32 %v2282, %v2285
          %v2288 = vshrl.u32 %v2053, 16
          %v2290 = vrot.slane %v2288, 3
          %v2291 = vshll.u32 %v2053, 16
          %v2293 = vrot.slane %v2291, 4
          %v2294 = vor.u32 %v2290, %v2293
          %v2295 = vsel %vm301, %v2286, %v2294
          %v2297 = vshrl.u32 %v2054, 16
          %v2299 = vrot.slane %v2297, 3
          %v2300 = vshll.u32 %v2054, 16
          %v2302 = vrot.slane %v2300, 4
          %v2303 = vor.u32 %v2299, %v2302
          %v2305 = vshrl.u32 %v2055, 16
          %v2307 = vrot.slane %v2305, 3
          %v2308 = vshll.u32 %v2055, 16
          %v2310 = vrot.slane %v2308, 4
          %v2311 = vor.u32 %v2307, %v2310
          %v2312 = vsel %vm301, %v2303, %v2311
          %v2314 = vshrl.u32 %v2056, 16
          %v2316 = vrot.slane %v2314, 3
          %v2317 = vshll.u32 %v2056, 16
          %v2319 = vrot.slane %v2317, 4
          %v2320 = vor.u32 %v2316, %v2319
          %v2322 = vshrl.u32 %v2057, 16
          %v2324 = vrot.slane %v2322, 3
          %v2325 = vshll.u32 %v2057, 16
          %v2327 = vrot.slane %v2325, 4
          %v2328 = vor.u32 %v2324, %v2327
          %v2329 = vsel %vm301, %v2320, %v2328
          %v2346 = vld [vmem:[%s1 + $0xc0] sm:$0xf]
          %v2347 = vld [vmem:[%s1 + $0xc4] sm:$0xf]
          %v2348 = vld [vmem:[%s1 + $0xc8] sm:$0xf]
          %v2349 = vld [vmem:[%s1 + $0xcc] sm:$0xf]
          %v2350 = vld [vmem:[%s1 + $0xd0] sm:$0xf]
          %v2351 = vld [vmem:[%s1 + $0xd4] sm:$0xf]
          %v2352 = vld [vmem:[%s1 + $0xd8] sm:$0xf]
          %v2353 = vld [vmem:[%s1 + $0xdc] sm:$0xf]
          %v2354 = vld [vmem:[%s1 + $0xe0] sm:$0xf]
          %v2355 = vld [vmem:[%s1 + $0xe4] sm:$0xf]
          %v2356 = vld [vmem:[%s1 + $0xe8] sm:$0xf]
          %v2357 = vld [vmem:[%s1 + $0xec] sm:$0xf]
          %v2358 = vld [vmem:[%s1 + $0xf0] sm:$0xf]
          %v2359 = vld [vmem:[%s1 + $0xf4] sm:$0xf]
          %v2360 = vld [vmem:[%s1 + $0xf8] sm:$0xf]
          %v2361 = vld [vmem:[%s1 + $0xfc] sm:$0xf]
          %v2378 = vunpack.c.l.b16 %v2346
          %v2379 = vunpack.c.l.b16 %v2347
          %v2380 = vunpack.c.l.b16 %v2348
          %v2381 = vunpack.c.l.b16 %v2349
          %v2382 = vunpack.c.l.b16 %v2350
          %v2383 = vunpack.c.l.b16 %v2351
          %v2384 = vunpack.c.l.b16 %v2352
          %v2385 = vunpack.c.l.b16 %v2353
          %v2386 = vunpack.c.l.b16 %v2354
          %v2387 = vunpack.c.l.b16 %v2355
          %v2388 = vunpack.c.l.b16 %v2356
          %v2389 = vunpack.c.l.b16 %v2357
          %v2390 = vunpack.c.l.b16 %v2358
          %v2391 = vunpack.c.l.b16 %v2359
          %v2392 = vunpack.c.l.b16 %v2360
          %v2393 = vunpack.c.l.b16 %v2361
          %v2394 = vpack.c.b16 %v2379, %v2378
          %v2395 = vpack.c.b16 %v2381, %v2380
          %v2396 = vpack.c.b16 %v2383, %v2382
          %v2397 = vpack.c.b16 %v2385, %v2384
          %v2398 = vpack.c.b16 %v2387, %v2386
          %v2399 = vpack.c.b16 %v2389, %v2388
          %v2400 = vpack.c.b16 %v2391, %v2390
          %v2401 = vpack.c.b16 %v2393, %v2392
          %2410 = vmatprep.subr.bf16.mxu0 0
          %2411 = vmatpush1.bf16.msra.mxu0 %v2394
          %2412 = vmatprep.subr.bf16.mxu0 0
          %2413 = vmatpush1.bf16.msra.mxu0 %v2395
          %2414 = vmatprep.subr.bf16.mxu0 0
          %2415 = vmatpush1.bf16.msra.mxu0 %v2396
          %2416 = vmatprep.subr.bf16.mxu0 0
          %2417 = vmatpush1.bf16.msra.mxu0 %v2397
          %2418 = vmatprep.subr.bf16.mxu0 0
          %2419 = vmatpush1.bf16.msra.mxu0 %v2398
          %2420 = vmatprep.subr.bf16.mxu0 0
          %2421 = vmatpush1.bf16.msra.mxu0 %v2399
          %2422 = vmatprep.subr.bf16.mxu0 0
          %2423 = vmatpush1.bf16.msra.mxu0 %v2400
          %2424 = vmatprep.subr.bf16.mxu0 0
          %2425 = vmatpush1.bf16.msra.mxu0 %v2401
          %2426 = vmatprep.subr.bf16.mxu0 0
          %2427 = vmatpush1.bf16.msra.mxu0 0
          %2428 = vmatprep.subr.bf16.mxu0 0
          %2429 = vmatpush1.bf16.msra.mxu0 0
          %2430 = vmatprep.subr.bf16.mxu0 0
          %2431 = vmatpush1.bf16.msra.mxu0 0
          %2432 = vmatprep.subr.bf16.mxu0 0
          %2433 = vmatpush1.bf16.msra.mxu0 0
          %2434 = vmatprep.subr.bf16.mxu0 0
          %2435 = vmatpush1.bf16.msra.mxu0 0
          %2436 = vmatprep.subr.bf16.mxu0 0
          %2437 = vmatpush1.bf16.msra.mxu0 0
          %2438 = vmatprep.subr.bf16.mxu0 0
          %2439 = vmatpush1.bf16.msra.mxu0 0
          %2440 = vmatprep.subr.bf16.mxu0 0
          %2441 = vmatpush1.bf16.msra.mxu0 0
          %2442 = vmatprep.mubr.bf16.mxu0 0
          %2443 = vmatmul.mubr.bf16.gmra.mrb[0].mxu0 %v2074
          %v2444 = vpop.f32.mrb[0].mxu0
          %v2445 = vadd.f32 0.0, %v2444
          %v2446 = vpop.f32.mrb[0].mxu0
          %v2447 = vpop.f32.mrb[0].mxu0
          %v2448 = vadd.f32 0.0, %v2447
          %v2449 = vpop.f32.mrb[0].mxu0
          %2450 = vmatprep.mubr.bf16.mxu0 0
          %2451 = vmatmul.mubr.bf16.gmra.mrb[0].mxu0 %v2091
          %v2452 = vpop.f32.mrb[0].mxu0
          %v2453 = vadd.f32 0.0, %v2452
          %v2454 = vpop.f32.mrb[0].mxu0
          %v2455 = vpop.f32.mrb[0].mxu0
          %v2456 = vadd.f32 0.0, %v2455
          %v2457 = vpop.f32.mrb[0].mxu0
          %2458 = vmatprep.mubr.bf16.mxu0 0
          %2459 = vmatmul.mubr.bf16.gmra.mrb[0].mxu0 %v2108
          %v2460 = vpop.f32.mrb[0].mxu0
          %v2461 = vadd.f32 0.0, %v2460
          %v2462 = vpop.f32.mrb[0].mxu0
          %v2463 = vpop.f32.mrb[0].mxu0
          %v2464 = vadd.f32 0.0, %v2463
          %v2465 = vpop.f32.mrb[0].mxu0
          %2466 = vmatprep.mubr.bf16.mxu0 0
          %2467 = vmatmul.mubr.bf16.gmra.mrb[0].mxu0 %v2125
          %v2468 = vpop.f32.mrb[0].mxu0
          %v2469 = vadd.f32 0.0, %v2468
          %v2470 = vpop.f32.mrb[0].mxu0
          %v2471 = vpop.f32.mrb[0].mxu0
          %v2472 = vadd.f32 0.0, %v2471
          %v2473 = vpop.f32.mrb[0].mxu0
          %2474 = vmatprep.mubr.bf16.mxu0 0
          %2475 = vmatmul.mubr.bf16.gmra.mrb[0].mxu0 %v2142
          %v2476 = vpop.f32.mrb[0].mxu0
          %v2477 = vadd.f32 0.0, %v2476
          %v2478 = vpop.f32.mrb[0].mxu0
          %v2479 = vpop.f32.mrb[0].mxu0
          %v2480 = vadd.f32 0.0, %v2479
          %v2481 = vpop.f32.mrb[0].mxu0
          %2482 = vmatprep.mubr.bf16.mxu0 0
          %2483 = vmatmul.mubr.bf16.gmra.mrb[0].mxu0 %v2159
          %v2484 = vpop.f32.mrb[0].mxu0
          %v2485 = vadd.f32 0.0, %v2484
          %v2486 = vpop.f32.mrb[0].mxu0
          %v2487 = vpop.f32.mrb[0].mxu0
          %v2488 = vadd.f32 0.0, %v2487
          %v2489 = vpop.f32.mrb[0].mxu0
          %2490 = vmatprep.mubr.bf16.mxu0 0
          %2491 = vmatmul.mubr.bf16.gmra.mrb[0].mxu0 %v2176
          %v2492 = vpop.f32.mrb[0].mxu0
          %v2493 = vadd.f32 0.0, %v2492
          %v2494 = vpop.f32.mrb[0].mxu0
          %v2495 = vpop.f32.mrb[0].mxu0
          %v2496 = vadd.f32 0.0, %v2495
          %v2497 = vpop.f32.mrb[0].mxu0
          %2498 = vmatprep.mubr.bf16.mxu0 0
          %2499 = vmatmul.mubr.bf16.gmra.mrb[0].mxu0 %v2193
          %v2500 = vpop.f32.mrb[0].mxu0
          %v2501 = vadd.f32 0.0, %v2500
          %v2502 = vpop.f32.mrb[0].mxu0
          %v2503 = vpop.f32.mrb[0].mxu0
          %v2504 = vadd.f32 0.0, %v2503
          %v2505 = vpop.f32.mrb[0].mxu0
          %2506 = vmatprep.mubr.bf16.mxu0 0
          %2507 = vmatmul.mubr.bf16.gmra.mrb[0].mxu0 %v2210
          %v2508 = vpop.f32.mrb[0].mxu0
          %v2509 = vadd.f32 0.0, %v2508
          %v2510 = vpop.f32.mrb[0].mxu0
          %v2511 = vpop.f32.mrb[0].mxu0
          %v2512 = vadd.f32 0.0, %v2511
          %v2513 = vpop.f32.mrb[0].mxu0
          %2514 = vmatprep.mubr.bf16.mxu0 0
          %2515 = vmatmul.mubr.bf16.gmra.mrb[0].mxu0 %v2227
          %v2516 = vpop.f32.mrb[0].mxu0
          %v2517 = vadd.f32 0.0, %v2516
          %v2518 = vpop.f32.mrb[0].mxu0
          %v2519 = vpop.f32.mrb[0].mxu0
          %v2520 = vadd.f32 0.0, %v2519
          %v2521 = vpop.f32.mrb[0].mxu0
          %2522 = vmatprep.mubr.bf16.mxu0 0
          %2523 = vmatmul.mubr.bf16.gmra.mrb[0].mxu0 %v2244
          %v2524 = vpop.f32.mrb[0].mxu0
          %v2525 = vadd.f32 0.0, %v2524
          %v2526 = vpop.f32.mrb[0].mxu0
          %v2527 = vpop.f32.mrb[0].mxu0
          %v2528 = vadd.f32 0.0, %v2527
          %v2529 = vpop.f32.mrb[0].mxu0
          %2530 = vmatprep.mubr.bf16.mxu0 0
          %2531 = vmatmul.mubr.bf16.gmra.mrb[0].mxu0 %v2261
          %v2532 = vpop.f32.mrb[0].mxu0
          %v2533 = vadd.f32 0.0, %v2532
          %v2534 = vpop.f32.mrb[0].mxu0
          %v2535 = vpop.f32.mrb[0].mxu0
          %v2536 = vadd.f32 0.0, %v2535
          %v2537 = vpop.f32.mrb[0].mxu0
          %2538 = vmatprep.mubr.bf16.mxu0 0
          %2539 = vmatmul.mubr.bf16.gmra.mrb[0].mxu0 %v2278
          %v2540 = vpop.f32.mrb[0].mxu0
          %v2541 = vadd.f32 0.0, %v2540
          %v2542 = vpop.f32.mrb[0].mxu0
          %v2543 = vpop.f32.mrb[0].mxu0
          %v2544 = vadd.f32 0.0, %v2543
          %v2545 = vpop.f32.mrb[0].mxu0
          %2546 = vmatprep.mubr.bf16.mxu0 0
          %2547 = vmatmul.mubr.bf16.gmra.mrb[0].mxu0 %v2295
          %v2548 = vpop.f32.mrb[0].mxu0
          %v2549 = vadd.f32 0.0, %v2548
          %v2550 = vpop.f32.mrb[0].mxu0
          %v2551 = vpop.f32.mrb[0].mxu0
          %v2552 = vadd.f32 0.0, %v2551
          %v2553 = vpop.f32.mrb[0].mxu0
          %2554 = vmatprep.mubr.bf16.mxu0 0
          %2555 = vmatmul.mubr.bf16.gmra.mrb[0].mxu0 %v2312
          %v2556 = vpop.f32.mrb[0].mxu0
          %v2557 = vadd.f32 0.0, %v2556
          %v2558 = vpop.f32.mrb[0].mxu0
          %v2559 = vpop.f32.mrb[0].mxu0
          %v2560 = vadd.f32 0.0, %v2559
          %v2561 = vpop.f32.mrb[0].mxu0
          %2562 = vmatprep.mubr.bf16.mxu0 0
          %2563 = vmatmul.mubr.bf16.gmra.mrb[0].mxu0 %v2329
          %v2564 = vpop.f32.mrb[0].mxu0
          %v2565 = vadd.f32 0.0, %v2564
          %v2566 = vpop.f32.mrb[0].mxu0
          %v2567 = vpop.f32.mrb[0].mxu0
          %v2568 = vadd.f32 0.0, %v2567
          %v2569 = vpop.f32.mrb[0].mxu0
          %2570 = vdwg.mxu0
          %v2571 = vadd.f32 %v1994, %v2445
          %v2572 = vadd.f32 %v1995, %v2448
          %v2573 = vadd.f32 %v1996, %v2453
          %v2574 = vadd.f32 %v1997, %v2456
          %v2575 = vadd.f32 %v1998, %v2461
          %v2576 = vadd.f32 %v1999, %v2464
          %v2577 = vadd.f32 %v2000, %v2469
          %v2578 = vadd.f32 %v2001, %v2472
          %v2579 = vadd.f32 %v2002, %v2477
          %v2580 = vadd.f32 %v2003, %v2480
          %v2581 = vadd.f32 %v2004, %v2485
          %v2582 = vadd.f32 %v2005, %v2488
          %v2583 = vadd.f32 %v2006, %v2493
          %v2584 = vadd.f32 %v2007, %v2496
          %v2585 = vadd.f32 %v2008, %v2501
          %v2586 = vadd.f32 %v2009, %v2504
          %v2587 = vadd.f32 %v2010, %v2509
          %v2588 = vadd.f32 %v2011, %v2512
          %v2589 = vadd.f32 %v2012, %v2517
          %v2590 = vadd.f32 %v2013, %v2520
          %v2591 = vadd.f32 %v2014, %v2525
          %v2592 = vadd.f32 %v2015, %v2528
          %v2593 = vadd.f32 %v2016, %v2533
          %v2594 = vadd.f32 %v2017, %v2536
          %v2595 = vadd.f32 %v2018, %v2541
          %v2596 = vadd.f32 %v2019, %v2544
          %v2597 = vadd.f32 %v2020, %v2549
          %v2598 = vadd.f32 %v2021, %v2552
          %v2599 = vadd.f32 %v2022, %v2557
          %v2600 = vadd.f32 %v2023, %v2560
          %v2601 = vadd.f32 %v2024, %v2565
          %v2602 = vadd.f32 %v2025, %v2568
          %v2603 = vld [vmem:[%s248] sm:$0xf0]
          %v2604 = vld [vmem:[%s248 + $0x10] sm:$0xf0]
          %v2605 = vld [vmem:[%s248 + $0x20] sm:$0xf0]
          %v2606 = vld [vmem:[%s248 + $0x30] sm:$0xf0]
          %v2607 = vld [vmem:[%s248 + $0x40] sm:$0xf0]
          %v2608 = vld [vmem:[%s248 + $0x50] sm:$0xf0]
          %v2609 = vld [vmem:[%s248 + $0x60] sm:$0xf0]
          %v2610 = vld [vmem:[%s248 + $0x70] sm:$0xf0]
          %v2611 = vld [vmem:[%s248 + $0x80] sm:$0xf0]
          %v2612 = vld [vmem:[%s248 + $0x90] sm:$0xf0]
          %v2613 = vld [vmem:[%s248 + $0xa0] sm:$0xf0]
          %v2614 = vld [vmem:[%s248 + $0xb0] sm:$0xf0]
          %v2615 = vld [vmem:[%s248 + $0xc0] sm:$0xf0]
          %v2616 = vld [vmem:[%s248 + $0xd0] sm:$0xf0]
          %v2617 = vld [vmem:[%s248 + $0xe0] sm:$0xf0]
          %v2618 = vld [vmem:[%s248 + $0xf0] sm:$0xf0]
          %v2651 = vrot.slane %v2603, 4
          %v2652 = vrot.slane %v2027, 4
          %v2653 = vsel %vm965, %v2651, %v2652
          %v2654 = vrot.slane %v2604, 4
          %v2655 = vrot.slane %v2029, 4
          %v2656 = vsel %vm965, %v2654, %v2655
          %v2657 = vrot.slane %v2605, 4
          %v2658 = vrot.slane %v2031, 4
          %v2659 = vsel %vm965, %v2657, %v2658
          %v2660 = vrot.slane %v2606, 4
          %v2661 = vrot.slane %v2033, 4
          %v2662 = vsel %vm965, %v2660, %v2661
          %v2663 = vrot.slane %v2607, 4
          %v2664 = vrot.slane %v2035, 4
          %v2665 = vsel %vm965, %v2663, %v2664
          %v2666 = vrot.slane %v2608, 4
          %v2667 = vrot.slane %v2037, 4
          %v2668 = vsel %vm965, %v2666, %v2667
          %v2669 = vrot.slane %v2609, 4
          %v2670 = vrot.slane %v2039, 4
          %v2671 = vsel %vm965, %v2669, %v2670
          %v2672 = vrot.slane %v2610, 4
          %v2673 = vrot.slane %v2041, 4
          %v2674 = vsel %vm965, %v2672, %v2673
          %v2675 = vrot.slane %v2611, 4
          %v2676 = vrot.slane %v2043, 4
          %v2677 = vsel %vm965, %v2675, %v2676
          %v2678 = vrot.slane %v2612, 4
          %v2679 = vrot.slane %v2045, 4
          %v2680 = vsel %vm965, %v2678, %v2679
          %v2681 = vrot.slane %v2613, 4
          %v2682 = vrot.slane %v2047, 4
          %v2683 = vsel %vm965, %v2681, %v2682
          %v2684 = vrot.slane %v2614, 4
          %v2685 = vrot.slane %v2049, 4
          %v2686 = vsel %vm965, %v2684, %v2685
          %v2687 = vrot.slane %v2615, 4
          %v2688 = vrot.slane %v2051, 4
          %v2689 = vsel %vm965, %v2687, %v2688
          %v2690 = vrot.slane %v2616, 4
          %v2691 = vrot.slane %v2053, 4
          %v2692 = vsel %vm965, %v2690, %v2691
          %v2693 = vrot.slane %v2617, 4
          %v2694 = vrot.slane %v2055, 4
          %v2695 = vsel %vm965, %v2693, %v2694
          %v2696 = vrot.slane %v2618, 4
          %v2697 = vrot.slane %v2057, 4
          %v2698 = vsel %vm965, %v2696, %v2697
          %v2715 = vld [vmem:[%s1 + $0x100] sm:$0xf]
          %v2716 = vld [vmem:[%s1 + $0x104] sm:$0xf]
          %v2717 = vld [vmem:[%s1 + $0x108] sm:$0xf]
          %v2718 = vld [vmem:[%s1 + $0x10c] sm:$0xf]
          %v2719 = vld [vmem:[%s1 + $0x110] sm:$0xf]
          %v2720 = vld [vmem:[%s1 + $0x114] sm:$0xf]
          %v2721 = vld [vmem:[%s1 + $0x118] sm:$0xf]
          %v2722 = vld [vmem:[%s1 + $0x11c] sm:$0xf]
          %v2723 = vld [vmem:[%s1 + $0x120] sm:$0xf]
          %v2724 = vld [vmem:[%s1 + $0x124] sm:$0xf]
          %v2725 = vld [vmem:[%s1 + $0x128] sm:$0xf]
          %v2726 = vld [vmem:[%s1 + $0x12c] sm:$0xf]
          %v2727 = vld [vmem:[%s1 + $0x130] sm:$0xf]
          %v2728 = vld [vmem:[%s1 + $0x134] sm:$0xf]
          %v2729 = vld [vmem:[%s1 + $0x138] sm:$0xf]
          %v2730 = vld [vmem:[%s1 + $0x13c] sm:$0xf]
          %v2747 = vunpack.c.l.b16 %v2715
          %v2748 = vunpack.c.l.b16 %v2716
          %v2749 = vunpack.c.l.b16 %v2717
          %v2750 = vunpack.c.l.b16 %v2718
          %v2751 = vunpack.c.l.b16 %v2719
          %v2752 = vunpack.c.l.b16 %v2720
          %v2753 = vunpack.c.l.b16 %v2721
          %v2754 = vunpack.c.l.b16 %v2722
          %v2755 = vunpack.c.l.b16 %v2723
          %v2756 = vunpack.c.l.b16 %v2724
          %v2757 = vunpack.c.l.b16 %v2725
          %v2758 = vunpack.c.l.b16 %v2726
          %v2759 = vunpack.c.l.b16 %v2727
          %v2760 = vunpack.c.l.b16 %v2728
          %v2761 = vunpack.c.l.b16 %v2729
          %v2762 = vunpack.c.l.b16 %v2730
          %v2763 = vpack.c.b16 %v2748, %v2747
          %v2764 = vpack.c.b16 %v2750, %v2749
          %v2765 = vpack.c.b16 %v2752, %v2751
          %v2766 = vpack.c.b16 %v2754, %v2753
          %v2767 = vpack.c.b16 %v2756, %v2755
          %v2768 = vpack.c.b16 %v2758, %v2757
          %v2769 = vpack.c.b16 %v2760, %v2759
          %v2770 = vpack.c.b16 %v2762, %v2761
          %2779 = vmatprep.subr.bf16.mxu0 0
          %2780 = vmatpush1.bf16.msra.mxu0 %v2763
          %2781 = vmatprep.subr.bf16.mxu0 0
          %2782 = vmatpush1.bf16.msra.mxu0 %v2764
          %2783 = vmatprep.subr.bf16.mxu0 0
          %2784 = vmatpush1.bf16.msra.mxu0 %v2765
          %2785 = vmatprep.subr.bf16.mxu0 0
          %2786 = vmatpush1.bf16.msra.mxu0 %v2766
          %2787 = vmatprep.subr.bf16.mxu0 0
          %2788 = vmatpush1.bf16.msra.mxu0 %v2767
          %2789 = vmatprep.subr.bf16.mxu0 0
          %2790 = vmatpush1.bf16.msra.mxu0 %v2768
          %2791 = vmatprep.subr.bf16.mxu0 0
          %2792 = vmatpush1.bf16.msra.mxu0 %v2769
          %2793 = vmatprep.subr.bf16.mxu0 0
          %2794 = vmatpush1.bf16.msra.mxu0 %v2770
          %2795 = vmatprep.subr.bf16.mxu0 0
          %2796 = vmatpush1.bf16.msra.mxu0 0
          %2797 = vmatprep.subr.bf16.mxu0 0
          %2798 = vmatpush1.bf16.msra.mxu0 0
          %2799 = vmatprep.subr.bf16.mxu0 0
          %2800 = vmatpush1.bf16.msra.mxu0 0
          %2801 = vmatprep.subr.bf16.mxu0 0
          %2802 = vmatpush1.bf16.msra.mxu0 0
          %2803 = vmatprep.subr.bf16.mxu0 0
          %2804 = vmatpush1.bf16.msra.mxu0 0
          %2805 = vmatprep.subr.bf16.mxu0 0
          %2806 = vmatpush1.bf16.msra.mxu0 0
          %2807 = vmatprep.subr.bf16.mxu0 0
          %2808 = vmatpush1.bf16.msra.mxu0 0
          %2809 = vmatprep.subr.bf16.mxu0 0
          %2810 = vmatpush1.bf16.msra.mxu0 0
          %2811 = vmatprep.mubr.bf16.mxu0 0
          %2812 = vmatmul.mubr.bf16.gmra.mrb[0].mxu0 %v2653
          %v2813 = vpop.f32.mrb[0].mxu0
          %v2814 = vadd.f32 0.0, %v2813
          %v2815 = vpop.f32.mrb[0].mxu0
          %v2816 = vpop.f32.mrb[0].mxu0
          %v2817 = vadd.f32 0.0, %v2816
          %v2818 = vpop.f32.mrb[0].mxu0
          %2819 = vmatprep.mubr.bf16.mxu0 0
          %2820 = vmatmul.mubr.bf16.gmra.mrb[0].mxu0 %v2656
          %v2821 = vpop.f32.mrb[0].mxu0
          %v2822 = vadd.f32 0.0, %v2821
          %v2823 = vpop.f32.mrb[0].mxu0
          %v2824 = vpop.f32.mrb[0].mxu0
          %v2825 = vadd.f32 0.0, %v2824
          %v2826 = vpop.f32.mrb[0].mxu0
          %2827 = vmatprep.mubr.bf16.mxu0 0
          %2828 = vmatmul.mubr.bf16.gmra.mrb[0].mxu0 %v2659
          %v2829 = vpop.f32.mrb[0].mxu0
          %v2830 = vadd.f32 0.0, %v2829
          %v2831 = vpop.f32.mrb[0].mxu0
          %v2832 = vpop.f32.mrb[0].mxu0
          %v2833 = vadd.f32 0.0, %v2832
          %v2834 = vpop.f32.mrb[0].mxu0
          %2835 = vmatprep.mubr.bf16.mxu0 0
          %2836 = vmatmul.mubr.bf16.gmra.mrb[0].mxu0 %v2662
          %v2837 = vpop.f32.mrb[0].mxu0
          %v2838 = vadd.f32 0.0, %v2837
          %v2839 = vpop.f32.mrb[0].mxu0
          %v2840 = vpop.f32.mrb[0].mxu0
          %v2841 = vadd.f32 0.0, %v2840
          %v2842 = vpop.f32.mrb[0].mxu0
          %2843 = vmatprep.mubr.bf16.mxu0 0
          %2844 = vmatmul.mubr.bf16.gmra.mrb[0].mxu0 %v2665
          %v2845 = vpop.f32.mrb[0].mxu0
          %v2846 = vadd.f32 0.0, %v2845
          %v2847 = vpop.f32.mrb[0].mxu0
          %v2848 = vpop.f32.mrb[0].mxu0
          %v2849 = vadd.f32 0.0, %v2848
          %v2850 = vpop.f32.mrb[0].mxu0
          %2851 = vmatprep.mubr.bf16.mxu0 0
          %2852 = vmatmul.mubr.bf16.gmra.mrb[0].mxu0 %v2668
          %v2853 = vpop.f32.mrb[0].mxu0
          %v2854 = vadd.f32 0.0, %v2853
          %v2855 = vpop.f32.mrb[0].mxu0
          %v2856 = vpop.f32.mrb[0].mxu0
          %v2857 = vadd.f32 0.0, %v2856
          %v2858 = vpop.f32.mrb[0].mxu0
          %2859 = vmatprep.mubr.bf16.mxu0 0
          %2860 = vmatmul.mubr.bf16.gmra.mrb[0].mxu0 %v2671
          %v2861 = vpop.f32.mrb[0].mxu0
          %v2862 = vadd.f32 0.0, %v2861
          %v2863 = vpop.f32.mrb[0].mxu0
          %v2864 = vpop.f32.mrb[0].mxu0
          %v2865 = vadd.f32 0.0, %v2864
          %v2866 = vpop.f32.mrb[0].mxu0
          %2867 = vmatprep.mubr.bf16.mxu0 0
          %2868 = vmatmul.mubr.bf16.gmra.mrb[0].mxu0 %v2674
          %v2869 = vpop.f32.mrb[0].mxu0
          %v2870 = vadd.f32 0.0, %v2869
          %v2871 = vpop.f32.mrb[0].mxu0
          %v2872 = vpop.f32.mrb[0].mxu0
          %v2873 = vadd.f32 0.0, %v2872
          %v2874 = vpop.f32.mrb[0].mxu0
          %2875 = vmatprep.mubr.bf16.mxu0 0
          %2876 = vmatmul.mubr.bf16.gmra.mrb[0].mxu0 %v2677
          %v2877 = vpop.f32.mrb[0].mxu0
          %v2878 = vadd.f32 0.0, %v2877
          %v2879 = vpop.f32.mrb[0].mxu0
          %v2880 = vpop.f32.mrb[0].mxu0
          %v2881 = vadd.f32 0.0, %v2880
          %v2882 = vpop.f32.mrb[0].mxu0
          %2883 = vmatprep.mubr.bf16.mxu0 0
          %2884 = vmatmul.mubr.bf16.gmra.mrb[0].mxu0 %v2680
          %v2885 = vpop.f32.mrb[0].mxu0
          %v2886 = vadd.f32 0.0, %v2885
          %v2887 = vpop.f32.mrb[0].mxu0
          %v2888 = vpop.f32.mrb[0].mxu0
          %v2889 = vadd.f32 0.0, %v2888
          %v2890 = vpop.f32.mrb[0].mxu0
          %2891 = vmatprep.mubr.bf16.mxu0 0
          %2892 = vmatmul.mubr.bf16.gmra.mrb[0].mxu0 %v2683
          %v2893 = vpop.f32.mrb[0].mxu0
          %v2894 = vadd.f32 0.0, %v2893
          %v2895 = vpop.f32.mrb[0].mxu0
          %v2896 = vpop.f32.mrb[0].mxu0
          %v2897 = vadd.f32 0.0, %v2896
          %v2898 = vpop.f32.mrb[0].mxu0
          %2899 = vmatprep.mubr.bf16.mxu0 0
          %2900 = vmatmul.mubr.bf16.gmra.mrb[0].mxu0 %v2686
          %v2901 = vpop.f32.mrb[0].mxu0
          %v2902 = vadd.f32 0.0, %v2901
          %v2903 = vpop.f32.mrb[0].mxu0
          %v2904 = vpop.f32.mrb[0].mxu0
          %v2905 = vadd.f32 0.0, %v2904
          %v2906 = vpop.f32.mrb[0].mxu0
          %2907 = vmatprep.mubr.bf16.mxu0 0
          %2908 = vmatmul.mubr.bf16.gmra.mrb[0].mxu0 %v2689
          %v2909 = vpop.f32.mrb[0].mxu0
          %v2910 = vadd.f32 0.0, %v2909
          %v2911 = vpop.f32.mrb[0].mxu0
          %v2912 = vpop.f32.mrb[0].mxu0
          %v2913 = vadd.f32 0.0, %v2912
          %v2914 = vpop.f32.mrb[0].mxu0
          %2915 = vmatprep.mubr.bf16.mxu0 0
          %2916 = vmatmul.mubr.bf16.gmra.mrb[0].mxu0 %v2692
          %v2917 = vpop.f32.mrb[0].mxu0
          %v2918 = vadd.f32 0.0, %v2917
          %v2919 = vpop.f32.mrb[0].mxu0
          %v2920 = vpop.f32.mrb[0].mxu0
          %v2921 = vadd.f32 0.0, %v2920
          %v2922 = vpop.f32.mrb[0].mxu0
          %2923 = vmatprep.mubr.bf16.mxu0 0
          %2924 = vmatmul.mubr.bf16.gmra.mrb[0].mxu0 %v2695
          %v2925 = vpop.f32.mrb[0].mxu0
          %v2926 = vadd.f32 0.0, %v2925
          %v2927 = vpop.f32.mrb[0].mxu0
          %v2928 = vpop.f32.mrb[0].mxu0
          %v2929 = vadd.f32 0.0, %v2928
          %v2930 = vpop.f32.mrb[0].mxu0
          %2931 = vmatprep.mubr.bf16.mxu0 0
          %2932 = vmatmul.mubr.bf16.gmra.mrb[0].mxu0 %v2698
          %v2933 = vpop.f32.mrb[0].mxu0
          %v2934 = vadd.f32 0.0, %v2933
          %v2935 = vpop.f32.mrb[0].mxu0
          %v2936 = vpop.f32.mrb[0].mxu0
          %v2937 = vadd.f32 0.0, %v2936
          %v2938 = vpop.f32.mrb[0].mxu0
          %2939 = vdwg.mxu0
          %v2940 = vadd.f32 %v2571, %v2814
          %v2941 = vadd.f32 %v2572, %v2817
          %v2942 = vadd.f32 %v2573, %v2822
          %v2943 = vadd.f32 %v2574, %v2825
          %v2944 = vadd.f32 %v2575, %v2830
          %v2945 = vadd.f32 %v2576, %v2833
          %v2946 = vadd.f32 %v2577, %v2838
          %v2947 = vadd.f32 %v2578, %v2841
          %v2948 = vadd.f32 %v2579, %v2846
          %v2949 = vadd.f32 %v2580, %v2849
          %v2950 = vadd.f32 %v2581, %v2854
          %v2951 = vadd.f32 %v2582, %v2857
          %v2952 = vadd.f32 %v2583, %v2862
          %v2953 = vadd.f32 %v2584, %v2865
          %v2954 = vadd.f32 %v2585, %v2870
          %v2955 = vadd.f32 %v2586, %v2873
          %v2956 = vadd.f32 %v2587, %v2878
          %v2957 = vadd.f32 %v2588, %v2881
          %v2958 = vadd.f32 %v2589, %v2886
          %v2959 = vadd.f32 %v2590, %v2889
          %v2960 = vadd.f32 %v2591, %v2894
          %v2961 = vadd.f32 %v2592, %v2897
          %v2962 = vadd.f32 %v2593, %v2902
          %v2963 = vadd.f32 %v2594, %v2905
          %v2964 = vadd.f32 %v2595, %v2910
          %v2965 = vadd.f32 %v2596, %v2913
          %v2966 = vadd.f32 %v2597, %v2918
          %v2967 = vadd.f32 %v2598, %v2921
          %v2968 = vadd.f32 %v2599, %v2926
          %v2969 = vadd.f32 %v2600, %v2929
          %v2970 = vadd.f32 %v2601, %v2934
          %v2971 = vadd.f32 %v2602, %v2937
          %v2972 = vld [vmem:[%s248 + $0x8] sm:$0x1f]
          %v2973 = vld [vmem:[%s248 + $0x18] sm:$0x1f]
          %v2974 = vld [vmem:[%s248 + $0x28] sm:$0x1f]
          %v2975 = vld [vmem:[%s248 + $0x38] sm:$0x1f]
          %v2976 = vld [vmem:[%s248 + $0x48] sm:$0x1f]
          %v2977 = vld [vmem:[%s248 + $0x58] sm:$0x1f]
          %v2978 = vld [vmem:[%s248 + $0x68] sm:$0x1f]
          %v2979 = vld [vmem:[%s248 + $0x78] sm:$0x1f]
          %v2980 = vld [vmem:[%s248 + $0x88] sm:$0x1f]
          %v2981 = vld [vmem:[%s248 + $0x98] sm:$0x1f]
          %v2982 = vld [vmem:[%s248 + $0xa8] sm:$0x1f]
          %v2983 = vld [vmem:[%s248 + $0xb8] sm:$0x1f]
          %v2984 = vld [vmem:[%s248 + $0xc8] sm:$0x1f]
          %v2985 = vld [vmem:[%s248 + $0xd8] sm:$0x1f]
          %v2986 = vld [vmem:[%s248 + $0xe8] sm:$0x1f]
          %v2987 = vld [vmem:[%s248 + $0xf8] sm:$0x1f]
          %v2989 = vshrl.u32 %v2603, 16
          %v2991 = vrot.slane %v2989, 4
          %v2992 = vshll.u32 %v2603, 16
          %v2994 = vrot.slane %v2992, 5
          %v2995 = vor.u32 %v2991, %v2994
          %v2997 = vshrl.u32 %v2972, 16
          %v2999 = vrot.slane %v2997, 4
          %v3000 = vshll.u32 %v2972, 16
          %v3002 = vrot.slane %v3000, 5
          %v3003 = vor.u32 %v2999, %v3002
          %v3004 = vsel %vm1480, %v2995, %v3003
          %v3006 = vshrl.u32 %v2604, 16
          %v3008 = vrot.slane %v3006, 4
          %v3009 = vshll.u32 %v2604, 16
          %v3011 = vrot.slane %v3009, 5
          %v3012 = vor.u32 %v3008, %v3011
          %v3014 = vshrl.u32 %v2973, 16
          %v3016 = vrot.slane %v3014, 4
          %v3017 = vshll.u32 %v2973, 16
          %v3019 = vrot.slane %v3017, 5
          %v3020 = vor.u32 %v3016, %v3019
          %v3021 = vsel %vm1480, %v3012, %v3020
          %v3023 = vshrl.u32 %v2605, 16
          %v3025 = vrot.slane %v3023, 4
          %v3026 = vshll.u32 %v2605, 16
          %v3028 = vrot.slane %v3026, 5
          %v3029 = vor.u32 %v3025, %v3028
          %v3031 = vshrl.u32 %v2974, 16
          %v3033 = vrot.slane %v3031, 4
          %v3034 = vshll.u32 %v2974, 16
          %v3036 = vrot.slane %v3034, 5
          %v3037 = vor.u32 %v3033, %v3036
          %v3038 = vsel %vm1480, %v3029, %v3037
          %v3040 = vshrl.u32 %v2606, 16
          %v3042 = vrot.slane %v3040, 4
          %v3043 = vshll.u32 %v2606, 16
          %v3045 = vrot.slane %v3043, 5
          %v3046 = vor.u32 %v3042, %v3045
          %v3048 = vshrl.u32 %v2975, 16
          %v3050 = vrot.slane %v3048, 4
          %v3051 = vshll.u32 %v2975, 16
          %v3053 = vrot.slane %v3051, 5
          %v3054 = vor.u32 %v3050, %v3053
          %v3055 = vsel %vm1480, %v3046, %v3054
          %v3057 = vshrl.u32 %v2607, 16
          %v3059 = vrot.slane %v3057, 4
          %v3060 = vshll.u32 %v2607, 16
          %v3062 = vrot.slane %v3060, 5
          %v3063 = vor.u32 %v3059, %v3062
          %v3065 = vshrl.u32 %v2976, 16
          %v3067 = vrot.slane %v3065, 4
          %v3068 = vshll.u32 %v2976, 16
          %v3070 = vrot.slane %v3068, 5
          %v3071 = vor.u32 %v3067, %v3070
          %v3072 = vsel %vm1480, %v3063, %v3071
          %v3074 = vshrl.u32 %v2608, 16
          %v3076 = vrot.slane %v3074, 4
          %v3077 = vshll.u32 %v2608, 16
          %v3079 = vrot.slane %v3077, 5
          %v3080 = vor.u32 %v3076, %v3079
          %v3082 = vshrl.u32 %v2977, 16
          %v3084 = vrot.slane %v3082, 4
          %v3085 = vshll.u32 %v2977, 16
          %v3087 = vrot.slane %v3085, 5
          %v3088 = vor.u32 %v3084, %v3087
          %v3089 = vsel %vm1480, %v3080, %v3088
          %v3091 = vshrl.u32 %v2609, 16
          %v3093 = vrot.slane %v3091, 4
          %v3094 = vshll.u32 %v2609, 16
          %v3096 = vrot.slane %v3094, 5
          %v3097 = vor.u32 %v3093, %v3096
          %v3099 = vshrl.u32 %v2978, 16
          %v3101 = vrot.slane %v3099, 4
          %v3102 = vshll.u32 %v2978, 16
          %v3104 = vrot.slane %v3102, 5
          %v3105 = vor.u32 %v3101, %v3104
          %v3106 = vsel %vm1480, %v3097, %v3105
          %v3108 = vshrl.u32 %v2610, 16
          %v3110 = vrot.slane %v3108, 4
          %v3111 = vshll.u32 %v2610, 16
          %v3113 = vrot.slane %v3111, 5
          %v3114 = vor.u32 %v3110, %v3113
          %v3116 = vshrl.u32 %v2979, 16
          %v3118 = vrot.slane %v3116, 4
          %v3119 = vshll.u32 %v2979, 16
          %v3121 = vrot.slane %v3119, 5
          %v3122 = vor.u32 %v3118, %v3121
          %v3123 = vsel %vm1480, %v3114, %v3122
          %v3125 = vshrl.u32 %v2611, 16
          %v3127 = vrot.slane %v3125, 4
          %v3128 = vshll.u32 %v2611, 16
          %v3130 = vrot.slane %v3128, 5
          %v3131 = vor.u32 %v3127, %v3130
          %v3133 = vshrl.u32 %v2980, 16
          %v3135 = vrot.slane %v3133, 4
          %v3136 = vshll.u32 %v2980, 16
          %v3138 = vrot.slane %v3136, 5
          %v3139 = vor.u32 %v3135, %v3138
          %v3140 = vsel %vm1480, %v3131, %v3139
          %v3142 = vshrl.u32 %v2612, 16
          %v3144 = vrot.slane %v3142, 4
          %v3145 = vshll.u32 %v2612, 16
          %v3147 = vrot.slane %v3145, 5
          %v3148 = vor.u32 %v3144, %v3147
          %v3150 = vshrl.u32 %v2981, 16
          %v3152 = vrot.slane %v3150, 4
          %v3153 = vshll.u32 %v2981, 16
          %v3155 = vrot.slane %v3153, 5
          %v3156 = vor.u32 %v3152, %v3155
          %v3157 = vsel %vm1480, %v3148, %v3156
          %v3159 = vshrl.u32 %v2613, 16
          %v3161 = vrot.slane %v3159, 4
          %v3162 = vshll.u32 %v2613, 16
          %v3164 = vrot.slane %v3162, 5
          %v3165 = vor.u32 %v3161, %v3164
          %v3167 = vshrl.u32 %v2982, 16
          %v3169 = vrot.slane %v3167, 4
          %v3170 = vshll.u32 %v2982, 16
          %v3172 = vrot.slane %v3170, 5
          %v3173 = vor.u32 %v3169, %v3172
          %v3174 = vsel %vm1480, %v3165, %v3173
          %v3176 = vshrl.u32 %v2614, 16
          %v3178 = vrot.slane %v3176, 4
          %v3179 = vshll.u32 %v2614, 16
          %v3181 = vrot.slane %v3179, 5
          %v3182 = vor.u32 %v3178, %v3181
          %v3184 = vshrl.u32 %v2983, 16
          %v3186 = vrot.slane %v3184, 4
          %v3187 = vshll.u32 %v2983, 16
          %v3189 = vrot.slane %v3187, 5
          %v3190 = vor.u32 %v3186, %v3189
          %v3191 = vsel %vm1480, %v3182, %v3190
          %v3193 = vshrl.u32 %v2615, 16
          %v3195 = vrot.slane %v3193, 4
          %v3196 = vshll.u32 %v2615, 16
          %v3198 = vrot.slane %v3196, 5
          %v3199 = vor.u32 %v3195, %v3198
          %v3201 = vshrl.u32 %v2984, 16
          %v3203 = vrot.slane %v3201, 4
          %v3204 = vshll.u32 %v2984, 16
          %v3206 = vrot.slane %v3204, 5
          %v3207 = vor.u32 %v3203, %v3206
          %v3208 = vsel %vm1480, %v3199, %v3207
          %v3210 = vshrl.u32 %v2616, 16
          %v3212 = vrot.slane %v3210, 4
          %v3213 = vshll.u32 %v2616, 16
          %v3215 = vrot.slane %v3213, 5
          %v3216 = vor.u32 %v3212, %v3215
          %v3218 = vshrl.u32 %v2985, 16
          %v3220 = vrot.slane %v3218, 4
          %v3221 = vshll.u32 %v2985, 16
          %v3223 = vrot.slane %v3221, 5
          %v3224 = vor.u32 %v3220, %v3223
          %v3225 = vsel %vm1480, %v3216, %v3224
          %v3227 = vshrl.u32 %v2617, 16
          %v3229 = vrot.slane %v3227, 4
          %v3230 = vshll.u32 %v2617, 16
          %v3232 = vrot.slane %v3230, 5
          %v3233 = vor.u32 %v3229, %v3232
          %v3235 = vshrl.u32 %v2986, 16
          %v3237 = vrot.slane %v3235, 4
          %v3238 = vshll.u32 %v2986, 16
          %v3240 = vrot.slane %v3238, 5
          %v3241 = vor.u32 %v3237, %v3240
          %v3242 = vsel %vm1480, %v3233, %v3241
          %v3244 = vshrl.u32 %v2618, 16
          %v3246 = vrot.slane %v3244, 4
          %v3247 = vshll.u32 %v2618, 16
          %v3249 = vrot.slane %v3247, 5
          %v3250 = vor.u32 %v3246, %v3249
          %v3252 = vshrl.u32 %v2987, 16
          %v3254 = vrot.slane %v3252, 4
          %v3255 = vshll.u32 %v2987, 16
          %v3257 = vrot.slane %v3255, 5
          %v3258 = vor.u32 %v3254, %v3257
          %v3259 = vsel %vm1480, %v3250, %v3258
          %v3276 = vld [vmem:[%s1 + $0x140] sm:$0xf]
          %v3277 = vld [vmem:[%s1 + $0x144] sm:$0xf]
          %v3278 = vld [vmem:[%s1 + $0x148] sm:$0xf]
          %v3279 = vld [vmem:[%s1 + $0x14c] sm:$0xf]
          %v3280 = vld [vmem:[%s1 + $0x150] sm:$0xf]
          %v3281 = vld [vmem:[%s1 + $0x154] sm:$0xf]
          %v3282 = vld [vmem:[%s1 + $0x158] sm:$0xf]
          %v3283 = vld [vmem:[%s1 + $0x15c] sm:$0xf]
          %v3284 = vld [vmem:[%s1 + $0x160] sm:$0xf]
          %v3285 = vld [vmem:[%s1 + $0x164] sm:$0xf]
          %v3286 = vld [vmem:[%s1 + $0x168] sm:$0xf]
          %v3287 = vld [vmem:[%s1 + $0x16c] sm:$0xf]
          %v3288 = vld [vmem:[%s1 + $0x170] sm:$0xf]
          %v3289 = vld [vmem:[%s1 + $0x174] sm:$0xf]
          %v3290 = vld [vmem:[%s1 + $0x178] sm:$0xf]
          %v3291 = vld [vmem:[%s1 + $0x17c] sm:$0xf]
          %v3308 = vunpack.c.l.b16 %v3276
          %v3309 = vunpack.c.l.b16 %v3277
          %v3310 = vunpack.c.l.b16 %v3278
          %v3311 = vunpack.c.l.b16 %v3279
          %v3312 = vunpack.c.l.b16 %v3280
          %v3313 = vunpack.c.l.b16 %v3281
          %v3314 = vunpack.c.l.b16 %v3282
          %v3315 = vunpack.c.l.b16 %v3283
          %v3316 = vunpack.c.l.b16 %v3284
          %v3317 = vunpack.c.l.b16 %v3285
          %v3318 = vunpack.c.l.b16 %v3286
          %v3319 = vunpack.c.l.b16 %v3287
          %v3320 = vunpack.c.l.b16 %v3288
          %v3321 = vunpack.c.l.b16 %v3289
          %v3322 = vunpack.c.l.b16 %v3290
          %v3323 = vunpack.c.l.b16 %v3291
          %v3324 = vpack.c.b16 %v3309, %v3308
          %v3325 = vpack.c.b16 %v3311, %v3310
          %v3326 = vpack.c.b16 %v3313, %v3312
          %v3327 = vpack.c.b16 %v3315, %v3314
          %v3328 = vpack.c.b16 %v3317, %v3316
          %v3329 = vpack.c.b16 %v3319, %v3318
          %v3330 = vpack.c.b16 %v3321, %v3320
          %v3331 = vpack.c.b16 %v3323, %v3322
          %3340 = vmatprep.subr.bf16.mxu0 0
          %3341 = vmatpush1.bf16.msra.mxu0 %v3324
          %3342 = vmatprep.subr.bf16.mxu0 0
          %3343 = vmatpush1.bf16.msra.mxu0 %v3325
          %3344 = vmatprep.subr.bf16.mxu0 0
          %3345 = vmatpush1.bf16.msra.mxu0 %v3326
          %3346 = vmatprep.subr.bf16.mxu0 0
          %3347 = vmatpush1.bf16.msra.mxu0 %v3327
          %3348 = vmatprep.subr.bf16.mxu0 0
          %3349 = vmatpush1.bf16.msra.mxu0 %v3328
          %3350 = vmatprep.subr.bf16.mxu0 0
          %3351 = vmatpush1.bf16.msra.mxu0 %v3329
          %3352 = vmatprep.subr.bf16.mxu0 0
          %3353 = vmatpush1.bf16.msra.mxu0 %v3330
          %3354 = vmatprep.subr.bf16.mxu0 0
          %3355 = vmatpush1.bf16.msra.mxu0 %v3331
          %3356 = vmatprep.subr.bf16.mxu0 0
          %3357 = vmatpush1.bf16.msra.mxu0 0
          %3358 = vmatprep.subr.bf16.mxu0 0
          %3359 = vmatpush1.bf16.msra.mxu0 0
          %3360 = vmatprep.subr.bf16.mxu0 0
          %3361 = vmatpush1.bf16.msra.mxu0 0
          %3362 = vmatprep.subr.bf16.mxu0 0
          %3363 = vmatpush1.bf16.msra.mxu0 0
          %3364 = vmatprep.subr.bf16.mxu0 0
          %3365 = vmatpush1.bf16.msra.mxu0 0
          %3366 = vmatprep.subr.bf16.mxu0 0
          %3367 = vmatpush1.bf16.msra.mxu0 0
          %3368 = vmatprep.subr.bf16.mxu0 0
          %3369 = vmatpush1.bf16.msra.mxu0 0
          %3370 = vmatprep.subr.bf16.mxu0 0
          %3371 = vmatpush1.bf16.msra.mxu0 0
          %3372 = vmatprep.mubr.bf16.mxu0 0
          %3373 = vmatmul.mubr.bf16.gmra.mrb[0].mxu0 %v3004
          %v3374 = vpop.f32.mrb[0].mxu0
          %v3375 = vadd.f32 0.0, %v3374
          %v3376 = vpop.f32.mrb[0].mxu0
          %v3377 = vpop.f32.mrb[0].mxu0
          %v3378 = vadd.f32 0.0, %v3377
          %v3379 = vpop.f32.mrb[0].mxu0
          %3380 = vmatprep.mubr.bf16.mxu0 0
          %3381 = vmatmul.mubr.bf16.gmra.mrb[0].mxu0 %v3021
          %v3382 = vpop.f32.mrb[0].mxu0
          %v3383 = vadd.f32 0.0, %v3382
          %v3384 = vpop.f32.mrb[0].mxu0
          %v3385 = vpop.f32.mrb[0].mxu0
          %v3386 = vadd.f32 0.0, %v3385
          %v3387 = vpop.f32.mrb[0].mxu0
          %3388 = vmatprep.mubr.bf16.mxu0 0
          %3389 = vmatmul.mubr.bf16.gmra.mrb[0].mxu0 %v3038
          %v3390 = vpop.f32.mrb[0].mxu0
          %v3391 = vadd.f32 0.0, %v3390
          %v3392 = vpop.f32.mrb[0].mxu0
          %v3393 = vpop.f32.mrb[0].mxu0
          %v3394 = vadd.f32 0.0, %v3393
          %v3395 = vpop.f32.mrb[0].mxu0
          %3396 = vmatprep.mubr.bf16.mxu0 0
          %3397 = vmatmul.mubr.bf16.gmra.mrb[0].mxu0 %v3055
          %v3398 = vpop.f32.mrb[0].mxu0
          %v3399 = vadd.f32 0.0, %v3398
          %v3400 = vpop.f32.mrb[0].mxu0
          %v3401 = vpop.f32.mrb[0].mxu0
          %v3402 = vadd.f32 0.0, %v3401
          %v3403 = vpop.f32.mrb[0].mxu0
          %3404 = vmatprep.mubr.bf16.mxu0 0
          %3405 = vmatmul.mubr.bf16.gmra.mrb[0].mxu0 %v3072
          %v3406 = vpop.f32.mrb[0].mxu0
          %v3407 = vadd.f32 0.0, %v3406
          %v3408 = vpop.f32.mrb[0].mxu0
          %v3409 = vpop.f32.mrb[0].mxu0
          %v3410 = vadd.f32 0.0, %v3409
          %v3411 = vpop.f32.mrb[0].mxu0
          %3412 = vmatprep.mubr.bf16.mxu0 0
          %3413 = vmatmul.mubr.bf16.gmra.mrb[0].mxu0 %v3089
          %v3414 = vpop.f32.mrb[0].mxu0
          %v3415 = vadd.f32 0.0, %v3414
          %v3416 = vpop.f32.mrb[0].mxu0
          %v3417 = vpop.f32.mrb[0].mxu0
          %v3418 = vadd.f32 0.0, %v3417
          %v3419 = vpop.f32.mrb[0].mxu0
          %3420 = vmatprep.mubr.bf16.mxu0 0
          %3421 = vmatmul.mubr.bf16.gmra.mrb[0].mxu0 %v3106
          %v3422 = vpop.f32.mrb[0].mxu0
          %v3423 = vadd.f32 0.0, %v3422
          %v3424 = vpop.f32.mrb[0].mxu0
          %v3425 = vpop.f32.mrb[0].mxu0
          %v3426 = vadd.f32 0.0, %v3425
          %v3427 = vpop.f32.mrb[0].mxu0
          %3428 = vmatprep.mubr.bf16.mxu0 0
          %3429 = vmatmul.mubr.bf16.gmra.mrb[0].mxu0 %v3123
          %v3430 = vpop.f32.mrb[0].mxu0
          %v3431 = vadd.f32 0.0, %v3430
          %v3432 = vpop.f32.mrb[0].mxu0
          %v3433 = vpop.f32.mrb[0].mxu0
          %v3434 = vadd.f32 0.0, %v3433
          %v3435 = vpop.f32.mrb[0].mxu0
          %3436 = vmatprep.mubr.bf16.mxu0 0
          %3437 = vmatmul.mubr.bf16.gmra.mrb[0].mxu0 %v3140
          %v3438 = vpop.f32.mrb[0].mxu0
          %v3439 = vadd.f32 0.0, %v3438
          %v3440 = vpop.f32.mrb[0].mxu0
          %v3441 = vpop.f32.mrb[0].mxu0
          %v3442 = vadd.f32 0.0, %v3441
          %v3443 = vpop.f32.mrb[0].mxu0
          %3444 = vmatprep.mubr.bf16.mxu0 0
          %3445 = vmatmul.mubr.bf16.gmra.mrb[0].mxu0 %v3157
          %v3446 = vpop.f32.mrb[0].mxu0
          %v3447 = vadd.f32 0.0, %v3446
          %v3448 = vpop.f32.mrb[0].mxu0
          %v3449 = vpop.f32.mrb[0].mxu0
          %v3450 = vadd.f32 0.0, %v3449
          %v3451 = vpop.f32.mrb[0].mxu0
          %3452 = vmatprep.mubr.bf16.mxu0 0
          %3453 = vmatmul.mubr.bf16.gmra.mrb[0].mxu0 %v3174
          %v3454 = vpop.f32.mrb[0].mxu0
          %v3455 = vadd.f32 0.0, %v3454
          %v3456 = vpop.f32.mrb[0].mxu0
          %v3457 = vpop.f32.mrb[0].mxu0
          %v3458 = vadd.f32 0.0, %v3457
          %v3459 = vpop.f32.mrb[0].mxu0
          %3460 = vmatprep.mubr.bf16.mxu0 0
          %3461 = vmatmul.mubr.bf16.gmra.mrb[0].mxu0 %v3191
          %v3462 = vpop.f32.mrb[0].mxu0
          %v3463 = vadd.f32 0.0, %v3462
          %v3464 = vpop.f32.mrb[0].mxu0
          %v3465 = vpop.f32.mrb[0].mxu0
          %v3466 = vadd.f32 0.0, %v3465
          %v3467 = vpop.f32.mrb[0].mxu0
          %3468 = vmatprep.mubr.bf16.mxu0 0
          %3469 = vmatmul.mubr.bf16.gmra.mrb[0].mxu0 %v3208
          %v3470 = vpop.f32.mrb[0].mxu0
          %v3471 = vadd.f32 0.0, %v3470
          %v3472 = vpop.f32.mrb[0].mxu0
          %v3473 = vpop.f32.mrb[0].mxu0
          %v3474 = vadd.f32 0.0, %v3473
          %v3475 = vpop.f32.mrb[0].mxu0
          %3476 = vmatprep.mubr.bf16.mxu0 0
          %3477 = vmatmul.mubr.bf16.gmra.mrb[0].mxu0 %v3225
          %v3478 = vpop.f32.mrb[0].mxu0
          %v3479 = vadd.f32 0.0, %v3478
          %v3480 = vpop.f32.mrb[0].mxu0
          %v3481 = vpop.f32.mrb[0].mxu0
          %v3482 = vadd.f32 0.0, %v3481
          %v3483 = vpop.f32.mrb[0].mxu0
          %3484 = vmatprep.mubr.bf16.mxu0 0
          %3485 = vmatmul.mubr.bf16.gmra.mrb[0].mxu0 %v3242
          %v3486 = vpop.f32.mrb[0].mxu0
          %v3487 = vadd.f32 0.0, %v3486
          %v3488 = vpop.f32.mrb[0].mxu0
          %v3489 = vpop.f32.mrb[0].mxu0
          %v3490 = vadd.f32 0.0, %v3489
          %v3491 = vpop.f32.mrb[0].mxu0
          %3492 = vmatprep.mubr.bf16.mxu0 0
          %3493 = vmatmul.mubr.bf16.gmra.mrb[0].mxu0 %v3259
          %v3494 = vpop.f32.mrb[0].mxu0
          %v3495 = vadd.f32 0.0, %v3494
          %v3496 = vpop.f32.mrb[0].mxu0
          %v3497 = vpop.f32.mrb[0].mxu0
          %v3498 = vadd.f32 0.0, %v3497
          %v3499 = vpop.f32.mrb[0].mxu0
          %3500 = vdwg.mxu0
          %v3501 = vadd.f32 %v2940, %v3375
          %v3502 = vadd.f32 %v2941, %v3378
          %v3503 = vadd.f32 %v2942, %v3383
          %v3504 = vadd.f32 %v2943, %v3386
          %v3505 = vadd.f32 %v2944, %v3391
          %v3506 = vadd.f32 %v2945, %v3394
          %v3507 = vadd.f32 %v2946, %v3399
          %v3508 = vadd.f32 %v2947, %v3402
          %v3509 = vadd.f32 %v2948, %v3407
          %v3510 = vadd.f32 %v2949, %v3410
          %v3511 = vadd.f32 %v2950, %v3415
          %v3512 = vadd.f32 %v2951, %v3418
          %v3513 = vadd.f32 %v2952, %v3423
          %v3514 = vadd.f32 %v2953, %v3426
          %v3515 = vadd.f32 %v2954, %v3431
          %v3516 = vadd.f32 %v2955, %v3434
          %v3517 = vadd.f32 %v2956, %v3439
          %v3518 = vadd.f32 %v2957, %v3442
          %v3519 = vadd.f32 %v2958, %v3447
          %v3520 = vadd.f32 %v2959, %v3450
          %v3521 = vadd.f32 %v2960, %v3455
          %v3522 = vadd.f32 %v2961, %v3458
          %v3523 = vadd.f32 %v2962, %v3463
          %v3524 = vadd.f32 %v2963, %v3466
          %v3525 = vadd.f32 %v2964, %v3471
          %v3526 = vadd.f32 %v2965, %v3474
          %v3527 = vadd.f32 %v2966, %v3479
          %v3528 = vadd.f32 %v2967, %v3482
          %v3529 = vadd.f32 %v2968, %v3487
          %v3530 = vadd.f32 %v2969, %v3490
          %v3531 = vadd.f32 %v2970, %v3495
          %v3532 = vadd.f32 %v2971, %v3498
          %s3533 = scalar_lea.vmem [#allocation2], 32
          %v3534 = vld [vmem:[%s3533] sm:$0xf8]
          %v3535 = vld [vmem:[%s3533 + $0x8] sm:$0xf]
          %v3536 = vld [vmem:[%s3533 + $0x10] sm:$0xf8]
          %v3537 = vld [vmem:[%s3533 + $0x18] sm:$0xf]
          %v3538 = vld [vmem:[%s3533 + $0x20] sm:$0xf8]
          %v3539 = vld [vmem:[%s3533 + $0x28] sm:$0xf]
          %v3540 = vld [vmem:[%s3533 + $0x30] sm:$0xf8]
          %v3541 = vld [vmem:[%s3533 + $0x38] sm:$0xf]
          %v3542 = vld [vmem:[%s3533 + $0x40] sm:$0xf8]
          %v3543 = vld [vmem:[%s3533 + $0x48] sm:$0xf]
          %v3544 = vld [vmem:[%s3533 + $0x50] sm:$0xf8]
          %v3545 = vld [vmem:[%s3533 + $0x58] sm:$0xf]
          %v3546 = vld [vmem:[%s3533 + $0x60] sm:$0xf8]
          %v3547 = vld [vmem:[%s3533 + $0x68] sm:$0xf]
          %v3548 = vld [vmem:[%s3533 + $0x70] sm:$0xf8]
          %v3549 = vld [vmem:[%s3533 + $0x78] sm:$0xf]
          %v3550 = vld [vmem:[%s3533 + $0x80] sm:$0xf8]
          %v3551 = vld [vmem:[%s3533 + $0x88] sm:$0xf]
          %v3552 = vld [vmem:[%s3533 + $0x90] sm:$0xf8]
          %v3553 = vld [vmem:[%s3533 + $0x98] sm:$0xf]
          %v3554 = vld [vmem:[%s3533 + $0xa0] sm:$0xf8]
          %v3555 = vld [vmem:[%s3533 + $0xa8] sm:$0xf]
          %v3556 = vld [vmem:[%s3533 + $0xb0] sm:$0xf8]
          %v3557 = vld [vmem:[%s3533 + $0xb8] sm:$0xf]
          %v3558 = vld [vmem:[%s3533 + $0xc0] sm:$0xf8]
          %v3559 = vld [vmem:[%s3533 + $0xc8] sm:$0xf]
          %v3560 = vld [vmem:[%s3533 + $0xd0] sm:$0xf8]
          %v3561 = vld [vmem:[%s3533 + $0xd8] sm:$0xf]
          %v3562 = vld [vmem:[%s3533 + $0xe0] sm:$0xf8]
          %v3563 = vld [vmem:[%s3533 + $0xe8] sm:$0xf]
          %v3564 = vld [vmem:[%s3533 + $0xf0] sm:$0xf8]
          %v3565 = vld [vmem:[%s3533 + $0xf8] sm:$0xf]
          %v3567 = vshrl.u32 %v3534, 16
          %v3569 = vrot.slane %v3567, 3
          %v3570 = vshll.u32 %v3534, 16
          %v3572 = vrot.slane %v3570, 4
          %v3573 = vor.u32 %v3569, %v3572
          %v3575 = vshrl.u32 %v3535, 16
          %v3577 = vrot.slane %v3575, 3
          %v3578 = vshll.u32 %v3535, 16
          %v3580 = vrot.slane %v3578, 4
          %v3581 = vor.u32 %v3577, %v3580
          %v3582 = vsel %vm301, %v3573, %v3581
          %v3584 = vshrl.u32 %v3536, 16
          %v3586 = vrot.slane %v3584, 3
          %v3587 = vshll.u32 %v3536, 16
          %v3589 = vrot.slane %v3587, 4
          %v3590 = vor.u32 %v3586, %v3589
          %v3592 = vshrl.u32 %v3537, 16
          %v3594 = vrot.slane %v3592, 3
          %v3595 = vshll.u32 %v3537, 16
          %v3597 = vrot.slane %v3595, 4
          %v3598 = vor.u32 %v3594, %v3597
          %v3599 = vsel %vm301, %v3590, %v3598
          %v3601 = vshrl.u32 %v3538, 16
          %v3603 = vrot.slane %v3601, 3
          %v3604 = vshll.u32 %v3538, 16
          %v3606 = vrot.slane %v3604, 4
          %v3607 = vor.u32 %v3603, %v3606
          %v3609 = vshrl.u32 %v3539, 16
          %v3611 = vrot.slane %v3609, 3
          %v3612 = vshll.u32 %v3539, 16
          %v3614 = vrot.slane %v3612, 4
          %v3615 = vor.u32 %v3611, %v3614
          %v3616 = vsel %vm301, %v3607, %v3615
          %v3618 = vshrl.u32 %v3540, 16
          %v3620 = vrot.slane %v3618, 3
          %v3621 = vshll.u32 %v3540, 16
          %v3623 = vrot.slane %v3621, 4
          %v3624 = vor.u32 %v3620, %v3623
          %v3626 = vshrl.u32 %v3541, 16
          %v3628 = vrot.slane %v3626, 3
          %v3629 = vshll.u32 %v3541, 16
          %v3631 = vrot.slane %v3629, 4
          %v3632 = vor.u32 %v3628, %v3631
          %v3633 = vsel %vm301, %v3624, %v3632
          %v3635 = vshrl.u32 %v3542, 16
          %v3637 = vrot.slane %v3635, 3
          %v3638 = vshll.u32 %v3542, 16
          %v3640 = vrot.slane %v3638, 4
          %v3641 = vor.u32 %v3637, %v3640
          %v3643 = vshrl.u32 %v3543, 16
          %v3645 = vrot.slane %v3643, 3
          %v3646 = vshll.u32 %v3543, 16
          %v3648 = vrot.slane %v3646, 4
          %v3649 = vor.u32 %v3645, %v3648
          %v3650 = vsel %vm301, %v3641, %v3649
          %v3652 = vshrl.u32 %v3544, 16
          %v3654 = vrot.slane %v3652, 3
          %v3655 = vshll.u32 %v3544, 16
          %v3657 = vrot.slane %v3655, 4
          %v3658 = vor.u32 %v3654, %v3657
          %v3660 = vshrl.u32 %v3545, 16
          %v3662 = vrot.slane %v3660, 3
          %v3663 = vshll.u32 %v3545, 16
          %v3665 = vrot.slane %v3663, 4
          %v3666 = vor.u32 %v3662, %v3665
          %v3667 = vsel %vm301, %v3658, %v3666
          %v3669 = vshrl.u32 %v3546, 16
          %v3671 = vrot.slane %v3669, 3
          %v3672 = vshll.u32 %v3546, 16
          %v3674 = vrot.slane %v3672, 4
          %v3675 = vor.u32 %v3671, %v3674
          %v3677 = vshrl.u32 %v3547, 16
          %v3679 = vrot.slane %v3677, 3
          %v3680 = vshll.u32 %v3547, 16
          %v3682 = vrot.slane %v3680, 4
          %v3683 = vor.u32 %v3679, %v3682
          %v3684 = vsel %vm301, %v3675, %v3683
          %v3686 = vshrl.u32 %v3548, 16
          %v3688 = vrot.slane %v3686, 3
          %v3689 = vshll.u32 %v3548, 16
          %v3691 = vrot.slane %v3689, 4
          %v3692 = vor.u32 %v3688, %v3691
          %v3694 = vshrl.u32 %v3549, 16
          %v3696 = vrot.slane %v3694, 3
          %v3697 = vshll.u32 %v3549, 16
          %v3699 = vrot.slane %v3697, 4
          %v3700 = vor.u32 %v3696, %v3699
          %v3701 = vsel %vm301, %v3692, %v3700
          %v3703 = vshrl.u32 %v3550, 16
          %v3705 = vrot.slane %v3703, 3
          %v3706 = vshll.u32 %v3550, 16
          %v3708 = vrot.slane %v3706, 4
          %v3709 = vor.u32 %v3705, %v3708
          %v3711 = vshrl.u32 %v3551, 16
          %v3713 = vrot.slane %v3711, 3
          %v3714 = vshll.u32 %v3551, 16
          %v3716 = vrot.slane %v3714, 4
          %v3717 = vor.u32 %v3713, %v3716
          %v3718 = vsel %vm301, %v3709, %v3717
          %v3720 = vshrl.u32 %v3552, 16
          %v3722 = vrot.slane %v3720, 3
          %v3723 = vshll.u32 %v3552, 16
          %v3725 = vrot.slane %v3723, 4
          %v3726 = vor.u32 %v3722, %v3725
          %v3728 = vshrl.u32 %v3553, 16
          %v3730 = vrot.slane %v3728, 3
          %v3731 = vshll.u32 %v3553, 16
          %v3733 = vrot.slane %v3731, 4
          %v3734 = vor.u32 %v3730, %v3733
          %v3735 = vsel %vm301, %v3726, %v3734
          %v3737 = vshrl.u32 %v3554, 16
          %v3739 = vrot.slane %v3737, 3
          %v3740 = vshll.u32 %v3554, 16
          %v3742 = vrot.slane %v3740, 4
          %v3743 = vor.u32 %v3739, %v3742
          %v3745 = vshrl.u32 %v3555, 16
          %v3747 = vrot.slane %v3745, 3
          %v3748 = vshll.u32 %v3555, 16
          %v3750 = vrot.slane %v3748, 4
          %v3751 = vor.u32 %v3747, %v3750
          %v3752 = vsel %vm301, %v3743, %v3751
          %v3754 = vshrl.u32 %v3556, 16
          %v3756 = vrot.slane %v3754, 3
          %v3757 = vshll.u32 %v3556, 16
          %v3759 = vrot.slane %v3757, 4
          %v3760 = vor.u32 %v3756, %v3759
          %v3762 = vshrl.u32 %v3557, 16
          %v3764 = vrot.slane %v3762, 3
          %v3765 = vshll.u32 %v3557, 16
          %v3767 = vrot.slane %v3765, 4
          %v3768 = vor.u32 %v3764, %v3767
          %v3769 = vsel %vm301, %v3760, %v3768
          %v3771 = vshrl.u32 %v3558, 16
          %v3773 = vrot.slane %v3771, 3
          %v3774 = vshll.u32 %v3558, 16
          %v3776 = vrot.slane %v3774, 4
          %v3777 = vor.u32 %v3773, %v3776
          %v3779 = vshrl.u32 %v3559, 16
          %v3781 = vrot.slane %v3779, 3
          %v3782 = vshll.u32 %v3559, 16
          %v3784 = vrot.slane %v3782, 4
          %v3785 = vor.u32 %v3781, %v3784
          %v3786 = vsel %vm301, %v3777, %v3785
          %v3788 = vshrl.u32 %v3560, 16
          %v3790 = vrot.slane %v3788, 3
          %v3791 = vshll.u32 %v3560, 16
          %v3793 = vrot.slane %v3791, 4
          %v3794 = vor.u32 %v3790, %v3793
          %v3796 = vshrl.u32 %v3561, 16
          %v3798 = vrot.slane %v3796, 3
          %v3799 = vshll.u32 %v3561, 16
          %v3801 = vrot.slane %v3799, 4
          %v3802 = vor.u32 %v3798, %v3801
          %v3803 = vsel %vm301, %v3794, %v3802
          %v3805 = vshrl.u32 %v3562, 16
          %v3807 = vrot.slane %v3805, 3
          %v3808 = vshll.u32 %v3562, 16
          %v3810 = vrot.slane %v3808, 4
          %v3811 = vor.u32 %v3807, %v3810
          %v3813 = vshrl.u32 %v3563, 16
          %v3815 = vrot.slane %v3813, 3
          %v3816 = vshll.u32 %v3563, 16
          %v3818 = vrot.slane %v3816, 4
          %v3819 = vor.u32 %v3815, %v3818
          %v3820 = vsel %vm301, %v3811, %v3819
          %v3822 = vshrl.u32 %v3564, 16
          %v3824 = vrot.slane %v3822, 3
          %v3825 = vshll.u32 %v3564, 16
          %v3827 = vrot.slane %v3825, 4
          %v3828 = vor.u32 %v3824, %v3827
          %v3830 = vshrl.u32 %v3565, 16
          %v3832 = vrot.slane %v3830, 3
          %v3833 = vshll.u32 %v3565, 16
          %v3835 = vrot.slane %v3833, 4
          %v3836 = vor.u32 %v3832, %v3835
          %v3837 = vsel %vm301, %v3828, %v3836
          %v3854 = vld [vmem:[%s1 + $0x180] sm:$0xf]
          %v3855 = vld [vmem:[%s1 + $0x184] sm:$0xf]
          %v3856 = vld [vmem:[%s1 + $0x188] sm:$0xf]
          %v3857 = vld [vmem:[%s1 + $0x18c] sm:$0xf]
          %v3858 = vld [vmem:[%s1 + $0x190] sm:$0xf]
          %v3859 = vld [vmem:[%s1 + $0x194] sm:$0xf]
          %v3860 = vld [vmem:[%s1 + $0x198] sm:$0xf]
          %v3861 = vld [vmem:[%s1 + $0x19c] sm:$0xf]
          %v3862 = vld [vmem:[%s1 + $0x1a0] sm:$0xf]
          %v3863 = vld [vmem:[%s1 + $0x1a4] sm:$0xf]
          %v3864 = vld [vmem:[%s1 + $0x1a8] sm:$0xf]
          %v3865 = vld [vmem:[%s1 + $0x1ac] sm:$0xf]
          %v3866 = vld [vmem:[%s1 + $0x1b0] sm:$0xf]
          %v3867 = vld [vmem:[%s1 + $0x1b4] sm:$0xf]
          %v3868 = vld [vmem:[%s1 + $0x1b8] sm:$0xf]
          %v3869 = vld [vmem:[%s1 + $0x1bc] sm:$0xf]
          %v3886 = vunpack.c.l.b16 %v3854
          %v3887 = vunpack.c.l.b16 %v3855
          %v3888 = vunpack.c.l.b16 %v3856
          %v3889 = vunpack.c.l.b16 %v3857
          %v3890 = vunpack.c.l.b16 %v3858
          %v3891 = vunpack.c.l.b16 %v3859
          %v3892 = vunpack.c.l.b16 %v3860
          %v3893 = vunpack.c.l.b16 %v3861
          %v3894 = vunpack.c.l.b16 %v3862
          %v3895 = vunpack.c.l.b16 %v3863
          %v3896 = vunpack.c.l.b16 %v3864
          %v3897 = vunpack.c.l.b16 %v3865
          %v3898 = vunpack.c.l.b16 %v3866
          %v3899 = vunpack.c.l.b16 %v3867
          %v3900 = vunpack.c.l.b16 %v3868
          %v3901 = vunpack.c.l.b16 %v3869
          %v3902 = vpack.c.b16 %v3887, %v3886
          %v3903 = vpack.c.b16 %v3889, %v3888
          %v3904 = vpack.c.b16 %v3891, %v3890
          %v3905 = vpack.c.b16 %v3893, %v3892
          %v3906 = vpack.c.b16 %v3895, %v3894
          %v3907 = vpack.c.b16 %v3897, %v3896
          %v3908 = vpack.c.b16 %v3899, %v3898
          %v3909 = vpack.c.b16 %v3901, %v3900
          %3918 = vmatprep.subr.bf16.mxu0 0
          %3919 = vmatpush1.bf16.msra.mxu0 %v3902
          %3920 = vmatprep.subr.bf16.mxu0 0
          %3921 = vmatpush1.bf16.msra.mxu0 %v3903
          %3922 = vmatprep.subr.bf16.mxu0 0
          %3923 = vmatpush1.bf16.msra.mxu0 %v3904
          %3924 = vmatprep.subr.bf16.mxu0 0
          %3925 = vmatpush1.bf16.msra.mxu0 %v3905
          %3926 = vmatprep.subr.bf16.mxu0 0
          %3927 = vmatpush1.bf16.msra.mxu0 %v3906
          %3928 = vmatprep.subr.bf16.mxu0 0
          %3929 = vmatpush1.bf16.msra.mxu0 %v3907
          %3930 = vmatprep.subr.bf16.mxu0 0
          %3931 = vmatpush1.bf16.msra.mxu0 %v3908
          %3932 = vmatprep.subr.bf16.mxu0 0
          %3933 = vmatpush1.bf16.msra.mxu0 %v3909
          %3934 = vmatprep.subr.bf16.mxu0 0
          %3935 = vmatpush1.bf16.msra.mxu0 0
          %3936 = vmatprep.subr.bf16.mxu0 0
          %3937 = vmatpush1.bf16.msra.mxu0 0
          %3938 = vmatprep.subr.bf16.mxu0 0
          %3939 = vmatpush1.bf16.msra.mxu0 0
          %3940 = vmatprep.subr.bf16.mxu0 0
          %3941 = vmatpush1.bf16.msra.mxu0 0
          %3942 = vmatprep.subr.bf16.mxu0 0
          %3943 = vmatpush1.bf16.msra.mxu0 0
          %3944 = vmatprep.subr.bf16.mxu0 0
          %3945 = vmatpush1.bf16.msra.mxu0 0
          %3946 = vmatprep.subr.bf16.mxu0 0
          %3947 = vmatpush1.bf16.msra.mxu0 0
          %3948 = vmatprep.subr.bf16.mxu0 0
          %3949 = vmatpush1.bf16.msra.mxu0 0
          %3950 = vmatprep.mubr.bf16.mxu0 0
          %3951 = vmatmul.mubr.bf16.gmra.mrb[0].mxu0 %v3582
          %v3952 = vpop.f32.mrb[0].mxu0
          %v3953 = vadd.f32 0.0, %v3952
          %v3954 = vpop.f32.mrb[0].mxu0
          %v3955 = vpop.f32.mrb[0].mxu0
          %v3956 = vadd.f32 0.0, %v3955
          %v3957 = vpop.f32.mrb[0].mxu0
          %3958 = vmatprep.mubr.bf16.mxu0 0
          %3959 = vmatmul.mubr.bf16.gmra.mrb[0].mxu0 %v3599
          %v3960 = vpop.f32.mrb[0].mxu0
          %v3961 = vadd.f32 0.0, %v3960
          %v3962 = vpop.f32.mrb[0].mxu0
          %v3963 = vpop.f32.mrb[0].mxu0
          %v3964 = vadd.f32 0.0, %v3963
          %v3965 = vpop.f32.mrb[0].mxu0
          %3966 = vmatprep.mubr.bf16.mxu0 0
          %3967 = vmatmul.mubr.bf16.gmra.mrb[0].mxu0 %v3616
          %v3968 = vpop.f32.mrb[0].mxu0
          %v3969 = vadd.f32 0.0, %v3968
          %v3970 = vpop.f32.mrb[0].mxu0
          %v3971 = vpop.f32.mrb[0].mxu0
          %v3972 = vadd.f32 0.0, %v3971
          %v3973 = vpop.f32.mrb[0].mxu0
          %3974 = vmatprep.mubr.bf16.mxu0 0
          %3975 = vmatmul.mubr.bf16.gmra.mrb[0].mxu0 %v3633
          %v3976 = vpop.f32.mrb[0].mxu0
          %v3977 = vadd.f32 0.0, %v3976
          %v3978 = vpop.f32.mrb[0].mxu0
          %v3979 = vpop.f32.mrb[0].mxu0
          %v3980 = vadd.f32 0.0, %v3979
          %v3981 = vpop.f32.mrb[0].mxu0
          %3982 = vmatprep.mubr.bf16.mxu0 0
          %3983 = vmatmul.mubr.bf16.gmra.mrb[0].mxu0 %v3650
          %v3984 = vpop.f32.mrb[0].mxu0
          %v3985 = vadd.f32 0.0, %v3984
          %v3986 = vpop.f32.mrb[0].mxu0
          %v3987 = vpop.f32.mrb[0].mxu0
          %v3988 = vadd.f32 0.0, %v3987
          %v3989 = vpop.f32.mrb[0].mxu0
          %3990 = vmatprep.mubr.bf16.mxu0 0
          %3991 = vmatmul.mubr.bf16.gmra.mrb[0].mxu0 %v3667
          %v3992 = vpop.f32.mrb[0].mxu0
          %v3993 = vadd.f32 0.0, %v3992
          %v3994 = vpop.f32.mrb[0].mxu0
          %v3995 = vpop.f32.mrb[0].mxu0
          %v3996 = vadd.f32 0.0, %v3995
          %v3997 = vpop.f32.mrb[0].mxu0
          %3998 = vmatprep.mubr.bf16.mxu0 0
          %3999 = vmatmul.mubr.bf16.gmra.mrb[0].mxu0 %v3684
          %v4000 = vpop.f32.mrb[0].mxu0
          %v4001 = vadd.f32 0.0, %v4000
          %v4002 = vpop.f32.mrb[0].mxu0
          %v4003 = vpop.f32.mrb[0].mxu0
          %v4004 = vadd.f32 0.0, %v4003
          %v4005 = vpop.f32.mrb[0].mxu0
          %4006 = vmatprep.mubr.bf16.mxu0 0
          %4007 = vmatmul.mubr.bf16.gmra.mrb[0].mxu0 %v3701
          %v4008 = vpop.f32.mrb[0].mxu0
          %v4009 = vadd.f32 0.0, %v4008
          %v4010 = vpop.f32.mrb[0].mxu0
          %v4011 = vpop.f32.mrb[0].mxu0
          %v4012 = vadd.f32 0.0, %v4011
          %v4013 = vpop.f32.mrb[0].mxu0
          %4014 = vmatprep.mubr.bf16.mxu0 0
          %4015 = vmatmul.mubr.bf16.gmra.mrb[0].mxu0 %v3718
          %v4016 = vpop.f32.mrb[0].mxu0
          %v4017 = vadd.f32 0.0, %v4016
          %v4018 = vpop.f32.mrb[0].mxu0
          %v4019 = vpop.f32.mrb[0].mxu0
          %v4020 = vadd.f32 0.0, %v4019
          %v4021 = vpop.f32.mrb[0].mxu0
          %4022 = vmatprep.mubr.bf16.mxu0 0
          %4023 = vmatmul.mubr.bf16.gmra.mrb[0].mxu0 %v3735
          %v4024 = vpop.f32.mrb[0].mxu0
          %v4025 = vadd.f32 0.0, %v4024
          %v4026 = vpop.f32.mrb[0].mxu0
          %v4027 = vpop.f32.mrb[0].mxu0
          %v4028 = vadd.f32 0.0, %v4027
          %v4029 = vpop.f32.mrb[0].mxu0
          %4030 = vmatprep.mubr.bf16.mxu0 0
          %4031 = vmatmul.mubr.bf16.gmra.mrb[0].mxu0 %v3752
          %v4032 = vpop.f32.mrb[0].mxu0
          %v4033 = vadd.f32 0.0, %v4032
          %v4034 = vpop.f32.mrb[0].mxu0
          %v4035 = vpop.f32.mrb[0].mxu0
          %v4036 = vadd.f32 0.0, %v4035
          %v4037 = vpop.f32.mrb[0].mxu0
          %4038 = vmatprep.mubr.bf16.mxu0 0
          %4039 = vmatmul.mubr.bf16.gmra.mrb[0].mxu0 %v3769
          %v4040 = vpop.f32.mrb[0].mxu0
          %v4041 = vadd.f32 0.0, %v4040
          %v4042 = vpop.f32.mrb[0].mxu0
          %v4043 = vpop.f32.mrb[0].mxu0
          %v4044 = vadd.f32 0.0, %v4043
          %v4045 = vpop.f32.mrb[0].mxu0
          %4046 = vmatprep.mubr.bf16.mxu0 0
          %4047 = vmatmul.mubr.bf16.gmra.mrb[0].mxu0 %v3786
          %v4048 = vpop.f32.mrb[0].mxu0
          %v4049 = vadd.f32 0.0, %v4048
          %v4050 = vpop.f32.mrb[0].mxu0
          %v4051 = vpop.f32.mrb[0].mxu0
          %v4052 = vadd.f32 0.0, %v4051
          %v4053 = vpop.f32.mrb[0].mxu0
          %4054 = vmatprep.mubr.bf16.mxu0 0
          %4055 = vmatmul.mubr.bf16.gmra.mrb[0].mxu0 %v3803
          %v4056 = vpop.f32.mrb[0].mxu0
          %v4057 = vadd.f32 0.0, %v4056
          %v4058 = vpop.f32.mrb[0].mxu0
          %v4059 = vpop.f32.mrb[0].mxu0
          %v4060 = vadd.f32 0.0, %v4059
          %v4061 = vpop.f32.mrb[0].mxu0
          %4062 = vmatprep.mubr.bf16.mxu0 0
          %4063 = vmatmul.mubr.bf16.gmra.mrb[0].mxu0 %v3820
          %v4064 = vpop.f32.mrb[0].mxu0
          %v4065 = vadd.f32 0.0, %v4064
          %v4066 = vpop.f32.mrb[0].mxu0
          %v4067 = vpop.f32.mrb[0].mxu0
          %v4068 = vadd.f32 0.0, %v4067
          %v4069 = vpop.f32.mrb[0].mxu0
          %4070 = vmatprep.mubr.bf16.mxu0 0
          %4071 = vmatmul.mubr.bf16.gmra.mrb[0].mxu0 %v3837
          %v4072 = vpop.f32.mrb[0].mxu0
          %v4073 = vadd.f32 0.0, %v4072
          %v4074 = vpop.f32.mrb[0].mxu0
          %v4075 = vpop.f32.mrb[0].mxu0
          %v4076 = vadd.f32 0.0, %v4075
          %v4077 = vpop.f32.mrb[0].mxu0
          %4078 = vdwg.mxu0
          %v4079 = vadd.f32 %v3501, %v3953
          %v4080 = vadd.f32 %v3502, %v3956
          %v4081 = vadd.f32 %v3503, %v3961
          %v4082 = vadd.f32 %v3504, %v3964
          %v4083 = vadd.f32 %v3505, %v3969
          %v4084 = vadd.f32 %v3506, %v3972
          %v4085 = vadd.f32 %v3507, %v3977
          %v4086 = vadd.f32 %v3508, %v3980
          %v4087 = vadd.f32 %v3509, %v3985
          %v4088 = vadd.f32 %v3510, %v3988
          %v4089 = vadd.f32 %v3511, %v3993
          %v4090 = vadd.f32 %v3512, %v3996
          %v4091 = vadd.f32 %v3513, %v4001
          %v4092 = vadd.f32 %v3514, %v4004
          %v4093 = vadd.f32 %v3515, %v4009
          %v4094 = vadd.f32 %v3516, %v4012
          %v4095 = vadd.f32 %v3517, %v4017
          %v4096 = vadd.f32 %v3518, %v4020
          %v4097 = vadd.f32 %v3519, %v4025
          %v4098 = vadd.f32 %v3520, %v4028
          %v4099 = vadd.f32 %v3521, %v4033
          %v4100 = vadd.f32 %v3522, %v4036
          %v4101 = vadd.f32 %v3523, %v4041
          %v4102 = vadd.f32 %v3524, %v4044
          %v4103 = vadd.f32 %v3525, %v4049
          %v4104 = vadd.f32 %v3526, %v4052
          %v4105 = vadd.f32 %v3527, %v4057
          %v4106 = vadd.f32 %v3528, %v4060
          %v4107 = vadd.f32 %v3529, %v4065
          %v4108 = vadd.f32 %v3530, %v4068
          %v4109 = vadd.f32 %v3531, %v4073
          %v4110 = vadd.f32 %v3532, %v4076
          %v4111 = vld [vmem:[%s3533] sm:$0xf0]
          %v4112 = vld [vmem:[%s3533 + $0x10] sm:$0xf0]
          %v4113 = vld [vmem:[%s3533 + $0x20] sm:$0xf0]
          %v4114 = vld [vmem:[%s3533 + $0x30] sm:$0xf0]
          %v4115 = vld [vmem:[%s3533 + $0x40] sm:$0xf0]
          %v4116 = vld [vmem:[%s3533 + $0x50] sm:$0xf0]
          %v4117 = vld [vmem:[%s3533 + $0x60] sm:$0xf0]
          %v4118 = vld [vmem:[%s3533 + $0x70] sm:$0xf0]
          %v4119 = vld [vmem:[%s3533 + $0x80] sm:$0xf0]
          %v4120 = vld [vmem:[%s3533 + $0x90] sm:$0xf0]
          %v4121 = vld [vmem:[%s3533 + $0xa0] sm:$0xf0]
          %v4122 = vld [vmem:[%s3533 + $0xb0] sm:$0xf0]
          %v4123 = vld [vmem:[%s3533 + $0xc0] sm:$0xf0]
          %v4124 = vld [vmem:[%s3533 + $0xd0] sm:$0xf0]
          %v4125 = vld [vmem:[%s3533 + $0xe0] sm:$0xf0]
          %v4126 = vld [vmem:[%s3533 + $0xf0] sm:$0xf0]
          %v4159 = vrot.slane %v4111, 4
          %v4160 = vrot.slane %v3535, 4
          %v4161 = vsel %vm965, %v4159, %v4160
          %v4162 = vrot.slane %v4112, 4
          %v4163 = vrot.slane %v3537, 4
          %v4164 = vsel %vm965, %v4162, %v4163
          %v4165 = vrot.slane %v4113, 4
          %v4166 = vrot.slane %v3539, 4
          %v4167 = vsel %vm965, %v4165, %v4166
          %v4168 = vrot.slane %v4114, 4
          %v4169 = vrot.slane %v3541, 4
          %v4170 = vsel %vm965, %v4168, %v4169
          %v4171 = vrot.slane %v4115, 4
          %v4172 = vrot.slane %v3543, 4
          %v4173 = vsel %vm965, %v4171, %v4172
          %v4174 = vrot.slane %v4116, 4
          %v4175 = vrot.slane %v3545, 4
          %v4176 = vsel %vm965, %v4174, %v4175
          %v4177 = vrot.slane %v4117, 4
          %v4178 = vrot.slane %v3547, 4
          %v4179 = vsel %vm965, %v4177, %v4178
          %v4180 = vrot.slane %v4118, 4
          %v4181 = vrot.slane %v3549, 4
          %v4182 = vsel %vm965, %v4180, %v4181
          %v4183 = vrot.slane %v4119, 4
          %v4184 = vrot.slane %v3551, 4
          %v4185 = vsel %vm965, %v4183, %v4184
          %v4186 = vrot.slane %v4120, 4
          %v4187 = vrot.slane %v3553, 4
          %v4188 = vsel %vm965, %v4186, %v4187
          %v4189 = vrot.slane %v4121, 4
          %v4190 = vrot.slane %v3555, 4
          %v4191 = vsel %vm965, %v4189, %v4190
          %v4192 = vrot.slane %v4122, 4
          %v4193 = vrot.slane %v3557, 4
          %v4194 = vsel %vm965, %v4192, %v4193
          %v4195 = vrot.slane %v4123, 4
          %v4196 = vrot.slane %v3559, 4
          %v4197 = vsel %vm965, %v4195, %v4196
          %v4198 = vrot.slane %v4124, 4
          %v4199 = vrot.slane %v3561, 4
          %v4200 = vsel %vm965, %v4198, %v4199
          %v4201 = vrot.slane %v4125, 4
          %v4202 = vrot.slane %v3563, 4
          %v4203 = vsel %vm965, %v4201, %v4202
          %v4204 = vrot.slane %v4126, 4
          %v4205 = vrot.slane %v3565, 4
          %v4206 = vsel %vm965, %v4204, %v4205
          %v4223 = vld [vmem:[%s1 + $0x1c0] sm:$0xf]
          %v4224 = vld [vmem:[%s1 + $0x1c4] sm:$0xf]
          %v4225 = vld [vmem:[%s1 + $0x1c8] sm:$0xf]
          %v4226 = vld [vmem:[%s1 + $0x1cc] sm:$0xf]
          %v4227 = vld [vmem:[%s1 + $0x1d0] sm:$0xf]
          %v4228 = vld [vmem:[%s1 + $0x1d4] sm:$0xf]
          %v4229 = vld [vmem:[%s1 + $0x1d8] sm:$0xf]
          %v4230 = vld [vmem:[%s1 + $0x1dc] sm:$0xf]
          %v4231 = vld [vmem:[%s1 + $0x1e0] sm:$0xf]
          %v4232 = vld [vmem:[%s1 + $0x1e4] sm:$0xf]
          %v4233 = vld [vmem:[%s1 + $0x1e8] sm:$0xf]
          %v4234 = vld [vmem:[%s1 + $0x1ec] sm:$0xf]
          %v4235 = vld [vmem:[%s1 + $0x1f0] sm:$0xf]
          %v4236 = vld [vmem:[%s1 + $0x1f4] sm:$0xf]
          %v4237 = vld [vmem:[%s1 + $0x1f8] sm:$0xf]
          %v4238 = vld [vmem:[%s1 + $0x1fc] sm:$0xf]
          %v4255 = vunpack.c.l.b16 %v4223
          %v4256 = vunpack.c.l.b16 %v4224
          %v4257 = vunpack.c.l.b16 %v4225
          %v4258 = vunpack.c.l.b16 %v4226
          %v4259 = vunpack.c.l.b16 %v4227
          %v4260 = vunpack.c.l.b16 %v4228
          %v4261 = vunpack.c.l.b16 %v4229
          %v4262 = vunpack.c.l.b16 %v4230
          %v4263 = vunpack.c.l.b16 %v4231
          %v4264 = vunpack.c.l.b16 %v4232
          %v4265 = vunpack.c.l.b16 %v4233
          %v4266 = vunpack.c.l.b16 %v4234
          %v4267 = vunpack.c.l.b16 %v4235
          %v4268 = vunpack.c.l.b16 %v4236
          %v4269 = vunpack.c.l.b16 %v4237
          %v4270 = vunpack.c.l.b16 %v4238
          %v4271 = vpack.c.b16 %v4256, %v4255
          %v4272 = vpack.c.b16 %v4258, %v4257
          %v4273 = vpack.c.b16 %v4260, %v4259
          %v4274 = vpack.c.b16 %v4262, %v4261
          %v4275 = vpack.c.b16 %v4264, %v4263
          %v4276 = vpack.c.b16 %v4266, %v4265
          %v4277 = vpack.c.b16 %v4268, %v4267
          %v4278 = vpack.c.b16 %v4270, %v4269
          %4287 = vmatprep.subr.bf16.mxu0 0
          %4288 = vmatpush1.bf16.msra.mxu0 %v4271
          %4289 = vmatprep.subr.bf16.mxu0 0
          %4290 = vmatpush1.bf16.msra.mxu0 %v4272
          %4291 = vmatprep.subr.bf16.mxu0 0
          %4292 = vmatpush1.bf16.msra.mxu0 %v4273
          %4293 = vmatprep.subr.bf16.mxu0 0
          %4294 = vmatpush1.bf16.msra.mxu0 %v4274
          %4295 = vmatprep.subr.bf16.mxu0 0
          %4296 = vmatpush1.bf16.msra.mxu0 %v4275
          %4297 = vmatprep.subr.bf16.mxu0 0
          %4298 = vmatpush1.bf16.msra.mxu0 %v4276
          %4299 = vmatprep.subr.bf16.mxu0 0
          %4300 = vmatpush1.bf16.msra.mxu0 %v4277
          %4301 = vmatprep.subr.bf16.mxu0 0
          %4302 = vmatpush1.bf16.msra.mxu0 %v4278
          %4303 = vmatprep.subr.bf16.mxu0 0
          %4304 = vmatpush1.bf16.msra.mxu0 0
          %4305 = vmatprep.subr.bf16.mxu0 0
          %4306 = vmatpush1.bf16.msra.mxu0 0
          %4307 = vmatprep.subr.bf16.mxu0 0
          %4308 = vmatpush1.bf16.msra.mxu0 0
          %4309 = vmatprep.subr.bf16.mxu0 0
          %4310 = vmatpush1.bf16.msra.mxu0 0
          %4311 = vmatprep.subr.bf16.mxu0 0
          %4312 = vmatpush1.bf16.msra.mxu0 0
          %4313 = vmatprep.subr.bf16.mxu0 0
          %4314 = vmatpush1.bf16.msra.mxu0 0
          %4315 = vmatprep.subr.bf16.mxu0 0
          %4316 = vmatpush1.bf16.msra.mxu0 0
          %4317 = vmatprep.subr.bf16.mxu0 0
          %4318 = vmatpush1.bf16.msra.mxu0 0
          %4319 = vmatprep.mubr.bf16.mxu0 0
          %4320 = vmatmul.mubr.bf16.gmra.mrb[0].mxu0 %v4161
          %v4321 = vpop.f32.mrb[0].mxu0
          %v4322 = vadd.f32 0.0, %v4321
          %v4323 = vpop.f32.mrb[0].mxu0
          %v4324 = vpop.f32.mrb[0].mxu0
          %v4325 = vadd.f32 0.0, %v4324
          %v4326 = vpop.f32.mrb[0].mxu0
          %4327 = vmatprep.mubr.bf16.mxu0 0
          %4328 = vmatmul.mubr.bf16.gmra.mrb[0].mxu0 %v4164
          %v4329 = vpop.f32.mrb[0].mxu0
          %v4330 = vadd.f32 0.0, %v4329
          %v4331 = vpop.f32.mrb[0].mxu0
          %v4332 = vpop.f32.mrb[0].mxu0
          %v4333 = vadd.f32 0.0, %v4332
          %v4334 = vpop.f32.mrb[0].mxu0
          %4335 = vmatprep.mubr.bf16.mxu0 0
          %4336 = vmatmul.mubr.bf16.gmra.mrb[0].mxu0 %v4167
          %v4337 = vpop.f32.mrb[0].mxu0
          %v4338 = vadd.f32 0.0, %v4337
          %v4339 = vpop.f32.mrb[0].mxu0
          %v4340 = vpop.f32.mrb[0].mxu0
          %v4341 = vadd.f32 0.0, %v4340
          %v4342 = vpop.f32.mrb[0].mxu0
          %4343 = vmatprep.mubr.bf16.mxu0 0
          %4344 = vmatmul.mubr.bf16.gmra.mrb[0].mxu0 %v4170
          %v4345 = vpop.f32.mrb[0].mxu0
          %v4346 = vadd.f32 0.0, %v4345
          %v4347 = vpop.f32.mrb[0].mxu0
          %v4348 = vpop.f32.mrb[0].mxu0
          %v4349 = vadd.f32 0.0, %v4348
          %v4350 = vpop.f32.mrb[0].mxu0
          %4351 = vmatprep.mubr.bf16.mxu0 0
          %4352 = vmatmul.mubr.bf16.gmra.mrb[0].mxu0 %v4173
          %v4353 = vpop.f32.mrb[0].mxu0
          %v4354 = vadd.f32 0.0, %v4353
          %v4355 = vpop.f32.mrb[0].mxu0
          %v4356 = vpop.f32.mrb[0].mxu0
          %v4357 = vadd.f32 0.0, %v4356
          %v4358 = vpop.f32.mrb[0].mxu0
          %4359 = vmatprep.mubr.bf16.mxu0 0
          %4360 = vmatmul.mubr.bf16.gmra.mrb[0].mxu0 %v4176
          %v4361 = vpop.f32.mrb[0].mxu0
          %v4362 = vadd.f32 0.0, %v4361
          %v4363 = vpop.f32.mrb[0].mxu0
          %v4364 = vpop.f32.mrb[0].mxu0
          %v4365 = vadd.f32 0.0, %v4364
          %v4366 = vpop.f32.mrb[0].mxu0
          %4367 = vmatprep.mubr.bf16.mxu0 0
          %4368 = vmatmul.mubr.bf16.gmra.mrb[0].mxu0 %v4179
          %v4369 = vpop.f32.mrb[0].mxu0
          %v4370 = vadd.f32 0.0, %v4369
          %v4371 = vpop.f32.mrb[0].mxu0
          %v4372 = vpop.f32.mrb[0].mxu0
          %v4373 = vadd.f32 0.0, %v4372
          %v4374 = vpop.f32.mrb[0].mxu0
          %4375 = vmatprep.mubr.bf16.mxu0 0
          %4376 = vmatmul.mubr.bf16.gmra.mrb[0].mxu0 %v4182
          %v4377 = vpop.f32.mrb[0].mxu0
          %v4378 = vadd.f32 0.0, %v4377
          %v4379 = vpop.f32.mrb[0].mxu0
          %v4380 = vpop.f32.mrb[0].mxu0
          %v4381 = vadd.f32 0.0, %v4380
          %v4382 = vpop.f32.mrb[0].mxu0
          %4383 = vmatprep.mubr.bf16.mxu0 0
          %4384 = vmatmul.mubr.bf16.gmra.mrb[0].mxu0 %v4185
          %v4385 = vpop.f32.mrb[0].mxu0
          %v4386 = vadd.f32 0.0, %v4385
          %v4387 = vpop.f32.mrb[0].mxu0
          %v4388 = vpop.f32.mrb[0].mxu0
          %v4389 = vadd.f32 0.0, %v4388
          %v4390 = vpop.f32.mrb[0].mxu0
          %4391 = vmatprep.mubr.bf16.mxu0 0
          %4392 = vmatmul.mubr.bf16.gmra.mrb[0].mxu0 %v4188
          %v4393 = vpop.f32.mrb[0].mxu0
          %v4394 = vadd.f32 0.0, %v4393
          %v4395 = vpop.f32.mrb[0].mxu0
          %v4396 = vpop.f32.mrb[0].mxu0
          %v4397 = vadd.f32 0.0, %v4396
          %v4398 = vpop.f32.mrb[0].mxu0
          %4399 = vmatprep.mubr.bf16.mxu0 0
          %4400 = vmatmul.mubr.bf16.gmra.mrb[0].mxu0 %v4191
          %v4401 = vpop.f32.mrb[0].mxu0
          %v4402 = vadd.f32 0.0, %v4401
          %v4403 = vpop.f32.mrb[0].mxu0
          %v4404 = vpop.f32.mrb[0].mxu0
          %v4405 = vadd.f32 0.0, %v4404
          %v4406 = vpop.f32.mrb[0].mxu0
          %4407 = vmatprep.mubr.bf16.mxu0 0
          %4408 = vmatmul.mubr.bf16.gmra.mrb[0].mxu0 %v4194
          %v4409 = vpop.f32.mrb[0].mxu0
          %v4410 = vadd.f32 0.0, %v4409
          %v4411 = vpop.f32.mrb[0].mxu0
          %v4412 = vpop.f32.mrb[0].mxu0
          %v4413 = vadd.f32 0.0, %v4412
          %v4414 = vpop.f32.mrb[0].mxu0
          %4415 = vmatprep.mubr.bf16.mxu0 0
          %4416 = vmatmul.mubr.bf16.gmra.mrb[0].mxu0 %v4197
          %v4417 = vpop.f32.mrb[0].mxu0
          %v4418 = vadd.f32 0.0, %v4417
          %v4419 = vpop.f32.mrb[0].mxu0
          %v4420 = vpop.f32.mrb[0].mxu0
          %v4421 = vadd.f32 0.0, %v4420
          %v4422 = vpop.f32.mrb[0].mxu0
          %4423 = vmatprep.mubr.bf16.mxu0 0
          %4424 = vmatmul.mubr.bf16.gmra.mrb[0].mxu0 %v4200
          %v4425 = vpop.f32.mrb[0].mxu0
          %v4426 = vadd.f32 0.0, %v4425
          %v4427 = vpop.f32.mrb[0].mxu0
          %v4428 = vpop.f32.mrb[0].mxu0
          %v4429 = vadd.f32 0.0, %v4428
          %v4430 = vpop.f32.mrb[0].mxu0
          %4431 = vmatprep.mubr.bf16.mxu0 0
          %4432 = vmatmul.mubr.bf16.gmra.mrb[0].mxu0 %v4203
          %v4433 = vpop.f32.mrb[0].mxu0
          %v4434 = vadd.f32 0.0, %v4433
          %v4435 = vpop.f32.mrb[0].mxu0
          %v4436 = vpop.f32.mrb[0].mxu0
          %v4437 = vadd.f32 0.0, %v4436
          %v4438 = vpop.f32.mrb[0].mxu0
          %4439 = vmatprep.mubr.bf16.mxu0 0
          %4440 = vmatmul.mubr.bf16.gmra.mrb[0].mxu0 %v4206
          %v4441 = vpop.f32.mrb[0].mxu0
          %v4442 = vadd.f32 0.0, %v4441
          %v4443 = vpop.f32.mrb[0].mxu0
          %v4444 = vpop.f32.mrb[0].mxu0
          %v4445 = vadd.f32 0.0, %v4444
          %v4446 = vpop.f32.mrb[0].mxu0
          %4447 = vdwg.mxu0
          %v4448 = vadd.f32 %v4079, %v4322
          %v4449 = vadd.f32 %v4080, %v4325
          %v4450 = vadd.f32 %v4081, %v4330
          %v4451 = vadd.f32 %v4082, %v4333
          %v4452 = vadd.f32 %v4083, %v4338
          %v4453 = vadd.f32 %v4084, %v4341
          %v4454 = vadd.f32 %v4085, %v4346
          %v4455 = vadd.f32 %v4086, %v4349
          %v4456 = vadd.f32 %v4087, %v4354
          %v4457 = vadd.f32 %v4088, %v4357
          %v4458 = vadd.f32 %v4089, %v4362
          %v4459 = vadd.f32 %v4090, %v4365
          %v4460 = vadd.f32 %v4091, %v4370
          %v4461 = vadd.f32 %v4092, %v4373
          %v4462 = vadd.f32 %v4093, %v4378
          %v4463 = vadd.f32 %v4094, %v4381
          %v4464 = vadd.f32 %v4095, %v4386
          %v4465 = vadd.f32 %v4096, %v4389
          %v4466 = vadd.f32 %v4097, %v4394
          %v4467 = vadd.f32 %v4098, %v4397
          %v4468 = vadd.f32 %v4099, %v4402
          %v4469 = vadd.f32 %v4100, %v4405
          %v4470 = vadd.f32 %v4101, %v4410
          %v4471 = vadd.f32 %v4102, %v4413
          %v4472 = vadd.f32 %v4103, %v4418
          %v4473 = vadd.f32 %v4104, %v4421
          %v4474 = vadd.f32 %v4105, %v4426
          %v4475 = vadd.f32 %v4106, %v4429
          %v4476 = vadd.f32 %v4107, %v4434
          %v4477 = vadd.f32 %v4108, %v4437
          %v4478 = vadd.f32 %v4109, %v4442
          %v4479 = vadd.f32 %v4110, %v4445
          %v4480 = vld [vmem:[%s3533 + $0x8] sm:$0x1f]
          %v4481 = vld [vmem:[%s3533 + $0x18] sm:$0x1f]
          %v4482 = vld [vmem:[%s3533 + $0x28] sm:$0x1f]
          %v4483 = vld [vmem:[%s3533 + $0x38] sm:$0x1f]
          %v4484 = vld [vmem:[%s3533 + $0x48] sm:$0x1f]
          %v4485 = vld [vmem:[%s3533 + $0x58] sm:$0x1f]
          %v4486 = vld [vmem:[%s3533 + $0x68] sm:$0x1f]
          %v4487 = vld [vmem:[%s3533 + $0x78] sm:$0x1f]
          %v4488 = vld [vmem:[%s3533 + $0x88] sm:$0x1f]
          %v4489 = vld [vmem:[%s3533 + $0x98] sm:$0x1f]
          %v4490 = vld [vmem:[%s3533 + $0xa8] sm:$0x1f]
          %v4491 = vld [vmem:[%s3533 + $0xb8] sm:$0x1f]
          %v4492 = vld [vmem:[%s3533 + $0xc8] sm:$0x1f]
          %v4493 = vld [vmem:[%s3533 + $0xd8] sm:$0x1f]
          %v4494 = vld [vmem:[%s3533 + $0xe8] sm:$0x1f]
          %v4495 = vld [vmem:[%s3533 + $0xf8] sm:$0x1f]
          %v4497 = vshrl.u32 %v4111, 16
          %v4499 = vrot.slane %v4497, 4
          %v4500 = vshll.u32 %v4111, 16
          %v4502 = vrot.slane %v4500, 5
          %v4503 = vor.u32 %v4499, %v4502
          %v4505 = vshrl.u32 %v4480, 16
          %v4507 = vrot.slane %v4505, 4
          %v4508 = vshll.u32 %v4480, 16
          %v4510 = vrot.slane %v4508, 5
          %v4511 = vor.u32 %v4507, %v4510
          %v4512 = vsel %vm1480, %v4503, %v4511
          %v4514 = vshrl.u32 %v4112, 16
          %v4516 = vrot.slane %v4514, 4
          %v4517 = vshll.u32 %v4112, 16
          %v4519 = vrot.slane %v4517, 5
          %v4520 = vor.u32 %v4516, %v4519
          %v4522 = vshrl.u32 %v4481, 16
          %v4524 = vrot.slane %v4522, 4
          %v4525 = vshll.u32 %v4481, 16
          %v4527 = vrot.slane %v4525, 5
          %v4528 = vor.u32 %v4524, %v4527
          %v4529 = vsel %vm1480, %v4520, %v4528
          %v4531 = vshrl.u32 %v4113, 16
          %v4533 = vrot.slane %v4531, 4
          %v4534 = vshll.u32 %v4113, 16
          %v4536 = vrot.slane %v4534, 5
          %v4537 = vor.u32 %v4533, %v4536
          %v4539 = vshrl.u32 %v4482, 16
          %v4541 = vrot.slane %v4539, 4
          %v4542 = vshll.u32 %v4482, 16
          %v4544 = vrot.slane %v4542, 5
          %v4545 = vor.u32 %v4541, %v4544
          %v4546 = vsel %vm1480, %v4537, %v4545
          %v4548 = vshrl.u32 %v4114, 16
          %v4550 = vrot.slane %v4548, 4
          %v4551 = vshll.u32 %v4114, 16
          %v4553 = vrot.slane %v4551, 5
          %v4554 = vor.u32 %v4550, %v4553
          %v4556 = vshrl.u32 %v4483, 16
          %v4558 = vrot.slane %v4556, 4
          %v4559 = vshll.u32 %v4483, 16
          %v4561 = vrot.slane %v4559, 5
          %v4562 = vor.u32 %v4558, %v4561
          %v4563 = vsel %vm1480, %v4554, %v4562
          %v4565 = vshrl.u32 %v4115, 16
          %v4567 = vrot.slane %v4565, 4
          %v4568 = vshll.u32 %v4115, 16
          %v4570 = vrot.slane %v4568, 5
          %v4571 = vor.u32 %v4567, %v4570
          %v4573 = vshrl.u32 %v4484, 16
          %v4575 = vrot.slane %v4573, 4
          %v4576 = vshll.u32 %v4484, 16
          %v4578 = vrot.slane %v4576, 5
          %v4579 = vor.u32 %v4575, %v4578
          %v4580 = vsel %vm1480, %v4571, %v4579
          %v4582 = vshrl.u32 %v4116, 16
          %v4584 = vrot.slane %v4582, 4
          %v4585 = vshll.u32 %v4116, 16
          %v4587 = vrot.slane %v4585, 5
          %v4588 = vor.u32 %v4584, %v4587
          %v4590 = vshrl.u32 %v4485, 16
          %v4592 = vrot.slane %v4590, 4
          %v4593 = vshll.u32 %v4485, 16
          %v4595 = vrot.slane %v4593, 5
          %v4596 = vor.u32 %v4592, %v4595
          %v4597 = vsel %vm1480, %v4588, %v4596
          %v4599 = vshrl.u32 %v4117, 16
          %v4601 = vrot.slane %v4599, 4
          %v4602 = vshll.u32 %v4117, 16
          %v4604 = vrot.slane %v4602, 5
          %v4605 = vor.u32 %v4601, %v4604
          %v4607 = vshrl.u32 %v4486, 16
          %v4609 = vrot.slane %v4607, 4
          %v4610 = vshll.u32 %v4486, 16
          %v4612 = vrot.slane %v4610, 5
          %v4613 = vor.u32 %v4609, %v4612
          %v4614 = vsel %vm1480, %v4605, %v4613
          %v4616 = vshrl.u32 %v4118, 16
          %v4618 = vrot.slane %v4616, 4
          %v4619 = vshll.u32 %v4118, 16
          %v4621 = vrot.slane %v4619, 5
          %v4622 = vor.u32 %v4618, %v4621
          %v4624 = vshrl.u32 %v4487, 16
          %v4626 = vrot.slane %v4624, 4
          %v4627 = vshll.u32 %v4487, 16
          %v4629 = vrot.slane %v4627, 5
          %v4630 = vor.u32 %v4626, %v4629
          %v4631 = vsel %vm1480, %v4622, %v4630
          %v4633 = vshrl.u32 %v4119, 16
          %v4635 = vrot.slane %v4633, 4
          %v4636 = vshll.u32 %v4119, 16
          %v4638 = vrot.slane %v4636, 5
          %v4639 = vor.u32 %v4635, %v4638
          %v4641 = vshrl.u32 %v4488, 16
          %v4643 = vrot.slane %v4641, 4
          %v4644 = vshll.u32 %v4488, 16
          %v4646 = vrot.slane %v4644, 5
          %v4647 = vor.u32 %v4643, %v4646
          %v4648 = vsel %vm1480, %v4639, %v4647
          %v4650 = vshrl.u32 %v4120, 16
          %v4652 = vrot.slane %v4650, 4
          %v4653 = vshll.u32 %v4120, 16
          %v4655 = vrot.slane %v4653, 5
          %v4656 = vor.u32 %v4652, %v4655
          %v4658 = vshrl.u32 %v4489, 16
          %v4660 = vrot.slane %v4658, 4
          %v4661 = vshll.u32 %v4489, 16
          %v4663 = vrot.slane %v4661, 5
          %v4664 = vor.u32 %v4660, %v4663
          %v4665 = vsel %vm1480, %v4656, %v4664
          %v4667 = vshrl.u32 %v4121, 16
          %v4669 = vrot.slane %v4667, 4
          %v4670 = vshll.u32 %v4121, 16
          %v4672 = vrot.slane %v4670, 5
          %v4673 = vor.u32 %v4669, %v4672
          %v4675 = vshrl.u32 %v4490, 16
          %v4677 = vrot.slane %v4675, 4
          %v4678 = vshll.u32 %v4490, 16
          %v4680 = vrot.slane %v4678, 5
          %v4681 = vor.u32 %v4677, %v4680
          %v4682 = vsel %vm1480, %v4673, %v4681
          %v4684 = vshrl.u32 %v4122, 16
          %v4686 = vrot.slane %v4684, 4
          %v4687 = vshll.u32 %v4122, 16
          %v4689 = vrot.slane %v4687, 5
          %v4690 = vor.u32 %v4686, %v4689
          %v4692 = vshrl.u32 %v4491, 16
          %v4694 = vrot.slane %v4692, 4
          %v4695 = vshll.u32 %v4491, 16
          %v4697 = vrot.slane %v4695, 5
          %v4698 = vor.u32 %v4694, %v4697
          %v4699 = vsel %vm1480, %v4690, %v4698
          %v4701 = vshrl.u32 %v4123, 16
          %v4703 = vrot.slane %v4701, 4
          %v4704 = vshll.u32 %v4123, 16
          %v4706 = vrot.slane %v4704, 5
          %v4707 = vor.u32 %v4703, %v4706
          %v4709 = vshrl.u32 %v4492, 16
          %v4711 = vrot.slane %v4709, 4
          %v4712 = vshll.u32 %v4492, 16
          %v4714 = vrot.slane %v4712, 5
          %v4715 = vor.u32 %v4711, %v4714
          %v4716 = vsel %vm1480, %v4707, %v4715
          %v4718 = vshrl.u32 %v4124, 16
          %v4720 = vrot.slane %v4718, 4
          %v4721 = vshll.u32 %v4124, 16
          %v4723 = vrot.slane %v4721, 5
          %v4724 = vor.u32 %v4720, %v4723
          %v4726 = vshrl.u32 %v4493, 16
          %v4728 = vrot.slane %v4726, 4
          %v4729 = vshll.u32 %v4493, 16
          %v4731 = vrot.slane %v4729, 5
          %v4732 = vor.u32 %v4728, %v4731
          %v4733 = vsel %vm1480, %v4724, %v4732
          %v4735 = vshrl.u32 %v4125, 16
          %v4737 = vrot.slane %v4735, 4
          %v4738 = vshll.u32 %v4125, 16
          %v4740 = vrot.slane %v4738, 5
          %v4741 = vor.u32 %v4737, %v4740
          %v4743 = vshrl.u32 %v4494, 16
          %v4745 = vrot.slane %v4743, 4
          %v4746 = vshll.u32 %v4494, 16
          %v4748 = vrot.slane %v4746, 5
          %v4749 = vor.u32 %v4745, %v4748
          %v4750 = vsel %vm1480, %v4741, %v4749
          %v4752 = vshrl.u32 %v4126, 16
          %v4754 = vrot.slane %v4752, 4
          %v4755 = vshll.u32 %v4126, 16
          %v4757 = vrot.slane %v4755, 5
          %v4758 = vor.u32 %v4754, %v4757
          %v4760 = vshrl.u32 %v4495, 16
          %v4762 = vrot.slane %v4760, 4
          %v4763 = vshll.u32 %v4495, 16
          %v4765 = vrot.slane %v4763, 5
          %v4766 = vor.u32 %v4762, %v4765
          %v4767 = vsel %vm1480, %v4758, %v4766
          %v4784 = vld [vmem:[%s1 + $0x200] sm:$0xf]
          %v4785 = vld [vmem:[%s1 + $0x204] sm:$0xf]
          %v4786 = vld [vmem:[%s1 + $0x208] sm:$0xf]
          %v4787 = vld [vmem:[%s1 + $0x20c] sm:$0xf]
          %v4788 = vld [vmem:[%s1 + $0x210] sm:$0xf]
          %v4789 = vld [vmem:[%s1 + $0x214] sm:$0xf]
          %v4790 = vld [vmem:[%s1 + $0x218] sm:$0xf]
          %v4791 = vld [vmem:[%s1 + $0x21c] sm:$0xf]
          %v4792 = vld [vmem:[%s1 + $0x220] sm:$0xf]
          %v4793 = vld [vmem:[%s1 + $0x224] sm:$0xf]
          %v4794 = vld [vmem:[%s1 + $0x228] sm:$0xf]
          %v4795 = vld [vmem:[%s1 + $0x22c] sm:$0xf]
          %v4796 = vld [vmem:[%s1 + $0x230] sm:$0xf]
          %v4797 = vld [vmem:[%s1 + $0x234] sm:$0xf]
          %v4798 = vld [vmem:[%s1 + $0x238] sm:$0xf]
          %v4799 = vld [vmem:[%s1 + $0x23c] sm:$0xf]
          %v4816 = vunpack.c.l.b16 %v4784
          %v4817 = vunpack.c.l.b16 %v4785
          %v4818 = vunpack.c.l.b16 %v4786
          %v4819 = vunpack.c.l.b16 %v4787
          %v4820 = vunpack.c.l.b16 %v4788
          %v4821 = vunpack.c.l.b16 %v4789
          %v4822 = vunpack.c.l.b16 %v4790
          %v4823 = vunpack.c.l.b16 %v4791
          %v4824 = vunpack.c.l.b16 %v4792
          %v4825 = vunpack.c.l.b16 %v4793
          %v4826 = vunpack.c.l.b16 %v4794
          %v4827 = vunpack.c.l.b16 %v4795
          %v4828 = vunpack.c.l.b16 %v4796
          %v4829 = vunpack.c.l.b16 %v4797
          %v4830 = vunpack.c.l.b16 %v4798
          %v4831 = vunpack.c.l.b16 %v4799
          %v4832 = vpack.c.b16 %v4817, %v4816
          %v4833 = vpack.c.b16 %v4819, %v4818
          %v4834 = vpack.c.b16 %v4821, %v4820
          %v4835 = vpack.c.b16 %v4823, %v4822
          %v4836 = vpack.c.b16 %v4825, %v4824
          %v4837 = vpack.c.b16 %v4827, %v4826
          %v4838 = vpack.c.b16 %v4829, %v4828
          %v4839 = vpack.c.b16 %v4831, %v4830
          %4848 = vmatprep.subr.bf16.mxu0 0
          %4849 = vmatpush1.bf16.msra.mxu0 %v4832
          %4850 = vmatprep.subr.bf16.mxu0 0
          %4851 = vmatpush1.bf16.msra.mxu0 %v4833
          %4852 = vmatprep.subr.bf16.mxu0 0
          %4853 = vmatpush1.bf16.msra.mxu0 %v4834
          %4854 = vmatprep.subr.bf16.mxu0 0
          %4855 = vmatpush1.bf16.msra.mxu0 %v4835
          %4856 = vmatprep.subr.bf16.mxu0 0
          %4857 = vmatpush1.bf16.msra.mxu0 %v4836
          %4858 = vmatprep.subr.bf16.mxu0 0
          %4859 = vmatpush1.bf16.msra.mxu0 %v4837
          %4860 = vmatprep.subr.bf16.mxu0 0
          %4861 = vmatpush1.bf16.msra.mxu0 %v4838
          %4862 = vmatprep.subr.bf16.mxu0 0
          %4863 = vmatpush1.bf16.msra.mxu0 %v4839
          %4864 = vmatprep.subr.bf16.mxu0 0
          %4865 = vmatpush1.bf16.msra.mxu0 0
          %4866 = vmatprep.subr.bf16.mxu0 0
          %4867 = vmatpush1.bf16.msra.mxu0 0
          %4868 = vmatprep.subr.bf16.mxu0 0
          %4869 = vmatpush1.bf16.msra.mxu0 0
          %4870 = vmatprep.subr.bf16.mxu0 0
          %4871 = vmatpush1.bf16.msra.mxu0 0
          %4872 = vmatprep.subr.bf16.mxu0 0
          %4873 = vmatpush1.bf16.msra.mxu0 0
          %4874 = vmatprep.subr.bf16.mxu0 0
          %4875 = vmatpush1.bf16.msra.mxu0 0
          %4876 = vmatprep.subr.bf16.mxu0 0
          %4877 = vmatpush1.bf16.msra.mxu0 0
          %4878 = vmatprep.subr.bf16.mxu0 0
          %4879 = vmatpush1.bf16.msra.mxu0 0
          %4880 = vmatprep.mubr.bf16.mxu0 0
          %4881 = vmatmul.mubr.bf16.gmra.mrb[0].mxu0 %v4512
          %v4882 = vpop.f32.mrb[0].mxu0
          %v4883 = vadd.f32 0.0, %v4882
          %v4884 = vpop.f32.mrb[0].mxu0
          %v4885 = vpop.f32.mrb[0].mxu0
          %v4886 = vadd.f32 0.0, %v4885
          %v4887 = vpop.f32.mrb[0].mxu0
          %4888 = vmatprep.mubr.bf16.mxu0 0
          %4889 = vmatmul.mubr.bf16.gmra.mrb[0].mxu0 %v4529
          %v4890 = vpop.f32.mrb[0].mxu0
          %v4891 = vadd.f32 0.0, %v4890
          %v4892 = vpop.f32.mrb[0].mxu0
          %v4893 = vpop.f32.mrb[0].mxu0
          %v4894 = vadd.f32 0.0, %v4893
          %v4895 = vpop.f32.mrb[0].mxu0
          %4896 = vmatprep.mubr.bf16.mxu0 0
          %4897 = vmatmul.mubr.bf16.gmra.mrb[0].mxu0 %v4546
          %v4898 = vpop.f32.mrb[0].mxu0
          %v4899 = vadd.f32 0.0, %v4898
          %v4900 = vpop.f32.mrb[0].mxu0
          %v4901 = vpop.f32.mrb[0].mxu0
          %v4902 = vadd.f32 0.0, %v4901
          %v4903 = vpop.f32.mrb[0].mxu0
          %4904 = vmatprep.mubr.bf16.mxu0 0
          %4905 = vmatmul.mubr.bf16.gmra.mrb[0].mxu0 %v4563
          %v4906 = vpop.f32.mrb[0].mxu0
          %v4907 = vadd.f32 0.0, %v4906
          %v4908 = vpop.f32.mrb[0].mxu0
          %v4909 = vpop.f32.mrb[0].mxu0
          %v4910 = vadd.f32 0.0, %v4909
          %v4911 = vpop.f32.mrb[0].mxu0
          %4912 = vmatprep.mubr.bf16.mxu0 0
          %4913 = vmatmul.mubr.bf16.gmra.mrb[0].mxu0 %v4580
          %v4914 = vpop.f32.mrb[0].mxu0
          %v4915 = vadd.f32 0.0, %v4914
          %v4916 = vpop.f32.mrb[0].mxu0
          %v4917 = vpop.f32.mrb[0].mxu0
          %v4918 = vadd.f32 0.0, %v4917
          %v4919 = vpop.f32.mrb[0].mxu0
          %4920 = vmatprep.mubr.bf16.mxu0 0
          %4921 = vmatmul.mubr.bf16.gmra.mrb[0].mxu0 %v4597
          %v4922 = vpop.f32.mrb[0].mxu0
          %v4923 = vadd.f32 0.0, %v4922
          %v4924 = vpop.f32.mrb[0].mxu0
          %v4925 = vpop.f32.mrb[0].mxu0
          %v4926 = vadd.f32 0.0, %v4925
          %v4927 = vpop.f32.mrb[0].mxu0
          %4928 = vmatprep.mubr.bf16.mxu0 0
          %4929 = vmatmul.mubr.bf16.gmra.mrb[0].mxu0 %v4614
          %v4930 = vpop.f32.mrb[0].mxu0
          %v4931 = vadd.f32 0.0, %v4930
          %v4932 = vpop.f32.mrb[0].mxu0
          %v4933 = vpop.f32.mrb[0].mxu0
          %v4934 = vadd.f32 0.0, %v4933
          %v4935 = vpop.f32.mrb[0].mxu0
          %4936 = vmatprep.mubr.bf16.mxu0 0
          %4937 = vmatmul.mubr.bf16.gmra.mrb[0].mxu0 %v4631
          %v4938 = vpop.f32.mrb[0].mxu0
          %v4939 = vadd.f32 0.0, %v4938
          %v4940 = vpop.f32.mrb[0].mxu0
          %v4941 = vpop.f32.mrb[0].mxu0
          %v4942 = vadd.f32 0.0, %v4941
          %v4943 = vpop.f32.mrb[0].mxu0
          %4944 = vmatprep.mubr.bf16.mxu0 0
          %4945 = vmatmul.mubr.bf16.gmra.mrb[0].mxu0 %v4648
          %v4946 = vpop.f32.mrb[0].mxu0
          %v4947 = vadd.f32 0.0, %v4946
          %v4948 = vpop.f32.mrb[0].mxu0
          %v4949 = vpop.f32.mrb[0].mxu0
          %v4950 = vadd.f32 0.0, %v4949
          %v4951 = vpop.f32.mrb[0].mxu0
          %4952 = vmatprep.mubr.bf16.mxu0 0
          %4953 = vmatmul.mubr.bf16.gmra.mrb[0].mxu0 %v4665
          %v4954 = vpop.f32.mrb[0].mxu0
          %v4955 = vadd.f32 0.0, %v4954
          %v4956 = vpop.f32.mrb[0].mxu0
          %v4957 = vpop.f32.mrb[0].mxu0
          %v4958 = vadd.f32 0.0, %v4957
          %v4959 = vpop.f32.mrb[0].mxu0
          %4960 = vmatprep.mubr.bf16.mxu0 0
          %4961 = vmatmul.mubr.bf16.gmra.mrb[0].mxu0 %v4682
          %v4962 = vpop.f32.mrb[0].mxu0
          %v4963 = vadd.f32 0.0, %v4962
          %v4964 = vpop.f32.mrb[0].mxu0
          %v4965 = vpop.f32.mrb[0].mxu0
          %v4966 = vadd.f32 0.0, %v4965
          %v4967 = vpop.f32.mrb[0].mxu0
          %4968 = vmatprep.mubr.bf16.mxu0 0
          %4969 = vmatmul.mubr.bf16.gmra.mrb[0].mxu0 %v4699
          %v4970 = vpop.f32.mrb[0].mxu0
          %v4971 = vadd.f32 0.0, %v4970
          %v4972 = vpop.f32.mrb[0].mxu0
          %v4973 = vpop.f32.mrb[0].mxu0
          %v4974 = vadd.f32 0.0, %v4973
          %v4975 = vpop.f32.mrb[0].mxu0
          %4976 = vmatprep.mubr.bf16.mxu0 0
          %4977 = vmatmul.mubr.bf16.gmra.mrb[0].mxu0 %v4716
          %v4978 = vpop.f32.mrb[0].mxu0
          %v4979 = vadd.f32 0.0, %v4978
          %v4980 = vpop.f32.mrb[0].mxu0
          %v4981 = vpop.f32.mrb[0].mxu0
          %v4982 = vadd.f32 0.0, %v4981
          %v4983 = vpop.f32.mrb[0].mxu0
          %4984 = vmatprep.mubr.bf16.mxu0 0
          %4985 = vmatmul.mubr.bf16.gmra.mrb[0].mxu0 %v4733
          %v4986 = vpop.f32.mrb[0].mxu0
          %v4987 = vadd.f32 0.0, %v4986
          %v4988 = vpop.f32.mrb[0].mxu0
          %v4989 = vpop.f32.mrb[0].mxu0
          %v4990 = vadd.f32 0.0, %v4989
          %v4991 = vpop.f32.mrb[0].mxu0
          %4992 = vmatprep.mubr.bf16.mxu0 0
          %4993 = vmatmul.mubr.bf16.gmra.mrb[0].mxu0 %v4750
          %v4994 = vpop.f32.mrb[0].mxu0
          %v4995 = vadd.f32 0.0, %v4994
          %v4996 = vpop.f32.mrb[0].mxu0
          %v4997 = vpop.f32.mrb[0].mxu0
          %v4998 = vadd.f32 0.0, %v4997
          %v4999 = vpop.f32.mrb[0].mxu0
          %5000 = vmatprep.mubr.bf16.mxu0 0
          %5001 = vmatmul.mubr.bf16.gmra.mrb[0].mxu0 %v4767
          %v5002 = vpop.f32.mrb[0].mxu0
          %v5003 = vadd.f32 0.0, %v5002
          %v5004 = vpop.f32.mrb[0].mxu0
          %v5005 = vpop.f32.mrb[0].mxu0
          %v5006 = vadd.f32 0.0, %v5005
          %v5007 = vpop.f32.mrb[0].mxu0
          %5008 = vdwg.mxu0
          %v5009 = vadd.f32 %v4448, %v4883
          %v5010 = vadd.f32 %v4449, %v4886
          %v5011 = vadd.f32 %v4450, %v4891
          %v5012 = vadd.f32 %v4451, %v4894
          %v5013 = vadd.f32 %v4452, %v4899
          %v5014 = vadd.f32 %v4453, %v4902
          %v5015 = vadd.f32 %v4454, %v4907
          %v5016 = vadd.f32 %v4455, %v4910
          %v5017 = vadd.f32 %v4456, %v4915
          %v5018 = vadd.f32 %v4457, %v4918
          %v5019 = vadd.f32 %v4458, %v4923
          %v5020 = vadd.f32 %v4459, %v4926
          %v5021 = vadd.f32 %v4460, %v4931
          %v5022 = vadd.f32 %v4461, %v4934
          %v5023 = vadd.f32 %v4462, %v4939
          %v5024 = vadd.f32 %v4463, %v4942
          %v5025 = vadd.f32 %v4464, %v4947
          %v5026 = vadd.f32 %v4465, %v4950
          %v5027 = vadd.f32 %v4466, %v4955
          %v5028 = vadd.f32 %v4467, %v4958
          %v5029 = vadd.f32 %v4468, %v4963
          %v5030 = vadd.f32 %v4469, %v4966
          %v5031 = vadd.f32 %v4470, %v4971
          %v5032 = vadd.f32 %v4471, %v4974
          %v5033 = vadd.f32 %v4472, %v4979
          %v5034 = vadd.f32 %v4473, %v4982
          %v5035 = vadd.f32 %v4474, %v4987
          %v5036 = vadd.f32 %v4475, %v4990
          %v5037 = vadd.f32 %v4476, %v4995
          %v5038 = vadd.f32 %v4477, %v4998
          %v5039 = vadd.f32 %v4478, %v5003
          %v5040 = vadd.f32 %v4479, %v5006
          %v5041 = vld [vmem:[%s2] sm:$0x1]
          %v5043 = vlaneseq
          %v5044 = vshrl.u32 %v5043, 7
          %v5045 = vsub.s32 0, %v5044
          %v5046 = vrot.slane %v5041, %v5045
          %v5048 = vadd.f32 %v5009, %v5046
          %v5049 = vadd.f32 %v5010, %v5046
          %v5050 = vadd.f32 %v5011, %v5046
          %v5051 = vadd.f32 %v5012, %v5046
          %v5052 = vadd.f32 %v5013, %v5046
          %v5053 = vadd.f32 %v5014, %v5046
          %v5054 = vadd.f32 %v5015, %v5046
          %v5055 = vadd.f32 %v5016, %v5046
          %v5056 = vadd.f32 %v5017, %v5046
          %v5057 = vadd.f32 %v5018, %v5046
          %v5058 = vadd.f32 %v5019, %v5046
          %v5059 = vadd.f32 %v5020, %v5046
          %v5060 = vadd.f32 %v5021, %v5046
          %v5061 = vadd.f32 %v5022, %v5046
          %v5062 = vadd.f32 %v5023, %v5046
          %v5063 = vadd.f32 %v5024, %v5046
          %v5064 = vadd.f32 %v5025, %v5046
          %v5065 = vadd.f32 %v5026, %v5046
          %v5066 = vadd.f32 %v5027, %v5046
          %v5067 = vadd.f32 %v5028, %v5046
          %v5068 = vadd.f32 %v5029, %v5046
          %v5069 = vadd.f32 %v5030, %v5046
          %v5070 = vadd.f32 %v5031, %v5046
          %v5071 = vadd.f32 %v5032, %v5046
          %v5072 = vadd.f32 %v5033, %v5046
          %v5073 = vadd.f32 %v5034, %v5046
          %v5074 = vadd.f32 %v5035, %v5046
          %v5075 = vadd.f32 %v5036, %v5046
          %v5076 = vadd.f32 %v5037, %v5046
          %v5077 = vadd.f32 %v5038, %v5046
          %v5078 = vadd.f32 %v5039, %v5046
          %v5079 = vadd.f32 %v5040, %v5046
          %v5080 = vmax.f32 %v5048, 0.0
          %v5081 = vmax.f32 %v5049, 0.0
          %v5082 = vmax.f32 %v5050, 0.0
          %v5083 = vmax.f32 %v5051, 0.0
          %v5084 = vmax.f32 %v5052, 0.0
          %v5085 = vmax.f32 %v5053, 0.0
          %v5086 = vmax.f32 %v5054, 0.0
          %v5087 = vmax.f32 %v5055, 0.0
          %v5088 = vmax.f32 %v5056, 0.0
          %v5089 = vmax.f32 %v5057, 0.0
          %v5090 = vmax.f32 %v5058, 0.0
          %v5091 = vmax.f32 %v5059, 0.0
          %v5092 = vmax.f32 %v5060, 0.0
          %v5093 = vmax.f32 %v5061, 0.0
          %v5094 = vmax.f32 %v5062, 0.0
          %v5095 = vmax.f32 %v5063, 0.0
          %v5096 = vmax.f32 %v5064, 0.0
          %v5097 = vmax.f32 %v5065, 0.0
          %v5098 = vmax.f32 %v5066, 0.0
          %v5099 = vmax.f32 %v5067, 0.0
          %v5100 = vmax.f32 %v5068, 0.0
          %v5101 = vmax.f32 %v5069, 0.0
          %v5102 = vmax.f32 %v5070, 0.0
          %v5103 = vmax.f32 %v5071, 0.0
          %v5104 = vmax.f32 %v5072, 0.0
          %v5105 = vmax.f32 %v5073, 0.0
          %v5106 = vmax.f32 %v5074, 0.0
          %v5107 = vmax.f32 %v5075, 0.0
          %v5108 = vmax.f32 %v5076, 0.0
          %v5109 = vmax.f32 %v5077, 0.0
          %v5110 = vmax.f32 %v5078, 0.0
          %v5111 = vmax.f32 %v5079, 0.0
          %v5112 = vpack.c.bf16 %v5081, %v5080
          %v5113 = vpack.c.bf16 %v5083, %v5082
          %v5114 = vpack.c.bf16 %v5085, %v5084
          %v5115 = vpack.c.bf16 %v5087, %v5086
          %v5116 = vpack.c.bf16 %v5089, %v5088
          %v5117 = vpack.c.bf16 %v5091, %v5090
          %v5118 = vpack.c.bf16 %v5093, %v5092
          %v5119 = vpack.c.bf16 %v5095, %v5094
          %v5120 = vpack.c.bf16 %v5097, %v5096
          %v5121 = vpack.c.bf16 %v5099, %v5098
          %v5122 = vpack.c.bf16 %v5101, %v5100
          %v5123 = vpack.c.bf16 %v5103, %v5102
          %v5124 = vpack.c.bf16 %v5105, %v5104
          %v5125 = vpack.c.bf16 %v5107, %v5106
          %v5126 = vpack.c.bf16 %v5109, %v5108
          %v5127 = vpack.c.bf16 %v5111, %v5110
          %v5144 = vrot.slane %v5112, 4
          %v5145 = vrot.slane %v5113, 4
          %v5146 = vrot.slane %v5114, 4
          %v5147 = vrot.slane %v5115, 4
          %v5148 = vrot.slane %v5116, 4
          %v5149 = vrot.slane %v5117, 4
          %v5150 = vrot.slane %v5118, 4
          %v5151 = vrot.slane %v5119, 4
          %v5152 = vrot.slane %v5120, 4
          %v5153 = vrot.slane %v5121, 4
          %v5154 = vrot.slane %v5122, 4
          %v5155 = vrot.slane %v5123, 4
          %v5156 = vrot.slane %v5124, 4
          %v5157 = vrot.slane %v5125, 4
          %v5158 = vrot.slane %v5126, 4
          %v5159 = vrot.slane %v5127, 4
          %5176 = vst [vmem:[%s356] sm:$0xf0] %v5144
          %5177 = vst [vmem:[%s356 + $0x8] sm:$0xf] %v5144
          %5178 = vst [vmem:[%s356 + $0x10] sm:$0xf0] %v5145
          %5179 = vst [vmem:[%s356 + $0x18] sm:$0xf] %v5145
          %5180 = vst [vmem:[%s356 + $0x20] sm:$0xf0] %v5146
          %5181 = vst [vmem:[%s356 + $0x28] sm:$0xf] %v5146
          %5182 = vst [vmem:[%s356 + $0x30] sm:$0xf0] %v5147
          %5183 = vst [vmem:[%s356 + $0x38] sm:$0xf] %v5147
          %5184 = vst [vmem:[%s356 + $0x40] sm:$0xf0] %v5148
          %5185 = vst [vmem:[%s356 + $0x48] sm:$0xf] %v5148
          %5186 = vst [vmem:[%s356 + $0x50] sm:$0xf0] %v5149
          %5187 = vst [vmem:[%s356 + $0x58] sm:$0xf] %v5149
          %5188 = vst [vmem:[%s356 + $0x60] sm:$0xf0] %v5150
          %5189 = vst [vmem:[%s356 + $0x68] sm:$0xf] %v5150
          %5190 = vst [vmem:[%s356 + $0x70] sm:$0xf0] %v5151
          %5191 = vst [vmem:[%s356 + $0x78] sm:$0xf] %v5151
          %5192 = vst [vmem:[%s356 + $0x80] sm:$0xf0] %v5152
          %5193 = vst [vmem:[%s356 + $0x88] sm:$0xf] %v5152
          %5194 = vst [vmem:[%s356 + $0x90] sm:$0xf0] %v5153
          %5195 = vst [vmem:[%s356 + $0x98] sm:$0xf] %v5153
          %5196 = vst [vmem:[%s356 + $0xa0] sm:$0xf0] %v5154
          %5197 = vst [vmem:[%s356 + $0xa8] sm:$0xf] %v5154
          %5198 = vst [vmem:[%s356 + $0xb0] sm:$0xf0] %v5155
          %5199 = vst [vmem:[%s356 + $0xb8] sm:$0xf] %v5155
          %5200 = vst [vmem:[%s356 + $0xc0] sm:$0xf0] %v5156
          %5201 = vst [vmem:[%s356 + $0xc8] sm:$0xf] %v5156
          %5202 = vst [vmem:[%s356 + $0xd0] sm:$0xf0] %v5157
          %5203 = vst [vmem:[%s356 + $0xd8] sm:$0xf] %v5157
          %5204 = vst [vmem:[%s356 + $0xe0] sm:$0xf0] %v5158
          %5205 = vst [vmem:[%s356 + $0xe8] sm:$0xf] %v5158
          %5206 = vst [vmem:[%s356 + $0xf0] sm:$0xf0] %v5159
          %5207 = vst [vmem:[%s356 + $0xf8] sm:$0xf] %v5159
        $region44: #{unit_pallas_nhwc.1} parent=39 // pred_fallthru
          _
        %s5208 = smul.u32 %s24, 8
        %s5209 = smul.u32 %s5208, 2
        %s5210 = smul.addr %s5209, 8
        %s5211 = scalar_lea.vmem [#allocation3], %s5210
        %v5212 = vld [vmem:[%s5211] sm:$0xf8]
        %v5213 = vld [vmem:[%s5211 + $0x8] sm:$0xf]
        %v5214 = vld [vmem:[%s5211 + $0x10] sm:$0xf8]
        %v5215 = vld [vmem:[%s5211 + $0x18] sm:$0xf]
        %v5216 = vld [vmem:[%s5211 + $0x20] sm:$0xf8]
        %v5217 = vld [vmem:[%s5211 + $0x28] sm:$0xf]
        %v5218 = vld [vmem:[%s5211 + $0x30] sm:$0xf8]
        %v5219 = vld [vmem:[%s5211 + $0x38] sm:$0xf]
        %v5220 = vld [vmem:[%s5211 + $0x40] sm:$0xf8]
        %v5221 = vld [vmem:[%s5211 + $0x48] sm:$0xf]
        %v5222 = vld [vmem:[%s5211 + $0x50] sm:$0xf8]
        %v5223 = vld [vmem:[%s5211 + $0x58] sm:$0xf]
        %v5224 = vld [vmem:[%s5211 + $0x60] sm:$0xf8]
        %v5225 = vld [vmem:[%s5211 + $0x68] sm:$0xf]
        %v5226 = vld [vmem:[%s5211 + $0x70] sm:$0xf8]
        %v5227 = vld [vmem:[%s5211 + $0x78] sm:$0xf]
        %vm5228 = vsmask.f32 4352
        %v5230 = vshrl.u32 %v5212, 16
        %v5232 = vrot.slane %v5230, 3
        %v5233 = vshll.u32 %v5212, 16
        %v5235 = vrot.slane %v5233, 4
        %v5236 = vor.u32 %v5232, %v5235
        %v5238 = vshrl.u32 %v5213, 16
        %v5240 = vrot.slane %v5238, 3
        %v5241 = vshll.u32 %v5213, 16
        %v5243 = vrot.slane %v5241, 4
        %v5244 = vor.u32 %v5240, %v5243
        %v5245 = vsel %vm5228, %v5236, %v5244
        %v5247 = vshrl.u32 %v5214, 16
        %v5249 = vrot.slane %v5247, 3
        %v5250 = vshll.u32 %v5214, 16
        %v5252 = vrot.slane %v5250, 4
        %v5253 = vor.u32 %v5249, %v5252
        %v5255 = vshrl.u32 %v5215, 16
        %v5257 = vrot.slane %v5255, 3
        %v5258 = vshll.u32 %v5215, 16
        %v5260 = vrot.slane %v5258, 4
        %v5261 = vor.u32 %v5257, %v5260
        %v5262 = vsel %vm5228, %v5253, %v5261
        %v5264 = vshrl.u32 %v5216, 16
        %v5266 = vrot.slane %v5264, 3
        %v5267 = vshll.u32 %v5216, 16
        %v5269 = vrot.slane %v5267, 4
        %v5270 = vor.u32 %v5266, %v5269
        %v5272 = vshrl.u32 %v5217, 16
        %v5274 = vrot.slane %v5272, 3
        %v5275 = vshll.u32 %v5217, 16
        %v5277 = vrot.slane %v5275, 4
        %v5278 = vor.u32 %v5274, %v5277
        %v5279 = vsel %vm5228, %v5270, %v5278
        %v5281 = vshrl.u32 %v5218, 16
        %v5283 = vrot.slane %v5281, 3
        %v5284 = vshll.u32 %v5218, 16
        %v5286 = vrot.slane %v5284, 4
        %v5287 = vor.u32 %v5283, %v5286
        %v5289 = vshrl.u32 %v5219, 16
        %v5291 = vrot.slane %v5289, 3
        %v5292 = vshll.u32 %v5219, 16
        %v5294 = vrot.slane %v5292, 4
        %v5295 = vor.u32 %v5291, %v5294
        %v5296 = vsel %vm5228, %v5287, %v5295
        %v5298 = vshrl.u32 %v5220, 16
        %v5300 = vrot.slane %v5298, 3
        %v5301 = vshll.u32 %v5220, 16
        %v5303 = vrot.slane %v5301, 4
        %v5304 = vor.u32 %v5300, %v5303
        %v5306 = vshrl.u32 %v5221, 16
        %v5308 = vrot.slane %v5306, 3
        %v5309 = vshll.u32 %v5221, 16
        %v5311 = vrot.slane %v5309, 4
        %v5312 = vor.u32 %v5308, %v5311
        %v5313 = vsel %vm5228, %v5304, %v5312
        %v5315 = vshrl.u32 %v5222, 16
        %v5317 = vrot.slane %v5315, 3
        %v5318 = vshll.u32 %v5222, 16
        %v5320 = vrot.slane %v5318, 4
        %v5321 = vor.u32 %v5317, %v5320
        %v5323 = vshrl.u32 %v5223, 16
        %v5325 = vrot.slane %v5323, 3
        %v5326 = vshll.u32 %v5223, 16
        %v5328 = vrot.slane %v5326, 4
        %v5329 = vor.u32 %v5325, %v5328
        %v5330 = vsel %vm5228, %v5321, %v5329
        %v5332 = vshrl.u32 %v5224, 16
        %v5334 = vrot.slane %v5332, 3
        %v5335 = vshll.u32 %v5224, 16
        %v5337 = vrot.slane %v5335, 4
        %v5338 = vor.u32 %v5334, %v5337
        %v5340 = vshrl.u32 %v5225, 16
        %v5342 = vrot.slane %v5340, 3
        %v5343 = vshll.u32 %v5225, 16
        %v5345 = vrot.slane %v5343, 4
        %v5346 = vor.u32 %v5342, %v5345
        %v5347 = vsel %vm5228, %v5338, %v5346
        %v5349 = vshrl.u32 %v5226, 16
        %v5351 = vrot.slane %v5349, 3
        %v5352 = vshll.u32 %v5226, 16
        %v5354 = vrot.slane %v5352, 4
        %v5355 = vor.u32 %v5351, %v5354
        %v5357 = vshrl.u32 %v5227, 16
        %v5359 = vrot.slane %v5357, 3
        %v5360 = vshll.u32 %v5227, 16
        %v5362 = vrot.slane %v5360, 4
        %v5363 = vor.u32 %v5359, %v5362
        %v5364 = vsel %vm5228, %v5355, %v5363
        %v5373 = vld [vmem:[%s3] sm:$0xf]
        %v5374 = vld [vmem:[%s3 + $0x4] sm:$0xf]
        %v5375 = vld [vmem:[%s3 + $0x8] sm:$0xf]
        %v5376 = vld [vmem:[%s3 + $0xc] sm:$0xf]
        %v5377 = vld [vmem:[%s3 + $0x10] sm:$0xf]
        %v5378 = vld [vmem:[%s3 + $0x14] sm:$0xf]
        %v5379 = vld [vmem:[%s3 + $0x18] sm:$0xf]
        %v5380 = vld [vmem:[%s3 + $0x1c] sm:$0xf]
        %v5381 = vld [vmem:[%s3 + $0x20] sm:$0xf]
        %v5382 = vld [vmem:[%s3 + $0x24] sm:$0xf]
        %v5383 = vld [vmem:[%s3 + $0x28] sm:$0xf]
        %v5384 = vld [vmem:[%s3 + $0x2c] sm:$0xf]
        %v5385 = vld [vmem:[%s3 + $0x30] sm:$0xf]
        %v5386 = vld [vmem:[%s3 + $0x34] sm:$0xf]
        %v5387 = vld [vmem:[%s3 + $0x38] sm:$0xf]
        %v5388 = vld [vmem:[%s3 + $0x3c] sm:$0xf]
        %v5389 = vld [vmem:[%s5211] sm:$0xf0]
        %v5390 = vld [vmem:[%s5211 + $0x10] sm:$0xf0]
        %v5391 = vld [vmem:[%s5211 + $0x20] sm:$0xf0]
        %v5392 = vld [vmem:[%s5211 + $0x30] sm:$0xf0]
        %v5393 = vld [vmem:[%s5211 + $0x40] sm:$0xf0]
        %v5394 = vld [vmem:[%s5211 + $0x50] sm:$0xf0]
        %v5395 = vld [vmem:[%s5211 + $0x60] sm:$0xf0]
        %v5396 = vld [vmem:[%s5211 + $0x70] sm:$0xf0]
        %vm5413 = vcmask 1043456
        %v5414 = vrot.slane %v5389, 4
        %v5415 = vrot.slane %v5213, 4
        %v5416 = vsel %vm5413, %v5414, %v5415
        %v5417 = vrot.slane %v5390, 4
        %v5418 = vrot.slane %v5215, 4
        %v5419 = vsel %vm5413, %v5417, %v5418
        %v5420 = vrot.slane %v5391, 4
        %v5421 = vrot.slane %v5217, 4
        %v5422 = vsel %vm5413, %v5420, %v5421
        %v5423 = vrot.slane %v5392, 4
        %v5424 = vrot.slane %v5219, 4
        %v5425 = vsel %vm5413, %v5423, %v5424
        %v5426 = vrot.slane %v5393, 4
        %v5427 = vrot.slane %v5221, 4
        %v5428 = vsel %vm5413, %v5426, %v5427
        %v5429 = vrot.slane %v5394, 4
        %v5430 = vrot.slane %v5223, 4
        %v5431 = vsel %vm5413, %v5429, %v5430
        %v5432 = vrot.slane %v5395, 4
        %v5433 = vrot.slane %v5225, 4
        %v5434 = vsel %vm5413, %v5432, %v5433
        %v5435 = vrot.slane %v5396, 4
        %v5436 = vrot.slane %v5227, 4
        %v5437 = vsel %vm5413, %v5435, %v5436
        %v5446 = vld [vmem:[%s3 + $0x40] sm:$0xf]
        %v5447 = vld [vmem:[%s3 + $0x44] sm:$0xf]
        %v5448 = vld [vmem:[%s3 + $0x48] sm:$0xf]
        %v5449 = vld [vmem:[%s3 + $0x4c] sm:$0xf]
        %v5450 = vld [vmem:[%s3 + $0x50] sm:$0xf]
        %v5451 = vld [vmem:[%s3 + $0x54] sm:$0xf]
        %v5452 = vld [vmem:[%s3 + $0x58] sm:$0xf]
        %v5453 = vld [vmem:[%s3 + $0x5c] sm:$0xf]
        %v5454 = vld [vmem:[%s3 + $0x60] sm:$0xf]
        %v5455 = vld [vmem:[%s3 + $0x64] sm:$0xf]
        %v5456 = vld [vmem:[%s3 + $0x68] sm:$0xf]
        %v5457 = vld [vmem:[%s3 + $0x6c] sm:$0xf]
        %v5458 = vld [vmem:[%s3 + $0x70] sm:$0xf]
        %v5459 = vld [vmem:[%s3 + $0x74] sm:$0xf]
        %v5460 = vld [vmem:[%s3 + $0x78] sm:$0xf]
        %v5461 = vld [vmem:[%s3 + $0x7c] sm:$0xf]
        %v5478 = vunpack.c.l.b16 %v5446
        %v5479 = vunpack.c.l.b16 %v5447
        %v5480 = vunpack.c.l.b16 %v5448
        %v5481 = vunpack.c.l.b16 %v5449
        %v5482 = vunpack.c.l.b16 %v5450
        %v5483 = vunpack.c.l.b16 %v5451
        %v5484 = vunpack.c.l.b16 %v5452
        %v5485 = vunpack.c.l.b16 %v5453
        %v5486 = vunpack.c.l.b16 %v5454
        %v5487 = vunpack.c.l.b16 %v5455
        %v5488 = vunpack.c.l.b16 %v5456
        %v5489 = vunpack.c.l.b16 %v5457
        %v5490 = vunpack.c.l.b16 %v5458
        %v5491 = vunpack.c.l.b16 %v5459
        %v5492 = vunpack.c.l.b16 %v5460
        %v5493 = vunpack.c.l.b16 %v5461
        %v5494 = vpack.c.b16 %v5479, %v5478
        %v5495 = vpack.c.b16 %v5481, %v5480
        %v5496 = vpack.c.b16 %v5483, %v5482
        %v5497 = vpack.c.b16 %v5485, %v5484
        %v5498 = vpack.c.b16 %v5487, %v5486
        %v5499 = vpack.c.b16 %v5489, %v5488
        %v5500 = vpack.c.b16 %v5491, %v5490
        %v5501 = vpack.c.b16 %v5493, %v5492
        %5510 = vmatprep.subr.bf16.mxu0 0
        %5511 = vmatpush1.bf16.msra.mxu0 %v5494
        %5512 = vmatprep.subr.bf16.mxu0 0
        %5513 = vmatpush1.bf16.msra.mxu0 %v5495
        %5514 = vmatprep.subr.bf16.mxu0 0
        %5515 = vmatpush1.bf16.msra.mxu0 %v5496
        %5516 = vmatprep.subr.bf16.mxu0 0
        %5517 = vmatpush1.bf16.msra.mxu0 %v5497
        %5518 = vmatprep.subr.bf16.mxu0 0
        %5519 = vmatpush1.bf16.msra.mxu0 %v5498
        %5520 = vmatprep.subr.bf16.mxu0 0
        %5521 = vmatpush1.bf16.msra.mxu0 %v5499
        %5522 = vmatprep.subr.bf16.mxu0 0
        %5523 = vmatpush1.bf16.msra.mxu0 %v5500
        %5524 = vmatprep.subr.bf16.mxu0 0
        %5525 = vmatpush1.bf16.msra.mxu0 %v5501
        %5526 = vmatprep.subr.bf16.mxu0 0
        %5527 = vmatpush1.bf16.msra.mxu0 0
        %5528 = vmatprep.subr.bf16.mxu0 0
        %5529 = vmatpush1.bf16.msra.mxu0 0
        %5530 = vmatprep.subr.bf16.mxu0 0
        %5531 = vmatpush1.bf16.msra.mxu0 0
        %5532 = vmatprep.subr.bf16.mxu0 0
        %5533 = vmatpush1.bf16.msra.mxu0 0
        %5534 = vmatprep.subr.bf16.mxu0 0
        %5535 = vmatpush1.bf16.msra.mxu0 0
        %5536 = vmatprep.subr.bf16.mxu0 0
        %5537 = vmatpush1.bf16.msra.mxu0 0
        %5538 = vmatprep.subr.bf16.mxu0 0
        %5539 = vmatpush1.bf16.msra.mxu0 0
        %5540 = vmatprep.subr.bf16.mxu0 0
        %5541 = vmatpush1.bf16.msra.mxu0 0
        %5542 = vmatprep.mubr.bf16.mxu0 0
        %5543 = vmatmul.mubr.bf16.gmra.mrb[0].mxu0 %v5416
        %v5544 = vpop.f32.mrb[0].mxu0
        %v5545 = vadd.f32 0.0, %v5544
        %v5546 = vpop.f32.mrb[0].mxu0
        %v5547 = vpop.f32.mrb[0].mxu0
        %v5548 = vadd.f32 0.0, %v5547
        %v5549 = vpop.f32.mrb[0].mxu0
        %5550 = vmatprep.mubr.bf16.mxu0 0
        %5551 = vmatmul.mubr.bf16.gmra.mrb[0].mxu0 %v5419
        %v5552 = vpop.f32.mrb[0].mxu0
        %v5553 = vadd.f32 0.0, %v5552
        %v5554 = vpop.f32.mrb[0].mxu0
        %v5555 = vpop.f32.mrb[0].mxu0
        %v5556 = vadd.f32 0.0, %v5555
        %v5557 = vpop.f32.mrb[0].mxu0
        %5558 = vmatprep.mubr.bf16.mxu0 0
        %5559 = vmatmul.mubr.bf16.gmra.mrb[0].mxu0 %v5422
        %v5560 = vpop.f32.mrb[0].mxu0
        %v5561 = vadd.f32 0.0, %v5560
        %v5562 = vpop.f32.mrb[0].mxu0
        %v5563 = vpop.f32.mrb[0].mxu0
        %v5564 = vadd.f32 0.0, %v5563
        %v5565 = vpop.f32.mrb[0].mxu0
        %5566 = vmatprep.mubr.bf16.mxu0 0
        %5567 = vmatmul.mubr.bf16.gmra.mrb[0].mxu0 %v5425
        %v5568 = vpop.f32.mrb[0].mxu0
        %v5569 = vadd.f32 0.0, %v5568
        %v5570 = vpop.f32.mrb[0].mxu0
        %v5571 = vpop.f32.mrb[0].mxu0
        %v5572 = vadd.f32 0.0, %v5571
        %v5573 = vpop.f32.mrb[0].mxu0
        %5574 = vmatprep.mubr.bf16.mxu0 0
        %5575 = vmatmul.mubr.bf16.gmra.mrb[0].mxu0 %v5428
        %v5576 = vpop.f32.mrb[0].mxu0
        %v5577 = vadd.f32 0.0, %v5576
        %v5578 = vpop.f32.mrb[0].mxu0
        %v5579 = vpop.f32.mrb[0].mxu0
        %v5580 = vadd.f32 0.0, %v5579
        %v5581 = vpop.f32.mrb[0].mxu0
        %5582 = vmatprep.mubr.bf16.mxu0 0
        %5583 = vmatmul.mubr.bf16.gmra.mrb[0].mxu0 %v5431
        %v5584 = vpop.f32.mrb[0].mxu0
        %v5585 = vadd.f32 0.0, %v5584
        %v5586 = vpop.f32.mrb[0].mxu0
        %v5587 = vpop.f32.mrb[0].mxu0
        %v5588 = vadd.f32 0.0, %v5587
        %v5589 = vpop.f32.mrb[0].mxu0
        %5590 = vmatprep.mubr.bf16.mxu0 0
        %5591 = vmatmul.mubr.bf16.gmra.mrb[0].mxu0 %v5434
        %v5592 = vpop.f32.mrb[0].mxu0
        %v5593 = vadd.f32 0.0, %v5592
        %v5594 = vpop.f32.mrb[0].mxu0
        %v5595 = vpop.f32.mrb[0].mxu0
        %v5596 = vadd.f32 0.0, %v5595
        %v5597 = vpop.f32.mrb[0].mxu0
        %5598 = vmatprep.mubr.bf16.mxu0 0
        %5599 = vmatmul.mubr.bf16.gmra.mrb[0].mxu0 %v5437
        %v5600 = vpop.f32.mrb[0].mxu0
        %v5601 = vadd.f32 0.0, %v5600
        %v5602 = vpop.f32.mrb[0].mxu0
        %v5603 = vpop.f32.mrb[0].mxu0
        %v5604 = vadd.f32 0.0, %v5603
        %v5605 = vpop.f32.mrb[0].mxu0
        %5606 = vdwg.mxu0
        %v5623 = vunpack.c.l.b16 %v5373
        %v5624 = vunpack.c.l.b16 %v5374
        %v5625 = vunpack.c.l.b16 %v5375
        %v5626 = vunpack.c.l.b16 %v5376
        %v5627 = vunpack.c.l.b16 %v5377
        %v5628 = vunpack.c.l.b16 %v5378
        %v5629 = vunpack.c.l.b16 %v5379
        %v5630 = vunpack.c.l.b16 %v5380
        %v5631 = vunpack.c.l.b16 %v5381
        %v5632 = vunpack.c.l.b16 %v5382
        %v5633 = vunpack.c.l.b16 %v5383
        %v5634 = vunpack.c.l.b16 %v5384
        %v5635 = vunpack.c.l.b16 %v5385
        %v5636 = vunpack.c.l.b16 %v5386
        %v5637 = vunpack.c.l.b16 %v5387
        %v5638 = vunpack.c.l.b16 %v5388
        %v5639 = vpack.c.b16 %v5624, %v5623
        %v5640 = vpack.c.b16 %v5626, %v5625
        %v5641 = vpack.c.b16 %v5628, %v5627
        %v5642 = vpack.c.b16 %v5630, %v5629
        %v5643 = vpack.c.b16 %v5632, %v5631
        %v5644 = vpack.c.b16 %v5634, %v5633
        %v5645 = vpack.c.b16 %v5636, %v5635
        %v5646 = vpack.c.b16 %v5638, %v5637
        %5655 = vmatprep.subr.bf16.mxu0 0
        %5656 = vmatpush1.bf16.msra.mxu0 %v5639
        %5657 = vmatprep.subr.bf16.mxu0 0
        %5658 = vmatpush1.bf16.msra.mxu0 %v5640
        %5659 = vmatprep.subr.bf16.mxu0 0
        %5660 = vmatpush1.bf16.msra.mxu0 %v5641
        %5661 = vmatprep.subr.bf16.mxu0 0
        %5662 = vmatpush1.bf16.msra.mxu0 %v5642
        %5663 = vmatprep.subr.bf16.mxu0 0
        %5664 = vmatpush1.bf16.msra.mxu0 %v5643
        %5665 = vmatprep.subr.bf16.mxu0 0
        %5666 = vmatpush1.bf16.msra.mxu0 %v5644
        %5667 = vmatprep.subr.bf16.mxu0 0
        %5668 = vmatpush1.bf16.msra.mxu0 %v5645
        %5669 = vmatprep.subr.bf16.mxu0 0
        %5670 = vmatpush1.bf16.msra.mxu0 %v5646
        %5671 = vmatprep.subr.bf16.mxu0 0
        %5672 = vmatpush1.bf16.msra.mxu0 0
        %5673 = vmatprep.subr.bf16.mxu0 0
        %5674 = vmatpush1.bf16.msra.mxu0 0
        %5675 = vmatprep.subr.bf16.mxu0 0
        %5676 = vmatpush1.bf16.msra.mxu0 0
        %5677 = vmatprep.subr.bf16.mxu0 0
        %5678 = vmatpush1.bf16.msra.mxu0 0
        %5679 = vmatprep.subr.bf16.mxu0 0
        %5680 = vmatpush1.bf16.msra.mxu0 0
        %5681 = vmatprep.subr.bf16.mxu0 0
        %5682 = vmatpush1.bf16.msra.mxu0 0
        %5683 = vmatprep.subr.bf16.mxu0 0
        %5684 = vmatpush1.bf16.msra.mxu0 0
        %5685 = vmatprep.subr.bf16.mxu0 0
        %5686 = vmatpush1.bf16.msra.mxu0 0
        %5687 = vmatprep.mubr.bf16.mxu0 0
        %5688 = vmatmul.mubr.bf16.gmra.mrb[0].mxu0 %v5245
        %v5689 = vpop.f32.mrb[0].mxu0
        %v5690 = vadd.f32 %v5545, %v5689
        %v5691 = vpop.f32.mrb[0].mxu0
        %v5692 = vpop.f32.mrb[0].mxu0
        %v5693 = vadd.f32 %v5548, %v5692
        %v5694 = vpop.f32.mrb[0].mxu0
        %5695 = vmatprep.mubr.bf16.mxu0 0
        %5696 = vmatmul.mubr.bf16.gmra.mrb[0].mxu0 %v5262
        %v5697 = vpop.f32.mrb[0].mxu0
        %v5698 = vadd.f32 %v5553, %v5697
        %v5699 = vpop.f32.mrb[0].mxu0
        %v5700 = vpop.f32.mrb[0].mxu0
        %v5701 = vadd.f32 %v5556, %v5700
        %v5702 = vpop.f32.mrb[0].mxu0
        %5703 = vmatprep.mubr.bf16.mxu0 0
        %5704 = vmatmul.mubr.bf16.gmra.mrb[0].mxu0 %v5279
        %v5705 = vpop.f32.mrb[0].mxu0
        %v5706 = vadd.f32 %v5561, %v5705
        %v5707 = vpop.f32.mrb[0].mxu0
        %v5708 = vpop.f32.mrb[0].mxu0
        %v5709 = vadd.f32 %v5564, %v5708
        %v5710 = vpop.f32.mrb[0].mxu0
        %5711 = vmatprep.mubr.bf16.mxu0 0
        %5712 = vmatmul.mubr.bf16.gmra.mrb[0].mxu0 %v5296
        %v5713 = vpop.f32.mrb[0].mxu0
        %v5714 = vadd.f32 %v5569, %v5713
        %v5715 = vpop.f32.mrb[0].mxu0
        %v5716 = vpop.f32.mrb[0].mxu0
        %v5717 = vadd.f32 %v5572, %v5716
        %v5718 = vpop.f32.mrb[0].mxu0
        %5719 = vmatprep.mubr.bf16.mxu0 0
        %5720 = vmatmul.mubr.bf16.gmra.mrb[0].mxu0 %v5313
        %v5721 = vpop.f32.mrb[0].mxu0
        %v5722 = vadd.f32 %v5577, %v5721
        %v5723 = vpop.f32.mrb[0].mxu0
        %v5724 = vpop.f32.mrb[0].mxu0
        %v5725 = vadd.f32 %v5580, %v5724
        %v5726 = vpop.f32.mrb[0].mxu0
        %5727 = vmatprep.mubr.bf16.mxu0 0
        %5728 = vmatmul.mubr.bf16.gmra.mrb[0].mxu0 %v5330
        %v5729 = vpop.f32.mrb[0].mxu0
        %v5730 = vadd.f32 %v5585, %v5729
        %v5731 = vpop.f32.mrb[0].mxu0
        %v5732 = vpop.f32.mrb[0].mxu0
        %v5733 = vadd.f32 %v5588, %v5732
        %v5734 = vpop.f32.mrb[0].mxu0
        %5735 = vmatprep.mubr.bf16.mxu0 0
        %5736 = vmatmul.mubr.bf16.gmra.mrb[0].mxu0 %v5347
        %v5737 = vpop.f32.mrb[0].mxu0
        %v5738 = vadd.f32 %v5593, %v5737
        %v5739 = vpop.f32.mrb[0].mxu0
        %v5740 = vpop.f32.mrb[0].mxu0
        %v5741 = vadd.f32 %v5596, %v5740
        %v5742 = vpop.f32.mrb[0].mxu0
        %5743 = vmatprep.mubr.bf16.mxu0 0
        %5744 = vmatmul.mubr.bf16.gmra.mrb[0].mxu0 %v5364
        %v5745 = vpop.f32.mrb[0].mxu0
        %v5746 = vadd.f32 %v5601, %v5745
        %v5747 = vpop.f32.mrb[0].mxu0
        %v5748 = vpop.f32.mrb[0].mxu0
        %v5749 = vadd.f32 %v5604, %v5748
        %v5750 = vpop.f32.mrb[0].mxu0
        %5751 = vdwg.mxu0
        %v5752 = vld [vmem:[%s5211 + $0x8] sm:$0x1f]
        %v5753 = vld [vmem:[%s5211 + $0x18] sm:$0x1f]
        %v5754 = vld [vmem:[%s5211 + $0x28] sm:$0x1f]
        %v5755 = vld [vmem:[%s5211 + $0x38] sm:$0x1f]
        %v5756 = vld [vmem:[%s5211 + $0x48] sm:$0x1f]
        %v5757 = vld [vmem:[%s5211 + $0x58] sm:$0x1f]
        %v5758 = vld [vmem:[%s5211 + $0x68] sm:$0x1f]
        %v5759 = vld [vmem:[%s5211 + $0x78] sm:$0x1f]
        %vm5760 = vsmask.f32 3328
        %v5762 = vshrl.u32 %v5389, 16
        %v5764 = vrot.slane %v5762, 4
        %v5765 = vshll.u32 %v5389, 16
        %v5767 = vrot.slane %v5765, 5
        %v5768 = vor.u32 %v5764, %v5767
        %v5770 = vshrl.u32 %v5752, 16
        %v5772 = vrot.slane %v5770, 4
        %v5773 = vshll.u32 %v5752, 16
        %v5775 = vrot.slane %v5773, 5
        %v5776 = vor.u32 %v5772, %v5775
        %v5777 = vsel %vm5760, %v5768, %v5776
        %v5779 = vshrl.u32 %v5390, 16
        %v5781 = vrot.slane %v5779, 4
        %v5782 = vshll.u32 %v5390, 16
        %v5784 = vrot.slane %v5782, 5
        %v5785 = vor.u32 %v5781, %v5784
        %v5787 = vshrl.u32 %v5753, 16
        %v5789 = vrot.slane %v5787, 4
        %v5790 = vshll.u32 %v5753, 16
        %v5792 = vrot.slane %v5790, 5
        %v5793 = vor.u32 %v5789, %v5792
        %v5794 = vsel %vm5760, %v5785, %v5793
        %v5796 = vshrl.u32 %v5391, 16
        %v5798 = vrot.slane %v5796, 4
        %v5799 = vshll.u32 %v5391, 16
        %v5801 = vrot.slane %v5799, 5
        %v5802 = vor.u32 %v5798, %v5801
        %v5804 = vshrl.u32 %v5754, 16
        %v5806 = vrot.slane %v5804, 4
        %v5807 = vshll.u32 %v5754, 16
        %v5809 = vrot.slane %v5807, 5
        %v5810 = vor.u32 %v5806, %v5809
        %v5811 = vsel %vm5760, %v5802, %v5810
        %v5813 = vshrl.u32 %v5392, 16
        %v5815 = vrot.slane %v5813, 4
        %v5816 = vshll.u32 %v5392, 16
        %v5818 = vrot.slane %v5816, 5
        %v5819 = vor.u32 %v5815, %v5818
        %v5821 = vshrl.u32 %v5755, 16
        %v5823 = vrot.slane %v5821, 4
        %v5824 = vshll.u32 %v5755, 16
        %v5826 = vrot.slane %v5824, 5
        %v5827 = vor.u32 %v5823, %v5826
        %v5828 = vsel %vm5760, %v5819, %v5827
        %v5830 = vshrl.u32 %v5393, 16
        %v5832 = vrot.slane %v5830, 4
        %v5833 = vshll.u32 %v5393, 16
        %v5835 = vrot.slane %v5833, 5
        %v5836 = vor.u32 %v5832, %v5835
        %v5838 = vshrl.u32 %v5756, 16
        %v5840 = vrot.slane %v5838, 4
        %v5841 = vshll.u32 %v5756, 16
        %v5843 = vrot.slane %v5841, 5
        %v5844 = vor.u32 %v5840, %v5843
        %v5845 = vsel %vm5760, %v5836, %v5844
        %v5847 = vshrl.u32 %v5394, 16
        %v5849 = vrot.slane %v5847, 4
        %v5850 = vshll.u32 %v5394, 16
        %v5852 = vrot.slane %v5850, 5
        %v5853 = vor.u32 %v5849, %v5852
        %v5855 = vshrl.u32 %v5757, 16
        %v5857 = vrot.slane %v5855, 4
        %v5858 = vshll.u32 %v5757, 16
        %v5860 = vrot.slane %v5858, 5
        %v5861 = vor.u32 %v5857, %v5860
        %v5862 = vsel %vm5760, %v5853, %v5861
        %v5864 = vshrl.u32 %v5395, 16
        %v5866 = vrot.slane %v5864, 4
        %v5867 = vshll.u32 %v5395, 16
        %v5869 = vrot.slane %v5867, 5
        %v5870 = vor.u32 %v5866, %v5869
        %v5872 = vshrl.u32 %v5758, 16
        %v5874 = vrot.slane %v5872, 4
        %v5875 = vshll.u32 %v5758, 16
        %v5877 = vrot.slane %v5875, 5
        %v5878 = vor.u32 %v5874, %v5877
        %v5879 = vsel %vm5760, %v5870, %v5878
        %v5881 = vshrl.u32 %v5396, 16
        %v5883 = vrot.slane %v5881, 4
        %v5884 = vshll.u32 %v5396, 16
        %v5886 = vrot.slane %v5884, 5
        %v5887 = vor.u32 %v5883, %v5886
        %v5889 = vshrl.u32 %v5759, 16
        %v5891 = vrot.slane %v5889, 4
        %v5892 = vshll.u32 %v5759, 16
        %v5894 = vrot.slane %v5892, 5
        %v5895 = vor.u32 %v5891, %v5894
        %v5896 = vsel %vm5760, %v5887, %v5895
        %v5905 = vld [vmem:[%s3 + $0x80] sm:$0xf]
        %v5906 = vld [vmem:[%s3 + $0x84] sm:$0xf]
        %v5907 = vld [vmem:[%s3 + $0x88] sm:$0xf]
        %v5908 = vld [vmem:[%s3 + $0x8c] sm:$0xf]
        %v5909 = vld [vmem:[%s3 + $0x90] sm:$0xf]
        %v5910 = vld [vmem:[%s3 + $0x94] sm:$0xf]
        %v5911 = vld [vmem:[%s3 + $0x98] sm:$0xf]
        %v5912 = vld [vmem:[%s3 + $0x9c] sm:$0xf]
        %v5913 = vld [vmem:[%s3 + $0xa0] sm:$0xf]
        %v5914 = vld [vmem:[%s3 + $0xa4] sm:$0xf]
        %v5915 = vld [vmem:[%s3 + $0xa8] sm:$0xf]
        %v5916 = vld [vmem:[%s3 + $0xac] sm:$0xf]
        %v5917 = vld [vmem:[%s3 + $0xb0] sm:$0xf]
        %v5918 = vld [vmem:[%s3 + $0xb4] sm:$0xf]
        %v5919 = vld [vmem:[%s3 + $0xb8] sm:$0xf]
        %v5920 = vld [vmem:[%s3 + $0xbc] sm:$0xf]
        %v5937 = vunpack.c.l.b16 %v5905
        %v5938 = vunpack.c.l.b16 %v5906
        %v5939 = vunpack.c.l.b16 %v5907
        %v5940 = vunpack.c.l.b16 %v5908
        %v5941 = vunpack.c.l.b16 %v5909
        %v5942 = vunpack.c.l.b16 %v5910
        %v5943 = vunpack.c.l.b16 %v5911
        %v5944 = vunpack.c.l.b16 %v5912
        %v5945 = vunpack.c.l.b16 %v5913
        %v5946 = vunpack.c.l.b16 %v5914
        %v5947 = vunpack.c.l.b16 %v5915
        %v5948 = vunpack.c.l.b16 %v5916
        %v5949 = vunpack.c.l.b16 %v5917
        %v5950 = vunpack.c.l.b16 %v5918
        %v5951 = vunpack.c.l.b16 %v5919
        %v5952 = vunpack.c.l.b16 %v5920
        %v5953 = vpack.c.b16 %v5938, %v5937
        %v5954 = vpack.c.b16 %v5940, %v5939
        %v5955 = vpack.c.b16 %v5942, %v5941
        %v5956 = vpack.c.b16 %v5944, %v5943
        %v5957 = vpack.c.b16 %v5946, %v5945
        %v5958 = vpack.c.b16 %v5948, %v5947
        %v5959 = vpack.c.b16 %v5950, %v5949
        %v5960 = vpack.c.b16 %v5952, %v5951
        %5969 = vmatprep.subr.bf16.mxu0 0
        %5970 = vmatpush1.bf16.msra.mxu0 %v5953
        %5971 = vmatprep.subr.bf16.mxu0 0
        %5972 = vmatpush1.bf16.msra.mxu0 %v5954
        %5973 = vmatprep.subr.bf16.mxu0 0
        %5974 = vmatpush1.bf16.msra.mxu0 %v5955
        %5975 = vmatprep.subr.bf16.mxu0 0
        %5976 = vmatpush1.bf16.msra.mxu0 %v5956
        %5977 = vmatprep.subr.bf16.mxu0 0
        %5978 = vmatpush1.bf16.msra.mxu0 %v5957
        %5979 = vmatprep.subr.bf16.mxu0 0
        %5980 = vmatpush1.bf16.msra.mxu0 %v5958
        %5981 = vmatprep.subr.bf16.mxu0 0
        %5982 = vmatpush1.bf16.msra.mxu0 %v5959
        %5983 = vmatprep.subr.bf16.mxu0 0
        %5984 = vmatpush1.bf16.msra.mxu0 %v5960
        %5985 = vmatprep.subr.bf16.mxu0 0
        %5986 = vmatpush1.bf16.msra.mxu0 0
        %5987 = vmatprep.subr.bf16.mxu0 0
        %5988 = vmatpush1.bf16.msra.mxu0 0
        %5989 = vmatprep.subr.bf16.mxu0 0
        %5990 = vmatpush1.bf16.msra.mxu0 0
        %5991 = vmatprep.subr.bf16.mxu0 0
        %5992 = vmatpush1.bf16.msra.mxu0 0
        %5993 = vmatprep.subr.bf16.mxu0 0
        %5994 = vmatpush1.bf16.msra.mxu0 0
        %5995 = vmatprep.subr.bf16.mxu0 0
        %5996 = vmatpush1.bf16.msra.mxu0 0
        %5997 = vmatprep.subr.bf16.mxu0 0
        %5998 = vmatpush1.bf16.msra.mxu0 0
        %5999 = vmatprep.subr.bf16.mxu0 0
        %6000 = vmatpush1.bf16.msra.mxu0 0
        %6001 = vmatprep.mubr.bf16.mxu0 0
        %6002 = vmatmul.mubr.bf16.gmra.mrb[0].mxu0 %v5777
        %v6003 = vpop.f32.mrb[0].mxu0
        %v6004 = vadd.f32 0.0, %v6003
        %v6005 = vpop.f32.mrb[0].mxu0
        %v6006 = vpop.f32.mrb[0].mxu0
        %v6007 = vadd.f32 0.0, %v6006
        %v6008 = vpop.f32.mrb[0].mxu0
        %6009 = vmatprep.mubr.bf16.mxu0 0
        %6010 = vmatmul.mubr.bf16.gmra.mrb[0].mxu0 %v5794
        %v6011 = vpop.f32.mrb[0].mxu0
        %v6012 = vadd.f32 0.0, %v6011
        %v6013 = vpop.f32.mrb[0].mxu0
        %v6014 = vpop.f32.mrb[0].mxu0
        %v6015 = vadd.f32 0.0, %v6014
        %v6016 = vpop.f32.mrb[0].mxu0
        %6017 = vmatprep.mubr.bf16.mxu0 0
        %6018 = vmatmul.mubr.bf16.gmra.mrb[0].mxu0 %v5811
        %v6019 = vpop.f32.mrb[0].mxu0
        %v6020 = vadd.f32 0.0, %v6019
        %v6021 = vpop.f32.mrb[0].mxu0
        %v6022 = vpop.f32.mrb[0].mxu0
        %v6023 = vadd.f32 0.0, %v6022
        %v6024 = vpop.f32.mrb[0].mxu0
        %6025 = vmatprep.mubr.bf16.mxu0 0
        %6026 = vmatmul.mubr.bf16.gmra.mrb[0].mxu0 %v5828
        %v6027 = vpop.f32.mrb[0].mxu0
        %v6028 = vadd.f32 0.0, %v6027
        %v6029 = vpop.f32.mrb[0].mxu0
        %v6030 = vpop.f32.mrb[0].mxu0
        %v6031 = vadd.f32 0.0, %v6030
        %v6032 = vpop.f32.mrb[0].mxu0
        %6033 = vmatprep.mubr.bf16.mxu0 0
        %6034 = vmatmul.mubr.bf16.gmra.mrb[0].mxu0 %v5845
        %v6035 = vpop.f32.mrb[0].mxu0
        %v6036 = vadd.f32 0.0, %v6035
        %v6037 = vpop.f32.mrb[0].mxu0
        %v6038 = vpop.f32.mrb[0].mxu0
        %v6039 = vadd.f32 0.0, %v6038
        %v6040 = vpop.f32.mrb[0].mxu0
        %6041 = vmatprep.mubr.bf16.mxu0 0
        %6042 = vmatmul.mubr.bf16.gmra.mrb[0].mxu0 %v5862
        %v6043 = vpop.f32.mrb[0].mxu0
        %v6044 = vadd.f32 0.0, %v6043
        %v6045 = vpop.f32.mrb[0].mxu0
        %v6046 = vpop.f32.mrb[0].mxu0
        %v6047 = vadd.f32 0.0, %v6046
        %v6048 = vpop.f32.mrb[0].mxu0
        %6049 = vmatprep.mubr.bf16.mxu0 0
        %6050 = vmatmul.mubr.bf16.gmra.mrb[0].mxu0 %v5879
        %v6051 = vpop.f32.mrb[0].mxu0
        %v6052 = vadd.f32 0.0, %v6051
        %v6053 = vpop.f32.mrb[0].mxu0
        %v6054 = vpop.f32.mrb[0].mxu0
        %v6055 = vadd.f32 0.0, %v6054
        %v6056 = vpop.f32.mrb[0].mxu0
        %6057 = vmatprep.mubr.bf16.mxu0 0
        %6058 = vmatmul.mubr.bf16.gmra.mrb[0].mxu0 %v5896
        %v6059 = vpop.f32.mrb[0].mxu0
        %v6060 = vadd.f32 0.0, %v6059
        %v6061 = vpop.f32.mrb[0].mxu0
        %v6062 = vpop.f32.mrb[0].mxu0
        %v6063 = vadd.f32 0.0, %v6062
        %v6064 = vpop.f32.mrb[0].mxu0
        %6065 = vdwg.mxu0
        %v6066 = vadd.f32 %v5690, %v6004
        %v6067 = vadd.f32 %v5693, %v6007
        %v6068 = vadd.f32 %v5698, %v6012
        %v6069 = vadd.f32 %v5701, %v6015
        %v6070 = vadd.f32 %v5706, %v6020
        %v6071 = vadd.f32 %v5709, %v6023
        %v6072 = vadd.f32 %v5714, %v6028
        %v6073 = vadd.f32 %v5717, %v6031
        %v6074 = vadd.f32 %v5722, %v6036
        %v6075 = vadd.f32 %v5725, %v6039
        %v6076 = vadd.f32 %v5730, %v6044
        %v6077 = vadd.f32 %v5733, %v6047
        %v6078 = vadd.f32 %v5738, %v6052
        %v6079 = vadd.f32 %v5741, %v6055
        %v6080 = vadd.f32 %v5746, %v6060
        %v6081 = vadd.f32 %v5749, %v6063
        %s6082 = sadd.s32 %s5208, 1
        %s6083 = smul.u32 %s6082, 2
        %s6084 = smul.addr %s6083, 8
        %s6085 = scalar_lea.vmem [#allocation3], %s6084
        %v6086 = vld [vmem:[%s6085] sm:$0xf8]
        %v6087 = vld [vmem:[%s6085 + $0x8] sm:$0xf]
        %v6088 = vld [vmem:[%s6085 + $0x10] sm:$0xf8]
        %v6089 = vld [vmem:[%s6085 + $0x18] sm:$0xf]
        %v6090 = vld [vmem:[%s6085 + $0x20] sm:$0xf8]
        %v6091 = vld [vmem:[%s6085 + $0x28] sm:$0xf]
        %v6092 = vld [vmem:[%s6085 + $0x30] sm:$0xf8]
        %v6093 = vld [vmem:[%s6085 + $0x38] sm:$0xf]
        %v6094 = vld [vmem:[%s6085 + $0x40] sm:$0xf8]
        %v6095 = vld [vmem:[%s6085 + $0x48] sm:$0xf]
        %v6096 = vld [vmem:[%s6085 + $0x50] sm:$0xf8]
        %v6097 = vld [vmem:[%s6085 + $0x58] sm:$0xf]
        %v6098 = vld [vmem:[%s6085 + $0x60] sm:$0xf8]
        %v6099 = vld [vmem:[%s6085 + $0x68] sm:$0xf]
        %v6100 = vld [vmem:[%s6085 + $0x70] sm:$0xf8]
        %v6101 = vld [vmem:[%s6085 + $0x78] sm:$0xf]
        %v6103 = vshrl.u32 %v6086, 16
        %v6105 = vrot.slane %v6103, 3
        %v6106 = vshll.u32 %v6086, 16
        %v6108 = vrot.slane %v6106, 4
        %v6109 = vor.u32 %v6105, %v6108
        %v6111 = vshrl.u32 %v6087, 16
        %v6113 = vrot.slane %v6111, 3
        %v6114 = vshll.u32 %v6087, 16
        %v6116 = vrot.slane %v6114, 4
        %v6117 = vor.u32 %v6113, %v6116
        %v6118 = vsel %vm5228, %v6109, %v6117
        %v6120 = vshrl.u32 %v6088, 16
        %v6122 = vrot.slane %v6120, 3
        %v6123 = vshll.u32 %v6088, 16
        %v6125 = vrot.slane %v6123, 4
        %v6126 = vor.u32 %v6122, %v6125
        %v6128 = vshrl.u32 %v6089, 16
        %v6130 = vrot.slane %v6128, 3
        %v6131 = vshll.u32 %v6089, 16
        %v6133 = vrot.slane %v6131, 4
        %v6134 = vor.u32 %v6130, %v6133
        %v6135 = vsel %vm5228, %v6126, %v6134
        %v6137 = vshrl.u32 %v6090, 16
        %v6139 = vrot.slane %v6137, 3
        %v6140 = vshll.u32 %v6090, 16
        %v6142 = vrot.slane %v6140, 4
        %v6143 = vor.u32 %v6139, %v6142
        %v6145 = vshrl.u32 %v6091, 16
        %v6147 = vrot.slane %v6145, 3
        %v6148 = vshll.u32 %v6091, 16
        %v6150 = vrot.slane %v6148, 4
        %v6151 = vor.u32 %v6147, %v6150
        %v6152 = vsel %vm5228, %v6143, %v6151
        %v6154 = vshrl.u32 %v6092, 16
        %v6156 = vrot.slane %v6154, 3
        %v6157 = vshll.u32 %v6092, 16
        %v6159 = vrot.slane %v6157, 4
        %v6160 = vor.u32 %v6156, %v6159
        %v6162 = vshrl.u32 %v6093, 16
        %v6164 = vrot.slane %v6162, 3
        %v6165 = vshll.u32 %v6093, 16
        %v6167 = vrot.slane %v6165, 4
        %v6168 = vor.u32 %v6164, %v6167
        %v6169 = vsel %vm5228, %v6160, %v6168
        %v6171 = vshrl.u32 %v6094, 16
        %v6173 = vrot.slane %v6171, 3
        %v6174 = vshll.u32 %v6094, 16
        %v6176 = vrot.slane %v6174, 4
        %v6177 = vor.u32 %v6173, %v6176
        %v6179 = vshrl.u32 %v6095, 16
        %v6181 = vrot.slane %v6179, 3
        %v6182 = vshll.u32 %v6095, 16
        %v6184 = vrot.slane %v6182, 4
        %v6185 = vor.u32 %v6181, %v6184
        %v6186 = vsel %vm5228, %v6177, %v6185
        %v6188 = vshrl.u32 %v6096, 16
        %v6190 = vrot.slane %v6188, 3
        %v6191 = vshll.u32 %v6096, 16
        %v6193 = vrot.slane %v6191, 4
        %v6194 = vor.u32 %v6190, %v6193
        %v6196 = vshrl.u32 %v6097, 16
        %v6198 = vrot.slane %v6196, 3
        %v6199 = vshll.u32 %v6097, 16
        %v6201 = vrot.slane %v6199, 4
        %v6202 = vor.u32 %v6198, %v6201
        %v6203 = vsel %vm5228, %v6194, %v6202
        %v6205 = vshrl.u32 %v6098, 16
        %v6207 = vrot.slane %v6205, 3
        %v6208 = vshll.u32 %v6098, 16
        %v6210 = vrot.slane %v6208, 4
        %v6211 = vor.u32 %v6207, %v6210
        %v6213 = vshrl.u32 %v6099, 16
        %v6215 = vrot.slane %v6213, 3
        %v6216 = vshll.u32 %v6099, 16
        %v6218 = vrot.slane %v6216, 4
        %v6219 = vor.u32 %v6215, %v6218
        %v6220 = vsel %vm5228, %v6211, %v6219
        %v6222 = vshrl.u32 %v6100, 16
        %v6224 = vrot.slane %v6222, 3
        %v6225 = vshll.u32 %v6100, 16
        %v6227 = vrot.slane %v6225, 4
        %v6228 = vor.u32 %v6224, %v6227
        %v6230 = vshrl.u32 %v6101, 16
        %v6232 = vrot.slane %v6230, 3
        %v6233 = vshll.u32 %v6101, 16
        %v6235 = vrot.slane %v6233, 4
        %v6236 = vor.u32 %v6232, %v6235
        %v6237 = vsel %vm5228, %v6228, %v6236
        %v6246 = vld [vmem:[%s3 + $0xc0] sm:$0xf]
        %v6247 = vld [vmem:[%s3 + $0xc4] sm:$0xf]
        %v6248 = vld [vmem:[%s3 + $0xc8] sm:$0xf]
        %v6249 = vld [vmem:[%s3 + $0xcc] sm:$0xf]
        %v6250 = vld [vmem:[%s3 + $0xd0] sm:$0xf]
        %v6251 = vld [vmem:[%s3 + $0xd4] sm:$0xf]
        %v6252 = vld [vmem:[%s3 + $0xd8] sm:$0xf]
        %v6253 = vld [vmem:[%s3 + $0xdc] sm:$0xf]
        %v6254 = vld [vmem:[%s3 + $0xe0] sm:$0xf]
        %v6255 = vld [vmem:[%s3 + $0xe4] sm:$0xf]
        %v6256 = vld [vmem:[%s3 + $0xe8] sm:$0xf]
        %v6257 = vld [vmem:[%s3 + $0xec] sm:$0xf]
        %v6258 = vld [vmem:[%s3 + $0xf0] sm:$0xf]
        %v6259 = vld [vmem:[%s3 + $0xf4] sm:$0xf]
        %v6260 = vld [vmem:[%s3 + $0xf8] sm:$0xf]
        %v6261 = vld [vmem:[%s3 + $0xfc] sm:$0xf]
        %v6278 = vunpack.c.l.b16 %v6246
        %v6279 = vunpack.c.l.b16 %v6247
        %v6280 = vunpack.c.l.b16 %v6248
        %v6281 = vunpack.c.l.b16 %v6249
        %v6282 = vunpack.c.l.b16 %v6250
        %v6283 = vunpack.c.l.b16 %v6251
        %v6284 = vunpack.c.l.b16 %v6252
        %v6285 = vunpack.c.l.b16 %v6253
        %v6286 = vunpack.c.l.b16 %v6254
        %v6287 = vunpack.c.l.b16 %v6255
        %v6288 = vunpack.c.l.b16 %v6256
        %v6289 = vunpack.c.l.b16 %v6257
        %v6290 = vunpack.c.l.b16 %v6258
        %v6291 = vunpack.c.l.b16 %v6259
        %v6292 = vunpack.c.l.b16 %v6260
        %v6293 = vunpack.c.l.b16 %v6261
        %v6294 = vpack.c.b16 %v6279, %v6278
        %v6295 = vpack.c.b16 %v6281, %v6280
        %v6296 = vpack.c.b16 %v6283, %v6282
        %v6297 = vpack.c.b16 %v6285, %v6284
        %v6298 = vpack.c.b16 %v6287, %v6286
        %v6299 = vpack.c.b16 %v6289, %v6288
        %v6300 = vpack.c.b16 %v6291, %v6290
        %v6301 = vpack.c.b16 %v6293, %v6292
        %6310 = vmatprep.subr.bf16.mxu0 0
        %6311 = vmatpush1.bf16.msra.mxu0 %v6294
        %6312 = vmatprep.subr.bf16.mxu0 0
        %6313 = vmatpush1.bf16.msra.mxu0 %v6295
        %6314 = vmatprep.subr.bf16.mxu0 0
        %6315 = vmatpush1.bf16.msra.mxu0 %v6296
        %6316 = vmatprep.subr.bf16.mxu0 0
        %6317 = vmatpush1.bf16.msra.mxu0 %v6297
        %6318 = vmatprep.subr.bf16.mxu0 0
        %6319 = vmatpush1.bf16.msra.mxu0 %v6298
        %6320 = vmatprep.subr.bf16.mxu0 0
        %6321 = vmatpush1.bf16.msra.mxu0 %v6299
        %6322 = vmatprep.subr.bf16.mxu0 0
        %6323 = vmatpush1.bf16.msra.mxu0 %v6300
        %6324 = vmatprep.subr.bf16.mxu0 0
        %6325 = vmatpush1.bf16.msra.mxu0 %v6301
        %6326 = vmatprep.subr.bf16.mxu0 0
        %6327 = vmatpush1.bf16.msra.mxu0 0
        %6328 = vmatprep.subr.bf16.mxu0 0
        %6329 = vmatpush1.bf16.msra.mxu0 0
        %6330 = vmatprep.subr.bf16.mxu0 0
        %6331 = vmatpush1.bf16.msra.mxu0 0
        %6332 = vmatprep.subr.bf16.mxu0 0
        %6333 = vmatpush1.bf16.msra.mxu0 0
        %6334 = vmatprep.subr.bf16.mxu0 0
        %6335 = vmatpush1.bf16.msra.mxu0 0
        %6336 = vmatprep.subr.bf16.mxu0 0
        %6337 = vmatpush1.bf16.msra.mxu0 0
        %6338 = vmatprep.subr.bf16.mxu0 0
        %6339 = vmatpush1.bf16.msra.mxu0 0
        %6340 = vmatprep.subr.bf16.mxu0 0
        %6341 = vmatpush1.bf16.msra.mxu0 0
        %6342 = vmatprep.mubr.bf16.mxu0 0
        %6343 = vmatmul.mubr.bf16.gmra.mrb[0].mxu0 %v6118
        %v6344 = vpop.f32.mrb[0].mxu0
        %v6345 = vadd.f32 0.0, %v6344
        %v6346 = vpop.f32.mrb[0].mxu0
        %v6347 = vpop.f32.mrb[0].mxu0
        %v6348 = vadd.f32 0.0, %v6347
        %v6349 = vpop.f32.mrb[0].mxu0
        %6350 = vmatprep.mubr.bf16.mxu0 0
        %6351 = vmatmul.mubr.bf16.gmra.mrb[0].mxu0 %v6135
        %v6352 = vpop.f32.mrb[0].mxu0
        %v6353 = vadd.f32 0.0, %v6352
        %v6354 = vpop.f32.mrb[0].mxu0
        %v6355 = vpop.f32.mrb[0].mxu0
        %v6356 = vadd.f32 0.0, %v6355
        %v6357 = vpop.f32.mrb[0].mxu0
        %6358 = vmatprep.mubr.bf16.mxu0 0
        %6359 = vmatmul.mubr.bf16.gmra.mrb[0].mxu0 %v6152
        %v6360 = vpop.f32.mrb[0].mxu0
        %v6361 = vadd.f32 0.0, %v6360
        %v6362 = vpop.f32.mrb[0].mxu0
        %v6363 = vpop.f32.mrb[0].mxu0
        %v6364 = vadd.f32 0.0, %v6363
        %v6365 = vpop.f32.mrb[0].mxu0
        %6366 = vmatprep.mubr.bf16.mxu0 0
        %6367 = vmatmul.mubr.bf16.gmra.mrb[0].mxu0 %v6169
        %v6368 = vpop.f32.mrb[0].mxu0
        %v6369 = vadd.f32 0.0, %v6368
        %v6370 = vpop.f32.mrb[0].mxu0
        %v6371 = vpop.f32.mrb[0].mxu0
        %v6372 = vadd.f32 0.0, %v6371
        %v6373 = vpop.f32.mrb[0].mxu0
        %6374 = vmatprep.mubr.bf16.mxu0 0
        %6375 = vmatmul.mubr.bf16.gmra.mrb[0].mxu0 %v6186
        %v6376 = vpop.f32.mrb[0].mxu0
        %v6377 = vadd.f32 0.0, %v6376
        %v6378 = vpop.f32.mrb[0].mxu0
        %v6379 = vpop.f32.mrb[0].mxu0
        %v6380 = vadd.f32 0.0, %v6379
        %v6381 = vpop.f32.mrb[0].mxu0
        %6382 = vmatprep.mubr.bf16.mxu0 0
        %6383 = vmatmul.mubr.bf16.gmra.mrb[0].mxu0 %v6203
        %v6384 = vpop.f32.mrb[0].mxu0
        %v6385 = vadd.f32 0.0, %v6384
        %v6386 = vpop.f32.mrb[0].mxu0
        %v6387 = vpop.f32.mrb[0].mxu0
        %v6388 = vadd.f32 0.0, %v6387
        %v6389 = vpop.f32.mrb[0].mxu0
        %6390 = vmatprep.mubr.bf16.mxu0 0
        %6391 = vmatmul.mubr.bf16.gmra.mrb[0].mxu0 %v6220
        %v6392 = vpop.f32.mrb[0].mxu0
        %v6393 = vadd.f32 0.0, %v6392
        %v6394 = vpop.f32.mrb[0].mxu0
        %v6395 = vpop.f32.mrb[0].mxu0
        %v6396 = vadd.f32 0.0, %v6395
        %v6397 = vpop.f32.mrb[0].mxu0
        %6398 = vmatprep.mubr.bf16.mxu0 0
        %6399 = vmatmul.mubr.bf16.gmra.mrb[0].mxu0 %v6237
        %v6400 = vpop.f32.mrb[0].mxu0
        %v6401 = vadd.f32 0.0, %v6400
        %v6402 = vpop.f32.mrb[0].mxu0
        %v6403 = vpop.f32.mrb[0].mxu0
        %v6404 = vadd.f32 0.0, %v6403
        %v6405 = vpop.f32.mrb[0].mxu0
        %6406 = vdwg.mxu0
        %v6407 = vadd.f32 %v6066, %v6345
        %v6408 = vadd.f32 %v6067, %v6348
        %v6409 = vadd.f32 %v6068, %v6353
        %v6410 = vadd.f32 %v6069, %v6356
        %v6411 = vadd.f32 %v6070, %v6361
        %v6412 = vadd.f32 %v6071, %v6364
        %v6413 = vadd.f32 %v6072, %v6369
        %v6414 = vadd.f32 %v6073, %v6372
        %v6415 = vadd.f32 %v6074, %v6377
        %v6416 = vadd.f32 %v6075, %v6380
        %v6417 = vadd.f32 %v6076, %v6385
        %v6418 = vadd.f32 %v6077, %v6388
        %v6419 = vadd.f32 %v6078, %v6393
        %v6420 = vadd.f32 %v6079, %v6396
        %v6421 = vadd.f32 %v6080, %v6401
        %v6422 = vadd.f32 %v6081, %v6404
        %v6423 = vld [vmem:[%s6085] sm:$0xf0]
        %v6424 = vld [vmem:[%s6085 + $0x10] sm:$0xf0]
        %v6425 = vld [vmem:[%s6085 + $0x20] sm:$0xf0]
        %v6426 = vld [vmem:[%s6085 + $0x30] sm:$0xf0]
        %v6427 = vld [vmem:[%s6085 + $0x40] sm:$0xf0]
        %v6428 = vld [vmem:[%s6085 + $0x50] sm:$0xf0]
        %v6429 = vld [vmem:[%s6085 + $0x60] sm:$0xf0]
        %v6430 = vld [vmem:[%s6085 + $0x70] sm:$0xf0]
        %v6447 = vrot.slane %v6423, 4
        %v6448 = vrot.slane %v6087, 4
        %v6449 = vsel %vm5413, %v6447, %v6448
        %v6450 = vrot.slane %v6424, 4
        %v6451 = vrot.slane %v6089, 4
        %v6452 = vsel %vm5413, %v6450, %v6451
        %v6453 = vrot.slane %v6425, 4
        %v6454 = vrot.slane %v6091, 4
        %v6455 = vsel %vm5413, %v6453, %v6454
        %v6456 = vrot.slane %v6426, 4
        %v6457 = vrot.slane %v6093, 4
        %v6458 = vsel %vm5413, %v6456, %v6457
        %v6459 = vrot.slane %v6427, 4
        %v6460 = vrot.slane %v6095, 4
        %v6461 = vsel %vm5413, %v6459, %v6460
        %v6462 = vrot.slane %v6428, 4
        %v6463 = vrot.slane %v6097, 4
        %v6464 = vsel %vm5413, %v6462, %v6463
        %v6465 = vrot.slane %v6429, 4
        %v6466 = vrot.slane %v6099, 4
        %v6467 = vsel %vm5413, %v6465, %v6466
        %v6468 = vrot.slane %v6430, 4
        %v6469 = vrot.slane %v6101, 4
        %v6470 = vsel %vm5413, %v6468, %v6469
        %v6479 = vld [vmem:[%s3 + $0x100] sm:$0xf]
        %v6480 = vld [vmem:[%s3 + $0x104] sm:$0xf]
        %v6481 = vld [vmem:[%s3 + $0x108] sm:$0xf]
        %v6482 = vld [vmem:[%s3 + $0x10c] sm:$0xf]
        %v6483 = vld [vmem:[%s3 + $0x110] sm:$0xf]
        %v6484 = vld [vmem:[%s3 + $0x114] sm:$0xf]
        %v6485 = vld [vmem:[%s3 + $0x118] sm:$0xf]
        %v6486 = vld [vmem:[%s3 + $0x11c] sm:$0xf]
        %v6487 = vld [vmem:[%s3 + $0x120] sm:$0xf]
        %v6488 = vld [vmem:[%s3 + $0x124] sm:$0xf]
        %v6489 = vld [vmem:[%s3 + $0x128] sm:$0xf]
        %v6490 = vld [vmem:[%s3 + $0x12c] sm:$0xf]
        %v6491 = vld [vmem:[%s3 + $0x130] sm:$0xf]
        %v6492 = vld [vmem:[%s3 + $0x134] sm:$0xf]
        %v6493 = vld [vmem:[%s3 + $0x138] sm:$0xf]
        %v6494 = vld [vmem:[%s3 + $0x13c] sm:$0xf]
        %v6511 = vunpack.c.l.b16 %v6479
        %v6512 = vunpack.c.l.b16 %v6480
        %v6513 = vunpack.c.l.b16 %v6481
        %v6514 = vunpack.c.l.b16 %v6482
        %v6515 = vunpack.c.l.b16 %v6483
        %v6516 = vunpack.c.l.b16 %v6484
        %v6517 = vunpack.c.l.b16 %v6485
        %v6518 = vunpack.c.l.b16 %v6486
        %v6519 = vunpack.c.l.b16 %v6487
        %v6520 = vunpack.c.l.b16 %v6488
        %v6521 = vunpack.c.l.b16 %v6489
        %v6522 = vunpack.c.l.b16 %v6490
        %v6523 = vunpack.c.l.b16 %v6491
        %v6524 = vunpack.c.l.b16 %v6492
        %v6525 = vunpack.c.l.b16 %v6493
        %v6526 = vunpack.c.l.b16 %v6494
        %v6527 = vpack.c.b16 %v6512, %v6511
        %v6528 = vpack.c.b16 %v6514, %v6513
        %v6529 = vpack.c.b16 %v6516, %v6515
        %v6530 = vpack.c.b16 %v6518, %v6517
        %v6531 = vpack.c.b16 %v6520, %v6519
        %v6532 = vpack.c.b16 %v6522, %v6521
        %v6533 = vpack.c.b16 %v6524, %v6523
        %v6534 = vpack.c.b16 %v6526, %v6525
        %6543 = vmatprep.subr.bf16.mxu0 0
        %6544 = vmatpush1.bf16.msra.mxu0 %v6527
        %6545 = vmatprep.subr.bf16.mxu0 0
        %6546 = vmatpush1.bf16.msra.mxu0 %v6528
        %6547 = vmatprep.subr.bf16.mxu0 0
        %6548 = vmatpush1.bf16.msra.mxu0 %v6529
        %6549 = vmatprep.subr.bf16.mxu0 0
        %6550 = vmatpush1.bf16.msra.mxu0 %v6530
        %6551 = vmatprep.subr.bf16.mxu0 0
        %6552 = vmatpush1.bf16.msra.mxu0 %v6531
        %6553 = vmatprep.subr.bf16.mxu0 0
        %6554 = vmatpush1.bf16.msra.mxu0 %v6532
        %6555 = vmatprep.subr.bf16.mxu0 0
        %6556 = vmatpush1.bf16.msra.mxu0 %v6533
        %6557 = vmatprep.subr.bf16.mxu0 0
        %6558 = vmatpush1.bf16.msra.mxu0 %v6534
        %6559 = vmatprep.subr.bf16.mxu0 0
        %6560 = vmatpush1.bf16.msra.mxu0 0
        %6561 = vmatprep.subr.bf16.mxu0 0
        %6562 = vmatpush1.bf16.msra.mxu0 0
        %6563 = vmatprep.subr.bf16.mxu0 0
        %6564 = vmatpush1.bf16.msra.mxu0 0
        %6565 = vmatprep.subr.bf16.mxu0 0
        %6566 = vmatpush1.bf16.msra.mxu0 0
        %6567 = vmatprep.subr.bf16.mxu0 0
        %6568 = vmatpush1.bf16.msra.mxu0 0
        %6569 = vmatprep.subr.bf16.mxu0 0
        %6570 = vmatpush1.bf16.msra.mxu0 0
        %6571 = vmatprep.subr.bf16.mxu0 0
        %6572 = vmatpush1.bf16.msra.mxu0 0
        %6573 = vmatprep.subr.bf16.mxu0 0
        %6574 = vmatpush1.bf16.msra.mxu0 0
        %6575 = vmatprep.mubr.bf16.mxu0 0
        %6576 = vmatmul.mubr.bf16.gmra.mrb[0].mxu0 %v6449
        %v6577 = vpop.f32.mrb[0].mxu0
        %v6578 = vadd.f32 0.0, %v6577
        %v6579 = vpop.f32.mrb[0].mxu0
        %v6580 = vpop.f32.mrb[0].mxu0
        %v6581 = vadd.f32 0.0, %v6580
        %v6582 = vpop.f32.mrb[0].mxu0
        %6583 = vmatprep.mubr.bf16.mxu0 0
        %6584 = vmatmul.mubr.bf16.gmra.mrb[0].mxu0 %v6452
        %v6585 = vpop.f32.mrb[0].mxu0
        %v6586 = vadd.f32 0.0, %v6585
        %v6587 = vpop.f32.mrb[0].mxu0
        %v6588 = vpop.f32.mrb[0].mxu0
        %v6589 = vadd.f32 0.0, %v6588
        %v6590 = vpop.f32.mrb[0].mxu0
        %6591 = vmatprep.mubr.bf16.mxu0 0
        %6592 = vmatmul.mubr.bf16.gmra.mrb[0].mxu0 %v6455
        %v6593 = vpop.f32.mrb[0].mxu0
        %v6594 = vadd.f32 0.0, %v6593
        %v6595 = vpop.f32.mrb[0].mxu0
        %v6596 = vpop.f32.mrb[0].mxu0
        %v6597 = vadd.f32 0.0, %v6596
        %v6598 = vpop.f32.mrb[0].mxu0
        %6599 = vmatprep.mubr.bf16.mxu0 0
        %6600 = vmatmul.mubr.bf16.gmra.mrb[0].mxu0 %v6458
        %v6601 = vpop.f32.mrb[0].mxu0
        %v6602 = vadd.f32 0.0, %v6601
        %v6603 = vpop.f32.mrb[0].mxu0
        %v6604 = vpop.f32.mrb[0].mxu0
        %v6605 = vadd.f32 0.0, %v6604
        %v6606 = vpop.f32.mrb[0].mxu0
        %6607 = vmatprep.mubr.bf16.mxu0 0
        %6608 = vmatmul.mubr.bf16.gmra.mrb[0].mxu0 %v6461
        %v6609 = vpop.f32.mrb[0].mxu0
        %v6610 = vadd.f32 0.0, %v6609
        %v6611 = vpop.f32.mrb[0].mxu0
        %v6612 = vpop.f32.mrb[0].mxu0
        %v6613 = vadd.f32 0.0, %v6612
        %v6614 = vpop.f32.mrb[0].mxu0
        %6615 = vmatprep.mubr.bf16.mxu0 0
        %6616 = vmatmul.mubr.bf16.gmra.mrb[0].mxu0 %v6464
        %v6617 = vpop.f32.mrb[0].mxu0
        %v6618 = vadd.f32 0.0, %v6617
        %v6619 = vpop.f32.mrb[0].mxu0
        %v6620 = vpop.f32.mrb[0].mxu0
        %v6621 = vadd.f32 0.0, %v6620
        %v6622 = vpop.f32.mrb[0].mxu0
        %6623 = vmatprep.mubr.bf16.mxu0 0
        %6624 = vmatmul.mubr.bf16.gmra.mrb[0].mxu0 %v6467
        %v6625 = vpop.f32.mrb[0].mxu0
        %v6626 = vadd.f32 0.0, %v6625
        %v6627 = vpop.f32.mrb[0].mxu0
        %v6628 = vpop.f32.mrb[0].mxu0
        %v6629 = vadd.f32 0.0, %v6628
        %v6630 = vpop.f32.mrb[0].mxu0
        %6631 = vmatprep.mubr.bf16.mxu0 0
        %6632 = vmatmul.mubr.bf16.gmra.mrb[0].mxu0 %v6470
        %v6633 = vpop.f32.mrb[0].mxu0
        %v6634 = vadd.f32 0.0, %v6633
        %v6635 = vpop.f32.mrb[0].mxu0
        %v6636 = vpop.f32.mrb[0].mxu0
        %v6637 = vadd.f32 0.0, %v6636
        %v6638 = vpop.f32.mrb[0].mxu0
        %6639 = vdwg.mxu0
        %v6640 = vadd.f32 %v6407, %v6578
        %v6641 = vadd.f32 %v6408, %v6581
        %v6642 = vadd.f32 %v6409, %v6586
        %v6643 = vadd.f32 %v6410, %v6589
        %v6644 = vadd.f32 %v6411, %v6594
        %v6645 = vadd.f32 %v6412, %v6597
        %v6646 = vadd.f32 %v6413, %v6602
        %v6647 = vadd.f32 %v6414, %v6605
        %v6648 = vadd.f32 %v6415, %v6610
        %v6649 = vadd.f32 %v6416, %v6613
        %v6650 = vadd.f32 %v6417, %v6618
        %v6651 = vadd.f32 %v6418, %v6621
        %v6652 = vadd.f32 %v6419, %v6626
        %v6653 = vadd.f32 %v6420, %v6629
        %v6654 = vadd.f32 %v6421, %v6634
        %v6655 = vadd.f32 %v6422, %v6637
        %v6656 = vld [vmem:[%s6085 + $0x8] sm:$0x1f]
        %v6657 = vld [vmem:[%s6085 + $0x18] sm:$0x1f]
        %v6658 = vld [vmem:[%s6085 + $0x28] sm:$0x1f]
        %v6659 = vld [vmem:[%s6085 + $0x38] sm:$0x1f]
        %v6660 = vld [vmem:[%s6085 + $0x48] sm:$0x1f]
        %v6661 = vld [vmem:[%s6085 + $0x58] sm:$0x1f]
        %v6662 = vld [vmem:[%s6085 + $0x68] sm:$0x1f]
        %v6663 = vld [vmem:[%s6085 + $0x78] sm:$0x1f]
        %v6665 = vshrl.u32 %v6423, 16
        %v6667 = vrot.slane %v6665, 4
        %v6668 = vshll.u32 %v6423, 16
        %v6670 = vrot.slane %v6668, 5
        %v6671 = vor.u32 %v6667, %v6670
        %v6673 = vshrl.u32 %v6656, 16
        %v6675 = vrot.slane %v6673, 4
        %v6676 = vshll.u32 %v6656, 16
        %v6678 = vrot.slane %v6676, 5
        %v6679 = vor.u32 %v6675, %v6678
        %v6680 = vsel %vm5760, %v6671, %v6679
        %v6682 = vshrl.u32 %v6424, 16
        %v6684 = vrot.slane %v6682, 4
        %v6685 = vshll.u32 %v6424, 16
        %v6687 = vrot.slane %v6685, 5
        %v6688 = vor.u32 %v6684, %v6687
        %v6690 = vshrl.u32 %v6657, 16
        %v6692 = vrot.slane %v6690, 4
        %v6693 = vshll.u32 %v6657, 16
        %v6695 = vrot.slane %v6693, 5
        %v6696 = vor.u32 %v6692, %v6695
        %v6697 = vsel %vm5760, %v6688, %v6696
        %v6699 = vshrl.u32 %v6425, 16
        %v6701 = vrot.slane %v6699, 4
        %v6702 = vshll.u32 %v6425, 16
        %v6704 = vrot.slane %v6702, 5
        %v6705 = vor.u32 %v6701, %v6704
        %v6707 = vshrl.u32 %v6658, 16
        %v6709 = vrot.slane %v6707, 4
        %v6710 = vshll.u32 %v6658, 16
        %v6712 = vrot.slane %v6710, 5
        %v6713 = vor.u32 %v6709, %v6712
        %v6714 = vsel %vm5760, %v6705, %v6713
        %v6716 = vshrl.u32 %v6426, 16
        %v6718 = vrot.slane %v6716, 4
        %v6719 = vshll.u32 %v6426, 16
        %v6721 = vrot.slane %v6719, 5
        %v6722 = vor.u32 %v6718, %v6721
        %v6724 = vshrl.u32 %v6659, 16
        %v6726 = vrot.slane %v6724, 4
        %v6727 = vshll.u32 %v6659, 16
        %v6729 = vrot.slane %v6727, 5
        %v6730 = vor.u32 %v6726, %v6729
        %v6731 = vsel %vm5760, %v6722, %v6730
        %v6733 = vshrl.u32 %v6427, 16
        %v6735 = vrot.slane %v6733, 4
        %v6736 = vshll.u32 %v6427, 16
        %v6738 = vrot.slane %v6736, 5
        %v6739 = vor.u32 %v6735, %v6738
        %v6741 = vshrl.u32 %v6660, 16
        %v6743 = vrot.slane %v6741, 4
        %v6744 = vshll.u32 %v6660, 16
        %v6746 = vrot.slane %v6744, 5
        %v6747 = vor.u32 %v6743, %v6746
        %v6748 = vsel %vm5760, %v6739, %v6747
        %v6750 = vshrl.u32 %v6428, 16
        %v6752 = vrot.slane %v6750, 4
        %v6753 = vshll.u32 %v6428, 16
        %v6755 = vrot.slane %v6753, 5
        %v6756 = vor.u32 %v6752, %v6755
        %v6758 = vshrl.u32 %v6661, 16
        %v6760 = vrot.slane %v6758, 4
        %v6761 = vshll.u32 %v6661, 16
        %v6763 = vrot.slane %v6761, 5
        %v6764 = vor.u32 %v6760, %v6763
        %v6765 = vsel %vm5760, %v6756, %v6764
        %v6767 = vshrl.u32 %v6429, 16
        %v6769 = vrot.slane %v6767, 4
        %v6770 = vshll.u32 %v6429, 16
        %v6772 = vrot.slane %v6770, 5
        %v6773 = vor.u32 %v6769, %v6772
        %v6775 = vshrl.u32 %v6662, 16
        %v6777 = vrot.slane %v6775, 4
        %v6778 = vshll.u32 %v6662, 16
        %v6780 = vrot.slane %v6778, 5
        %v6781 = vor.u32 %v6777, %v6780
        %v6782 = vsel %vm5760, %v6773, %v6781
        %v6784 = vshrl.u32 %v6430, 16
        %v6786 = vrot.slane %v6784, 4
        %v6787 = vshll.u32 %v6430, 16
        %v6789 = vrot.slane %v6787, 5
        %v6790 = vor.u32 %v6786, %v6789
        %v6792 = vshrl.u32 %v6663, 16
        %v6794 = vrot.slane %v6792, 4
        %v6795 = vshll.u32 %v6663, 16
        %v6797 = vrot.slane %v6795, 5
        %v6798 = vor.u32 %v6794, %v6797
        %v6799 = vsel %vm5760, %v6790, %v6798
        %v6808 = vld [vmem:[%s3 + $0x140] sm:$0xf]
        %v6809 = vld [vmem:[%s3 + $0x144] sm:$0xf]
        %v6810 = vld [vmem:[%s3 + $0x148] sm:$0xf]
        %v6811 = vld [vmem:[%s3 + $0x14c] sm:$0xf]
        %v6812 = vld [vmem:[%s3 + $0x150] sm:$0xf]
        %v6813 = vld [vmem:[%s3 + $0x154] sm:$0xf]
        %v6814 = vld [vmem:[%s3 + $0x158] sm:$0xf]
        %v6815 = vld [vmem:[%s3 + $0x15c] sm:$0xf]
        %v6816 = vld [vmem:[%s3 + $0x160] sm:$0xf]
        %v6817 = vld [vmem:[%s3 + $0x164] sm:$0xf]
        %v6818 = vld [vmem:[%s3 + $0x168] sm:$0xf]
        %v6819 = vld [vmem:[%s3 + $0x16c] sm:$0xf]
        %v6820 = vld [vmem:[%s3 + $0x170] sm:$0xf]
        %v6821 = vld [vmem:[%s3 + $0x174] sm:$0xf]
        %v6822 = vld [vmem:[%s3 + $0x178] sm:$0xf]
        %v6823 = vld [vmem:[%s3 + $0x17c] sm:$0xf]
        %v6840 = vunpack.c.l.b16 %v6808
        %v6841 = vunpack.c.l.b16 %v6809
        %v6842 = vunpack.c.l.b16 %v6810
        %v6843 = vunpack.c.l.b16 %v6811
        %v6844 = vunpack.c.l.b16 %v6812
        %v6845 = vunpack.c.l.b16 %v6813
        %v6846 = vunpack.c.l.b16 %v6814
        %v6847 = vunpack.c.l.b16 %v6815
        %v6848 = vunpack.c.l.b16 %v6816
        %v6849 = vunpack.c.l.b16 %v6817
        %v6850 = vunpack.c.l.b16 %v6818
        %v6851 = vunpack.c.l.b16 %v6819
        %v6852 = vunpack.c.l.b16 %v6820
        %v6853 = vunpack.c.l.b16 %v6821
        %v6854 = vunpack.c.l.b16 %v6822
        %v6855 = vunpack.c.l.b16 %v6823
        %v6856 = vpack.c.b16 %v6841, %v6840
        %v6857 = vpack.c.b16 %v6843, %v6842
        %v6858 = vpack.c.b16 %v6845, %v6844
        %v6859 = vpack.c.b16 %v6847, %v6846
        %v6860 = vpack.c.b16 %v6849, %v6848
        %v6861 = vpack.c.b16 %v6851, %v6850
        %v6862 = vpack.c.b16 %v6853, %v6852
        %v6863 = vpack.c.b16 %v6855, %v6854
        %6872 = vmatprep.subr.bf16.mxu0 0
        %6873 = vmatpush1.bf16.msra.mxu0 %v6856
        %6874 = vmatprep.subr.bf16.mxu0 0
        %6875 = vmatpush1.bf16.msra.mxu0 %v6857
        %6876 = vmatprep.subr.bf16.mxu0 0
        %6877 = vmatpush1.bf16.msra.mxu0 %v6858
        %6878 = vmatprep.subr.bf16.mxu0 0
        %6879 = vmatpush1.bf16.msra.mxu0 %v6859
        %6880 = vmatprep.subr.bf16.mxu0 0
        %6881 = vmatpush1.bf16.msra.mxu0 %v6860
        %6882 = vmatprep.subr.bf16.mxu0 0
        %6883 = vmatpush1.bf16.msra.mxu0 %v6861
        %6884 = vmatprep.subr.bf16.mxu0 0
        %6885 = vmatpush1.bf16.msra.mxu0 %v6862
        %6886 = vmatprep.subr.bf16.mxu0 0
        %6887 = vmatpush1.bf16.msra.mxu0 %v6863
        %6888 = vmatprep.subr.bf16.mxu0 0
        %6889 = vmatpush1.bf16.msra.mxu0 0
        %6890 = vmatprep.subr.bf16.mxu0 0
        %6891 = vmatpush1.bf16.msra.mxu0 0
        %6892 = vmatprep.subr.bf16.mxu0 0
        %6893 = vmatpush1.bf16.msra.mxu0 0
        %6894 = vmatprep.subr.bf16.mxu0 0
        %6895 = vmatpush1.bf16.msra.mxu0 0
        %6896 = vmatprep.subr.bf16.mxu0 0
        %6897 = vmatpush1.bf16.msra.mxu0 0
        %6898 = vmatprep.subr.bf16.mxu0 0
        %6899 = vmatpush1.bf16.msra.mxu0 0
        %6900 = vmatprep.subr.bf16.mxu0 0
        %6901 = vmatpush1.bf16.msra.mxu0 0
        %6902 = vmatprep.subr.bf16.mxu0 0
        %6903 = vmatpush1.bf16.msra.mxu0 0
        %6904 = vmatprep.mubr.bf16.mxu0 0
        %6905 = vmatmul.mubr.bf16.gmra.mrb[0].mxu0 %v6680
        %v6906 = vpop.f32.mrb[0].mxu0
        %v6907 = vadd.f32 0.0, %v6906
        %v6908 = vpop.f32.mrb[0].mxu0
        %v6909 = vpop.f32.mrb[0].mxu0
        %v6910 = vadd.f32 0.0, %v6909
        %v6911 = vpop.f32.mrb[0].mxu0
        %6912 = vmatprep.mubr.bf16.mxu0 0
        %6913 = vmatmul.mubr.bf16.gmra.mrb[0].mxu0 %v6697
        %v6914 = vpop.f32.mrb[0].mxu0
        %v6915 = vadd.f32 0.0, %v6914
        %v6916 = vpop.f32.mrb[0].mxu0
        %v6917 = vpop.f32.mrb[0].mxu0
        %v6918 = vadd.f32 0.0, %v6917
        %v6919 = vpop.f32.mrb[0].mxu0
        %6920 = vmatprep.mubr.bf16.mxu0 0
        %6921 = vmatmul.mubr.bf16.gmra.mrb[0].mxu0 %v6714
        %v6922 = vpop.f32.mrb[0].mxu0
        %v6923 = vadd.f32 0.0, %v6922
        %v6924 = vpop.f32.mrb[0].mxu0
        %v6925 = vpop.f32.mrb[0].mxu0
        %v6926 = vadd.f32 0.0, %v6925
        %v6927 = vpop.f32.mrb[0].mxu0
        %6928 = vmatprep.mubr.bf16.mxu0 0
        %6929 = vmatmul.mubr.bf16.gmra.mrb[0].mxu0 %v6731
        %v6930 = vpop.f32.mrb[0].mxu0
        %v6931 = vadd.f32 0.0, %v6930
        %v6932 = vpop.f32.mrb[0].mxu0
        %v6933 = vpop.f32.mrb[0].mxu0
        %v6934 = vadd.f32 0.0, %v6933
        %v6935 = vpop.f32.mrb[0].mxu0
        %6936 = vmatprep.mubr.bf16.mxu0 0
        %6937 = vmatmul.mubr.bf16.gmra.mrb[0].mxu0 %v6748
        %v6938 = vpop.f32.mrb[0].mxu0
        %v6939 = vadd.f32 0.0, %v6938
        %v6940 = vpop.f32.mrb[0].mxu0
        %v6941 = vpop.f32.mrb[0].mxu0
        %v6942 = vadd.f32 0.0, %v6941
        %v6943 = vpop.f32.mrb[0].mxu0
        %6944 = vmatprep.mubr.bf16.mxu0 0
        %6945 = vmatmul.mubr.bf16.gmra.mrb[0].mxu0 %v6765
        %v6946 = vpop.f32.mrb[0].mxu0
        %v6947 = vadd.f32 0.0, %v6946
        %v6948 = vpop.f32.mrb[0].mxu0
        %v6949 = vpop.f32.mrb[0].mxu0
        %v6950 = vadd.f32 0.0, %v6949
        %v6951 = vpop.f32.mrb[0].mxu0
        %6952 = vmatprep.mubr.bf16.mxu0 0
        %6953 = vmatmul.mubr.bf16.gmra.mrb[0].mxu0 %v6782
        %v6954 = vpop.f32.mrb[0].mxu0
        %v6955 = vadd.f32 0.0, %v6954
        %v6956 = vpop.f32.mrb[0].mxu0
        %v6957 = vpop.f32.mrb[0].mxu0
        %v6958 = vadd.f32 0.0, %v6957
        %v6959 = vpop.f32.mrb[0].mxu0
        %6960 = vmatprep.mubr.bf16.mxu0 0
        %6961 = vmatmul.mubr.bf16.gmra.mrb[0].mxu0 %v6799
        %v6962 = vpop.f32.mrb[0].mxu0
        %v6963 = vadd.f32 0.0, %v6962
        %v6964 = vpop.f32.mrb[0].mxu0
        %v6965 = vpop.f32.mrb[0].mxu0
        %v6966 = vadd.f32 0.0, %v6965
        %v6967 = vpop.f32.mrb[0].mxu0
        %6968 = vdwg.mxu0
        %v6969 = vadd.f32 %v6640, %v6907
        %v6970 = vadd.f32 %v6641, %v6910
        %v6971 = vadd.f32 %v6642, %v6915
        %v6972 = vadd.f32 %v6643, %v6918
        %v6973 = vadd.f32 %v6644, %v6923
        %v6974 = vadd.f32 %v6645, %v6926
        %v6975 = vadd.f32 %v6646, %v6931
        %v6976 = vadd.f32 %v6647, %v6934
        %v6977 = vadd.f32 %v6648, %v6939
        %v6978 = vadd.f32 %v6649, %v6942
        %v6979 = vadd.f32 %v6650, %v6947
        %v6980 = vadd.f32 %v6651, %v6950
        %v6981 = vadd.f32 %v6652, %v6955
        %v6982 = vadd.f32 %v6653, %v6958
        %v6983 = vadd.f32 %v6654, %v6963
        %v6984 = vadd.f32 %v6655, %v6966
        %s6985 = sadd.s32 %s5208, 2
        %s6986 = smul.u32 %s6985, 2
        %s6987 = smul.addr %s6986, 8
        %s6988 = scalar_lea.vmem [#allocation3], %s6987
        %v6989 = vld [vmem:[%s6988] sm:$0xf8]
        %v6990 = vld [vmem:[%s6988 + $0x8] sm:$0xf]
        %v6991 = vld [vmem:[%s6988 + $0x10] sm:$0xf8]
        %v6992 = vld [vmem:[%s6988 + $0x18] sm:$0xf]
        %v6993 = vld [vmem:[%s6988 + $0x20] sm:$0xf8]
        %v6994 = vld [vmem:[%s6988 + $0x28] sm:$0xf]
        %v6995 = vld [vmem:[%s6988 + $0x30] sm:$0xf8]
        %v6996 = vld [vmem:[%s6988 + $0x38] sm:$0xf]
        %v6997 = vld [vmem:[%s6988 + $0x40] sm:$0xf8]
        %v6998 = vld [vmem:[%s6988 + $0x48] sm:$0xf]
        %v6999 = vld [vmem:[%s6988 + $0x50] sm:$0xf8]
        %v7000 = vld [vmem:[%s6988 + $0x58] sm:$0xf]
        %v7001 = vld [vmem:[%s6988 + $0x60] sm:$0xf8]
        %v7002 = vld [vmem:[%s6988 + $0x68] sm:$0xf]
        %v7003 = vld [vmem:[%s6988 + $0x70] sm:$0xf8]
        %v7004 = vld [vmem:[%s6988 + $0x78] sm:$0xf]
        %v7006 = vshrl.u32 %v6989, 16
        %v7008 = vrot.slane %v7006, 3
        %v7009 = vshll.u32 %v6989, 16
        %v7011 = vrot.slane %v7009, 4
        %v7012 = vor.u32 %v7008, %v7011
        %v7014 = vshrl.u32 %v6990, 16
        %v7016 = vrot.slane %v7014, 3
        %v7017 = vshll.u32 %v6990, 16
        %v7019 = vrot.slane %v7017, 4
        %v7020 = vor.u32 %v7016, %v7019
        %v7021 = vsel %vm5228, %v7012, %v7020
        %v7023 = vshrl.u32 %v6991, 16
        %v7025 = vrot.slane %v7023, 3
        %v7026 = vshll.u32 %v6991, 16
        %v7028 = vrot.slane %v7026, 4
        %v7029 = vor.u32 %v7025, %v7028
        %v7031 = vshrl.u32 %v6992, 16
        %v7033 = vrot.slane %v7031, 3
        %v7034 = vshll.u32 %v6992, 16
        %v7036 = vrot.slane %v7034, 4
        %v7037 = vor.u32 %v7033, %v7036
        %v7038 = vsel %vm5228, %v7029, %v7037
        %v7040 = vshrl.u32 %v6993, 16
        %v7042 = vrot.slane %v7040, 3
        %v7043 = vshll.u32 %v6993, 16
        %v7045 = vrot.slane %v7043, 4
        %v7046 = vor.u32 %v7042, %v7045
        %v7048 = vshrl.u32 %v6994, 16
        %v7050 = vrot.slane %v7048, 3
        %v7051 = vshll.u32 %v6994, 16
        %v7053 = vrot.slane %v7051, 4
        %v7054 = vor.u32 %v7050, %v7053
        %v7055 = vsel %vm5228, %v7046, %v7054
        %v7057 = vshrl.u32 %v6995, 16
        %v7059 = vrot.slane %v7057, 3
        %v7060 = vshll.u32 %v6995, 16
        %v7062 = vrot.slane %v7060, 4
        %v7063 = vor.u32 %v7059, %v7062
        %v7065 = vshrl.u32 %v6996, 16
        %v7067 = vrot.slane %v7065, 3
        %v7068 = vshll.u32 %v6996, 16
        %v7070 = vrot.slane %v7068, 4
        %v7071 = vor.u32 %v7067, %v7070
        %v7072 = vsel %vm5228, %v7063, %v7071
        %v7074 = vshrl.u32 %v6997, 16
        %v7076 = vrot.slane %v7074, 3
        %v7077 = vshll.u32 %v6997, 16
        %v7079 = vrot.slane %v7077, 4
        %v7080 = vor.u32 %v7076, %v7079
        %v7082 = vshrl.u32 %v6998, 16
        %v7084 = vrot.slane %v7082, 3
        %v7085 = vshll.u32 %v6998, 16
        %v7087 = vrot.slane %v7085, 4
        %v7088 = vor.u32 %v7084, %v7087
        %v7089 = vsel %vm5228, %v7080, %v7088
        %v7091 = vshrl.u32 %v6999, 16
        %v7093 = vrot.slane %v7091, 3
        %v7094 = vshll.u32 %v6999, 16
        %v7096 = vrot.slane %v7094, 4
        %v7097 = vor.u32 %v7093, %v7096
        %v7099 = vshrl.u32 %v7000, 16
        %v7101 = vrot.slane %v7099, 3
        %v7102 = vshll.u32 %v7000, 16
        %v7104 = vrot.slane %v7102, 4
        %v7105 = vor.u32 %v7101, %v7104
        %v7106 = vsel %vm5228, %v7097, %v7105
        %v7108 = vshrl.u32 %v7001, 16
        %v7110 = vrot.slane %v7108, 3
        %v7111 = vshll.u32 %v7001, 16
        %v7113 = vrot.slane %v7111, 4
        %v7114 = vor.u32 %v7110, %v7113
        %v7116 = vshrl.u32 %v7002, 16
        %v7118 = vrot.slane %v7116, 3
        %v7119 = vshll.u32 %v7002, 16
        %v7121 = vrot.slane %v7119, 4
        %v7122 = vor.u32 %v7118, %v7121
        %v7123 = vsel %vm5228, %v7114, %v7122
        %v7125 = vshrl.u32 %v7003, 16
        %v7127 = vrot.slane %v7125, 3
        %v7128 = vshll.u32 %v7003, 16
        %v7130 = vrot.slane %v7128, 4
        %v7131 = vor.u32 %v7127, %v7130
        %v7133 = vshrl.u32 %v7004, 16
        %v7135 = vrot.slane %v7133, 3
        %v7136 = vshll.u32 %v7004, 16
        %v7138 = vrot.slane %v7136, 4
        %v7139 = vor.u32 %v7135, %v7138
        %v7140 = vsel %vm5228, %v7131, %v7139
        %v7149 = vld [vmem:[%s3 + $0x180] sm:$0xf]
        %v7150 = vld [vmem:[%s3 + $0x184] sm:$0xf]
        %v7151 = vld [vmem:[%s3 + $0x188] sm:$0xf]
        %v7152 = vld [vmem:[%s3 + $0x18c] sm:$0xf]
        %v7153 = vld [vmem:[%s3 + $0x190] sm:$0xf]
        %v7154 = vld [vmem:[%s3 + $0x194] sm:$0xf]
        %v7155 = vld [vmem:[%s3 + $0x198] sm:$0xf]
        %v7156 = vld [vmem:[%s3 + $0x19c] sm:$0xf]
        %v7157 = vld [vmem:[%s3 + $0x1a0] sm:$0xf]
        %v7158 = vld [vmem:[%s3 + $0x1a4] sm:$0xf]
        %v7159 = vld [vmem:[%s3 + $0x1a8] sm:$0xf]
        %v7160 = vld [vmem:[%s3 + $0x1ac] sm:$0xf]
        %v7161 = vld [vmem:[%s3 + $0x1b0] sm:$0xf]
        %v7162 = vld [vmem:[%s3 + $0x1b4] sm:$0xf]
        %v7163 = vld [vmem:[%s3 + $0x1b8] sm:$0xf]
        %v7164 = vld [vmem:[%s3 + $0x1bc] sm:$0xf]
        %v7181 = vunpack.c.l.b16 %v7149
        %v7182 = vunpack.c.l.b16 %v7150
        %v7183 = vunpack.c.l.b16 %v7151
        %v7184 = vunpack.c.l.b16 %v7152
        %v7185 = vunpack.c.l.b16 %v7153
        %v7186 = vunpack.c.l.b16 %v7154
        %v7187 = vunpack.c.l.b16 %v7155
        %v7188 = vunpack.c.l.b16 %v7156
        %v7189 = vunpack.c.l.b16 %v7157
        %v7190 = vunpack.c.l.b16 %v7158
        %v7191 = vunpack.c.l.b16 %v7159
        %v7192 = vunpack.c.l.b16 %v7160
        %v7193 = vunpack.c.l.b16 %v7161
        %v7194 = vunpack.c.l.b16 %v7162
        %v7195 = vunpack.c.l.b16 %v7163
        %v7196 = vunpack.c.l.b16 %v7164
        %v7197 = vpack.c.b16 %v7182, %v7181
        %v7198 = vpack.c.b16 %v7184, %v7183
        %v7199 = vpack.c.b16 %v7186, %v7185
        %v7200 = vpack.c.b16 %v7188, %v7187
        %v7201 = vpack.c.b16 %v7190, %v7189
        %v7202 = vpack.c.b16 %v7192, %v7191
        %v7203 = vpack.c.b16 %v7194, %v7193
        %v7204 = vpack.c.b16 %v7196, %v7195
        %7213 = vmatprep.subr.bf16.mxu0 0
        %7214 = vmatpush1.bf16.msra.mxu0 %v7197
        %7215 = vmatprep.subr.bf16.mxu0 0
        %7216 = vmatpush1.bf16.msra.mxu0 %v7198
        %7217 = vmatprep.subr.bf16.mxu0 0
        %7218 = vmatpush1.bf16.msra.mxu0 %v7199
        %7219 = vmatprep.subr.bf16.mxu0 0
        %7220 = vmatpush1.bf16.msra.mxu0 %v7200
        %7221 = vmatprep.subr.bf16.mxu0 0
        %7222 = vmatpush1.bf16.msra.mxu0 %v7201
        %7223 = vmatprep.subr.bf16.mxu0 0
        %7224 = vmatpush1.bf16.msra.mxu0 %v7202
        %7225 = vmatprep.subr.bf16.mxu0 0
        %7226 = vmatpush1.bf16.msra.mxu0 %v7203
        %7227 = vmatprep.subr.bf16.mxu0 0
        %7228 = vmatpush1.bf16.msra.mxu0 %v7204
        %7229 = vmatprep.subr.bf16.mxu0 0
        %7230 = vmatpush1.bf16.msra.mxu0 0
        %7231 = vmatprep.subr.bf16.mxu0 0
        %7232 = vmatpush1.bf16.msra.mxu0 0
        %7233 = vmatprep.subr.bf16.mxu0 0
        %7234 = vmatpush1.bf16.msra.mxu0 0
        %7235 = vmatprep.subr.bf16.mxu0 0
        %7236 = vmatpush1.bf16.msra.mxu0 0
        %7237 = vmatprep.subr.bf16.mxu0 0
        %7238 = vmatpush1.bf16.msra.mxu0 0
        %7239 = vmatprep.subr.bf16.mxu0 0
        %7240 = vmatpush1.bf16.msra.mxu0 0
        %7241 = vmatprep.subr.bf16.mxu0 0
        %7242 = vmatpush1.bf16.msra.mxu0 0
        %7243 = vmatprep.subr.bf16.mxu0 0
        %7244 = vmatpush1.bf16.msra.mxu0 0
        %7245 = vmatprep.mubr.bf16.mxu0 0
        %7246 = vmatmul.mubr.bf16.gmra.mrb[0].mxu0 %v7021
        %v7247 = vpop.f32.mrb[0].mxu0
        %v7248 = vadd.f32 0.0, %v7247
        %v7249 = vpop.f32.mrb[0].mxu0
        %v7250 = vpop.f32.mrb[0].mxu0
        %v7251 = vadd.f32 0.0, %v7250
        %v7252 = vpop.f32.mrb[0].mxu0
        %7253 = vmatprep.mubr.bf16.mxu0 0
        %7254 = vmatmul.mubr.bf16.gmra.mrb[0].mxu0 %v7038
        %v7255 = vpop.f32.mrb[0].mxu0
        %v7256 = vadd.f32 0.0, %v7255
        %v7257 = vpop.f32.mrb[0].mxu0
        %v7258 = vpop.f32.mrb[0].mxu0
        %v7259 = vadd.f32 0.0, %v7258
        %v7260 = vpop.f32.mrb[0].mxu0
        %7261 = vmatprep.mubr.bf16.mxu0 0
        %7262 = vmatmul.mubr.bf16.gmra.mrb[0].mxu0 %v7055
        %v7263 = vpop.f32.mrb[0].mxu0
        %v7264 = vadd.f32 0.0, %v7263
        %v7265 = vpop.f32.mrb[0].mxu0
        %v7266 = vpop.f32.mrb[0].mxu0
        %v7267 = vadd.f32 0.0, %v7266
        %v7268 = vpop.f32.mrb[0].mxu0
        %7269 = vmatprep.mubr.bf16.mxu0 0
        %7270 = vmatmul.mubr.bf16.gmra.mrb[0].mxu0 %v7072
        %v7271 = vpop.f32.mrb[0].mxu0
        %v7272 = vadd.f32 0.0, %v7271
        %v7273 = vpop.f32.mrb[0].mxu0
        %v7274 = vpop.f32.mrb[0].mxu0
        %v7275 = vadd.f32 0.0, %v7274
        %v7276 = vpop.f32.mrb[0].mxu0
        %7277 = vmatprep.mubr.bf16.mxu0 0
        %7278 = vmatmul.mubr.bf16.gmra.mrb[0].mxu0 %v7089
        %v7279 = vpop.f32.mrb[0].mxu0
        %v7280 = vadd.f32 0.0, %v7279
        %v7281 = vpop.f32.mrb[0].mxu0
        %v7282 = vpop.f32.mrb[0].mxu0
        %v7283 = vadd.f32 0.0, %v7282
        %v7284 = vpop.f32.mrb[0].mxu0
        %7285 = vmatprep.mubr.bf16.mxu0 0
        %7286 = vmatmul.mubr.bf16.gmra.mrb[0].mxu0 %v7106
        %v7287 = vpop.f32.mrb[0].mxu0
        %v7288 = vadd.f32 0.0, %v7287
        %v7289 = vpop.f32.mrb[0].mxu0
        %v7290 = vpop.f32.mrb[0].mxu0
        %v7291 = vadd.f32 0.0, %v7290
        %v7292 = vpop.f32.mrb[0].mxu0
        %7293 = vmatprep.mubr.bf16.mxu0 0
        %7294 = vmatmul.mubr.bf16.gmra.mrb[0].mxu0 %v7123
        %v7295 = vpop.f32.mrb[0].mxu0
        %v7296 = vadd.f32 0.0, %v7295
        %v7297 = vpop.f32.mrb[0].mxu0
        %v7298 = vpop.f32.mrb[0].mxu0
        %v7299 = vadd.f32 0.0, %v7298
        %v7300 = vpop.f32.mrb[0].mxu0
        %7301 = vmatprep.mubr.bf16.mxu0 0
        %7302 = vmatmul.mubr.bf16.gmra.mrb[0].mxu0 %v7140
        %v7303 = vpop.f32.mrb[0].mxu0
        %v7304 = vadd.f32 0.0, %v7303
        %v7305 = vpop.f32.mrb[0].mxu0
        %v7306 = vpop.f32.mrb[0].mxu0
        %v7307 = vadd.f32 0.0, %v7306
        %v7308 = vpop.f32.mrb[0].mxu0
        %7309 = vdwg.mxu0
        %v7310 = vadd.f32 %v6969, %v7248
        %v7311 = vadd.f32 %v6970, %v7251
        %v7312 = vadd.f32 %v6971, %v7256
        %v7313 = vadd.f32 %v6972, %v7259
        %v7314 = vadd.f32 %v6973, %v7264
        %v7315 = vadd.f32 %v6974, %v7267
        %v7316 = vadd.f32 %v6975, %v7272
        %v7317 = vadd.f32 %v6976, %v7275
        %v7318 = vadd.f32 %v6977, %v7280
        %v7319 = vadd.f32 %v6978, %v7283
        %v7320 = vadd.f32 %v6979, %v7288
        %v7321 = vadd.f32 %v6980, %v7291
        %v7322 = vadd.f32 %v6981, %v7296
        %v7323 = vadd.f32 %v6982, %v7299
        %v7324 = vadd.f32 %v6983, %v7304
        %v7325 = vadd.f32 %v6984, %v7307
        %v7326 = vld [vmem:[%s6988] sm:$0xf0]
        %v7327 = vld [vmem:[%s6988 + $0x10] sm:$0xf0]
        %v7328 = vld [vmem:[%s6988 + $0x20] sm:$0xf0]
        %v7329 = vld [vmem:[%s6988 + $0x30] sm:$0xf0]
        %v7330 = vld [vmem:[%s6988 + $0x40] sm:$0xf0]
        %v7331 = vld [vmem:[%s6988 + $0x50] sm:$0xf0]
        %v7332 = vld [vmem:[%s6988 + $0x60] sm:$0xf0]
        %v7333 = vld [vmem:[%s6988 + $0x70] sm:$0xf0]
        %v7350 = vrot.slane %v7326, 4
        %v7351 = vrot.slane %v6990, 4
        %v7352 = vsel %vm5413, %v7350, %v7351
        %v7353 = vrot.slane %v7327, 4
        %v7354 = vrot.slane %v6992, 4
        %v7355 = vsel %vm5413, %v7353, %v7354
        %v7356 = vrot.slane %v7328, 4
        %v7357 = vrot.slane %v6994, 4
        %v7358 = vsel %vm5413, %v7356, %v7357
        %v7359 = vrot.slane %v7329, 4
        %v7360 = vrot.slane %v6996, 4
        %v7361 = vsel %vm5413, %v7359, %v7360
        %v7362 = vrot.slane %v7330, 4
        %v7363 = vrot.slane %v6998, 4
        %v7364 = vsel %vm5413, %v7362, %v7363
        %v7365 = vrot.slane %v7331, 4
        %v7366 = vrot.slane %v7000, 4
        %v7367 = vsel %vm5413, %v7365, %v7366
        %v7368 = vrot.slane %v7332, 4
        %v7369 = vrot.slane %v7002, 4
        %v7370 = vsel %vm5413, %v7368, %v7369
        %v7371 = vrot.slane %v7333, 4
        %v7372 = vrot.slane %v7004, 4
        %v7373 = vsel %vm5413, %v7371, %v7372
        %v7382 = vld [vmem:[%s3 + $0x1c0] sm:$0xf]
        %v7383 = vld [vmem:[%s3 + $0x1c4] sm:$0xf]
        %v7384 = vld [vmem:[%s3 + $0x1c8] sm:$0xf]
        %v7385 = vld [vmem:[%s3 + $0x1cc] sm:$0xf]
        %v7386 = vld [vmem:[%s3 + $0x1d0] sm:$0xf]
        %v7387 = vld [vmem:[%s3 + $0x1d4] sm:$0xf]
        %v7388 = vld [vmem:[%s3 + $0x1d8] sm:$0xf]
        %v7389 = vld [vmem:[%s3 + $0x1dc] sm:$0xf]
        %v7390 = vld [vmem:[%s3 + $0x1e0] sm:$0xf]
        %v7391 = vld [vmem:[%s3 + $0x1e4] sm:$0xf]
        %v7392 = vld [vmem:[%s3 + $0x1e8] sm:$0xf]
        %v7393 = vld [vmem:[%s3 + $0x1ec] sm:$0xf]
        %v7394 = vld [vmem:[%s3 + $0x1f0] sm:$0xf]
        %v7395 = vld [vmem:[%s3 + $0x1f4] sm:$0xf]
        %v7396 = vld [vmem:[%s3 + $0x1f8] sm:$0xf]
        %v7397 = vld [vmem:[%s3 + $0x1fc] sm:$0xf]
        %v7414 = vunpack.c.l.b16 %v7382
        %v7415 = vunpack.c.l.b16 %v7383
        %v7416 = vunpack.c.l.b16 %v7384
        %v7417 = vunpack.c.l.b16 %v7385
        %v7418 = vunpack.c.l.b16 %v7386
        %v7419 = vunpack.c.l.b16 %v7387
        %v7420 = vunpack.c.l.b16 %v7388
        %v7421 = vunpack.c.l.b16 %v7389
        %v7422 = vunpack.c.l.b16 %v7390
        %v7423 = vunpack.c.l.b16 %v7391
        %v7424 = vunpack.c.l.b16 %v7392
        %v7425 = vunpack.c.l.b16 %v7393
        %v7426 = vunpack.c.l.b16 %v7394
        %v7427 = vunpack.c.l.b16 %v7395
        %v7428 = vunpack.c.l.b16 %v7396
        %v7429 = vunpack.c.l.b16 %v7397
        %v7430 = vpack.c.b16 %v7415, %v7414
        %v7431 = vpack.c.b16 %v7417, %v7416
        %v7432 = vpack.c.b16 %v7419, %v7418
        %v7433 = vpack.c.b16 %v7421, %v7420
        %v7434 = vpack.c.b16 %v7423, %v7422
        %v7435 = vpack.c.b16 %v7425, %v7424
        %v7436 = vpack.c.b16 %v7427, %v7426
        %v7437 = vpack.c.b16 %v7429, %v7428
        %7446 = vmatprep.subr.bf16.mxu0 0
        %7447 = vmatpush1.bf16.msra.mxu0 %v7430
        %7448 = vmatprep.subr.bf16.mxu0 0
        %7449 = vmatpush1.bf16.msra.mxu0 %v7431
        %7450 = vmatprep.subr.bf16.mxu0 0
        %7451 = vmatpush1.bf16.msra.mxu0 %v7432
        %7452 = vmatprep.subr.bf16.mxu0 0
        %7453 = vmatpush1.bf16.msra.mxu0 %v7433
        %7454 = vmatprep.subr.bf16.mxu0 0
        %7455 = vmatpush1.bf16.msra.mxu0 %v7434
        %7456 = vmatprep.subr.bf16.mxu0 0
        %7457 = vmatpush1.bf16.msra.mxu0 %v7435
        %7458 = vmatprep.subr.bf16.mxu0 0
        %7459 = vmatpush1.bf16.msra.mxu0 %v7436
        %7460 = vmatprep.subr.bf16.mxu0 0
        %7461 = vmatpush1.bf16.msra.mxu0 %v7437
        %7462 = vmatprep.subr.bf16.mxu0 0
        %7463 = vmatpush1.bf16.msra.mxu0 0
        %7464 = vmatprep.subr.bf16.mxu0 0
        %7465 = vmatpush1.bf16.msra.mxu0 0
        %7466 = vmatprep.subr.bf16.mxu0 0
        %7467 = vmatpush1.bf16.msra.mxu0 0
        %7468 = vmatprep.subr.bf16.mxu0 0
        %7469 = vmatpush1.bf16.msra.mxu0 0
        %7470 = vmatprep.subr.bf16.mxu0 0
        %7471 = vmatpush1.bf16.msra.mxu0 0
        %7472 = vmatprep.subr.bf16.mxu0 0
        %7473 = vmatpush1.bf16.msra.mxu0 0
        %7474 = vmatprep.subr.bf16.mxu0 0
        %7475 = vmatpush1.bf16.msra.mxu0 0
        %7476 = vmatprep.subr.bf16.mxu0 0
        %7477 = vmatpush1.bf16.msra.mxu0 0
        %7478 = vmatprep.mubr.bf16.mxu0 0
        %7479 = vmatmul.mubr.bf16.gmra.mrb[0].mxu0 %v7352
        %v7480 = vpop.f32.mrb[0].mxu0
        %v7481 = vadd.f32 0.0, %v7480
        %v7482 = vpop.f32.mrb[0].mxu0
        %v7483 = vpop.f32.mrb[0].mxu0
        %v7484 = vadd.f32 0.0, %v7483
        %v7485 = vpop.f32.mrb[0].mxu0
        %7486 = vmatprep.mubr.bf16.mxu0 0
        %7487 = vmatmul.mubr.bf16.gmra.mrb[0].mxu0 %v7355
        %v7488 = vpop.f32.mrb[0].mxu0
        %v7489 = vadd.f32 0.0, %v7488
        %v7490 = vpop.f32.mrb[0].mxu0
        %v7491 = vpop.f32.mrb[0].mxu0
        %v7492 = vadd.f32 0.0, %v7491
        %v7493 = vpop.f32.mrb[0].mxu0
        %7494 = vmatprep.mubr.bf16.mxu0 0
        %7495 = vmatmul.mubr.bf16.gmra.mrb[0].mxu0 %v7358
        %v7496 = vpop.f32.mrb[0].mxu0
        %v7497 = vadd.f32 0.0, %v7496
        %v7498 = vpop.f32.mrb[0].mxu0
        %v7499 = vpop.f32.mrb[0].mxu0
        %v7500 = vadd.f32 0.0, %v7499
        %v7501 = vpop.f32.mrb[0].mxu0
        %7502 = vmatprep.mubr.bf16.mxu0 0
        %7503 = vmatmul.mubr.bf16.gmra.mrb[0].mxu0 %v7361
        %v7504 = vpop.f32.mrb[0].mxu0
        %v7505 = vadd.f32 0.0, %v7504
        %v7506 = vpop.f32.mrb[0].mxu0
        %v7507 = vpop.f32.mrb[0].mxu0
        %v7508 = vadd.f32 0.0, %v7507
        %v7509 = vpop.f32.mrb[0].mxu0
        %7510 = vmatprep.mubr.bf16.mxu0 0
        %7511 = vmatmul.mubr.bf16.gmra.mrb[0].mxu0 %v7364
        %v7512 = vpop.f32.mrb[0].mxu0
        %v7513 = vadd.f32 0.0, %v7512
        %v7514 = vpop.f32.mrb[0].mxu0
        %v7515 = vpop.f32.mrb[0].mxu0
        %v7516 = vadd.f32 0.0, %v7515
        %v7517 = vpop.f32.mrb[0].mxu0
        %7518 = vmatprep.mubr.bf16.mxu0 0
        %7519 = vmatmul.mubr.bf16.gmra.mrb[0].mxu0 %v7367
        %v7520 = vpop.f32.mrb[0].mxu0
        %v7521 = vadd.f32 0.0, %v7520
        %v7522 = vpop.f32.mrb[0].mxu0
        %v7523 = vpop.f32.mrb[0].mxu0
        %v7524 = vadd.f32 0.0, %v7523
        %v7525 = vpop.f32.mrb[0].mxu0
        %7526 = vmatprep.mubr.bf16.mxu0 0
        %7527 = vmatmul.mubr.bf16.gmra.mrb[0].mxu0 %v7370
        %v7528 = vpop.f32.mrb[0].mxu0
        %v7529 = vadd.f32 0.0, %v7528
        %v7530 = vpop.f32.mrb[0].mxu0
        %v7531 = vpop.f32.mrb[0].mxu0
        %v7532 = vadd.f32 0.0, %v7531
        %v7533 = vpop.f32.mrb[0].mxu0
        %7534 = vmatprep.mubr.bf16.mxu0 0
        %7535 = vmatmul.mubr.bf16.gmra.mrb[0].mxu0 %v7373
        %v7536 = vpop.f32.mrb[0].mxu0
        %v7537 = vadd.f32 0.0, %v7536
        %v7538 = vpop.f32.mrb[0].mxu0
        %v7539 = vpop.f32.mrb[0].mxu0
        %v7540 = vadd.f32 0.0, %v7539
        %v7541 = vpop.f32.mrb[0].mxu0
        %7542 = vdwg.mxu0
        %v7543 = vadd.f32 %v7310, %v7481
        %v7544 = vadd.f32 %v7311, %v7484
        %v7545 = vadd.f32 %v7312, %v7489
        %v7546 = vadd.f32 %v7313, %v7492
        %v7547 = vadd.f32 %v7314, %v7497
        %v7548 = vadd.f32 %v7315, %v7500
        %v7549 = vadd.f32 %v7316, %v7505
        %v7550 = vadd.f32 %v7317, %v7508
        %v7551 = vadd.f32 %v7318, %v7513
        %v7552 = vadd.f32 %v7319, %v7516
        %v7553 = vadd.f32 %v7320, %v7521
        %v7554 = vadd.f32 %v7321, %v7524
        %v7555 = vadd.f32 %v7322, %v7529
        %v7556 = vadd.f32 %v7323, %v7532
        %v7557 = vadd.f32 %v7324, %v7537
        %v7558 = vadd.f32 %v7325, %v7540
        %v7559 = vld [vmem:[%s6988 + $0x8] sm:$0x1f]
        %v7560 = vld [vmem:[%s6988 + $0x18] sm:$0x1f]
        %v7561 = vld [vmem:[%s6988 + $0x28] sm:$0x1f]
        %v7562 = vld [vmem:[%s6988 + $0x38] sm:$0x1f]
        %v7563 = vld [vmem:[%s6988 + $0x48] sm:$0x1f]
        %v7564 = vld [vmem:[%s6988 + $0x58] sm:$0x1f]
        %v7565 = vld [vmem:[%s6988 + $0x68] sm:$0x1f]
        %v7566 = vld [vmem:[%s6988 + $0x78] sm:$0x1f]
        %v7568 = vshrl.u32 %v7326, 16
        %v7570 = vrot.slane %v7568, 4
        %v7571 = vshll.u32 %v7326, 16
        %v7573 = vrot.slane %v7571, 5
        %v7574 = vor.u32 %v7570, %v7573
        %v7576 = vshrl.u32 %v7559, 16
        %v7578 = vrot.slane %v7576, 4
        %v7579 = vshll.u32 %v7559, 16
        %v7581 = vrot.slane %v7579, 5
        %v7582 = vor.u32 %v7578, %v7581
        %v7583 = vsel %vm5760, %v7574, %v7582
        %v7585 = vshrl.u32 %v7327, 16
        %v7587 = vrot.slane %v7585, 4
        %v7588 = vshll.u32 %v7327, 16
        %v7590 = vrot.slane %v7588, 5
        %v7591 = vor.u32 %v7587, %v7590
        %v7593 = vshrl.u32 %v7560, 16
        %v7595 = vrot.slane %v7593, 4
        %v7596 = vshll.u32 %v7560, 16
        %v7598 = vrot.slane %v7596, 5
        %v7599 = vor.u32 %v7595, %v7598
        %v7600 = vsel %vm5760, %v7591, %v7599
        %v7602 = vshrl.u32 %v7328, 16
        %v7604 = vrot.slane %v7602, 4
        %v7605 = vshll.u32 %v7328, 16
        %v7607 = vrot.slane %v7605, 5
        %v7608 = vor.u32 %v7604, %v7607
        %v7610 = vshrl.u32 %v7561, 16
        %v7612 = vrot.slane %v7610, 4
        %v7613 = vshll.u32 %v7561, 16
        %v7615 = vrot.slane %v7613, 5
        %v7616 = vor.u32 %v7612, %v7615
        %v7617 = vsel %vm5760, %v7608, %v7616
        %v7619 = vshrl.u32 %v7329, 16
        %v7621 = vrot.slane %v7619, 4
        %v7622 = vshll.u32 %v7329, 16
        %v7624 = vrot.slane %v7622, 5
        %v7625 = vor.u32 %v7621, %v7624
        %v7627 = vshrl.u32 %v7562, 16
        %v7629 = vrot.slane %v7627, 4
        %v7630 = vshll.u32 %v7562, 16
        %v7632 = vrot.slane %v7630, 5
        %v7633 = vor.u32 %v7629, %v7632
        %v7634 = vsel %vm5760, %v7625, %v7633
        %v7636 = vshrl.u32 %v7330, 16
        %v7638 = vrot.slane %v7636, 4
        %v7639 = vshll.u32 %v7330, 16
        %v7641 = vrot.slane %v7639, 5
        %v7642 = vor.u32 %v7638, %v7641
        %v7644 = vshrl.u32 %v7563, 16
        %v7646 = vrot.slane %v7644, 4
        %v7647 = vshll.u32 %v7563, 16
        %v7649 = vrot.slane %v7647, 5
        %v7650 = vor.u32 %v7646, %v7649
        %v7651 = vsel %vm5760, %v7642, %v7650
        %v7653 = vshrl.u32 %v7331, 16
        %v7655 = vrot.slane %v7653, 4
        %v7656 = vshll.u32 %v7331, 16
        %v7658 = vrot.slane %v7656, 5
        %v7659 = vor.u32 %v7655, %v7658
        %v7661 = vshrl.u32 %v7564, 16
        %v7663 = vrot.slane %v7661, 4
        %v7664 = vshll.u32 %v7564, 16
        %v7666 = vrot.slane %v7664, 5
        %v7667 = vor.u32 %v7663, %v7666
        %v7668 = vsel %vm5760, %v7659, %v7667
        %v7670 = vshrl.u32 %v7332, 16
        %v7672 = vrot.slane %v7670, 4
        %v7673 = vshll.u32 %v7332, 16
        %v7675 = vrot.slane %v7673, 5
        %v7676 = vor.u32 %v7672, %v7675
        %v7678 = vshrl.u32 %v7565, 16
        %v7680 = vrot.slane %v7678, 4
        %v7681 = vshll.u32 %v7565, 16
        %v7683 = vrot.slane %v7681, 5
        %v7684 = vor.u32 %v7680, %v7683
        %v7685 = vsel %vm5760, %v7676, %v7684
        %v7687 = vshrl.u32 %v7333, 16
        %v7689 = vrot.slane %v7687, 4
        %v7690 = vshll.u32 %v7333, 16
        %v7692 = vrot.slane %v7690, 5
        %v7693 = vor.u32 %v7689, %v7692
        %v7695 = vshrl.u32 %v7566, 16
        %v7697 = vrot.slane %v7695, 4
        %v7698 = vshll.u32 %v7566, 16
        %v7700 = vrot.slane %v7698, 5
        %v7701 = vor.u32 %v7697, %v7700
        %v7702 = vsel %vm5760, %v7693, %v7701
        %v7711 = vld [vmem:[%s3 + $0x200] sm:$0xf]
        %v7712 = vld [vmem:[%s3 + $0x204] sm:$0xf]
        %v7713 = vld [vmem:[%s3 + $0x208] sm:$0xf]
        %v7714 = vld [vmem:[%s3 + $0x20c] sm:$0xf]
        %v7715 = vld [vmem:[%s3 + $0x210] sm:$0xf]
        %v7716 = vld [vmem:[%s3 + $0x214] sm:$0xf]
        %v7717 = vld [vmem:[%s3 + $0x218] sm:$0xf]
        %v7718 = vld [vmem:[%s3 + $0x21c] sm:$0xf]
        %v7719 = vld [vmem:[%s3 + $0x220] sm:$0xf]
        %v7720 = vld [vmem:[%s3 + $0x224] sm:$0xf]
        %v7721 = vld [vmem:[%s3 + $0x228] sm:$0xf]
        %v7722 = vld [vmem:[%s3 + $0x22c] sm:$0xf]
        %v7723 = vld [vmem:[%s3 + $0x230] sm:$0xf]
        %v7724 = vld [vmem:[%s3 + $0x234] sm:$0xf]
        %v7725 = vld [vmem:[%s3 + $0x238] sm:$0xf]
        %v7726 = vld [vmem:[%s3 + $0x23c] sm:$0xf]
        %v7743 = vunpack.c.l.b16 %v7711
        %v7744 = vunpack.c.l.b16 %v7712
        %v7745 = vunpack.c.l.b16 %v7713
        %v7746 = vunpack.c.l.b16 %v7714
        %v7747 = vunpack.c.l.b16 %v7715
        %v7748 = vunpack.c.l.b16 %v7716
        %v7749 = vunpack.c.l.b16 %v7717
        %v7750 = vunpack.c.l.b16 %v7718
        %v7751 = vunpack.c.l.b16 %v7719
        %v7752 = vunpack.c.l.b16 %v7720
        %v7753 = vunpack.c.l.b16 %v7721
        %v7754 = vunpack.c.l.b16 %v7722
        %v7755 = vunpack.c.l.b16 %v7723
        %v7756 = vunpack.c.l.b16 %v7724
        %v7757 = vunpack.c.l.b16 %v7725
        %v7758 = vunpack.c.l.b16 %v7726
        %v7759 = vpack.c.b16 %v7744, %v7743
        %v7760 = vpack.c.b16 %v7746, %v7745
        %v7761 = vpack.c.b16 %v7748, %v7747
        %v7762 = vpack.c.b16 %v7750, %v7749
        %v7763 = vpack.c.b16 %v7752, %v7751
        %v7764 = vpack.c.b16 %v7754, %v7753
        %v7765 = vpack.c.b16 %v7756, %v7755
        %v7766 = vpack.c.b16 %v7758, %v7757
        %7775 = vmatprep.subr.bf16.mxu0 0
        %7776 = vmatpush1.bf16.msra.mxu0 %v7759
        %7777 = vmatprep.subr.bf16.mxu0 0
        %7778 = vmatpush1.bf16.msra.mxu0 %v7760
        %7779 = vmatprep.subr.bf16.mxu0 0
        %7780 = vmatpush1.bf16.msra.mxu0 %v7761
        %7781 = vmatprep.subr.bf16.mxu0 0
        %7782 = vmatpush1.bf16.msra.mxu0 %v7762
        %7783 = vmatprep.subr.bf16.mxu0 0
        %7784 = vmatpush1.bf16.msra.mxu0 %v7763
        %7785 = vmatprep.subr.bf16.mxu0 0
        %7786 = vmatpush1.bf16.msra.mxu0 %v7764
        %7787 = vmatprep.subr.bf16.mxu0 0
        %7788 = vmatpush1.bf16.msra.mxu0 %v7765
        %7789 = vmatprep.subr.bf16.mxu0 0
        %7790 = vmatpush1.bf16.msra.mxu0 %v7766
        %7791 = vmatprep.subr.bf16.mxu0 0
        %7792 = vmatpush1.bf16.msra.mxu0 0
        %7793 = vmatprep.subr.bf16.mxu0 0
        %7794 = vmatpush1.bf16.msra.mxu0 0
        %7795 = vmatprep.subr.bf16.mxu0 0
        %7796 = vmatpush1.bf16.msra.mxu0 0
        %7797 = vmatprep.subr.bf16.mxu0 0
        %7798 = vmatpush1.bf16.msra.mxu0 0
        %7799 = vmatprep.subr.bf16.mxu0 0
        %7800 = vmatpush1.bf16.msra.mxu0 0
        %7801 = vmatprep.subr.bf16.mxu0 0
        %7802 = vmatpush1.bf16.msra.mxu0 0
        %7803 = vmatprep.subr.bf16.mxu0 0
        %7804 = vmatpush1.bf16.msra.mxu0 0
        %7805 = vmatprep.subr.bf16.mxu0 0
        %7806 = vmatpush1.bf16.msra.mxu0 0
        %7807 = vmatprep.mubr.bf16.mxu0 0
        %7808 = vmatmul.mubr.bf16.gmra.mrb[0].mxu0 %v7583
        %v7809 = vpop.f32.mrb[0].mxu0
        %v7810 = vadd.f32 0.0, %v7809
        %v7811 = vpop.f32.mrb[0].mxu0
        %v7812 = vpop.f32.mrb[0].mxu0
        %v7813 = vadd.f32 0.0, %v7812
        %v7814 = vpop.f32.mrb[0].mxu0
        %7815 = vmatprep.mubr.bf16.mxu0 0
        %7816 = vmatmul.mubr.bf16.gmra.mrb[0].mxu0 %v7600
        %v7817 = vpop.f32.mrb[0].mxu0
        %v7818 = vadd.f32 0.0, %v7817
        %v7819 = vpop.f32.mrb[0].mxu0
        %v7820 = vpop.f32.mrb[0].mxu0
        %v7821 = vadd.f32 0.0, %v7820
        %v7822 = vpop.f32.mrb[0].mxu0
        %7823 = vmatprep.mubr.bf16.mxu0 0
        %7824 = vmatmul.mubr.bf16.gmra.mrb[0].mxu0 %v7617
        %v7825 = vpop.f32.mrb[0].mxu0
        %v7826 = vadd.f32 0.0, %v7825
        %v7827 = vpop.f32.mrb[0].mxu0
        %v7828 = vpop.f32.mrb[0].mxu0
        %v7829 = vadd.f32 0.0, %v7828
        %v7830 = vpop.f32.mrb[0].mxu0
        %7831 = vmatprep.mubr.bf16.mxu0 0
        %7832 = vmatmul.mubr.bf16.gmra.mrb[0].mxu0 %v7634
        %v7833 = vpop.f32.mrb[0].mxu0
        %v7834 = vadd.f32 0.0, %v7833
        %v7835 = vpop.f32.mrb[0].mxu0
        %v7836 = vpop.f32.mrb[0].mxu0
        %v7837 = vadd.f32 0.0, %v7836
        %v7838 = vpop.f32.mrb[0].mxu0
        %7839 = vmatprep.mubr.bf16.mxu0 0
        %7840 = vmatmul.mubr.bf16.gmra.mrb[0].mxu0 %v7651
        %v7841 = vpop.f32.mrb[0].mxu0
        %v7842 = vadd.f32 0.0, %v7841
        %v7843 = vpop.f32.mrb[0].mxu0
        %v7844 = vpop.f32.mrb[0].mxu0
        %v7845 = vadd.f32 0.0, %v7844
        %v7846 = vpop.f32.mrb[0].mxu0
        %7847 = vmatprep.mubr.bf16.mxu0 0
        %7848 = vmatmul.mubr.bf16.gmra.mrb[0].mxu0 %v7668
        %v7849 = vpop.f32.mrb[0].mxu0
        %v7850 = vadd.f32 0.0, %v7849
        %v7851 = vpop.f32.mrb[0].mxu0
        %v7852 = vpop.f32.mrb[0].mxu0
        %v7853 = vadd.f32 0.0, %v7852
        %v7854 = vpop.f32.mrb[0].mxu0
        %7855 = vmatprep.mubr.bf16.mxu0 0
        %7856 = vmatmul.mubr.bf16.gmra.mrb[0].mxu0 %v7685
        %v7857 = vpop.f32.mrb[0].mxu0
        %v7858 = vadd.f32 0.0, %v7857
        %v7859 = vpop.f32.mrb[0].mxu0
        %v7860 = vpop.f32.mrb[0].mxu0
        %v7861 = vadd.f32 0.0, %v7860
        %v7862 = vpop.f32.mrb[0].mxu0
        %7863 = vmatprep.mubr.bf16.mxu0 0
        %7864 = vmatmul.mubr.bf16.gmra.mrb[0].mxu0 %v7702
        %v7865 = vpop.f32.mrb[0].mxu0
        %v7866 = vadd.f32 0.0, %v7865
        %v7867 = vpop.f32.mrb[0].mxu0
        %v7868 = vpop.f32.mrb[0].mxu0
        %v7869 = vadd.f32 0.0, %v7868
        %v7870 = vpop.f32.mrb[0].mxu0
        %7871 = vdwg.mxu0
        %v7872 = vadd.f32 %v7543, %v7810
        %v7873 = vadd.f32 %v7544, %v7813
        %v7874 = vadd.f32 %v7545, %v7818
        %v7875 = vadd.f32 %v7546, %v7821
        %v7876 = vadd.f32 %v7547, %v7826
        %v7877 = vadd.f32 %v7548, %v7829
        %v7878 = vadd.f32 %v7549, %v7834
        %v7879 = vadd.f32 %v7550, %v7837
        %v7880 = vadd.f32 %v7551, %v7842
        %v7881 = vadd.f32 %v7552, %v7845
        %v7882 = vadd.f32 %v7553, %v7850
        %v7883 = vadd.f32 %v7554, %v7853
        %v7884 = vadd.f32 %v7555, %v7858
        %v7885 = vadd.f32 %v7556, %v7861
        %v7886 = vadd.f32 %v7557, %v7866
        %v7887 = vadd.f32 %v7558, %v7869
        %v7888 = vld [vmem:[%s4] sm:$0x1]
        %v7890 = vlaneseq
        %v7891 = vshrl.u32 %v7890, 7
        %v7892 = vsub.s32 0, %v7891
        %v7893 = vrot.slane %v7888, %v7892
        %v7895 = vadd.f32 %v7872, %v7893
        %v7896 = vadd.f32 %v7873, %v7893
        %v7897 = vadd.f32 %v7874, %v7893
        %v7898 = vadd.f32 %v7875, %v7893
        %v7899 = vadd.f32 %v7876, %v7893
        %v7900 = vadd.f32 %v7877, %v7893
        %v7901 = vadd.f32 %v7878, %v7893
        %v7902 = vadd.f32 %v7879, %v7893
        %v7903 = vadd.f32 %v7880, %v7893
        %v7904 = vadd.f32 %v7881, %v7893
        %v7905 = vadd.f32 %v7882, %v7893
        %v7906 = vadd.f32 %v7883, %v7893
        %v7907 = vadd.f32 %v7884, %v7893
        %v7908 = vadd.f32 %v7885, %v7893
        %v7909 = vadd.f32 %v7886, %v7893
        %v7910 = vadd.f32 %v7887, %v7893
        %s7911 = smul.u32 %s5208, 16
        %s7912 = scalar_lea.vmem %s236, %s7911
        %v7913 = vld [vmem:[%s7912] sm:$0xff]
        %v7914 = vld [vmem:[%s7912 + $0x8] sm:$0xff]
        %v7915 = vld [vmem:[%s7912 + $0x10] sm:$0xff]
        %v7916 = vld [vmem:[%s7912 + $0x18] sm:$0xff]
        %v7917 = vld [vmem:[%s7912 + $0x20] sm:$0xff]
        %v7918 = vld [vmem:[%s7912 + $0x28] sm:$0xff]
        %v7919 = vld [vmem:[%s7912 + $0x30] sm:$0xff]
        %v7920 = vld [vmem:[%s7912 + $0x38] sm:$0xff]
        %v7921 = vld [vmem:[%s7912 + $0x40] sm:$0xff]
        %v7922 = vld [vmem:[%s7912 + $0x48] sm:$0xff]
        %v7923 = vld [vmem:[%s7912 + $0x50] sm:$0xff]
        %v7924 = vld [vmem:[%s7912 + $0x58] sm:$0xff]
        %v7925 = vld [vmem:[%s7912 + $0x60] sm:$0xff]
        %v7926 = vld [vmem:[%s7912 + $0x68] sm:$0xff]
        %v7927 = vld [vmem:[%s7912 + $0x70] sm:$0xff]
        %v7928 = vld [vmem:[%s7912 + $0x78] sm:$0xff]
        %v7929 = vadd.f32 %v7895, %v7913
        %v7930 = vadd.f32 %v7896, %v7914
        %v7931 = vadd.f32 %v7897, %v7915
        %v7932 = vadd.f32 %v7898, %v7916
        %v7933 = vadd.f32 %v7899, %v7917
        %v7934 = vadd.f32 %v7900, %v7918
        %v7935 = vadd.f32 %v7901, %v7919
        %v7936 = vadd.f32 %v7902, %v7920
        %v7937 = vadd.f32 %v7903, %v7921
        %v7938 = vadd.f32 %v7904, %v7922
        %v7939 = vadd.f32 %v7905, %v7923
        %v7940 = vadd.f32 %v7906, %v7924
        %v7941 = vadd.f32 %v7907, %v7925
        %v7942 = vadd.f32 %v7908, %v7926
        %v7943 = vadd.f32 %v7909, %v7927
        %v7944 = vadd.f32 %v7910, %v7928
        %7945 = vst [vmem:[%s231] sm:$0xff] %v7929
        %7946 = vst [vmem:[%s231 + $0x8] sm:$0xff] %v7930
        %7947 = vst [vmem:[%s231 + $0x10] sm:$0xff] %v7931
        %7948 = vst [vmem:[%s231 + $0x18] sm:$0xff] %v7932
        %7949 = vst [vmem:[%s231 + $0x20] sm:$0xff] %v7933
        %7950 = vst [vmem:[%s231 + $0x28] sm:$0xff] %v7934
        %7951 = vst [vmem:[%s231 + $0x30] sm:$0xff] %v7935
        %7952 = vst [vmem:[%s231 + $0x38] sm:$0xff] %v7936
        %7953 = vst [vmem:[%s231 + $0x40] sm:$0xff] %v7937
        %7954 = vst [vmem:[%s231 + $0x48] sm:$0xff] %v7938
        %7955 = vst [vmem:[%s231 + $0x50] sm:$0xff] %v7939
        %7956 = vst [vmem:[%s231 + $0x58] sm:$0xff] %v7940
        %7957 = vst [vmem:[%s231 + $0x60] sm:$0xff] %v7941
        %7958 = vst [vmem:[%s231 + $0x68] sm:$0xff] %v7942
        %7959 = vst [vmem:[%s231 + $0x70] sm:$0xff] %v7943
        %7960 = vst [vmem:[%s231 + $0x78] sm:$0xff] %v7944
        %s7961 = sand.u32 %s151, 1
        %s7962 = scalar_lea.sflag [#allocation5], %s7961
        %s7963 = sand.u32 %s151, 1
        %s7964 = smul.addr %s7963, 128
        %s7965 = scalar_lea.vmem [#allocation4], %s7964
        // Predicated region
        $region45: #{unit_pallas_nhwc.1} parent=39 // pred_check
          %p7966 = pneg %p161
        $region46: #{unit_pallas_nhwc.1} parent=39 // pred_check_branch
          %7968 = sbr.rel (%p7966) target = $region48
        $region47: #{unit_pallas_nhwc.1} parent=39 // pred_region
          %s7969 = smul.u32 8, %s24
          %s7971 = ssub.s32 2048, 2048
          %7972 = vsyncadd %s7962, %s7971
          %s7973 = smul.addr %s7969, 2
          %s7974 = smul.addr %s23, 32
          %s7975 = sadd.s32 %s7973, %s7974
          %s7976 = smul.addr %s7975, 128
          %s7977 = scalar_lea.hbm %s5, %s7976
          %s7978 = sshll.u32 %s7965, 4
          %s7979 = int_to_ptr.vmem [resolvable:$true] %s7978
          %7984 = dma.vmem_to_hbm [thread:$0]  %s7979, 2048, %s7977, %s7962, 128, 128, 8
        $region48: #{unit_pallas_nhwc.1} parent=39 // pred_fallthru
          _
      $region40: #{unit_pallas_nhwc.1} parent=5 // pred_fallthru
        _
      %p7985 = scmp.le.s32.totalorder 2, %s14
      // Predicated region
      $region49: #{unit_pallas_nhwc.1} parent=5 // pred_check
        %p7986 = pneg %p7985
      $region50: #{unit_pallas_nhwc.1} parent=5 // pred_check_branch
        %7988 = sbr.rel (%p7986) target = $region52
      $region51: #{unit_pallas_nhwc.1} parent=5 // pred_region
        %s7989 = ssub.s32 %s14, 2
        // Predicated region
        $region53: #{unit_pallas_nhwc.1} parent=51 // pred_check
          %p7990 = pneg %p167
        $region54: #{unit_pallas_nhwc.1} parent=51 // pred_check_branch
          %7992 = sbr.rel (%p7990) target = $region56
        $region55: #{unit_pallas_nhwc.1} parent=51 // pred_region
          %s7993 = sand.u32 %s152, 1
          %s7994 = scalar_lea.sflag [#allocation5], %s7993
          %s7995 = sand.u32 %s152, 1
          %s7996 = smul.addr %s7995, 128
          %s7997 = scalar_lea.vmem [#allocation4], %s7996
          %7998 = dma.done %s7994, 2048
        $region56: #{unit_pallas_nhwc.1} parent=51 // pred_fallthru
          _
      $region52: #{unit_pallas_nhwc.1} parent=5 // pred_fallthru
        _
    $region6: #{unit_pallas_nhwc.1} parent=1 // loop_footer
      %s18 = sadd.s32 1, %s14
    $region7: #{unit_pallas_nhwc.1} parent=1 // loop_footer_branch
      %13 = sbr.rel target = $region3
    $region8: #{unit_pallas_nhwc.1} parent=1 // loop_exit
      _
    %7999 = vsyncpa [#allocation5], 1
    %s8000 = scalar_lea.sflag [#allocation5], 1
    %8001 = vsyncpa %s8000, 1

</llo_original>
